<compile_context>
chip_gen: v6e
topology: v6e:2x2x1
jax: 0.10.0
libtpu: 0.0.40
codegen_flags: <defaults>
</compile_context>

<pallas_src>
import numpy as np
import jax
import jax.numpy as jnp
from jax.experimental import pallas as pl
from jax.experimental.pallas import tpu as pltpu

INPUT_SIZE = (2148, 10)
NUM_CLASSES = 2
NUM_CAPSULES = 16
IN_FEATURES = NUM_CAPSULES * NUM_CLASSES          # 32
H1 = 512
H2 = 1024
OUT_FEATURES = int(np.prod(INPUT_SIZE))           # 21480
LANE = 128


def _round_up(x, m):
    return ((x + m - 1) // m) * m


OUT_PADDED = _round_up(OUT_FEATURES, LANE)        # 21504 = 168 * 128


def recon_kernel(x_ref, w1_ref, b1_ref, w2_ref, b2_ref, w3_ref, b3_ref,
                 out_ref, h2_ref):
    j = pl.program_id(1)

    # fc1/fc2 trunk is <3% of the FLOPs: compute it once per batch tile and
    # reuse it for every fc3 column tile via the persistent VMEM scratch.
    @pl.when(j == 0)
    def _():
        x = x_ref[...].astype(jnp.bfloat16)
        h1 = jnp.dot(x, w1_ref[...], preferred_element_type=jnp.float32) + b1_ref[...]
        h1 = jnp.maximum(h1, 0.0).astype(jnp.bfloat16)
        h2 = jnp.dot(h1, w2_ref[...], preferred_element_type=jnp.float32) + b2_ref[...]
        h2_ref[...] = jnp.maximum(h2, 0.0).astype(jnp.bfloat16)

    # fc3 column tile + sigmoid (f32 accumulation / elementwise).
    z = jnp.dot(h2_ref[...], w3_ref[...], preferred_element_type=jnp.float32) + b3_ref[...]
    out_ref[...] = 1.0 / (1.0 + jnp.exp(-z))


def reconstruction_net_forward(x, params, *, tb_max=256, tn=2688):
    """x: (B, 32) f32 -> (B, 2148, 10) f32."""
    w1, b1, w2, b2, w3, b3 = params                # w* bf16, b* f32, fc3 padded

    B = x.shape[0]
    tb = min(tb_max, _round_up(B, 8))              # batch tile (multiple of 8)
    b_pad = _round_up(B, tb)
    if b_pad != B:
        x = jnp.pad(x, ((0, b_pad - B), (0, 0)))

    grid = (b_pad // tb, OUT_PADDED // tn)

    cost = pl.CostEstimate(
        flops=2 * b_pad * (IN_FEATURES * H1 + H1 * H2 + H2 * OUT_PADDED),
        transcendentals=b_pad * OUT_PADDED,
        bytes_accessed=(x.size * 4
                        + (w1.size + w2.size + w3.size) * 2
                        + (b1.size + b2.size + b3.size) * 4
                        + b_pad * OUT_PADDED * 4),
    )

    out = pl.pallas_call(
        recon_kernel,
        out_shape=jax.ShapeDtypeStruct((b_pad, OUT_PADDED), jnp.float32),
        grid_spec=pltpu.PrefetchScalarGridSpec(
            num_scalar_prefetch=0,
            grid=grid,
            in_specs=[
                pl.BlockSpec((tb, IN_FEATURES), lambda i, j: (i, 0)),   # x tile
                pl.BlockSpec((IN_FEATURES, H1), lambda i, j: (0, 0)),   # w1 (resident)
                pl.BlockSpec((1, H1), lambda i, j: (0, 0)),             # b1 (resident)
                pl.BlockSpec((H1, H2), lambda i, j: (0, 0)),            # w2 (resident)
                pl.BlockSpec((1, H2), lambda i, j: (0, 0)),             # b2 (resident)
                pl.BlockSpec((H2, tn), lambda i, j: (0, j)),            # w3 column tile
                pl.BlockSpec((1, tn), lambda i, j: (0, j)),             # b3 column tile
            ],
            out_specs=pl.BlockSpec((tb, tn), lambda i, j: (i, j)),
            scratch_shapes=[pltpu.VMEM((tb, H2), jnp.bfloat16)],        # cached trunk
        ),
        compiler_params=pltpu.CompilerParams(
            dimension_semantics=("parallel", "arbitrary")),
        cost_estimate=cost,
    )(x, w1, b1, w2, b2, w3, b3)

    return out[:B, :OUT_FEATURES].reshape(B, *INPUT_SIZE)


def make_params(key):
    """PyTorch-equivalent init (kaiming_normal for fc1/fc2, xavier_normal for fc3,
    default uniform biases). Weights are returned pre-transposed to (in, out),
    cast to bf16 once here (hoisted out of the kernel), and fc3 is padded to a
    lane-dense OUT_PADDED columns."""
    k1w, k1b, k2w, k2b, k3w, k3b = jax.random.split(key, 6)

    def kaiming(k, fan_in, fan_out):
        return jax.random.normal(k, (fan_in, fan_out), jnp.float32) * np.sqrt(2.0 / fan_in)

    def xavier(k, fan_in, fan_out):
        return jax.random.normal(k, (fan_in, fan_out), jnp.float32) * np.sqrt(2.0 / (fan_in + fan_out))

    def bias(k, fan_in, fan_out):
        bound = 1.0 / np.sqrt(fan_in)
        return jax.random.uniform(k, (1, fan_out), jnp.float32, -bound, bound)

    w1 = kaiming(k1w, IN_FEATURES, H1); b1 = bias(k1b, IN_FEATURES, H1)
    w2 = kaiming(k2w, H1, H2);          b2 = bias(k2b, H1, H2)
    w3 = xavier(k3w, H2, OUT_FEATURES); b3 = bias(k3b, H2, OUT_FEATURES)

    w1 = w1.astype(jnp.bfloat16)
    w2 = w2.astype(jnp.bfloat16)
    w3 = jnp.pad(w3, ((0, 0), (0, OUT_PADDED - OUT_FEATURES))).astype(jnp.bfloat16)
    b3 = jnp.pad(b3, ((0, 0), (0, OUT_PADDED - OUT_FEATURES)))
    return (w1, b1, w2, b2, w3, b3)


def reference_forward(x, params):
    """Pure-JAX reference with identical bf16-matmul / f32-accumulate numerics."""
    w1, b1, w2, b2, w3, b3 = params
    h1 = jnp.maximum(
        jnp.dot(x.astype(jnp.bfloat16), w1, preferred_element_type=jnp.float32) + b1, 0.0)
    h2 = jnp.maximum(
        jnp.dot(h1.astype(jnp.bfloat16), w2, preferred_element_type=jnp.float32) + b2, 0.0)
    z = jnp.dot(h2.astype(jnp.bfloat16), w3, preferred_element_type=jnp.float32) + b3
    out = 1.0 / (1.0 + jnp.exp(-z))
    return out[:, :OUT_FEATURES].reshape(x.shape[0], *INPUT_SIZE)


if __name__ == "__main__":
    key = jax.random.PRNGKey(0)
    k_x, k_p = jax.random.split(key)

    batch = 8
    x = jax.random.normal(k_x, (batch, IN_FEATURES), jnp.float32)
    params = make_params(k_p)

    out = reconstruction_net_forward(x, params)
    out = jax.block_until_ready(out)
    assert out.shape == (batch, *INPUT_SIZE)

    ref = reference_forward(x, params)
    np.testing.assert_allclose(np.asarray(out), np.asarray(ref), rtol=5e-3, atol=5e-3)

    print("KERNEL_OK")
</pallas_src>

<mosaic_0001>
module attributes {stable_mosaic.version = 11 : i64} {
  func.func @recon_kernel(%arg0: i32, %arg1: i32, %arg2: memref<8x32xf32, #tpu.memory_space<vmem>>, %arg3: memref<32x512xbf16, #tpu.memory_space<vmem>>, %arg4: memref<1x512xf32, #tpu.memory_space<vmem>>, %arg5: memref<512x1024xbf16, #tpu.memory_space<vmem>>, %arg6: memref<1x1024xf32, #tpu.memory_space<vmem>>, %arg7: memref<1024x2688xbf16, #tpu.memory_space<vmem>>, %arg8: memref<1x2688xf32, #tpu.memory_space<vmem>>, %arg9: memref<8x2688xf32, #tpu.memory_space<vmem>>, %arg10: memref<8x1024xbf16, #tpu.memory_space<vmem>>) attributes {dimension_semantics = [#tpu.dimension_semantics<parallel>, #tpu.dimension_semantics<arbitrary>], iteration_bounds = array<i64: 1, 8>, scalar_prefetch = 0 : i64, scratch_operands = 1 : i64, tpu.core_type = #tpu.core_type<tc>, window_params = [{transform_indices = @transform_0, window_bounds = array<i64: 8, 32>}, {pipeline_mode = #tpu.pipeline_mode<synchronous>, transform_indices = @transform_1, window_bounds = array<i64: 32, 512>}, {pipeline_mode = #tpu.pipeline_mode<synchronous>, transform_indices = @transform_2, window_bounds = array<i64: 1, 512>}, {pipeline_mode = #tpu.pipeline_mode<synchronous>, transform_indices = @transform_3, window_bounds = array<i64: 512, 1024>}, {pipeline_mode = #tpu.pipeline_mode<synchronous>, transform_indices = @transform_4, window_bounds = array<i64: 1, 1024>}, {transform_indices = @transform_5, window_bounds = array<i64: 1024, 2688>}, {transform_indices = @transform_6, window_bounds = array<i64: 1, 2688>}, {transform_indices = @transform_7, window_bounds = array<i64: 8, 2688>}]} {
    %c0_i32 = arith.constant 0 : i32
    %0 = arith.cmpi eq, %arg1, %c0_i32 : i32
    %1 = arith.extui %0 : i1 to i32
    %c0_i32_0 = arith.constant 0 : i32
    %2 = arith.cmpi ne, %1, %c0_i32_0 : i32
    scf.if %2 {
      %c0_11 = arith.constant 0 : index
      %c0_12 = arith.constant 0 : index
      %17 = vector.load %arg2[%c0_11, %c0_12] : memref<8x32xf32, #tpu.memory_space<vmem>>, vector<8x32xf32>
      %18 = arith.truncf %17 : vector<8x32xf32> to vector<8x32xbf16>
      %c0_13 = arith.constant 0 : index
      %c0_14 = arith.constant 0 : index
      %19 = vector.load %arg3[%c0_13, %c0_14] : memref<32x512xbf16, #tpu.memory_space<vmem>>, vector<32x512xbf16>
      %cst_15 = arith.constant dense<0.000000e+00> : vector<8x512xf32>
      %20 = tpu.matmul %18, %19, %cst_15 {dimension_numbers = #tpu.dot_dimension_numbers<[1], [0], [0], [1], [0, 0, 1, 1], [], []>} : vector<8x32xbf16>, vector<32x512xbf16>, vector<8x512xf32> -> vector<8x512xf32>
      %c0_16 = arith.constant 0 : index
      %c0_17 = arith.constant 0 : index
      %21 = vector.load %arg4[%c0_16, %c0_17] : memref<1x512xf32, #tpu.memory_space<vmem>>, vector<1x512xf32>
      %22 = vector.broadcast %21 : vector<1x512xf32> to vector<8x512xf32>
      %23 = arith.addf %20, %22 : vector<8x512xf32>
      %cst_18 = arith.constant 0.000000e+00 : f32
      %24 = vector.broadcast %cst_18 : f32 to vector<8x512xf32>
      %25 = arith.maximumf %23, %24 : vector<8x512xf32>
      %26 = arith.truncf %25 : vector<8x512xf32> to vector<8x512xbf16>
      %c0_19 = arith.constant 0 : index
      %c0_20 = arith.constant 0 : index
      %27 = vector.load %arg5[%c0_19, %c0_20] : memref<512x1024xbf16, #tpu.memory_space<vmem>>, vector<512x1024xbf16>
      %cst_21 = arith.constant dense<0.000000e+00> : vector<8x1024xf32>
      %28 = tpu.matmul %26, %27, %cst_21 {dimension_numbers = #tpu.dot_dimension_numbers<[1], [0], [0], [1], [0, 0, 1, 1], [], []>} : vector<8x512xbf16>, vector<512x1024xbf16>, vector<8x1024xf32> -> vector<8x1024xf32>
      %c0_22 = arith.constant 0 : index
      %c0_23 = arith.constant 0 : index
      %29 = vector.load %arg6[%c0_22, %c0_23] : memref<1x1024xf32, #tpu.memory_space<vmem>>, vector<1x1024xf32>
      %30 = vector.broadcast %29 : vector<1x1024xf32> to vector<8x1024xf32>
      %31 = arith.addf %28, %30 : vector<8x1024xf32>
      %cst_24 = arith.constant 0.000000e+00 : f32
      %32 = vector.broadcast %cst_24 : f32 to vector<8x1024xf32>
      %33 = arith.maximumf %31, %32 : vector<8x1024xf32>
      %34 = arith.truncf %33 : vector<8x1024xf32> to vector<8x1024xbf16>
      %c0_25 = arith.constant 0 : index
      %c0_26 = arith.constant 0 : index
      %35 = vector.load %arg10[%c0_25, %c0_26] : memref<8x1024xbf16, #tpu.memory_space<vmem>>, vector<8x1024xbf16>
      tpu.vector_store %arg10[%c0_25, %c0_26], %34 {strides = array<i32>} : memref<8x1024xbf16, #tpu.memory_space<vmem>>, vector<8x1024xbf16>,
    } else {
    }
    %c0 = arith.constant 0 : index
    %c0_1 = arith.constant 0 : index
    %3 = vector.load %arg10[%c0, %c0_1] : memref<8x1024xbf16, #tpu.memory_space<vmem>>, vector<8x1024xbf16>
    %c0_2 = arith.constant 0 : index
    %c0_3 = arith.constant 0 : index
    %4 = vector.load %arg7[%c0_2, %c0_3] : memref<1024x2688xbf16, #tpu.memory_space<vmem>>, vector<1024x2688xbf16>
    %cst = arith.constant dense<0.000000e+00> : vector<8x2688xf32>
    %5 = tpu.matmul %3, %4, %cst {dimension_numbers = #tpu.dot_dimension_numbers<[1], [0], [0], [1], [0, 0, 1, 1], [], []>} : vector<8x1024xbf16>, vector<1024x2688xbf16>, vector<8x2688xf32> -> vector<8x2688xf32>
    %c0_4 = arith.constant 0 : index
    %c0_5 = arith.constant 0 : index
    %6 = vector.load %arg8[%c0_4, %c0_5] : memref<1x2688xf32, #tpu.memory_space<vmem>>, vector<1x2688xf32>
    %7 = vector.broadcast %6 : vector<1x2688xf32> to vector<8x2688xf32>
    %8 = arith.addf %5, %7 : vector<8x2688xf32>
    %cst_6 = arith.constant 0.000000e+00 : f32
    %9 = vector.broadcast %cst_6 : f32 to vector<8x2688xf32>
    %10 = arith.subf %9, %8 : vector<8x2688xf32>
    %11 = math.exp %10 : vector<8x2688xf32>
    %cst_7 = arith.constant 1.000000e+00 : f32
    %12 = vector.broadcast %cst_7 : f32 to vector<8x2688xf32>
    %13 = arith.addf %12, %11 : vector<8x2688xf32>
    %cst_8 = arith.constant 1.000000e+00 : f32
    %14 = vector.broadcast %cst_8 : f32 to vector<8x2688xf32>
    %15 = arith.divf %14, %13 : vector<8x2688xf32>
    %c0_9 = arith.constant 0 : index
    %c0_10 = arith.constant 0 : index
    %16 = vector.load %arg9[%c0_9, %c0_10] : memref<8x2688xf32, #tpu.memory_space<vmem>>, vector<8x2688xf32>
    tpu.vector_store %arg9[%c0_9, %c0_10], %15 {strides = array<i32>} : memref<8x2688xf32, #tpu.memory_space<vmem>>, vector<8x2688xf32>,
    return
  }
  func.func @transform_0(%arg0: i32, %arg1: i32) -> (i32, i32) {
    %c0_i32 = arith.constant 0 : i32
    %c0_i32_0 = arith.constant 0 : i32
    return %arg0, %c0_i32 : i32, i32
  }
  func.func @transform_1(%arg0: i32, %arg1: i32) -> (i32, i32) {
    %c0_i32 = arith.constant 0 : i32
    %c0_i32_0 = arith.constant 0 : i32
    %c0_i32_1 = arith.constant 0 : i32
    return %c0_i32, %c0_i32_0 : i32, i32
  }
  func.func @transform_2(%arg0: i32, %arg1: i32) -> (i32, i32) {
    %c0_i32 = arith.constant 0 : i32
    %c0_i32_0 = arith.constant 0 : i32
    %c0_i32_1 = arith.constant 0 : i32
    return %c0_i32, %c0_i32_0 : i32, i32
  }
  func.func @transform_3(%arg0: i32, %arg1: i32) -> (i32, i32) {
    %c0_i32 = arith.constant 0 : i32
    %c0_i32_0 = arith.constant 0 : i32
    %c0_i32_1 = arith.constant 0 : i32
    return %c0_i32, %c0_i32_0 : i32, i32
  }
  func.func @transform_4(%arg0: i32, %arg1: i32) -> (i32, i32) {
    %c0_i32 = arith.constant 0 : i32
    %c0_i32_0 = arith.constant 0 : i32
    %c0_i32_1 = arith.constant 0 : i32
    return %c0_i32, %c0_i32_0 : i32, i32
  }
  func.func @transform_5(%arg0: i32, %arg1: i32) -> (i32, i32) {
    %c0_i32 = arith.constant 0 : i32
    %c0_i32_0 = arith.constant 0 : i32
    return %c0_i32, %arg1 : i32, i32
  }
  func.func @transform_6(%arg0: i32, %arg1: i32) -> (i32, i32) {
    %c0_i32 = arith.constant 0 : i32
    %c0_i32_0 = arith.constant 0 : i32
    return %c0_i32, %arg1 : i32, i32
  }
  func.func @transform_7(%arg0: i32, %arg1: i32) -> (i32, i32) {
    %c0_i32 = arith.constant 0 : i32
    return %arg0, %arg1 : i32, i32
  }
}

</mosaic_0001>

<llo_original>
// kernel: tpu_custom_call.1
$region0: #{tpu_custom_call.1}
  #allocation0 [shape = 'u32[]', space=smem, size = 0x4, offset = 0x4, fixed_abs, tag = 'smem constant byte address 0x4 - core index']
  #allocation1 [shape = 'u32[144,128]{1,0:T(1,128)}', space=vmem, size = 0x12000, scoped, tag = 'internal scratch']
  #allocation2 [shape = 'bf16[8,1024]{1,0:T(8,128)(2,1)}', space=vmem, size = 0x4000, scoped, tag = 'scratch operand']
  %s0 = inlined_call_operand.hbm [shape: f32[8,32], index: 0, kind: input, shape index: {}]
  %s1 = inlined_call_operand.hbm [shape: bf16[32,512], index: 1, kind: input, shape index: {}]
  %s2 = inlined_call_operand.hbm [shape: f32[1,512], index: 2, kind: input, shape index: {}]
  %s3 = inlined_call_operand.hbm [shape: bf16[512,1024], index: 3, kind: input, shape index: {}]
  %s4 = inlined_call_operand.hbm [shape: f32[1,1024], index: 4, kind: input, shape index: {}]
  %s5 = inlined_call_operand.hbm [shape: bf16[1024,21504], index: 5, kind: input, shape index: {}]
  %s6 = inlined_call_operand.hbm [shape: f32[1,21504], index: 6, kind: input, shape index: {}]
  %s7 = inlined_call_operand.hbm [shape: f32[8,21504], index: 7, kind: output, shape index: {}]
  %s8 = sld [smem:[#allocation0]]
  $region93: #{tpu_custom_call.1} parent=0
    _
  %s10 = ssub.s32 1, %s8
  %s11 = scalar_select 0, %s10, %s8
  $region1: #{tpu_custom_call.1} parent=0
    #allocation3 [shape = 'u8[4096]{0}', space=vmem, size = 0x1000, scoped, tag = 'input window, operand 0, single buffered']
    #allocation4 [shape = 's32[2]{0}', space=sflag, size = 0x8, scoped, tag = 'scoped memory for tpu_custom_call.1']
    #allocation5 [shape = 's32[2]{0}', space=sflag, size = 0x8, scoped, tag = 'scoped memory for tpu_custom_call.1']
    #allocation6 [shape = 'u8[32768]{0}', space=vmem, size = 0x8000, scoped, tag = 'input window, operand 1, single buffered']
    #allocation7 [shape = 's32[1]{0}', space=sflag, size = 0x4, scoped, tag = 'scoped memory for tpu_custom_call.1']
    #allocation8 [shape = 'u8[2048]{0}', space=vmem, size = 0x800, scoped, tag = 'input window, operand 2, single buffered']
    #allocation9 [shape = 'u8[1048576]{0}', space=vmem, size = 0x100000, scoped, tag = 'input window, operand 3, single buffered']
    #allocation10 [shape = 's32[1]{0}', space=sflag, size = 0x4, scoped, tag = 'scoped memory for tpu_custom_call.1']
    #allocation11 [shape = 'u8[4096]{0}', space=vmem, size = 0x1000, scoped, tag = 'input window, operand 4, single buffered']
    #allocation12 [shape = 'u8[11010048]{0}', space=vmem, size = 0xa80000, scoped, tag = 'input window, operand 5']
    #allocation13 [shape = 's32[2]{0}', space=sflag, size = 0x8, scoped, tag = 'scoped memory for tpu_custom_call.1']
    #allocation14 [shape = 'u8[21504]{0}', space=vmem, size = 0x5400, scoped, tag = 'input window, operand 6']
    #allocation15 [shape = 'u8[172032]{0}', space=vmem, size = 0x2a000, scoped, tag = 'output window, operand 0']
    %12 = vsyncpa [#allocation4], 0
    %13 = vsyncpa [#allocation7], 0
    %14 = vsyncpa [#allocation10], 0
    %15 = vsyncpa [#allocation13], 0
    %s16 = scalar_lea.sflag [#allocation13], 1
    %17 = vsyncpa %s16, 0
    %18 = vsyncpa [#allocation5], 0
    %s19 = scalar_lea.sflag [#allocation5], 1
    %20 = vsyncpa %s19, 0
    loop: start=0, step=1, limit=10
    $region2: #{tpu_custom_call.1} parent=1 // loop_pre_header
      _
    $region3: #{tpu_custom_call.1} parent=1 // loop_header
      %s22 = sphi 0, %s26
      %p23 = scmp.ge.s32.totalorder %s22, 10
      %s29 = sphi 0, %s41
      %s30 = sphi 0, %s37
      %s31 = sphi 0, %s29
      %s32 = sphi 0, %s30
      %s33 = sphi 0, %s31
      %s34 = sphi 0, %s32
      %s44 = sphi 0, %s46
      %s47 = sphi 0, %s44
      %s48 = sphi 0, %s47
      %s64 = sphi 0, %s48
      %s68 = sphi 0, %s68
      %s70 = sphi 0, %s68
      %s71 = sphi 0, %s70
      %s85 = sphi 0, %s71
      %s89 = sphi 0, %s89
      %s91 = sphi 0, %s89
      %s92 = sphi 0, %s91
      %s106 = sphi 0, %s92
      %s110 = sphi 0, %s110
      %s112 = sphi 0, %s110
      %s113 = sphi 0, %s112
      %s127 = sphi 0, %s113
      %s131 = sphi 0, %s131
      %s133 = sphi 0, %s131
      %s134 = sphi 0, %s133
      %s148 = sphi 0, %s134
      %s154 = sphi 0, %s156
      %s157 = sphi 0, %s154
      %s158 = sphi 0, %s157
      %s174 = sphi 0, %s158
      %s180 = sphi 0, %s182
      %s183 = sphi 0, %s180
      %s184 = sphi 0, %s183
      %s200 = sphi 0, %s184
      %s208 = sphi 0, %s210
      %s211 = sphi 0, %s208
      %s212 = sphi 0, %s211
      %s228 = sphi 0, %s212
    $region4: #{tpu_custom_call.1} parent=1 // loop_header_branch
      %25 = sbr.rel (%p23) target = $region8
    $region5: #{tpu_custom_call.1} parent=1 // loop_body
      %s27 = ssub.s32 %s22, 1
      %s28 = ssub.s32 %s22, 2
      %s35 = sadd.s32 1, %s30
      %p36 = scmp.ge.s32.totalorder %s35, 8
      %s37 = scalar_select %p36, 0, %s35
      %s38 = sadd.s32 1, %s29
      %s39 = scalar_select %p36, %s38, %s29
      %p40 = scmp.ge.s32.totalorder %s39, 1
      %s41 = scalar_select %p40, 0, %s39
      %s42 = ssub.s32 %s29, %s41
      %p43 = scmp.eq.s32.totalorder %s42, 0
      %s45 = sadd.s32 %s44, 1
      %s46 = scalar_select %p43, %s44, %s45
      %p49 = pneg %p43
      %p50 = scmp.eq.s32.totalorder %s22, 7
      %p51 = por %p49, %p50
      %p52 = scmp.ne.s32.totalorder %s44, %s47
      %p53 = scmp.eq.s32.totalorder %s22, 0
      %p54 = por %p52, %p53
      %p55 = scmp.ne.s32.totalorder %s44, %s47
      %p56 = scmp.eq.s32.totalorder %s27, 7
      %p57 = por %p55, %p56
      %p58 = scmp.ne.s32.totalorder %s47, %s48
      %p59 = scmp.eq.s32.totalorder %s27, 0
      %p60 = por %p58, %p59
      %p61 = scmp.ne.s32.totalorder %s47, %s48
      %p62 = scmp.eq.s32.totalorder %s28, 7
      %p63 = por %p61, %p62
      %p65 = scmp.ne.s32.totalorder %s48, %s64
      %p66 = scmp.eq.s32.totalorder %s28, 0
      %p67 = por %p65, %p66
      %s69 = sadd.s32 %s68, 1
      %p72 = scmp.eq.s32.totalorder %s22, 7
      %p73 = scmp.ne.s32.totalorder %s68, %s70
      %p74 = scmp.eq.s32.totalorder %s22, 0
      %p75 = por %p73, %p74
      %p76 = scmp.ne.s32.totalorder %s68, %s70
      %p77 = scmp.eq.s32.totalorder %s27, 7
      %p78 = por %p76, %p77
      %p79 = scmp.ne.s32.totalorder %s70, %s71
      %p80 = scmp.eq.s32.totalorder %s27, 0
      %p81 = por %p79, %p80
      %p82 = scmp.ne.s32.totalorder %s70, %s71
      %p83 = scmp.eq.s32.totalorder %s28, 7
      %p84 = por %p82, %p83
      %p86 = scmp.ne.s32.totalorder %s71, %s85
      %p87 = scmp.eq.s32.totalorder %s28, 0
      %p88 = por %p86, %p87
      %s90 = sadd.s32 %s89, 1
      %p93 = scmp.eq.s32.totalorder %s22, 7
      %p94 = scmp.ne.s32.totalorder %s89, %s91
      %p95 = scmp.eq.s32.totalorder %s22, 0
      %p96 = por %p94, %p95
      %p97 = scmp.ne.s32.totalorder %s89, %s91
      %p98 = scmp.eq.s32.totalorder %s27, 7
      %p99 = por %p97, %p98
      %p100 = scmp.ne.s32.totalorder %s91, %s92
      %p101 = scmp.eq.s32.totalorder %s27, 0
      %p102 = por %p100, %p101
      %p103 = scmp.ne.s32.totalorder %s91, %s92
      %p104 = scmp.eq.s32.totalorder %s28, 7
      %p105 = por %p103, %p104
      %p107 = scmp.ne.s32.totalorder %s92, %s106
      %p108 = scmp.eq.s32.totalorder %s28, 0
      %p109 = por %p107, %p108
      %s111 = sadd.s32 %s110, 1
      %p114 = scmp.eq.s32.totalorder %s22, 7
      %p115 = scmp.ne.s32.totalorder %s110, %s112
      %p116 = scmp.eq.s32.totalorder %s22, 0
      %p117 = por %p115, %p116
      %p118 = scmp.ne.s32.totalorder %s110, %s112
      %p119 = scmp.eq.s32.totalorder %s27, 7
      %p120 = por %p118, %p119
      %p121 = scmp.ne.s32.totalorder %s112, %s113
      %p122 = scmp.eq.s32.totalorder %s27, 0
      %p123 = por %p121, %p122
      %p124 = scmp.ne.s32.totalorder %s112, %s113
      %p125 = scmp.eq.s32.totalorder %s28, 7
      %p126 = por %p124, %p125
      %p128 = scmp.ne.s32.totalorder %s113, %s127
      %p129 = scmp.eq.s32.totalorder %s28, 0
      %p130 = por %p128, %p129
      %s132 = sadd.s32 %s131, 1
      %p135 = scmp.eq.s32.totalorder %s22, 7
      %p136 = scmp.ne.s32.totalorder %s131, %s133
      %p137 = scmp.eq.s32.totalorder %s22, 0
      %p138 = por %p136, %p137
      %p139 = scmp.ne.s32.totalorder %s131, %s133
      %p140 = scmp.eq.s32.totalorder %s27, 7
      %p141 = por %p139, %p140
      %p142 = scmp.ne.s32.totalorder %s133, %s134
      %p143 = scmp.eq.s32.totalorder %s27, 0
      %p144 = por %p142, %p143
      %p145 = scmp.ne.s32.totalorder %s133, %s134
      %p146 = scmp.eq.s32.totalorder %s28, 7
      %p147 = por %p145, %p146
      %p149 = scmp.ne.s32.totalorder %s134, %s148
      %p150 = scmp.eq.s32.totalorder %s28, 0
      %p151 = por %p149, %p150
      %s152 = ssub.s32 %s30, %s37
      %p153 = scmp.eq.s32.totalorder %s152, 0
      %s155 = sadd.s32 %s154, 1
      %s156 = scalar_select %p153, %s154, %s155
      %p159 = pneg %p153
      %p160 = scmp.eq.s32.totalorder %s22, 7
      %p161 = por %p159, %p160
      %p162 = scmp.ne.s32.totalorder %s154, %s157
      %p163 = scmp.eq.s32.totalorder %s22, 0
      %p164 = por %p162, %p163
      %p165 = scmp.ne.s32.totalorder %s154, %s157
      %p166 = scmp.eq.s32.totalorder %s27, 7
      %p167 = por %p165, %p166
      %p168 = scmp.ne.s32.totalorder %s157, %s158
      %p169 = scmp.eq.s32.totalorder %s27, 0
      %p170 = por %p168, %p169
      %p171 = scmp.ne.s32.totalorder %s157, %s158
      %p172 = scmp.eq.s32.totalorder %s28, 7
      %p173 = por %p171, %p172
      %p175 = scmp.ne.s32.totalorder %s158, %s174
      %p176 = scmp.eq.s32.totalorder %s28, 0
      %p177 = por %p175, %p176
      %s178 = ssub.s32 %s30, %s37
      %p179 = scmp.eq.s32.totalorder %s178, 0
      %s181 = sadd.s32 %s180, 1
      %s182 = scalar_select %p179, %s180, %s181
      %p185 = pneg %p179
      %p186 = scmp.eq.s32.totalorder %s22, 7
      %p187 = por %p185, %p186
      %p188 = scmp.ne.s32.totalorder %s180, %s183
      %p189 = scmp.eq.s32.totalorder %s22, 0
      %p190 = por %p188, %p189
      %p191 = scmp.ne.s32.totalorder %s180, %s183
      %p192 = scmp.eq.s32.totalorder %s27, 7
      %p193 = por %p191, %p192
      %p194 = scmp.ne.s32.totalorder %s183, %s184
      %p195 = scmp.eq.s32.totalorder %s27, 0
      %p196 = por %p194, %p195
      %p197 = scmp.ne.s32.totalorder %s183, %s184
      %p198 = scmp.eq.s32.totalorder %s28, 7
      %p199 = por %p197, %p198
      %p201 = scmp.ne.s32.totalorder %s184, %s200
      %p202 = scmp.eq.s32.totalorder %s28, 0
      %p203 = por %p201, %p202
      %s204 = ssub.s32 %s29, %s41
      %s205 = ssub.s32 %s30, %s37
      %s206 = sor.u32 %s204, %s205
      %p207 = scmp.eq.s32.totalorder %s206, 0
      %s209 = sadd.s32 %s208, 1
      %s210 = scalar_select %p207, %s208, %s209
      %p213 = pneg %p207
      %p214 = scmp.eq.s32.totalorder %s22, 7
      %p215 = por %p213, %p214
      %p216 = scmp.ne.s32.totalorder %s208, %s211
      %p217 = scmp.eq.s32.totalorder %s22, 0
      %p218 = por %p216, %p217
      %p219 = scmp.ne.s32.totalorder %s208, %s211
      %p220 = scmp.eq.s32.totalorder %s27, 7
      %p221 = por %p219, %p220
      %p222 = scmp.ne.s32.totalorder %s211, %s212
      %p223 = scmp.eq.s32.totalorder %s27, 0
      %p224 = por %p222, %p223
      %p225 = scmp.ne.s32.totalorder %s211, %s212
      %p226 = scmp.eq.s32.totalorder %s28, 7
      %p227 = por %p225, %p226
      %p229 = scmp.ne.s32.totalorder %s212, %s228
      %p230 = scmp.eq.s32.totalorder %s28, 0
      %p231 = por %p229, %p230
      %p232 = scmp.le.s32.totalorder 1, %s22
      %p233 = scmp.lt.s32.totalorder %s22, 9
      %p234 = pnand %p232, %p233
      %p235 = pneg %p234
      // Predicated region
      $region9: #{tpu_custom_call.1} parent=5 // pred_check
        _
      $region10: #{tpu_custom_call.1} parent=5 // pred_check_branch
        %237 = sbr.rel (%p234) target = $region12
      $region11: #{tpu_custom_call.1} parent=5 // pred_region
        %s238 = ssub.s32 %s22, 1
        // Predicated region
        $region13: #{tpu_custom_call.1} parent=11 // pred_check
          %p239 = pneg %p60
        $region14: #{tpu_custom_call.1} parent=11 // pred_check_branch
          %241 = sbr.rel (%p239) target = $region16
        $region15: #{tpu_custom_call.1} parent=11 // pred_region
          %s243 = ssub.s32 128, 128
          %244 = vsyncadd [#allocation4], %s243
          %s245 = smul.addr %s31, 128
          %s246 = scalar_lea.hbm %s0, %s245
          %s248 = sshll.u32 [#allocation3], 4
          %s249 = int_to_ptr.vmem [resolvable:$true] %s248
          %251 = dma.hbm_to_vmem [thread:$0]  %s246, 128, %s249, [#allocation4]
        $region16: #{tpu_custom_call.1} parent=11 // pred_fallthru
          _
        // Predicated region
        $region17: #{tpu_custom_call.1} parent=11 // pred_check
          %p252 = pneg %p81
        $region18: #{tpu_custom_call.1} parent=11 // pred_check_branch
          %254 = sbr.rel (%p252) target = $region20
        $region19: #{tpu_custom_call.1} parent=11 // pred_region
          %s256 = ssub.s32 1024, 1024
          %257 = vsyncadd [#allocation7], %s256
          %s258 = sshll.u32 [#allocation6], 4
          %s259 = int_to_ptr.vmem [resolvable:$true] %s258
          %264 = dma.hbm_to_vmem [thread:$0]  %s1, 1024, %s259, [#allocation7], 256, 256, 16
        $region20: #{tpu_custom_call.1} parent=11 // pred_fallthru
          _
        // Predicated region
        $region21: #{tpu_custom_call.1} parent=11 // pred_check
          %p265 = pneg %p102
        $region22: #{tpu_custom_call.1} parent=11 // pred_check_branch
          %267 = sbr.rel (%p265) target = $region24
        $region23: #{tpu_custom_call.1} parent=11 // pred_region
          %s269 = ssub.s32 64, 64
          %270 = vsyncadd [#allocation7], %s269
          %s272 = sshll.u32 [#allocation8], 4
          %s273 = int_to_ptr.vmem [resolvable:$true] %s272
          %275 = dma.hbm_to_vmem [thread:$0]  %s2, 64, %s273, [#allocation7]
        $region24: #{tpu_custom_call.1} parent=11 // pred_fallthru
          _
        // Predicated region
        $region25: #{tpu_custom_call.1} parent=11 // pred_check
          %p276 = pneg %p123
        $region26: #{tpu_custom_call.1} parent=11 // pred_check_branch
          %278 = sbr.rel (%p276) target = $region28
        $region27: #{tpu_custom_call.1} parent=11 // pred_region
          %s280 = ssub.s32 32768, 32768
          %281 = vsyncadd [#allocation10], %s280
          %s282 = sshll.u32 [#allocation9], 4
          %s283 = int_to_ptr.vmem [resolvable:$true] %s282
          %288 = dma.hbm_to_vmem [thread:$0]  %s3, 32768, %s283, [#allocation10], 512, 512, 32
        $region28: #{tpu_custom_call.1} parent=11 // pred_fallthru
          _
        // Predicated region
        $region29: #{tpu_custom_call.1} parent=11 // pred_check
          %p289 = pneg %p144
        $region30: #{tpu_custom_call.1} parent=11 // pred_check_branch
          %291 = sbr.rel (%p289) target = $region32
        $region31: #{tpu_custom_call.1} parent=11 // pred_region
          %s293 = ssub.s32 128, 128
          %294 = vsyncadd [#allocation10], %s293
          %s296 = sshll.u32 [#allocation11], 4
          %s297 = int_to_ptr.vmem [resolvable:$true] %s296
          %299 = dma.hbm_to_vmem [thread:$0]  %s4, 128, %s297, [#allocation10]
        $region32: #{tpu_custom_call.1} parent=11 // pred_fallthru
          _
      $region12: #{tpu_custom_call.1} parent=5 // pred_fallthru
        _
      %p300 = scmp.lt.s32.totalorder %s22, 8
      // Predicated region
      $region33: #{tpu_custom_call.1} parent=5 // pred_check
        %p301 = pneg %p300
      $region34: #{tpu_custom_call.1} parent=5 // pred_check_branch
        %303 = sbr.rel (%p301) target = $region36
      $region35: #{tpu_custom_call.1} parent=5 // pred_region
        // Predicated region
        $region37: #{tpu_custom_call.1} parent=35 // pred_check
          %p304 = pneg %p164
        $region38: #{tpu_custom_call.1} parent=35 // pred_check_branch
          %306 = sbr.rel (%p304) target = $region40
        $region39: #{tpu_custom_call.1} parent=35 // pred_region
          %s307 = sand.u32 %s22, 1
          %s308 = scalar_lea.sflag [#allocation13], %s307
          %s309 = sand.u32 %s154, 1
          %s310 = smul.addr %s309, 10752
          %s311 = scalar_lea.vmem [#allocation12], %s310
          %s312 = smul.u32 21, %s30
          %s314 = ssub.s32 172032, 172032
          %315 = vsyncadd %s308, %s314
          %s316 = smul.addr %s312, 64
          %s317 = scalar_lea.hbm %s5, %s316
          %s318 = sshll.u32 %s311, 4
          %s319 = int_to_ptr.vmem [resolvable:$true] %s318
          %324 = dma.hbm_to_vmem [thread:$0]  %s317, 172032, %s319, %s308, 10752, 1344, 84
        $region40: #{tpu_custom_call.1} parent=35 // pred_fallthru
          _
        // Predicated region
        $region41: #{tpu_custom_call.1} parent=35 // pred_check
          %p325 = pneg %p190
        $region42: #{tpu_custom_call.1} parent=35 // pred_check_branch
          %327 = sbr.rel (%p325) target = $region44
        $region43: #{tpu_custom_call.1} parent=35 // pred_region
          %s328 = sand.u32 %s22, 1
          %s329 = scalar_lea.sflag [#allocation13], %s328
          %s330 = sand.u32 %s180, 1
          %s331 = smul.addr %s330, 21
          %s332 = scalar_lea.vmem [#allocation14], %s331
          %s333 = smul.u32 21, %s30
          %s335 = ssub.s32 336, 336
          %336 = vsyncadd %s329, %s335
          %s337 = smul.addr %s333, 16
          %s338 = scalar_lea.hbm %s6, %s337
          %s340 = sshll.u32 %s332, 4
          %s341 = int_to_ptr.vmem [resolvable:$true] %s340
          %343 = dma.hbm_to_vmem [thread:$0]  %s338, 336, %s341, %s329
        $region44: #{tpu_custom_call.1} parent=35 // pred_fallthru
          _
      $region36: #{tpu_custom_call.1} parent=5 // pred_fallthru
        _
      %p344 = scmp.le.s32.totalorder 1, %s22
      %p345 = scmp.lt.s32.totalorder %s22, 9
      %p346 = pnand %p344, %p345
      %p347 = pneg %p346
      // Predicated region
      $region45: #{tpu_custom_call.1} parent=5 // pred_check
        _
      $region46: #{tpu_custom_call.1} parent=5 // pred_check_branch
        %349 = sbr.rel (%p346) target = $region48
      $region47: #{tpu_custom_call.1} parent=5 // pred_region
        %s350 = ssub.s32 %s22, 1
        // Predicated region
        $region49: #{tpu_custom_call.1} parent=47 // pred_check
          %p351 = pneg %p60
        $region50: #{tpu_custom_call.1} parent=47 // pred_check_branch
          %353 = sbr.rel (%p351) target = $region52
        $region51: #{tpu_custom_call.1} parent=47 // pred_region
          %354 = dma.done [#allocation4], 128
        $region52: #{tpu_custom_call.1} parent=47 // pred_fallthru
          _
        // Predicated region
        $region53: #{tpu_custom_call.1} parent=47 // pred_check
          %p355 = pneg %p81
        $region54: #{tpu_custom_call.1} parent=47 // pred_check_branch
          %357 = sbr.rel (%p355) target = $region56
        $region55: #{tpu_custom_call.1} parent=47 // pred_region
          %358 = dma.done [#allocation7], 1024
        $region56: #{tpu_custom_call.1} parent=47 // pred_fallthru
          _
        // Predicated region
        $region57: #{tpu_custom_call.1} parent=47 // pred_check
          %p359 = pneg %p102
        $region58: #{tpu_custom_call.1} parent=47 // pred_check_branch
          %361 = sbr.rel (%p359) target = $region60
        $region59: #{tpu_custom_call.1} parent=47 // pred_region
          %362 = dma.done [#allocation7], 64
        $region60: #{tpu_custom_call.1} parent=47 // pred_fallthru
          _
        // Predicated region
        $region61: #{tpu_custom_call.1} parent=47 // pred_check
          %p363 = pneg %p123
        $region62: #{tpu_custom_call.1} parent=47 // pred_check_branch
          %365 = sbr.rel (%p363) target = $region64
        $region63: #{tpu_custom_call.1} parent=47 // pred_region
          %366 = dma.done [#allocation10], 32768
        $region64: #{tpu_custom_call.1} parent=47 // pred_fallthru
          _
        // Predicated region
        $region65: #{tpu_custom_call.1} parent=47 // pred_check
          %p367 = pneg %p144
        $region66: #{tpu_custom_call.1} parent=47 // pred_check_branch
          %369 = sbr.rel (%p367) target = $region68
        $region67: #{tpu_custom_call.1} parent=47 // pred_region
          %370 = dma.done [#allocation10], 128
        $region68: #{tpu_custom_call.1} parent=47 // pred_fallthru
          _
        %s371 = sand.u32 %s27, 1
        %s372 = scalar_lea.sflag [#allocation13], %s371
        %s373 = sand.u32 %s157, 1
        %s374 = smul.addr %s373, 10752
        %s375 = scalar_lea.vmem [#allocation12], %s374
        // Predicated region
        $region69: #{tpu_custom_call.1} parent=47 // pred_check
          %p376 = pneg %p170
        $region70: #{tpu_custom_call.1} parent=47 // pred_check_branch
          %378 = sbr.rel (%p376) target = $region72
        $region71: #{tpu_custom_call.1} parent=47 // pred_region
          %379 = dma.done %s372, 172032
        $region72: #{tpu_custom_call.1} parent=47 // pred_fallthru
          _
        %s380 = sand.u32 %s27, 1
        %s381 = scalar_lea.sflag [#allocation13], %s380
        %s382 = sand.u32 %s183, 1
        %s383 = smul.addr %s382, 21
        %s384 = scalar_lea.vmem [#allocation14], %s383
        // Predicated region
        $region73: #{tpu_custom_call.1} parent=47 // pred_check
          %p385 = pneg %p196
        $region74: #{tpu_custom_call.1} parent=47 // pred_check_branch
          %387 = sbr.rel (%p385) target = $region76
        $region75: #{tpu_custom_call.1} parent=47 // pred_region
          %388 = dma.done %s381, 336
        $region76: #{tpu_custom_call.1} parent=47 // pred_fallthru
          _
        %p389 = pneg %p60
        %p390 = pneg %p57
        %p391 = pneg %p81
        %p392 = pneg %p78
        %p393 = pneg %p102
        %p394 = pneg %p99
        %p395 = pneg %p123
        %p396 = pneg %p120
        %p397 = pneg %p144
        %p398 = pneg %p141
        %s399 = sand.u32 %s27, 1
        %s400 = scalar_lea.sflag [#allocation13], %s399
        %s401 = sand.u32 %s157, 1
        %s402 = smul.addr %s401, 10752
        %s403 = scalar_lea.vmem [#allocation12], %s402
        %p404 = pneg %p170
        %p405 = pneg %p167
        %s406 = sand.u32 %s27, 1
        %s407 = scalar_lea.sflag [#allocation13], %s406
        %s408 = sand.u32 %s183, 1
        %s409 = smul.addr %s408, 21
        %s410 = scalar_lea.vmem [#allocation14], %s409
        %p411 = pneg %p196
        %p412 = pneg %p193
        %p413 = pneg %p224
        %p414 = pneg %p221
        %s415 = sand.u32 %s211, 1
        %s416 = scalar_lea.sflag [#allocation5], %s415
        %s417 = sand.u32 %s211, 1
        %s418 = smul.addr %s417, 168
        %s419 = scalar_lea.vmem [#allocation15], %s418
        %s420 = smul.u32 21, %s32
        %s421 = smul.u32 21, %s32
        %s422 = smul.u32 21, %s32
        %p424 = scmp.eq.s32.totalorder %s32, 0
        // Predicated region
        $region77: #{tpu_custom_call.1} parent=47 // pred_check
          %p425 = pneg %p424
        $region78: #{tpu_custom_call.1} parent=47 // pred_check_branch
          %427 = sbr.rel (%p425) target = $region80
        $region79: #{tpu_custom_call.1} parent=47 // pred_region
          %v428 = vld [vmem:[#allocation3] sm:$0xff]
          %v429 = vpack.c.bf16 %v428, %v428
          %v430 = vld [vmem:[#allocation6] sm:$0xff]
          %v431 = vld [vmem:[#allocation6 + $0x8] sm:$0xff]
          %v432 = vld [vmem:[#allocation6 + $0x10] sm:$0xff]
          %v433 = vld [vmem:[#allocation6 + $0x18] sm:$0xff]
          %v434 = vld [vmem:[#allocation6 + $0x20] sm:$0xff]
          %v435 = vld [vmem:[#allocation6 + $0x28] sm:$0xff]
          %v436 = vld [vmem:[#allocation6 + $0x30] sm:$0xff]
          %v437 = vld [vmem:[#allocation6 + $0x38] sm:$0xff]
          %v438 = vld [vmem:[#allocation8] sm:$0xf]
          %v440 = vlaneseq
          %v441 = vshrl.u32 %v440, 7
          %v442 = vsub.s32 0, %v441
          %v443 = vrot.slane %v438, %v442
          %v444 = vlaneseq
          %v445 = vshrl.u32 %v444, 7
          %v446 = vsub.s32 1, %v445
          %v447 = vrot.slane %v438, %v446
          %v448 = vlaneseq
          %v449 = vshrl.u32 %v448, 7
          %v450 = vsub.s32 2, %v449
          %v451 = vrot.slane %v438, %v450
          %v452 = vlaneseq
          %v453 = vshrl.u32 %v452, 7
          %v454 = vsub.s32 3, %v453
          %v455 = vrot.slane %v438, %v454
          %v468 = vunpack.c.l.b16 %v430
          %v469 = vunpack.c.h.b16 %v430
          %v470 = vunpack.c.l.b16 %v431
          %v471 = vunpack.c.h.b16 %v431
          %v472 = vunpack.c.l.b16 %v432
          %v473 = vunpack.c.h.b16 %v432
          %v474 = vunpack.c.l.b16 %v433
          %v475 = vunpack.c.h.b16 %v433
          %v476 = vunpack.c.l.b16 %v434
          %v477 = vunpack.c.h.b16 %v434
          %v478 = vunpack.c.l.b16 %v435
          %v479 = vunpack.c.h.b16 %v435
          %v480 = vunpack.c.l.b16 %v436
          %v481 = vunpack.c.h.b16 %v436
          %v482 = vunpack.c.l.b16 %v437
          %v483 = vunpack.c.h.b16 %v437
          %v484 = vpack.c.b16 %v472, %v468
          %v485 = vpack.c.b16 %v473, %v469
          %v486 = vpack.c.b16 %v474, %v470
          %v487 = vpack.c.b16 %v475, %v471
          %v488 = vpack.c.b16 %v480, %v476
          %v489 = vpack.c.b16 %v481, %v477
          %v490 = vpack.c.b16 %v482, %v478
          %v491 = vpack.c.b16 %v483, %v479
          %vm500 = vcmask 261120
          %v502 = vsel %vm500, %v429, 0
          %504 = vmatprep.subr.bf16.mxu0 0
          %505 = vmatpush1.bf16.msra.mxu0 0
          %506 = vmatprep.subr.bf16.mxu0 0
          %507 = vmatpush1.bf16.msra.mxu0 0
          %508 = vmatprep.subr.bf16.mxu0 0
          %509 = vmatpush1.bf16.msra.mxu0 0
          %510 = vmatprep.subr.bf16.mxu0 0
          %511 = vmatpush1.bf16.msra.mxu0 0
          %512 = vmatprep.subr.bf16.mxu0 0
          %513 = vmatpush1.bf16.msra.mxu0 0
          %514 = vmatprep.subr.bf16.mxu0 0
          %515 = vmatpush1.bf16.msra.mxu0 0
          %516 = vmatprep.subr.bf16.mxu0 %v489
          %517 = vmatpush1.bf16.msra.mxu0 %v488
          %518 = vmatprep.subr.bf16.mxu0 %v485
          %519 = vmatpush1.bf16.msra.mxu0 %v484
          %520 = vmatprep.subr.bf16.mxu0 0
          %521 = vmatpush2.bf16.msra.mxu0 0
          %522 = vmatprep.subr.bf16.mxu0 0
          %523 = vmatpush2.bf16.msra.mxu0 0
          %524 = vmatprep.subr.bf16.mxu0 0
          %525 = vmatpush2.bf16.msra.mxu0 0
          %526 = vmatprep.subr.bf16.mxu0 0
          %527 = vmatpush2.bf16.msra.mxu0 0
          %528 = vmatprep.subr.bf16.mxu0 0
          %529 = vmatpush2.bf16.msra.mxu0 0
          %530 = vmatprep.subr.bf16.mxu0 0
          %531 = vmatpush2.bf16.msra.mxu0 0
          %532 = vmatprep.subr.bf16.mxu0 0
          %533 = vmatpush2.bf16.msra.mxu0 0
          %534 = vmatprep.subr.bf16.mxu0 0
          %535 = vmatpush2.bf16.msra.mxu0 0
          %536 = vmatprep.mubr.bf16.mxu0 0
          %537 = vmatmul.mubr.bf16.gmra.mxu0 %v502
          %v538 = vpop.f32.mrf.mxu0
          %v539 = vadd.f32 %v443, %v538
          %v540 = vpop.f32.mrf.mxu0
          %v541 = vadd.f32 %v447, %v540
          %v542 = vpop.f32.mrf.mxu0
          %v543 = vpop.f32.mrf.mxu0
          %544 = vdwg.mxu0
          %545 = vmatprep.subr.bf16.mxu0 0
          %546 = vmatpush1.bf16.msra.mxu0 0
          %547 = vmatprep.subr.bf16.mxu0 0
          %548 = vmatpush1.bf16.msra.mxu0 0
          %549 = vmatprep.subr.bf16.mxu0 0
          %550 = vmatpush1.bf16.msra.mxu0 0
          %551 = vmatprep.subr.bf16.mxu0 0
          %552 = vmatpush1.bf16.msra.mxu0 0
          %553 = vmatprep.subr.bf16.mxu0 0
          %554 = vmatpush1.bf16.msra.mxu0 0
          %555 = vmatprep.subr.bf16.mxu0 0
          %556 = vmatpush1.bf16.msra.mxu0 0
          %557 = vmatprep.subr.bf16.mxu0 %v491
          %558 = vmatpush1.bf16.msra.mxu0 %v490
          %559 = vmatprep.subr.bf16.mxu0 %v487
          %560 = vmatpush1.bf16.msra.mxu0 %v486
          %561 = vmatprep.subr.bf16.mxu0 0
          %562 = vmatpush2.bf16.msra.mxu0 0
          %563 = vmatprep.subr.bf16.mxu0 0
          %564 = vmatpush2.bf16.msra.mxu0 0
          %565 = vmatprep.subr.bf16.mxu0 0
          %566 = vmatpush2.bf16.msra.mxu0 0
          %567 = vmatprep.subr.bf16.mxu0 0
          %568 = vmatpush2.bf16.msra.mxu0 0
          %569 = vmatprep.subr.bf16.mxu0 0
          %570 = vmatpush2.bf16.msra.mxu0 0
          %571 = vmatprep.subr.bf16.mxu0 0
          %572 = vmatpush2.bf16.msra.mxu0 0
          %573 = vmatprep.subr.bf16.mxu0 0
          %574 = vmatpush2.bf16.msra.mxu0 0
          %575 = vmatprep.subr.bf16.mxu0 0
          %576 = vmatpush2.bf16.msra.mxu0 0
          %577 = vmatprep.mubr.bf16.mxu0 0
          %578 = vmatmul.mubr.bf16.gmra.mxu0 %v502
          %v579 = vpop.f32.mrf.mxu0
          %v580 = vadd.f32 %v451, %v579
          %v581 = vpop.f32.mrf.mxu0
          %v582 = vadd.f32 %v455, %v581
          %v583 = vpop.f32.mrf.mxu0
          %v584 = vpop.f32.mrf.mxu0
          %585 = vdwg.mxu0
          %v586 = vmax.f32 %v539, 0.0
          %v587 = vmax.f32 %v541, 0.0
          %v588 = vmax.f32 %v580, 0.0
          %v589 = vmax.f32 %v582, 0.0
          %v590 = vpack.c.bf16 %v586, %v586
          %v591 = vpack.c.bf16 %v587, %v587
          %v592 = vpack.c.bf16 %v588, %v588
          %v593 = vpack.c.bf16 %v589, %v589
          %v594 = vld [vmem:[#allocation9] sm:$0xff]
          %v595 = vld [vmem:[#allocation9 + $0x8] sm:$0xff]
          %v596 = vld [vmem:[#allocation9 + $0x10] sm:$0xff]
          %v597 = vld [vmem:[#allocation9 + $0x18] sm:$0xff]
          %v598 = vld [vmem:[#allocation9 + $0x20] sm:$0xff]
          %v599 = vld [vmem:[#allocation9 + $0x28] sm:$0xff]
          %v600 = vld [vmem:[#allocation9 + $0x30] sm:$0xff]
          %v601 = vld [vmem:[#allocation9 + $0x38] sm:$0xff]
          %v602 = vld [vmem:[#allocation9 + $0x40] sm:$0xff]
          %v603 = vld [vmem:[#allocation9 + $0x48] sm:$0xff]
          %v604 = vld [vmem:[#allocation9 + $0x50] sm:$0xff]
          %v605 = vld [vmem:[#allocation9 + $0x58] sm:$0xff]
          %v606 = vld [vmem:[#allocation9 + $0x60] sm:$0xff]
          %v607 = vld [vmem:[#allocation9 + $0x68] sm:$0xff]
          %v608 = vld [vmem:[#allocation9 + $0x70] sm:$0xff]
          %v609 = vld [vmem:[#allocation9 + $0x78] sm:$0xff]
          %v610 = vld [vmem:[#allocation9 + $0x80] sm:$0xff]
          %v611 = vld [vmem:[#allocation9 + $0x88] sm:$0xff]
          %v612 = vld [vmem:[#allocation9 + $0x90] sm:$0xff]
          %v613 = vld [vmem:[#allocation9 + $0x98] sm:$0xff]
          %v614 = vld [vmem:[#allocation9 + $0xa0] sm:$0xff]
          %v615 = vld [vmem:[#allocation9 + $0xa8] sm:$0xff]
          %v616 = vld [vmem:[#allocation9 + $0xb0] sm:$0xff]
          %v617 = vld [vmem:[#allocation9 + $0xb8] sm:$0xff]
          %v618 = vld [vmem:[#allocation9 + $0xc0] sm:$0xff]
          %v619 = vld [vmem:[#allocation9 + $0xc8] sm:$0xff]
          %v620 = vld [vmem:[#allocation9 + $0xd0] sm:$0xff]
          %v621 = vld [vmem:[#allocation9 + $0xd8] sm:$0xff]
          %v622 = vld [vmem:[#allocation9 + $0xe0] sm:$0xff]
          %v623 = vld [vmem:[#allocation9 + $0xe8] sm:$0xff]
          %v624 = vld [vmem:[#allocation9 + $0xf0] sm:$0xff]
          %v625 = vld [vmem:[#allocation9 + $0xf8] sm:$0xff]
          %v626 = vld [vmem:[#allocation9 + $0x100] sm:$0xff]
          %v627 = vld [vmem:[#allocation9 + $0x108] sm:$0xff]
          %v628 = vld [vmem:[#allocation9 + $0x110] sm:$0xff]
          %v629 = vld [vmem:[#allocation9 + $0x118] sm:$0xff]
          %v630 = vld [vmem:[#allocation9 + $0x120] sm:$0xff]
          %v631 = vld [vmem:[#allocation9 + $0x128] sm:$0xff]
          %v632 = vld [vmem:[#allocation9 + $0x130] sm:$0xff]
          %v633 = vld [vmem:[#allocation9 + $0x138] sm:$0xff]
          %v634 = vld [vmem:[#allocation9 + $0x140] sm:$0xff]
          %v635 = vld [vmem:[#allocation9 + $0x148] sm:$0xff]
          %v636 = vld [vmem:[#allocation9 + $0x150] sm:$0xff]
          %v637 = vld [vmem:[#allocation9 + $0x158] sm:$0xff]
          %v638 = vld [vmem:[#allocation9 + $0x160] sm:$0xff]
          %v639 = vld [vmem:[#allocation9 + $0x168] sm:$0xff]
          %v640 = vld [vmem:[#allocation9 + $0x170] sm:$0xff]
          %v641 = vld [vmem:[#allocation9 + $0x178] sm:$0xff]
          %v642 = vld [vmem:[#allocation9 + $0x180] sm:$0xff]
          %v643 = vld [vmem:[#allocation9 + $0x188] sm:$0xff]
          %v644 = vld [vmem:[#allocation9 + $0x190] sm:$0xff]
          %v645 = vld [vmem:[#allocation9 + $0x198] sm:$0xff]
          %v646 = vld [vmem:[#allocation9 + $0x1a0] sm:$0xff]
          %v647 = vld [vmem:[#allocation9 + $0x1a8] sm:$0xff]
          %v648 = vld [vmem:[#allocation9 + $0x1b0] sm:$0xff]
          %v649 = vld [vmem:[#allocation9 + $0x1b8] sm:$0xff]
          %v650 = vld [vmem:[#allocation9 + $0x1c0] sm:$0xff]
          %v651 = vld [vmem:[#allocation9 + $0x1c8] sm:$0xff]
          %v652 = vld [vmem:[#allocation9 + $0x1d0] sm:$0xff]
          %v653 = vld [vmem:[#allocation9 + $0x1d8] sm:$0xff]
          %v654 = vld [vmem:[#allocation9 + $0x1e0] sm:$0xff]
          %v655 = vld [vmem:[#allocation9 + $0x1e8] sm:$0xff]
          %v656 = vld [vmem:[#allocation9 + $0x1f0] sm:$0xff]
          %v657 = vld [vmem:[#allocation9 + $0x1f8] sm:$0xff]
          %v658 = vld [vmem:[#allocation9 + $0x200] sm:$0xff]
          %v659 = vld [vmem:[#allocation9 + $0x208] sm:$0xff]
          %v660 = vld [vmem:[#allocation9 + $0x210] sm:$0xff]
          %v661 = vld [vmem:[#allocation9 + $0x218] sm:$0xff]
          %v662 = vld [vmem:[#allocation9 + $0x220] sm:$0xff]
          %v663 = vld [vmem:[#allocation9 + $0x228] sm:$0xff]
          %v664 = vld [vmem:[#allocation9 + $0x230] sm:$0xff]
          %v665 = vld [vmem:[#allocation9 + $0x238] sm:$0xff]
          %v666 = vld [vmem:[#allocation9 + $0x240] sm:$0xff]
          %v667 = vld [vmem:[#allocation9 + $0x248] sm:$0xff]
          %v668 = vld [vmem:[#allocation9 + $0x250] sm:$0xff]
          %v669 = vld [vmem:[#allocation9 + $0x258] sm:$0xff]
          %v670 = vld [vmem:[#allocation9 + $0x260] sm:$0xff]
          %v671 = vld [vmem:[#allocation9 + $0x268] sm:$0xff]
          %v672 = vld [vmem:[#allocation9 + $0x270] sm:$0xff]
          %v673 = vld [vmem:[#allocation9 + $0x278] sm:$0xff]
          %v674 = vld [vmem:[#allocation9 + $0x280] sm:$0xff]
          %v675 = vld [vmem:[#allocation9 + $0x288] sm:$0xff]
          %v676 = vld [vmem:[#allocation9 + $0x290] sm:$0xff]
          %v677 = vld [vmem:[#allocation9 + $0x298] sm:$0xff]
          %v678 = vld [vmem:[#allocation9 + $0x2a0] sm:$0xff]
          %v679 = vld [vmem:[#allocation9 + $0x2a8] sm:$0xff]
          %v680 = vld [vmem:[#allocation9 + $0x2b0] sm:$0xff]
          %v681 = vld [vmem:[#allocation9 + $0x2b8] sm:$0xff]
          %v682 = vld [vmem:[#allocation9 + $0x2c0] sm:$0xff]
          %v683 = vld [vmem:[#allocation9 + $0x2c8] sm:$0xff]
          %v684 = vld [vmem:[#allocation9 + $0x2d0] sm:$0xff]
          %v685 = vld [vmem:[#allocation9 + $0x2d8] sm:$0xff]
          %v686 = vld [vmem:[#allocation9 + $0x2e0] sm:$0xff]
          %v687 = vld [vmem:[#allocation9 + $0x2e8] sm:$0xff]
          %v688 = vld [vmem:[#allocation9 + $0x2f0] sm:$0xff]
          %v689 = vld [vmem:[#allocation9 + $0x2f8] sm:$0xff]
          %v690 = vld [vmem:[#allocation9 + $0x300] sm:$0xff]
          %v691 = vld [vmem:[#allocation9 + $0x308] sm:$0xff]
          %v692 = vld [vmem:[#allocation9 + $0x310] sm:$0xff]
          %v693 = vld [vmem:[#allocation9 + $0x318] sm:$0xff]
          %v694 = vld [vmem:[#allocation9 + $0x320] sm:$0xff]
          %v695 = vld [vmem:[#allocation9 + $0x328] sm:$0xff]
          %v696 = vld [vmem:[#allocation9 + $0x330] sm:$0xff]
          %v697 = vld [vmem:[#allocation9 + $0x338] sm:$0xff]
          %v698 = vld [vmem:[#allocation9 + $0x340] sm:$0xff]
          %v699 = vld [vmem:[#allocation9 + $0x348] sm:$0xff]
          %v700 = vld [vmem:[#allocation9 + $0x350] sm:$0xff]
          %v701 = vld [vmem:[#allocation9 + $0x358] sm:$0xff]
          %v702 = vld [vmem:[#allocation9 + $0x360] sm:$0xff]
          %v703 = vld [vmem:[#allocation9 + $0x368] sm:$0xff]
          %v704 = vld [vmem:[#allocation9 + $0x370] sm:$0xff]
          %v705 = vld [vmem:[#allocation9 + $0x378] sm:$0xff]
          %v706 = vld [vmem:[#allocation9 + $0x380] sm:$0xff]
          %v707 = vld [vmem:[#allocation9 + $0x388] sm:$0xff]
          %v708 = vld [vmem:[#allocation9 + $0x390] sm:$0xff]
          %v709 = vld [vmem:[#allocation9 + $0x398] sm:$0xff]
          %v710 = vld [vmem:[#allocation9 + $0x3a0] sm:$0xff]
          %v711 = vld [vmem:[#allocation9 + $0x3a8] sm:$0xff]
          %v712 = vld [vmem:[#allocation9 + $0x3b0] sm:$0xff]
          %v713 = vld [vmem:[#allocation9 + $0x3b8] sm:$0xff]
          %v714 = vld [vmem:[#allocation9 + $0x3c0] sm:$0xff]
          %v715 = vld [vmem:[#allocation9 + $0x3c8] sm:$0xff]
          %v716 = vld [vmem:[#allocation9 + $0x3d0] sm:$0xff]
          %v717 = vld [vmem:[#allocation9 + $0x3d8] sm:$0xff]
          %v718 = vld [vmem:[#allocation9 + $0x3e0] sm:$0xff]
          %v719 = vld [vmem:[#allocation9 + $0x3e8] sm:$0xff]
          %v720 = vld [vmem:[#allocation9 + $0x3f0] sm:$0xff]
          %v721 = vld [vmem:[#allocation9 + $0x3f8] sm:$0xff]
          %v722 = vld [vmem:[#allocation9 + $0x400] sm:$0xff]
          %v723 = vld [vmem:[#allocation9 + $0x408] sm:$0xff]
          %v724 = vld [vmem:[#allocation9 + $0x410] sm:$0xff]
          %v725 = vld [vmem:[#allocation9 + $0x418] sm:$0xff]
          %v726 = vld [vmem:[#allocation9 + $0x420] sm:$0xff]
          %v727 = vld [vmem:[#allocation9 + $0x428] sm:$0xff]
          %v728 = vld [vmem:[#allocation9 + $0x430] sm:$0xff]
          %v729 = vld [vmem:[#allocation9 + $0x438] sm:$0xff]
          %v730 = vld [vmem:[#allocation9 + $0x440] sm:$0xff]
          %v731 = vld [vmem:[#allocation9 + $0x448] sm:$0xff]
          %v732 = vld [vmem:[#allocation9 + $0x450] sm:$0xff]
          %v733 = vld [vmem:[#allocation9 + $0x458] sm:$0xff]
          %v734 = vld [vmem:[#allocation9 + $0x460] sm:$0xff]
          %v735 = vld [vmem:[#allocation9 + $0x468] sm:$0xff]
          %v736 = vld [vmem:[#allocation9 + $0x470] sm:$0xff]
          %v737 = vld [vmem:[#allocation9 + $0x478] sm:$0xff]
          %v738 = vld [vmem:[#allocation9 + $0x480] sm:$0xff]
          %v739 = vld [vmem:[#allocation9 + $0x488] sm:$0xff]
          %v740 = vld [vmem:[#allocation9 + $0x490] sm:$0xff]
          %v741 = vld [vmem:[#allocation9 + $0x498] sm:$0xff]
          %v742 = vld [vmem:[#allocation9 + $0x4a0] sm:$0xff]
          %v743 = vld [vmem:[#allocation9 + $0x4a8] sm:$0xff]
          %v744 = vld [vmem:[#allocation9 + $0x4b0] sm:$0xff]
          %v745 = vld [vmem:[#allocation9 + $0x4b8] sm:$0xff]
          %v746 = vld [vmem:[#allocation9 + $0x4c0] sm:$0xff]
          %v747 = vld [vmem:[#allocation9 + $0x4c8] sm:$0xff]
          %v748 = vld [vmem:[#allocation9 + $0x4d0] sm:$0xff]
          %v749 = vld [vmem:[#allocation9 + $0x4d8] sm:$0xff]
          %v750 = vld [vmem:[#allocation9 + $0x4e0] sm:$0xff]
          %v751 = vld [vmem:[#allocation9 + $0x4e8] sm:$0xff]
          %v752 = vld [vmem:[#allocation9 + $0x4f0] sm:$0xff]
          %v753 = vld [vmem:[#allocation9 + $0x4f8] sm:$0xff]
          %v754 = vld [vmem:[#allocation9 + $0x500] sm:$0xff]
          %v755 = vld [vmem:[#allocation9 + $0x508] sm:$0xff]
          %v756 = vld [vmem:[#allocation9 + $0x510] sm:$0xff]
          %v757 = vld [vmem:[#allocation9 + $0x518] sm:$0xff]
          %v758 = vld [vmem:[#allocation9 + $0x520] sm:$0xff]
          %v759 = vld [vmem:[#allocation9 + $0x528] sm:$0xff]
          %v760 = vld [vmem:[#allocation9 + $0x530] sm:$0xff]
          %v761 = vld [vmem:[#allocation9 + $0x538] sm:$0xff]
          %v762 = vld [vmem:[#allocation9 + $0x540] sm:$0xff]
          %v763 = vld [vmem:[#allocation9 + $0x548] sm:$0xff]
          %v764 = vld [vmem:[#allocation9 + $0x550] sm:$0xff]
          %v765 = vld [vmem:[#allocation9 + $0x558] sm:$0xff]
          %v766 = vld [vmem:[#allocation9 + $0x560] sm:$0xff]
          %v767 = vld [vmem:[#allocation9 + $0x568] sm:$0xff]
          %v768 = vld [vmem:[#allocation9 + $0x570] sm:$0xff]
          %v769 = vld [vmem:[#allocation9 + $0x578] sm:$0xff]
          %v770 = vld [vmem:[#allocation9 + $0x580] sm:$0xff]
          %v771 = vld [vmem:[#allocation9 + $0x588] sm:$0xff]
          %v772 = vld [vmem:[#allocation9 + $0x590] sm:$0xff]
          %v773 = vld [vmem:[#allocation9 + $0x598] sm:$0xff]
          %v774 = vld [vmem:[#allocation9 + $0x5a0] sm:$0xff]
          %v775 = vld [vmem:[#allocation9 + $0x5a8] sm:$0xff]
          %v776 = vld [vmem:[#allocation9 + $0x5b0] sm:$0xff]
          %v777 = vld [vmem:[#allocation9 + $0x5b8] sm:$0xff]
          %v778 = vld [vmem:[#allocation9 + $0x5c0] sm:$0xff]
          %v779 = vld [vmem:[#allocation9 + $0x5c8] sm:$0xff]
          %v780 = vld [vmem:[#allocation9 + $0x5d0] sm:$0xff]
          %v781 = vld [vmem:[#allocation9 + $0x5d8] sm:$0xff]
          %v782 = vld [vmem:[#allocation9 + $0x5e0] sm:$0xff]
          %v783 = vld [vmem:[#allocation9 + $0x5e8] sm:$0xff]
          %v784 = vld [vmem:[#allocation9 + $0x5f0] sm:$0xff]
          %v785 = vld [vmem:[#allocation9 + $0x5f8] sm:$0xff]
          %v786 = vld [vmem:[#allocation9 + $0x600] sm:$0xff]
          %v787 = vld [vmem:[#allocation9 + $0x608] sm:$0xff]
          %v788 = vld [vmem:[#allocation9 + $0x610] sm:$0xff]
          %v789 = vld [vmem:[#allocation9 + $0x618] sm:$0xff]
          %v790 = vld [vmem:[#allocation9 + $0x620] sm:$0xff]
          %v791 = vld [vmem:[#allocation9 + $0x628] sm:$0xff]
          %v792 = vld [vmem:[#allocation9 + $0x630] sm:$0xff]
          %v793 = vld [vmem:[#allocation9 + $0x638] sm:$0xff]
          %v794 = vld [vmem:[#allocation9 + $0x640] sm:$0xff]
          %v795 = vld [vmem:[#allocation9 + $0x648] sm:$0xff]
          %v796 = vld [vmem:[#allocation9 + $0x650] sm:$0xff]
          %v797 = vld [vmem:[#allocation9 + $0x658] sm:$0xff]
          %v798 = vld [vmem:[#allocation9 + $0x660] sm:$0xff]
          %v799 = vld [vmem:[#allocation9 + $0x668] sm:$0xff]
          %v800 = vld [vmem:[#allocation9 + $0x670] sm:$0xff]
          %v801 = vld [vmem:[#allocation9 + $0x678] sm:$0xff]
          %v802 = vld [vmem:[#allocation9 + $0x680] sm:$0xff]
          %v803 = vld [vmem:[#allocation9 + $0x688] sm:$0xff]
          %v804 = vld [vmem:[#allocation9 + $0x690] sm:$0xff]
          %v805 = vld [vmem:[#allocation9 + $0x698] sm:$0xff]
          %v806 = vld [vmem:[#allocation9 + $0x6a0] sm:$0xff]
          %v807 = vld [vmem:[#allocation9 + $0x6a8] sm:$0xff]
          %v808 = vld [vmem:[#allocation9 + $0x6b0] sm:$0xff]
          %v809 = vld [vmem:[#allocation9 + $0x6b8] sm:$0xff]
          %v810 = vld [vmem:[#allocation9 + $0x6c0] sm:$0xff]
          %v811 = vld [vmem:[#allocation9 + $0x6c8] sm:$0xff]
          %v812 = vld [vmem:[#allocation9 + $0x6d0] sm:$0xff]
          %v813 = vld [vmem:[#allocation9 + $0x6d8] sm:$0xff]
          %v814 = vld [vmem:[#allocation9 + $0x6e0] sm:$0xff]
          %v815 = vld [vmem:[#allocation9 + $0x6e8] sm:$0xff]
          %v816 = vld [vmem:[#allocation9 + $0x6f0] sm:$0xff]
          %v817 = vld [vmem:[#allocation9 + $0x6f8] sm:$0xff]
          %v818 = vld [vmem:[#allocation9 + $0x700] sm:$0xff]
          %v819 = vld [vmem:[#allocation9 + $0x708] sm:$0xff]
          %v820 = vld [vmem:[#allocation9 + $0x710] sm:$0xff]
          %v821 = vld [vmem:[#allocation9 + $0x718] sm:$0xff]
          %v822 = vld [vmem:[#allocation9 + $0x720] sm:$0xff]
          %v823 = vld [vmem:[#allocation9 + $0x728] sm:$0xff]
          %v824 = vld [vmem:[#allocation9 + $0x730] sm:$0xff]
          %v825 = vld [vmem:[#allocation9 + $0x738] sm:$0xff]
          %v826 = vld [vmem:[#allocation9 + $0x740] sm:$0xff]
          %v827 = vld [vmem:[#allocation9 + $0x748] sm:$0xff]
          %v828 = vld [vmem:[#allocation9 + $0x750] sm:$0xff]
          %v829 = vld [vmem:[#allocation9 + $0x758] sm:$0xff]
          %v830 = vld [vmem:[#allocation9 + $0x760] sm:$0xff]
          %v831 = vld [vmem:[#allocation9 + $0x768] sm:$0xff]
          %v832 = vld [vmem:[#allocation9 + $0x770] sm:$0xff]
          %v833 = vld [vmem:[#allocation9 + $0x778] sm:$0xff]
          %v834 = vld [vmem:[#allocation9 + $0x780] sm:$0xff]
          %v835 = vld [vmem:[#allocation9 + $0x788] sm:$0xff]
          %v836 = vld [vmem:[#allocation9 + $0x790] sm:$0xff]
          %v837 = vld [vmem:[#allocation9 + $0x798] sm:$0xff]
          %v838 = vld [vmem:[#allocation9 + $0x7a0] sm:$0xff]
          %v839 = vld [vmem:[#allocation9 + $0x7a8] sm:$0xff]
          %v840 = vld [vmem:[#allocation9 + $0x7b0] sm:$0xff]
          %v841 = vld [vmem:[#allocation9 + $0x7b8] sm:$0xff]
          %v842 = vld [vmem:[#allocation9 + $0x7c0] sm:$0xff]
          %v843 = vld [vmem:[#allocation9 + $0x7c8] sm:$0xff]
          %v844 = vld [vmem:[#allocation9 + $0x7d0] sm:$0xff]
          %v845 = vld [vmem:[#allocation9 + $0x7d8] sm:$0xff]
          %v846 = vld [vmem:[#allocation9 + $0x7e0] sm:$0xff]
          %v847 = vld [vmem:[#allocation9 + $0x7e8] sm:$0xff]
          %v848 = vld [vmem:[#allocation9 + $0x7f0] sm:$0xff]
          %v849 = vld [vmem:[#allocation9 + $0x7f8] sm:$0xff]
          %v850 = vld [vmem:[#allocation11] sm:$0xff]
          %v852 = vlaneseq
          %v853 = vshrl.u32 %v852, 7
          %v854 = vsub.s32 0, %v853
          %v855 = vrot.slane %v850, %v854
          %v856 = vlaneseq
          %v857 = vshrl.u32 %v856, 7
          %v858 = vsub.s32 1, %v857
          %v859 = vrot.slane %v850, %v858
          %v860 = vlaneseq
          %v861 = vshrl.u32 %v860, 7
          %v862 = vsub.s32 2, %v861
          %v863 = vrot.slane %v850, %v862
          %v864 = vlaneseq
          %v865 = vshrl.u32 %v864, 7
          %v866 = vsub.s32 3, %v865
          %v867 = vrot.slane %v850, %v866
          %v868 = vlaneseq
          %v869 = vshrl.u32 %v868, 7
          %v870 = vsub.s32 4, %v869
          %v871 = vrot.slane %v850, %v870
          %v872 = vlaneseq
          %v873 = vshrl.u32 %v872, 7
          %v874 = vsub.s32 5, %v873
          %v875 = vrot.slane %v850, %v874
          %v876 = vlaneseq
          %v877 = vshrl.u32 %v876, 7
          %v878 = vsub.s32 6, %v877
          %v879 = vrot.slane %v850, %v878
          %v880 = vlaneseq
          %v881 = vshrl.u32 %v880, 7
          %v882 = vsub.s32 7, %v881
          %v883 = vrot.slane %v850, %v882
          %v1148 = vunpack.c.l.b16 %v594
          %v1149 = vunpack.c.h.b16 %v594
          %v1150 = vunpack.c.l.b16 %v595
          %v1151 = vunpack.c.h.b16 %v595
          %v1152 = vunpack.c.l.b16 %v596
          %v1153 = vunpack.c.h.b16 %v596
          %v1154 = vunpack.c.l.b16 %v597
          %v1155 = vunpack.c.h.b16 %v597
          %v1156 = vunpack.c.l.b16 %v598
          %v1157 = vunpack.c.h.b16 %v598
          %v1158 = vunpack.c.l.b16 %v599
          %v1159 = vunpack.c.h.b16 %v599
          %v1160 = vunpack.c.l.b16 %v600
          %v1161 = vunpack.c.h.b16 %v600
          %v1162 = vunpack.c.l.b16 %v601
          %v1163 = vunpack.c.h.b16 %v601
          %v1164 = vunpack.c.l.b16 %v602
          %v1165 = vunpack.c.h.b16 %v602
          %v1166 = vunpack.c.l.b16 %v603
          %v1167 = vunpack.c.h.b16 %v603
          %v1168 = vunpack.c.l.b16 %v604
          %v1169 = vunpack.c.h.b16 %v604
          %v1170 = vunpack.c.l.b16 %v605
          %v1171 = vunpack.c.h.b16 %v605
          %v1172 = vunpack.c.l.b16 %v606
          %v1173 = vunpack.c.h.b16 %v606
          %v1174 = vunpack.c.l.b16 %v607
          %v1175 = vunpack.c.h.b16 %v607
          %v1176 = vunpack.c.l.b16 %v608
          %v1177 = vunpack.c.h.b16 %v608
          %v1178 = vunpack.c.l.b16 %v609
          %v1179 = vunpack.c.h.b16 %v609
          %v1180 = vunpack.c.l.b16 %v610
          %v1181 = vunpack.c.h.b16 %v610
          %v1182 = vunpack.c.l.b16 %v611
          %v1183 = vunpack.c.h.b16 %v611
          %v1184 = vunpack.c.l.b16 %v612
          %v1185 = vunpack.c.h.b16 %v612
          %v1186 = vunpack.c.l.b16 %v613
          %v1187 = vunpack.c.h.b16 %v613
          %v1188 = vunpack.c.l.b16 %v614
          %v1189 = vunpack.c.h.b16 %v614
          %v1190 = vunpack.c.l.b16 %v615
          %v1191 = vunpack.c.h.b16 %v615
          %v1192 = vunpack.c.l.b16 %v616
          %v1193 = vunpack.c.h.b16 %v616
          %v1194 = vunpack.c.l.b16 %v617
          %v1195 = vunpack.c.h.b16 %v617
          %v1196 = vunpack.c.l.b16 %v618
          %v1197 = vunpack.c.h.b16 %v618
          %v1198 = vunpack.c.l.b16 %v619
          %v1199 = vunpack.c.h.b16 %v619
          %v1200 = vunpack.c.l.b16 %v620
          %v1201 = vunpack.c.h.b16 %v620
          %v1202 = vunpack.c.l.b16 %v621
          %v1203 = vunpack.c.h.b16 %v621
          %v1204 = vunpack.c.l.b16 %v622
          %v1205 = vunpack.c.h.b16 %v622
          %v1206 = vunpack.c.l.b16 %v623
          %v1207 = vunpack.c.h.b16 %v623
          %v1208 = vunpack.c.l.b16 %v624
          %v1209 = vunpack.c.h.b16 %v624
          %v1210 = vunpack.c.l.b16 %v625
          %v1211 = vunpack.c.h.b16 %v625
          %v1212 = vunpack.c.l.b16 %v626
          %v1213 = vunpack.c.h.b16 %v626
          %v1214 = vunpack.c.l.b16 %v627
          %v1215 = vunpack.c.h.b16 %v627
          %v1216 = vunpack.c.l.b16 %v628
          %v1217 = vunpack.c.h.b16 %v628
          %v1218 = vunpack.c.l.b16 %v629
          %v1219 = vunpack.c.h.b16 %v629
          %v1220 = vunpack.c.l.b16 %v630
          %v1221 = vunpack.c.h.b16 %v630
          %v1222 = vunpack.c.l.b16 %v631
          %v1223 = vunpack.c.h.b16 %v631
          %v1224 = vunpack.c.l.b16 %v632
          %v1225 = vunpack.c.h.b16 %v632
          %v1226 = vunpack.c.l.b16 %v633
          %v1227 = vunpack.c.h.b16 %v633
          %v1228 = vunpack.c.l.b16 %v634
          %v1229 = vunpack.c.h.b16 %v634
          %v1230 = vunpack.c.l.b16 %v635
          %v1231 = vunpack.c.h.b16 %v635
          %v1232 = vunpack.c.l.b16 %v636
          %v1233 = vunpack.c.h.b16 %v636
          %v1234 = vunpack.c.l.b16 %v637
          %v1235 = vunpack.c.h.b16 %v637
          %v1236 = vunpack.c.l.b16 %v638
          %v1237 = vunpack.c.h.b16 %v638
          %v1238 = vunpack.c.l.b16 %v639
          %v1239 = vunpack.c.h.b16 %v639
          %v1240 = vunpack.c.l.b16 %v640
          %v1241 = vunpack.c.h.b16 %v640
          %v1242 = vunpack.c.l.b16 %v641
          %v1243 = vunpack.c.h.b16 %v641
          %v1244 = vunpack.c.l.b16 %v642
          %v1245 = vunpack.c.h.b16 %v642
          %v1246 = vunpack.c.l.b16 %v643
          %v1247 = vunpack.c.h.b16 %v643
          %v1248 = vunpack.c.l.b16 %v644
          %v1249 = vunpack.c.h.b16 %v644
          %v1250 = vunpack.c.l.b16 %v645
          %v1251 = vunpack.c.h.b16 %v645
          %v1252 = vunpack.c.l.b16 %v646
          %v1253 = vunpack.c.h.b16 %v646
          %v1254 = vunpack.c.l.b16 %v647
          %v1255 = vunpack.c.h.b16 %v647
          %v1256 = vunpack.c.l.b16 %v648
          %v1257 = vunpack.c.h.b16 %v648
          %v1258 = vunpack.c.l.b16 %v649
          %v1259 = vunpack.c.h.b16 %v649
          %v1260 = vunpack.c.l.b16 %v650
          %v1261 = vunpack.c.h.b16 %v650
          %v1262 = vunpack.c.l.b16 %v651
          %v1263 = vunpack.c.h.b16 %v651
          %v1264 = vunpack.c.l.b16 %v652
          %v1265 = vunpack.c.h.b16 %v652
          %v1266 = vunpack.c.l.b16 %v653
          %v1267 = vunpack.c.h.b16 %v653
          %v1268 = vunpack.c.l.b16 %v654
          %v1269 = vunpack.c.h.b16 %v654
          %v1270 = vunpack.c.l.b16 %v655
          %v1271 = vunpack.c.h.b16 %v655
          %v1272 = vunpack.c.l.b16 %v656
          %v1273 = vunpack.c.h.b16 %v656
          %v1274 = vunpack.c.l.b16 %v657
          %v1275 = vunpack.c.h.b16 %v657
          %v1276 = vunpack.c.l.b16 %v658
          %v1277 = vunpack.c.h.b16 %v658
          %v1278 = vunpack.c.l.b16 %v659
          %v1279 = vunpack.c.h.b16 %v659
          %v1280 = vunpack.c.l.b16 %v660
          %v1281 = vunpack.c.h.b16 %v660
          %v1282 = vunpack.c.l.b16 %v661
          %v1283 = vunpack.c.h.b16 %v661
          %v1284 = vunpack.c.l.b16 %v662
          %v1285 = vunpack.c.h.b16 %v662
          %v1286 = vunpack.c.l.b16 %v663
          %v1287 = vunpack.c.h.b16 %v663
          %v1288 = vunpack.c.l.b16 %v664
          %v1289 = vunpack.c.h.b16 %v664
          %v1290 = vunpack.c.l.b16 %v665
          %v1291 = vunpack.c.h.b16 %v665
          %v1292 = vunpack.c.l.b16 %v666
          %v1293 = vunpack.c.h.b16 %v666
          %v1294 = vunpack.c.l.b16 %v667
          %v1295 = vunpack.c.h.b16 %v667
          %v1296 = vunpack.c.l.b16 %v668
          %v1297 = vunpack.c.h.b16 %v668
          %v1298 = vunpack.c.l.b16 %v669
          %v1299 = vunpack.c.h.b16 %v669
          %v1300 = vunpack.c.l.b16 %v670
          %v1301 = vunpack.c.h.b16 %v670
          %v1302 = vunpack.c.l.b16 %v671
          %v1303 = vunpack.c.h.b16 %v671
          %v1304 = vunpack.c.l.b16 %v672
          %v1305 = vunpack.c.h.b16 %v672
          %v1306 = vunpack.c.l.b16 %v673
          %v1307 = vunpack.c.h.b16 %v673
          %v1308 = vunpack.c.l.b16 %v674
          %v1309 = vunpack.c.h.b16 %v674
          %v1310 = vunpack.c.l.b16 %v675
          %v1311 = vunpack.c.h.b16 %v675
          %v1312 = vunpack.c.l.b16 %v676
          %v1313 = vunpack.c.h.b16 %v676
          %v1314 = vunpack.c.l.b16 %v677
          %v1315 = vunpack.c.h.b16 %v677
          %v1316 = vunpack.c.l.b16 %v678
          %v1317 = vunpack.c.h.b16 %v678
          %v1318 = vunpack.c.l.b16 %v679
          %v1319 = vunpack.c.h.b16 %v679
          %v1320 = vunpack.c.l.b16 %v680
          %v1321 = vunpack.c.h.b16 %v680
          %v1322 = vunpack.c.l.b16 %v681
          %v1323 = vunpack.c.h.b16 %v681
          %v1324 = vunpack.c.l.b16 %v682
          %v1325 = vunpack.c.h.b16 %v682
          %v1326 = vunpack.c.l.b16 %v683
          %v1327 = vunpack.c.h.b16 %v683
          %v1328 = vunpack.c.l.b16 %v684
          %v1329 = vunpack.c.h.b16 %v684
          %v1330 = vunpack.c.l.b16 %v685
          %v1331 = vunpack.c.h.b16 %v685
          %v1332 = vunpack.c.l.b16 %v686
          %v1333 = vunpack.c.h.b16 %v686
          %v1334 = vunpack.c.l.b16 %v687
          %v1335 = vunpack.c.h.b16 %v687
          %v1336 = vunpack.c.l.b16 %v688
          %v1337 = vunpack.c.h.b16 %v688
          %v1338 = vunpack.c.l.b16 %v689
          %v1339 = vunpack.c.h.b16 %v689
          %v1340 = vunpack.c.l.b16 %v690
          %v1341 = vunpack.c.h.b16 %v690
          %v1342 = vunpack.c.l.b16 %v691
          %v1343 = vunpack.c.h.b16 %v691
          %v1344 = vunpack.c.l.b16 %v692
          %v1345 = vunpack.c.h.b16 %v692
          %v1346 = vunpack.c.l.b16 %v693
          %v1347 = vunpack.c.h.b16 %v693
          %v1348 = vunpack.c.l.b16 %v694
          %v1349 = vunpack.c.h.b16 %v694
          %v1350 = vunpack.c.l.b16 %v695
          %v1351 = vunpack.c.h.b16 %v695
          %v1352 = vunpack.c.l.b16 %v696
          %v1353 = vunpack.c.h.b16 %v696
          %v1354 = vunpack.c.l.b16 %v697
          %v1355 = vunpack.c.h.b16 %v697
          %v1356 = vunpack.c.l.b16 %v698
          %v1357 = vunpack.c.h.b16 %v698
          %v1358 = vunpack.c.l.b16 %v699
          %v1359 = vunpack.c.h.b16 %v699
          %v1360 = vunpack.c.l.b16 %v700
          %v1361 = vunpack.c.h.b16 %v700
          %v1362 = vunpack.c.l.b16 %v701
          %v1363 = vunpack.c.h.b16 %v701
          %v1364 = vunpack.c.l.b16 %v702
          %v1365 = vunpack.c.h.b16 %v702
          %v1366 = vunpack.c.l.b16 %v703
          %v1367 = vunpack.c.h.b16 %v703
          %v1368 = vunpack.c.l.b16 %v704
          %v1369 = vunpack.c.h.b16 %v704
          %v1370 = vunpack.c.l.b16 %v705
          %v1371 = vunpack.c.h.b16 %v705
          %v1372 = vunpack.c.l.b16 %v706
          %v1373 = vunpack.c.h.b16 %v706
          %v1374 = vunpack.c.l.b16 %v707
          %v1375 = vunpack.c.h.b16 %v707
          %v1376 = vunpack.c.l.b16 %v708
          %v1377 = vunpack.c.h.b16 %v708
          %v1378 = vunpack.c.l.b16 %v709
          %v1379 = vunpack.c.h.b16 %v709
          %v1380 = vunpack.c.l.b16 %v710
          %v1381 = vunpack.c.h.b16 %v710
          %v1382 = vunpack.c.l.b16 %v711
          %v1383 = vunpack.c.h.b16 %v711
          %v1384 = vunpack.c.l.b16 %v712
          %v1385 = vunpack.c.h.b16 %v712
          %v1386 = vunpack.c.l.b16 %v713
          %v1387 = vunpack.c.h.b16 %v713
          %v1388 = vunpack.c.l.b16 %v714
          %v1389 = vunpack.c.h.b16 %v714
          %v1390 = vunpack.c.l.b16 %v715
          %v1391 = vunpack.c.h.b16 %v715
          %v1392 = vunpack.c.l.b16 %v716
          %v1393 = vunpack.c.h.b16 %v716
          %v1394 = vunpack.c.l.b16 %v717
          %v1395 = vunpack.c.h.b16 %v717
          %v1396 = vunpack.c.l.b16 %v718
          %v1397 = vunpack.c.h.b16 %v718
          %v1398 = vunpack.c.l.b16 %v719
          %v1399 = vunpack.c.h.b16 %v719
          %v1400 = vunpack.c.l.b16 %v720
          %v1401 = vunpack.c.h.b16 %v720
          %v1402 = vunpack.c.l.b16 %v721
          %v1403 = vunpack.c.h.b16 %v721
          %v1404 = vunpack.c.l.b16 %v722
          %v1405 = vunpack.c.h.b16 %v722
          %v1406 = vunpack.c.l.b16 %v723
          %v1407 = vunpack.c.h.b16 %v723
          %v1408 = vunpack.c.l.b16 %v724
          %v1409 = vunpack.c.h.b16 %v724
          %v1410 = vunpack.c.l.b16 %v725
          %v1411 = vunpack.c.h.b16 %v725
          %v1412 = vunpack.c.l.b16 %v726
          %v1413 = vunpack.c.h.b16 %v726
          %v1414 = vunpack.c.l.b16 %v727
          %v1415 = vunpack.c.h.b16 %v727
          %v1416 = vunpack.c.l.b16 %v728
          %v1417 = vunpack.c.h.b16 %v728
          %v1418 = vunpack.c.l.b16 %v729
          %v1419 = vunpack.c.h.b16 %v729
          %v1420 = vunpack.c.l.b16 %v730
          %v1421 = vunpack.c.h.b16 %v730
          %v1422 = vunpack.c.l.b16 %v731
          %v1423 = vunpack.c.h.b16 %v731
          %v1424 = vunpack.c.l.b16 %v732
          %v1425 = vunpack.c.h.b16 %v732
          %v1426 = vunpack.c.l.b16 %v733
          %v1427 = vunpack.c.h.b16 %v733
          %v1428 = vunpack.c.l.b16 %v734
          %v1429 = vunpack.c.h.b16 %v734
          %v1430 = vunpack.c.l.b16 %v735
          %v1431 = vunpack.c.h.b16 %v735
          %v1432 = vunpack.c.l.b16 %v736
          %v1433 = vunpack.c.h.b16 %v736
          %v1434 = vunpack.c.l.b16 %v737
          %v1435 = vunpack.c.h.b16 %v737
          %v1436 = vunpack.c.l.b16 %v738
          %v1437 = vunpack.c.h.b16 %v738
          %v1438 = vunpack.c.l.b16 %v739
          %v1439 = vunpack.c.h.b16 %v739
          %v1440 = vunpack.c.l.b16 %v740
          %v1441 = vunpack.c.h.b16 %v740
          %v1442 = vunpack.c.l.b16 %v741
          %v1443 = vunpack.c.h.b16 %v741
          %v1444 = vunpack.c.l.b16 %v742
          %v1445 = vunpack.c.h.b16 %v742
          %v1446 = vunpack.c.l.b16 %v743
          %v1447 = vunpack.c.h.b16 %v743
          %v1448 = vunpack.c.l.b16 %v744
          %v1449 = vunpack.c.h.b16 %v744
          %v1450 = vunpack.c.l.b16 %v745
          %v1451 = vunpack.c.h.b16 %v745
          %v1452 = vunpack.c.l.b16 %v746
          %v1453 = vunpack.c.h.b16 %v746
          %v1454 = vunpack.c.l.b16 %v747
          %v1455 = vunpack.c.h.b16 %v747
          %v1456 = vunpack.c.l.b16 %v748
          %v1457 = vunpack.c.h.b16 %v748
          %v1458 = vunpack.c.l.b16 %v749
          %v1459 = vunpack.c.h.b16 %v749
          %v1460 = vunpack.c.l.b16 %v750
          %v1461 = vunpack.c.h.b16 %v750
          %v1462 = vunpack.c.l.b16 %v751
          %v1463 = vunpack.c.h.b16 %v751
          %v1464 = vunpack.c.l.b16 %v752
          %v1465 = vunpack.c.h.b16 %v752
          %v1466 = vunpack.c.l.b16 %v753
          %v1467 = vunpack.c.h.b16 %v753
          %v1468 = vunpack.c.l.b16 %v754
          %v1469 = vunpack.c.h.b16 %v754
          %v1470 = vunpack.c.l.b16 %v755
          %v1471 = vunpack.c.h.b16 %v755
          %v1472 = vunpack.c.l.b16 %v756
          %v1473 = vunpack.c.h.b16 %v756
          %v1474 = vunpack.c.l.b16 %v757
          %v1475 = vunpack.c.h.b16 %v757
          %v1476 = vunpack.c.l.b16 %v758
          %v1477 = vunpack.c.h.b16 %v758
          %v1478 = vunpack.c.l.b16 %v759
          %v1479 = vunpack.c.h.b16 %v759
          %v1480 = vunpack.c.l.b16 %v760
          %v1481 = vunpack.c.h.b16 %v760
          %v1482 = vunpack.c.l.b16 %v761
          %v1483 = vunpack.c.h.b16 %v761
          %v1484 = vunpack.c.l.b16 %v762
          %v1485 = vunpack.c.h.b16 %v762
          %v1486 = vunpack.c.l.b16 %v763
          %v1487 = vunpack.c.h.b16 %v763
          %v1488 = vunpack.c.l.b16 %v764
          %v1489 = vunpack.c.h.b16 %v764
          %v1490 = vunpack.c.l.b16 %v765
          %v1491 = vunpack.c.h.b16 %v765
          %v1492 = vunpack.c.l.b16 %v766
          %v1493 = vunpack.c.h.b16 %v766
          %v1494 = vunpack.c.l.b16 %v767
          %v1495 = vunpack.c.h.b16 %v767
          %v1496 = vunpack.c.l.b16 %v768
          %v1497 = vunpack.c.h.b16 %v768
          %v1498 = vunpack.c.l.b16 %v769
          %v1499 = vunpack.c.h.b16 %v769
          %v1500 = vunpack.c.l.b16 %v770
          %v1501 = vunpack.c.h.b16 %v770
          %v1502 = vunpack.c.l.b16 %v771
          %v1503 = vunpack.c.h.b16 %v771
          %v1504 = vunpack.c.l.b16 %v772
          %v1505 = vunpack.c.h.b16 %v772
          %v1506 = vunpack.c.l.b16 %v773
          %v1507 = vunpack.c.h.b16 %v773
          %v1508 = vunpack.c.l.b16 %v774
          %v1509 = vunpack.c.h.b16 %v774
          %v1510 = vunpack.c.l.b16 %v775
          %v1511 = vunpack.c.h.b16 %v775
          %v1512 = vunpack.c.l.b16 %v776
          %v1513 = vunpack.c.h.b16 %v776
          %v1514 = vunpack.c.l.b16 %v777
          %v1515 = vunpack.c.h.b16 %v777
          %v1516 = vunpack.c.l.b16 %v778
          %v1517 = vunpack.c.h.b16 %v778
          %v1518 = vunpack.c.l.b16 %v779
          %v1519 = vunpack.c.h.b16 %v779
          %v1520 = vunpack.c.l.b16 %v780
          %v1521 = vunpack.c.h.b16 %v780
          %v1522 = vunpack.c.l.b16 %v781
          %v1523 = vunpack.c.h.b16 %v781
          %v1524 = vunpack.c.l.b16 %v782
          %v1525 = vunpack.c.h.b16 %v782
          %v1526 = vunpack.c.l.b16 %v783
          %v1527 = vunpack.c.h.b16 %v783
          %v1528 = vunpack.c.l.b16 %v784
          %v1529 = vunpack.c.h.b16 %v784
          %v1530 = vunpack.c.l.b16 %v785
          %v1531 = vunpack.c.h.b16 %v785
          %v1532 = vunpack.c.l.b16 %v786
          %v1533 = vunpack.c.h.b16 %v786
          %v1534 = vunpack.c.l.b16 %v787
          %v1535 = vunpack.c.h.b16 %v787
          %v1536 = vunpack.c.l.b16 %v788
          %v1537 = vunpack.c.h.b16 %v788
          %v1538 = vunpack.c.l.b16 %v789
          %v1539 = vunpack.c.h.b16 %v789
          %v1540 = vunpack.c.l.b16 %v790
          %v1541 = vunpack.c.h.b16 %v790
          %v1542 = vunpack.c.l.b16 %v791
          %v1543 = vunpack.c.h.b16 %v791
          %v1544 = vunpack.c.l.b16 %v792
          %v1545 = vunpack.c.h.b16 %v792
          %v1546 = vunpack.c.l.b16 %v793
          %v1547 = vunpack.c.h.b16 %v793
          %v1548 = vunpack.c.l.b16 %v794
          %v1549 = vunpack.c.h.b16 %v794
          %v1550 = vunpack.c.l.b16 %v795
          %v1551 = vunpack.c.h.b16 %v795
          %v1552 = vunpack.c.l.b16 %v796
          %v1553 = vunpack.c.h.b16 %v796
          %v1554 = vunpack.c.l.b16 %v797
          %v1555 = vunpack.c.h.b16 %v797
          %v1556 = vunpack.c.l.b16 %v798
          %v1557 = vunpack.c.h.b16 %v798
          %v1558 = vunpack.c.l.b16 %v799
          %v1559 = vunpack.c.h.b16 %v799
          %v1560 = vunpack.c.l.b16 %v800
          %v1561 = vunpack.c.h.b16 %v800
          %v1562 = vunpack.c.l.b16 %v801
          %v1563 = vunpack.c.h.b16 %v801
          %v1564 = vunpack.c.l.b16 %v802
          %v1565 = vunpack.c.h.b16 %v802
          %v1566 = vunpack.c.l.b16 %v803
          %v1567 = vunpack.c.h.b16 %v803
          %v1568 = vunpack.c.l.b16 %v804
          %v1569 = vunpack.c.h.b16 %v804
          %v1570 = vunpack.c.l.b16 %v805
          %v1571 = vunpack.c.h.b16 %v805
          %v1572 = vunpack.c.l.b16 %v806
          %v1573 = vunpack.c.h.b16 %v806
          %v1574 = vunpack.c.l.b16 %v807
          %v1575 = vunpack.c.h.b16 %v807
          %v1576 = vunpack.c.l.b16 %v808
          %v1577 = vunpack.c.h.b16 %v808
          %v1578 = vunpack.c.l.b16 %v809
          %v1579 = vunpack.c.h.b16 %v809
          %v1580 = vunpack.c.l.b16 %v810
          %v1581 = vunpack.c.h.b16 %v810
          %v1582 = vunpack.c.l.b16 %v811
          %v1583 = vunpack.c.h.b16 %v811
          %v1584 = vunpack.c.l.b16 %v812
          %v1585 = vunpack.c.h.b16 %v812
          %v1586 = vunpack.c.l.b16 %v813
          %v1587 = vunpack.c.h.b16 %v813
          %v1588 = vunpack.c.l.b16 %v814
          %v1589 = vunpack.c.h.b16 %v814
          %v1590 = vunpack.c.l.b16 %v815
          %v1591 = vunpack.c.h.b16 %v815
          %v1592 = vunpack.c.l.b16 %v816
          %v1593 = vunpack.c.h.b16 %v816
          %v1594 = vunpack.c.l.b16 %v817
          %v1595 = vunpack.c.h.b16 %v817
          %v1596 = vunpack.c.l.b16 %v818
          %v1597 = vunpack.c.h.b16 %v818
          %v1598 = vunpack.c.l.b16 %v819
          %v1599 = vunpack.c.h.b16 %v819
          %v1600 = vunpack.c.l.b16 %v820
          %v1601 = vunpack.c.h.b16 %v820
          %v1602 = vunpack.c.l.b16 %v821
          %v1603 = vunpack.c.h.b16 %v821
          %v1604 = vunpack.c.l.b16 %v822
          %v1605 = vunpack.c.h.b16 %v822
          %v1606 = vunpack.c.l.b16 %v823
          %v1607 = vunpack.c.h.b16 %v823
          %v1608 = vunpack.c.l.b16 %v824
          %v1609 = vunpack.c.h.b16 %v824
          %v1610 = vunpack.c.l.b16 %v825
          %v1611 = vunpack.c.h.b16 %v825
          %v1612 = vunpack.c.l.b16 %v826
          %v1613 = vunpack.c.h.b16 %v826
          %v1614 = vunpack.c.l.b16 %v827
          %v1615 = vunpack.c.h.b16 %v827
          %v1616 = vunpack.c.l.b16 %v828
          %v1617 = vunpack.c.h.b16 %v828
          %v1618 = vunpack.c.l.b16 %v829
          %v1619 = vunpack.c.h.b16 %v829
          %v1620 = vunpack.c.l.b16 %v830
          %v1621 = vunpack.c.h.b16 %v830
          %v1622 = vunpack.c.l.b16 %v831
          %v1623 = vunpack.c.h.b16 %v831
          %v1624 = vunpack.c.l.b16 %v832
          %v1625 = vunpack.c.h.b16 %v832
          %v1626 = vunpack.c.l.b16 %v833
          %v1627 = vunpack.c.h.b16 %v833
          %v1628 = vunpack.c.l.b16 %v834
          %v1629 = vunpack.c.h.b16 %v834
          %v1630 = vunpack.c.l.b16 %v835
          %v1631 = vunpack.c.h.b16 %v835
          %v1632 = vunpack.c.l.b16 %v836
          %v1633 = vunpack.c.h.b16 %v836
          %v1634 = vunpack.c.l.b16 %v837
          %v1635 = vunpack.c.h.b16 %v837
          %v1636 = vunpack.c.l.b16 %v838
          %v1637 = vunpack.c.h.b16 %v838
          %v1638 = vunpack.c.l.b16 %v839
          %v1639 = vunpack.c.h.b16 %v839
          %v1640 = vunpack.c.l.b16 %v840
          %v1641 = vunpack.c.h.b16 %v840
          %v1642 = vunpack.c.l.b16 %v841
          %v1643 = vunpack.c.h.b16 %v841
          %v1644 = vunpack.c.l.b16 %v842
          %v1645 = vunpack.c.h.b16 %v842
          %v1646 = vunpack.c.l.b16 %v843
          %v1647 = vunpack.c.h.b16 %v843
          %v1648 = vunpack.c.l.b16 %v844
          %v1649 = vunpack.c.h.b16 %v844
          %v1650 = vunpack.c.l.b16 %v845
          %v1651 = vunpack.c.h.b16 %v845
          %v1652 = vunpack.c.l.b16 %v846
          %v1653 = vunpack.c.h.b16 %v846
          %v1654 = vunpack.c.l.b16 %v847
          %v1655 = vunpack.c.h.b16 %v847
          %v1656 = vunpack.c.l.b16 %v848
          %v1657 = vunpack.c.h.b16 %v848
          %v1658 = vunpack.c.l.b16 %v849
          %v1659 = vunpack.c.h.b16 %v849
          %v1660 = vpack.c.b16 %v1156, %v1148
          %v1661 = vpack.c.b16 %v1157, %v1149
          %v1662 = vpack.c.b16 %v1158, %v1150
          %v1663 = vpack.c.b16 %v1159, %v1151
          %v1664 = vpack.c.b16 %v1160, %v1152
          %v1665 = vpack.c.b16 %v1161, %v1153
          %v1666 = vpack.c.b16 %v1162, %v1154
          %v1667 = vpack.c.b16 %v1163, %v1155
          %v1668 = vpack.c.b16 %v1172, %v1164
          %v1669 = vpack.c.b16 %v1173, %v1165
          %v1670 = vpack.c.b16 %v1174, %v1166
          %v1671 = vpack.c.b16 %v1175, %v1167
          %v1672 = vpack.c.b16 %v1176, %v1168
          %v1673 = vpack.c.b16 %v1177, %v1169
          %v1674 = vpack.c.b16 %v1178, %v1170
          %v1675 = vpack.c.b16 %v1179, %v1171
          %v1676 = vpack.c.b16 %v1188, %v1180
          %v1677 = vpack.c.b16 %v1189, %v1181
          %v1678 = vpack.c.b16 %v1190, %v1182
          %v1679 = vpack.c.b16 %v1191, %v1183
          %v1680 = vpack.c.b16 %v1192, %v1184
          %v1681 = vpack.c.b16 %v1193, %v1185
          %v1682 = vpack.c.b16 %v1194, %v1186
          %v1683 = vpack.c.b16 %v1195, %v1187
          %v1684 = vpack.c.b16 %v1204, %v1196
          %v1685 = vpack.c.b16 %v1205, %v1197
          %v1686 = vpack.c.b16 %v1206, %v1198
          %v1687 = vpack.c.b16 %v1207, %v1199
          %v1688 = vpack.c.b16 %v1208, %v1200
          %v1689 = vpack.c.b16 %v1209, %v1201
          %v1690 = vpack.c.b16 %v1210, %v1202
          %v1691 = vpack.c.b16 %v1211, %v1203
          %v1692 = vpack.c.b16 %v1220, %v1212
          %v1693 = vpack.c.b16 %v1221, %v1213
          %v1694 = vpack.c.b16 %v1222, %v1214
          %v1695 = vpack.c.b16 %v1223, %v1215
          %v1696 = vpack.c.b16 %v1224, %v1216
          %v1697 = vpack.c.b16 %v1225, %v1217
          %v1698 = vpack.c.b16 %v1226, %v1218
          %v1699 = vpack.c.b16 %v1227, %v1219
          %v1700 = vpack.c.b16 %v1236, %v1228
          %v1701 = vpack.c.b16 %v1237, %v1229
          %v1702 = vpack.c.b16 %v1238, %v1230
          %v1703 = vpack.c.b16 %v1239, %v1231
          %v1704 = vpack.c.b16 %v1240, %v1232
          %v1705 = vpack.c.b16 %v1241, %v1233
          %v1706 = vpack.c.b16 %v1242, %v1234
          %v1707 = vpack.c.b16 %v1243, %v1235
          %v1708 = vpack.c.b16 %v1252, %v1244
          %v1709 = vpack.c.b16 %v1253, %v1245
          %v1710 = vpack.c.b16 %v1254, %v1246
          %v1711 = vpack.c.b16 %v1255, %v1247
          %v1712 = vpack.c.b16 %v1256, %v1248
          %v1713 = vpack.c.b16 %v1257, %v1249
          %v1714 = vpack.c.b16 %v1258, %v1250
          %v1715 = vpack.c.b16 %v1259, %v1251
          %v1716 = vpack.c.b16 %v1268, %v1260
          %v1717 = vpack.c.b16 %v1269, %v1261
          %v1718 = vpack.c.b16 %v1270, %v1262
          %v1719 = vpack.c.b16 %v1271, %v1263
          %v1720 = vpack.c.b16 %v1272, %v1264
          %v1721 = vpack.c.b16 %v1273, %v1265
          %v1722 = vpack.c.b16 %v1274, %v1266
          %v1723 = vpack.c.b16 %v1275, %v1267
          %v1724 = vpack.c.b16 %v1284, %v1276
          %v1725 = vpack.c.b16 %v1285, %v1277
          %v1726 = vpack.c.b16 %v1286, %v1278
          %v1727 = vpack.c.b16 %v1287, %v1279
          %v1728 = vpack.c.b16 %v1288, %v1280
          %v1729 = vpack.c.b16 %v1289, %v1281
          %v1730 = vpack.c.b16 %v1290, %v1282
          %v1731 = vpack.c.b16 %v1291, %v1283
          %v1732 = vpack.c.b16 %v1300, %v1292
          %v1733 = vpack.c.b16 %v1301, %v1293
          %v1734 = vpack.c.b16 %v1302, %v1294
          %v1735 = vpack.c.b16 %v1303, %v1295
          %v1736 = vpack.c.b16 %v1304, %v1296
          %v1737 = vpack.c.b16 %v1305, %v1297
          %v1738 = vpack.c.b16 %v1306, %v1298
          %v1739 = vpack.c.b16 %v1307, %v1299
          %v1740 = vpack.c.b16 %v1316, %v1308
          %v1741 = vpack.c.b16 %v1317, %v1309
          %v1742 = vpack.c.b16 %v1318, %v1310
          %v1743 = vpack.c.b16 %v1319, %v1311
          %v1744 = vpack.c.b16 %v1320, %v1312
          %v1745 = vpack.c.b16 %v1321, %v1313
          %v1746 = vpack.c.b16 %v1322, %v1314
          %v1747 = vpack.c.b16 %v1323, %v1315
          %v1748 = vpack.c.b16 %v1332, %v1324
          %v1749 = vpack.c.b16 %v1333, %v1325
          %v1750 = vpack.c.b16 %v1334, %v1326
          %v1751 = vpack.c.b16 %v1335, %v1327
          %v1752 = vpack.c.b16 %v1336, %v1328
          %v1753 = vpack.c.b16 %v1337, %v1329
          %v1754 = vpack.c.b16 %v1338, %v1330
          %v1755 = vpack.c.b16 %v1339, %v1331
          %v1756 = vpack.c.b16 %v1348, %v1340
          %v1757 = vpack.c.b16 %v1349, %v1341
          %v1758 = vpack.c.b16 %v1350, %v1342
          %v1759 = vpack.c.b16 %v1351, %v1343
          %v1760 = vpack.c.b16 %v1352, %v1344
          %v1761 = vpack.c.b16 %v1353, %v1345
          %v1762 = vpack.c.b16 %v1354, %v1346
          %v1763 = vpack.c.b16 %v1355, %v1347
          %v1764 = vpack.c.b16 %v1364, %v1356
          %v1765 = vpack.c.b16 %v1365, %v1357
          %v1766 = vpack.c.b16 %v1366, %v1358
          %v1767 = vpack.c.b16 %v1367, %v1359
          %v1768 = vpack.c.b16 %v1368, %v1360
          %v1769 = vpack.c.b16 %v1369, %v1361
          %v1770 = vpack.c.b16 %v1370, %v1362
          %v1771 = vpack.c.b16 %v1371, %v1363
          %v1772 = vpack.c.b16 %v1380, %v1372
          %v1773 = vpack.c.b16 %v1381, %v1373
          %v1774 = vpack.c.b16 %v1382, %v1374
          %v1775 = vpack.c.b16 %v1383, %v1375
          %v1776 = vpack.c.b16 %v1384, %v1376
          %v1777 = vpack.c.b16 %v1385, %v1377
          %v1778 = vpack.c.b16 %v1386, %v1378
          %v1779 = vpack.c.b16 %v1387, %v1379
          %v1780 = vpack.c.b16 %v1396, %v1388
          %v1781 = vpack.c.b16 %v1397, %v1389
          %v1782 = vpack.c.b16 %v1398, %v1390
          %v1783 = vpack.c.b16 %v1399, %v1391
          %v1784 = vpack.c.b16 %v1400, %v1392
          %v1785 = vpack.c.b16 %v1401, %v1393
          %v1786 = vpack.c.b16 %v1402, %v1394
          %v1787 = vpack.c.b16 %v1403, %v1395
          %v1788 = vpack.c.b16 %v1412, %v1404
          %v1789 = vpack.c.b16 %v1413, %v1405
          %v1790 = vpack.c.b16 %v1414, %v1406
          %v1791 = vpack.c.b16 %v1415, %v1407
          %v1792 = vpack.c.b16 %v1416, %v1408
          %v1793 = vpack.c.b16 %v1417, %v1409
          %v1794 = vpack.c.b16 %v1418, %v1410
          %v1795 = vpack.c.b16 %v1419, %v1411
          %v1796 = vpack.c.b16 %v1428, %v1420
          %v1797 = vpack.c.b16 %v1429, %v1421
          %v1798 = vpack.c.b16 %v1430, %v1422
          %v1799 = vpack.c.b16 %v1431, %v1423
          %v1800 = vpack.c.b16 %v1432, %v1424
          %v1801 = vpack.c.b16 %v1433, %v1425
          %v1802 = vpack.c.b16 %v1434, %v1426
          %v1803 = vpack.c.b16 %v1435, %v1427
          %v1804 = vpack.c.b16 %v1444, %v1436
          %v1805 = vpack.c.b16 %v1445, %v1437
          %v1806 = vpack.c.b16 %v1446, %v1438
          %v1807 = vpack.c.b16 %v1447, %v1439
          %v1808 = vpack.c.b16 %v1448, %v1440
          %v1809 = vpack.c.b16 %v1449, %v1441
          %v1810 = vpack.c.b16 %v1450, %v1442
          %v1811 = vpack.c.b16 %v1451, %v1443
          %v1812 = vpack.c.b16 %v1460, %v1452
          %v1813 = vpack.c.b16 %v1461, %v1453
          %v1814 = vpack.c.b16 %v1462, %v1454
          %v1815 = vpack.c.b16 %v1463, %v1455
          %v1816 = vpack.c.b16 %v1464, %v1456
          %v1817 = vpack.c.b16 %v1465, %v1457
          %v1818 = vpack.c.b16 %v1466, %v1458
          %v1819 = vpack.c.b16 %v1467, %v1459
          %v1820 = vpack.c.b16 %v1476, %v1468
          %v1821 = vpack.c.b16 %v1477, %v1469
          %v1822 = vpack.c.b16 %v1478, %v1470
          %v1823 = vpack.c.b16 %v1479, %v1471
          %v1824 = vpack.c.b16 %v1480, %v1472
          %v1825 = vpack.c.b16 %v1481, %v1473
          %v1826 = vpack.c.b16 %v1482, %v1474
          %v1827 = vpack.c.b16 %v1483, %v1475
          %v1828 = vpack.c.b16 %v1492, %v1484
          %v1829 = vpack.c.b16 %v1493, %v1485
          %v1830 = vpack.c.b16 %v1494, %v1486
          %v1831 = vpack.c.b16 %v1495, %v1487
          %v1832 = vpack.c.b16 %v1496, %v1488
          %v1833 = vpack.c.b16 %v1497, %v1489
          %v1834 = vpack.c.b16 %v1498, %v1490
          %v1835 = vpack.c.b16 %v1499, %v1491
          %v1836 = vpack.c.b16 %v1508, %v1500
          %v1837 = vpack.c.b16 %v1509, %v1501
          %v1838 = vpack.c.b16 %v1510, %v1502
          %v1839 = vpack.c.b16 %v1511, %v1503
          %v1840 = vpack.c.b16 %v1512, %v1504
          %v1841 = vpack.c.b16 %v1513, %v1505
          %v1842 = vpack.c.b16 %v1514, %v1506
          %v1843 = vpack.c.b16 %v1515, %v1507
          %v1844 = vpack.c.b16 %v1524, %v1516
          %v1845 = vpack.c.b16 %v1525, %v1517
          %v1846 = vpack.c.b16 %v1526, %v1518
          %v1847 = vpack.c.b16 %v1527, %v1519
          %v1848 = vpack.c.b16 %v1528, %v1520
          %v1849 = vpack.c.b16 %v1529, %v1521
          %v1850 = vpack.c.b16 %v1530, %v1522
          %v1851 = vpack.c.b16 %v1531, %v1523
          %v1852 = vpack.c.b16 %v1540, %v1532
          %v1853 = vpack.c.b16 %v1541, %v1533
          %v1854 = vpack.c.b16 %v1542, %v1534
          %v1855 = vpack.c.b16 %v1543, %v1535
          %v1856 = vpack.c.b16 %v1544, %v1536
          %v1857 = vpack.c.b16 %v1545, %v1537
          %v1858 = vpack.c.b16 %v1546, %v1538
          %v1859 = vpack.c.b16 %v1547, %v1539
          %v1860 = vpack.c.b16 %v1556, %v1548
          %v1861 = vpack.c.b16 %v1557, %v1549
          %v1862 = vpack.c.b16 %v1558, %v1550
          %v1863 = vpack.c.b16 %v1559, %v1551
          %v1864 = vpack.c.b16 %v1560, %v1552
          %v1865 = vpack.c.b16 %v1561, %v1553
          %v1866 = vpack.c.b16 %v1562, %v1554
          %v1867 = vpack.c.b16 %v1563, %v1555
          %v1868 = vpack.c.b16 %v1572, %v1564
          %v1869 = vpack.c.b16 %v1573, %v1565
          %v1870 = vpack.c.b16 %v1574, %v1566
          %v1871 = vpack.c.b16 %v1575, %v1567
          %v1872 = vpack.c.b16 %v1576, %v1568
          %v1873 = vpack.c.b16 %v1577, %v1569
          %v1874 = vpack.c.b16 %v1578, %v1570
          %v1875 = vpack.c.b16 %v1579, %v1571
          %v1876 = vpack.c.b16 %v1588, %v1580
          %v1877 = vpack.c.b16 %v1589, %v1581
          %v1878 = vpack.c.b16 %v1590, %v1582
          %v1879 = vpack.c.b16 %v1591, %v1583
          %v1880 = vpack.c.b16 %v1592, %v1584
          %v1881 = vpack.c.b16 %v1593, %v1585
          %v1882 = vpack.c.b16 %v1594, %v1586
          %v1883 = vpack.c.b16 %v1595, %v1587
          %v1884 = vpack.c.b16 %v1604, %v1596
          %v1885 = vpack.c.b16 %v1605, %v1597
          %v1886 = vpack.c.b16 %v1606, %v1598
          %v1887 = vpack.c.b16 %v1607, %v1599
          %v1888 = vpack.c.b16 %v1608, %v1600
          %v1889 = vpack.c.b16 %v1609, %v1601
          %v1890 = vpack.c.b16 %v1610, %v1602
          %v1891 = vpack.c.b16 %v1611, %v1603
          %v1892 = vpack.c.b16 %v1620, %v1612
          %v1893 = vpack.c.b16 %v1621, %v1613
          %v1894 = vpack.c.b16 %v1622, %v1614
          %v1895 = vpack.c.b16 %v1623, %v1615
          %v1896 = vpack.c.b16 %v1624, %v1616
          %v1897 = vpack.c.b16 %v1625, %v1617
          %v1898 = vpack.c.b16 %v1626, %v1618
          %v1899 = vpack.c.b16 %v1627, %v1619
          %v1900 = vpack.c.b16 %v1636, %v1628
          %v1901 = vpack.c.b16 %v1637, %v1629
          %v1902 = vpack.c.b16 %v1638, %v1630
          %v1903 = vpack.c.b16 %v1639, %v1631
          %v1904 = vpack.c.b16 %v1640, %v1632
          %v1905 = vpack.c.b16 %v1641, %v1633
          %v1906 = vpack.c.b16 %v1642, %v1634
          %v1907 = vpack.c.b16 %v1643, %v1635
          %v1908 = vpack.c.b16 %v1652, %v1644
          %v1909 = vpack.c.b16 %v1653, %v1645
          %v1910 = vpack.c.b16 %v1654, %v1646
          %v1911 = vpack.c.b16 %v1655, %v1647
          %v1912 = vpack.c.b16 %v1656, %v1648
          %v1913 = vpack.c.b16 %v1657, %v1649
          %v1914 = vpack.c.b16 %v1658, %v1650
          %v1915 = vpack.c.b16 %v1659, %v1651
          %2172 = vmatprep.subr.bf16.mxu0 %v1717
          %2173 = vmatpush1.bf16.msra.mxu0 %v1716
          %2174 = vmatprep.subr.bf16.mxu0 %v1709
          %2175 = vmatpush1.bf16.msra.mxu0 %v1708
          %2176 = vmatprep.subr.bf16.mxu0 %v1701
          %2177 = vmatpush1.bf16.msra.mxu0 %v1700
          %2178 = vmatprep.subr.bf16.mxu0 %v1693
          %2179 = vmatpush1.bf16.msra.mxu0 %v1692
          %2180 = vmatprep.subr.bf16.mxu0 %v1685
          %2181 = vmatpush1.bf16.msra.mxu0 %v1684
          %2182 = vmatprep.subr.bf16.mxu0 %v1677
          %2183 = vmatpush1.bf16.msra.mxu0 %v1676
          %2184 = vmatprep.subr.bf16.mxu0 %v1669
          %2185 = vmatpush1.bf16.msra.mxu0 %v1668
          %2186 = vmatprep.subr.bf16.mxu0 %v1661
          %2187 = vmatpush1.bf16.msra.mxu0 %v1660
          %2188 = vmatprep.subr.bf16.mxu0 %v1781
          %2189 = vmatpush2.bf16.msra.mxu0 %v1780
          %2190 = vmatprep.subr.bf16.mxu0 %v1773
          %2191 = vmatpush2.bf16.msra.mxu0 %v1772
          %2192 = vmatprep.subr.bf16.mxu0 %v1765
          %2193 = vmatpush2.bf16.msra.mxu0 %v1764
          %2194 = vmatprep.subr.bf16.mxu0 %v1757
          %2195 = vmatpush2.bf16.msra.mxu0 %v1756
          %2196 = vmatprep.subr.bf16.mxu0 %v1749
          %2197 = vmatpush2.bf16.msra.mxu0 %v1748
          %2198 = vmatprep.subr.bf16.mxu0 %v1741
          %2199 = vmatpush2.bf16.msra.mxu0 %v1740
          %2200 = vmatprep.subr.bf16.mxu0 %v1733
          %2201 = vmatpush2.bf16.msra.mxu0 %v1732
          %2202 = vmatprep.subr.bf16.mxu0 %v1725
          %2203 = vmatpush2.bf16.msra.mxu0 %v1724
          %2204 = vmatprep.mubr.bf16.mxu0 %v591
          %2205 = vmatmul.mubr.bf16.gmra.mxu0 %v590
          %v2206 = vpop.f32.mrf.mxu0
          %v2207 = vadd.f32 %v855, %v2206
          %v2208 = vpop.f32.mrf.mxu0
          %v2209 = vadd.f32 %v859, %v2208
          %v2210 = vpop.f32.mrf.mxu0
          %v2211 = vpop.f32.mrf.mxu0
          %2212 = vdwg.mxu0
          %2213 = vmatprep.subr.bf16.mxu0 %v1845
          %2214 = vmatpush1.bf16.msra.mxu0 %v1844
          %2215 = vmatprep.subr.bf16.mxu0 %v1837
          %2216 = vmatpush1.bf16.msra.mxu0 %v1836
          %2217 = vmatprep.subr.bf16.mxu0 %v1829
          %2218 = vmatpush1.bf16.msra.mxu0 %v1828
          %2219 = vmatprep.subr.bf16.mxu0 %v1821
          %2220 = vmatpush1.bf16.msra.mxu0 %v1820
          %2221 = vmatprep.subr.bf16.mxu0 %v1813
          %2222 = vmatpush1.bf16.msra.mxu0 %v1812
          %2223 = vmatprep.subr.bf16.mxu0 %v1805
          %2224 = vmatpush1.bf16.msra.mxu0 %v1804
          %2225 = vmatprep.subr.bf16.mxu0 %v1797
          %2226 = vmatpush1.bf16.msra.mxu0 %v1796
          %2227 = vmatprep.subr.bf16.mxu0 %v1789
          %2228 = vmatpush1.bf16.msra.mxu0 %v1788
          %2229 = vmatprep.subr.bf16.mxu0 %v1909
          %2230 = vmatpush2.bf16.msra.mxu0 %v1908
          %2231 = vmatprep.subr.bf16.mxu0 %v1901
          %2232 = vmatpush2.bf16.msra.mxu0 %v1900
          %2233 = vmatprep.subr.bf16.mxu0 %v1893
          %2234 = vmatpush2.bf16.msra.mxu0 %v1892
          %2235 = vmatprep.subr.bf16.mxu0 %v1885
          %2236 = vmatpush2.bf16.msra.mxu0 %v1884
          %2237 = vmatprep.subr.bf16.mxu0 %v1877
          %2238 = vmatpush2.bf16.msra.mxu0 %v1876
          %2239 = vmatprep.subr.bf16.mxu0 %v1869
          %2240 = vmatpush2.bf16.msra.mxu0 %v1868
          %2241 = vmatprep.subr.bf16.mxu0 %v1861
          %2242 = vmatpush2.bf16.msra.mxu0 %v1860
          %2243 = vmatprep.subr.bf16.mxu0 %v1853
          %2244 = vmatpush2.bf16.msra.mxu0 %v1852
          %2245 = vmatprep.mubr.bf16.mxu0 %v593
          %2246 = vmatmul.mubr.bf16.gmra.mxu0 %v592
          %v2247 = vpop.f32.mrf.mxu0
          %v2248 = vadd.f32 %v2207, %v2247
          %v2249 = vpop.f32.mrf.mxu0
          %v2250 = vadd.f32 %v2209, %v2249
          %v2251 = vpop.f32.mrf.mxu0
          %v2252 = vpop.f32.mrf.mxu0
          %2253 = vdwg.mxu0
          %2254 = vmatprep.subr.bf16.mxu0 %v1719
          %2255 = vmatpush1.bf16.msra.mxu0 %v1718
          %2256 = vmatprep.subr.bf16.mxu0 %v1711
          %2257 = vmatpush1.bf16.msra.mxu0 %v1710
          %2258 = vmatprep.subr.bf16.mxu0 %v1703
          %2259 = vmatpush1.bf16.msra.mxu0 %v1702
          %2260 = vmatprep.subr.bf16.mxu0 %v1695
          %2261 = vmatpush1.bf16.msra.mxu0 %v1694
          %2262 = vmatprep.subr.bf16.mxu0 %v1687
          %2263 = vmatpush1.bf16.msra.mxu0 %v1686
          %2264 = vmatprep.subr.bf16.mxu0 %v1679
          %2265 = vmatpush1.bf16.msra.mxu0 %v1678
          %2266 = vmatprep.subr.bf16.mxu0 %v1671
          %2267 = vmatpush1.bf16.msra.mxu0 %v1670
          %2268 = vmatprep.subr.bf16.mxu0 %v1663
          %2269 = vmatpush1.bf16.msra.mxu0 %v1662
          %2270 = vmatprep.subr.bf16.mxu0 %v1783
          %2271 = vmatpush2.bf16.msra.mxu0 %v1782
          %2272 = vmatprep.subr.bf16.mxu0 %v1775
          %2273 = vmatpush2.bf16.msra.mxu0 %v1774
          %2274 = vmatprep.subr.bf16.mxu0 %v1767
          %2275 = vmatpush2.bf16.msra.mxu0 %v1766
          %2276 = vmatprep.subr.bf16.mxu0 %v1759
          %2277 = vmatpush2.bf16.msra.mxu0 %v1758
          %2278 = vmatprep.subr.bf16.mxu0 %v1751
          %2279 = vmatpush2.bf16.msra.mxu0 %v1750
          %2280 = vmatprep.subr.bf16.mxu0 %v1743
          %2281 = vmatpush2.bf16.msra.mxu0 %v1742
          %2282 = vmatprep.subr.bf16.mxu0 %v1735
          %2283 = vmatpush2.bf16.msra.mxu0 %v1734
          %2284 = vmatprep.subr.bf16.mxu0 %v1727
          %2285 = vmatpush2.bf16.msra.mxu0 %v1726
          %2286 = vmatprep.mubr.bf16.mxu0 %v591
          %2287 = vmatmul.mubr.bf16.gmra.mxu0 %v590
          %v2288 = vpop.f32.mrf.mxu0
          %v2289 = vadd.f32 %v863, %v2288
          %v2290 = vpop.f32.mrf.mxu0
          %v2291 = vadd.f32 %v867, %v2290
          %v2292 = vpop.f32.mrf.mxu0
          %v2293 = vpop.f32.mrf.mxu0
          %2294 = vdwg.mxu0
          %2295 = vmatprep.subr.bf16.mxu0 %v1847
          %2296 = vmatpush1.bf16.msra.mxu0 %v1846
          %2297 = vmatprep.subr.bf16.mxu0 %v1839
          %2298 = vmatpush1.bf16.msra.mxu0 %v1838
          %2299 = vmatprep.subr.bf16.mxu0 %v1831
          %2300 = vmatpush1.bf16.msra.mxu0 %v1830
          %2301 = vmatprep.subr.bf16.mxu0 %v1823
          %2302 = vmatpush1.bf16.msra.mxu0 %v1822
          %2303 = vmatprep.subr.bf16.mxu0 %v1815
          %2304 = vmatpush1.bf16.msra.mxu0 %v1814
          %2305 = vmatprep.subr.bf16.mxu0 %v1807
          %2306 = vmatpush1.bf16.msra.mxu0 %v1806
          %2307 = vmatprep.subr.bf16.mxu0 %v1799
          %2308 = vmatpush1.bf16.msra.mxu0 %v1798
          %2309 = vmatprep.subr.bf16.mxu0 %v1791
          %2310 = vmatpush1.bf16.msra.mxu0 %v1790
          %2311 = vmatprep.subr.bf16.mxu0 %v1911
          %2312 = vmatpush2.bf16.msra.mxu0 %v1910
          %2313 = vmatprep.subr.bf16.mxu0 %v1903
          %2314 = vmatpush2.bf16.msra.mxu0 %v1902
          %2315 = vmatprep.subr.bf16.mxu0 %v1895
          %2316 = vmatpush2.bf16.msra.mxu0 %v1894
          %2317 = vmatprep.subr.bf16.mxu0 %v1887
          %2318 = vmatpush2.bf16.msra.mxu0 %v1886
          %2319 = vmatprep.subr.bf16.mxu0 %v1879
          %2320 = vmatpush2.bf16.msra.mxu0 %v1878
          %2321 = vmatprep.subr.bf16.mxu0 %v1871
          %2322 = vmatpush2.bf16.msra.mxu0 %v1870
          %2323 = vmatprep.subr.bf16.mxu0 %v1863
          %2324 = vmatpush2.bf16.msra.mxu0 %v1862
          %2325 = vmatprep.subr.bf16.mxu0 %v1855
          %2326 = vmatpush2.bf16.msra.mxu0 %v1854
          %2327 = vmatprep.mubr.bf16.mxu0 %v593
          %2328 = vmatmul.mubr.bf16.gmra.mxu0 %v592
          %v2329 = vpop.f32.mrf.mxu0
          %v2330 = vadd.f32 %v2289, %v2329
          %v2331 = vpop.f32.mrf.mxu0
          %v2332 = vadd.f32 %v2291, %v2331
          %v2333 = vpop.f32.mrf.mxu0
          %v2334 = vpop.f32.mrf.mxu0
          %2335 = vdwg.mxu0
          %2336 = vmatprep.subr.bf16.mxu0 %v1721
          %2337 = vmatpush1.bf16.msra.mxu0 %v1720
          %2338 = vmatprep.subr.bf16.mxu0 %v1713
          %2339 = vmatpush1.bf16.msra.mxu0 %v1712
          %2340 = vmatprep.subr.bf16.mxu0 %v1705
          %2341 = vmatpush1.bf16.msra.mxu0 %v1704
          %2342 = vmatprep.subr.bf16.mxu0 %v1697
          %2343 = vmatpush1.bf16.msra.mxu0 %v1696
          %2344 = vmatprep.subr.bf16.mxu0 %v1689
          %2345 = vmatpush1.bf16.msra.mxu0 %v1688
          %2346 = vmatprep.subr.bf16.mxu0 %v1681
          %2347 = vmatpush1.bf16.msra.mxu0 %v1680
          %2348 = vmatprep.subr.bf16.mxu0 %v1673
          %2349 = vmatpush1.bf16.msra.mxu0 %v1672
          %2350 = vmatprep.subr.bf16.mxu0 %v1665
          %2351 = vmatpush1.bf16.msra.mxu0 %v1664
          %2352 = vmatprep.subr.bf16.mxu0 %v1785
          %2353 = vmatpush2.bf16.msra.mxu0 %v1784
          %2354 = vmatprep.subr.bf16.mxu0 %v1777
          %2355 = vmatpush2.bf16.msra.mxu0 %v1776
          %2356 = vmatprep.subr.bf16.mxu0 %v1769
          %2357 = vmatpush2.bf16.msra.mxu0 %v1768
          %2358 = vmatprep.subr.bf16.mxu0 %v1761
          %2359 = vmatpush2.bf16.msra.mxu0 %v1760
          %2360 = vmatprep.subr.bf16.mxu0 %v1753
          %2361 = vmatpush2.bf16.msra.mxu0 %v1752
          %2362 = vmatprep.subr.bf16.mxu0 %v1745
          %2363 = vmatpush2.bf16.msra.mxu0 %v1744
          %2364 = vmatprep.subr.bf16.mxu0 %v1737
          %2365 = vmatpush2.bf16.msra.mxu0 %v1736
          %2366 = vmatprep.subr.bf16.mxu0 %v1729
          %2367 = vmatpush2.bf16.msra.mxu0 %v1728
          %2368 = vmatprep.mubr.bf16.mxu0 %v591
          %2369 = vmatmul.mubr.bf16.gmra.mxu0 %v590
          %v2370 = vpop.f32.mrf.mxu0
          %v2371 = vadd.f32 %v871, %v2370
          %v2372 = vpop.f32.mrf.mxu0
          %v2373 = vadd.f32 %v875, %v2372
          %v2374 = vpop.f32.mrf.mxu0
          %v2375 = vpop.f32.mrf.mxu0
          %2376 = vdwg.mxu0
          %2377 = vmatprep.subr.bf16.mxu0 %v1849
          %2378 = vmatpush1.bf16.msra.mxu0 %v1848
          %2379 = vmatprep.subr.bf16.mxu0 %v1841
          %2380 = vmatpush1.bf16.msra.mxu0 %v1840
          %2381 = vmatprep.subr.bf16.mxu0 %v1833
          %2382 = vmatpush1.bf16.msra.mxu0 %v1832
          %2383 = vmatprep.subr.bf16.mxu0 %v1825
          %2384 = vmatpush1.bf16.msra.mxu0 %v1824
          %2385 = vmatprep.subr.bf16.mxu0 %v1817
          %2386 = vmatpush1.bf16.msra.mxu0 %v1816
          %2387 = vmatprep.subr.bf16.mxu0 %v1809
          %2388 = vmatpush1.bf16.msra.mxu0 %v1808
          %2389 = vmatprep.subr.bf16.mxu0 %v1801
          %2390 = vmatpush1.bf16.msra.mxu0 %v1800
          %2391 = vmatprep.subr.bf16.mxu0 %v1793
          %2392 = vmatpush1.bf16.msra.mxu0 %v1792
          %2393 = vmatprep.subr.bf16.mxu0 %v1913
          %2394 = vmatpush2.bf16.msra.mxu0 %v1912
          %2395 = vmatprep.subr.bf16.mxu0 %v1905
          %2396 = vmatpush2.bf16.msra.mxu0 %v1904
          %2397 = vmatprep.subr.bf16.mxu0 %v1897
          %2398 = vmatpush2.bf16.msra.mxu0 %v1896
          %2399 = vmatprep.subr.bf16.mxu0 %v1889
          %2400 = vmatpush2.bf16.msra.mxu0 %v1888
          %2401 = vmatprep.subr.bf16.mxu0 %v1881
          %2402 = vmatpush2.bf16.msra.mxu0 %v1880
          %2403 = vmatprep.subr.bf16.mxu0 %v1873
          %2404 = vmatpush2.bf16.msra.mxu0 %v1872
          %2405 = vmatprep.subr.bf16.mxu0 %v1865
          %2406 = vmatpush2.bf16.msra.mxu0 %v1864
          %2407 = vmatprep.subr.bf16.mxu0 %v1857
          %2408 = vmatpush2.bf16.msra.mxu0 %v1856
          %2409 = vmatprep.mubr.bf16.mxu0 %v593
          %2410 = vmatmul.mubr.bf16.gmra.mxu0 %v592
          %v2411 = vpop.f32.mrf.mxu0
          %v2412 = vadd.f32 %v2371, %v2411
          %v2413 = vpop.f32.mrf.mxu0
          %v2414 = vadd.f32 %v2373, %v2413
          %v2415 = vpop.f32.mrf.mxu0
          %v2416 = vpop.f32.mrf.mxu0
          %2417 = vdwg.mxu0
          %2418 = vmatprep.subr.bf16.mxu0 %v1723
          %2419 = vmatpush1.bf16.msra.mxu0 %v1722
          %2420 = vmatprep.subr.bf16.mxu0 %v1715
          %2421 = vmatpush1.bf16.msra.mxu0 %v1714
          %2422 = vmatprep.subr.bf16.mxu0 %v1707
          %2423 = vmatpush1.bf16.msra.mxu0 %v1706
          %2424 = vmatprep.subr.bf16.mxu0 %v1699
          %2425 = vmatpush1.bf16.msra.mxu0 %v1698
          %2426 = vmatprep.subr.bf16.mxu0 %v1691
          %2427 = vmatpush1.bf16.msra.mxu0 %v1690
          %2428 = vmatprep.subr.bf16.mxu0 %v1683
          %2429 = vmatpush1.bf16.msra.mxu0 %v1682
          %2430 = vmatprep.subr.bf16.mxu0 %v1675
          %2431 = vmatpush1.bf16.msra.mxu0 %v1674
          %2432 = vmatprep.subr.bf16.mxu0 %v1667
          %2433 = vmatpush1.bf16.msra.mxu0 %v1666
          %2434 = vmatprep.subr.bf16.mxu0 %v1787
          %2435 = vmatpush2.bf16.msra.mxu0 %v1786
          %2436 = vmatprep.subr.bf16.mxu0 %v1779
          %2437 = vmatpush2.bf16.msra.mxu0 %v1778
          %2438 = vmatprep.subr.bf16.mxu0 %v1771
          %2439 = vmatpush2.bf16.msra.mxu0 %v1770
          %2440 = vmatprep.subr.bf16.mxu0 %v1763
          %2441 = vmatpush2.bf16.msra.mxu0 %v1762
          %2442 = vmatprep.subr.bf16.mxu0 %v1755
          %2443 = vmatpush2.bf16.msra.mxu0 %v1754
          %2444 = vmatprep.subr.bf16.mxu0 %v1747
          %2445 = vmatpush2.bf16.msra.mxu0 %v1746
          %2446 = vmatprep.subr.bf16.mxu0 %v1739
          %2447 = vmatpush2.bf16.msra.mxu0 %v1738
          %2448 = vmatprep.subr.bf16.mxu0 %v1731
          %2449 = vmatpush2.bf16.msra.mxu0 %v1730
          %2450 = vmatprep.mubr.bf16.mxu0 %v591
          %2451 = vmatmul.mubr.bf16.gmra.mxu0 %v590
          %v2452 = vpop.f32.mrf.mxu0
          %v2453 = vadd.f32 %v879, %v2452
          %v2454 = vpop.f32.mrf.mxu0
          %v2455 = vadd.f32 %v883, %v2454
          %v2456 = vpop.f32.mrf.mxu0
          %v2457 = vpop.f32.mrf.mxu0
          %2458 = vdwg.mxu0
          %2459 = vmatprep.subr.bf16.mxu0 %v1851
          %2460 = vmatpush1.bf16.msra.mxu0 %v1850
          %2461 = vmatprep.subr.bf16.mxu0 %v1843
          %2462 = vmatpush1.bf16.msra.mxu0 %v1842
          %2463 = vmatprep.subr.bf16.mxu0 %v1835
          %2464 = vmatpush1.bf16.msra.mxu0 %v1834
          %2465 = vmatprep.subr.bf16.mxu0 %v1827
          %2466 = vmatpush1.bf16.msra.mxu0 %v1826
          %2467 = vmatprep.subr.bf16.mxu0 %v1819
          %2468 = vmatpush1.bf16.msra.mxu0 %v1818
          %2469 = vmatprep.subr.bf16.mxu0 %v1811
          %2470 = vmatpush1.bf16.msra.mxu0 %v1810
          %2471 = vmatprep.subr.bf16.mxu0 %v1803
          %2472 = vmatpush1.bf16.msra.mxu0 %v1802
          %2473 = vmatprep.subr.bf16.mxu0 %v1795
          %2474 = vmatpush1.bf16.msra.mxu0 %v1794
          %2475 = vmatprep.subr.bf16.mxu0 %v1915
          %2476 = vmatpush2.bf16.msra.mxu0 %v1914
          %2477 = vmatprep.subr.bf16.mxu0 %v1907
          %2478 = vmatpush2.bf16.msra.mxu0 %v1906
          %2479 = vmatprep.subr.bf16.mxu0 %v1899
          %2480 = vmatpush2.bf16.msra.mxu0 %v1898
          %2481 = vmatprep.subr.bf16.mxu0 %v1891
          %2482 = vmatpush2.bf16.msra.mxu0 %v1890
          %2483 = vmatprep.subr.bf16.mxu0 %v1883
          %2484 = vmatpush2.bf16.msra.mxu0 %v1882
          %2485 = vmatprep.subr.bf16.mxu0 %v1875
          %2486 = vmatpush2.bf16.msra.mxu0 %v1874
          %2487 = vmatprep.subr.bf16.mxu0 %v1867
          %2488 = vmatpush2.bf16.msra.mxu0 %v1866
          %2489 = vmatprep.subr.bf16.mxu0 %v1859
          %2490 = vmatpush2.bf16.msra.mxu0 %v1858
          %2491 = vmatprep.mubr.bf16.mxu0 %v593
          %2492 = vmatmul.mubr.bf16.gmra.mxu0 %v592
          %v2493 = vpop.f32.mrf.mxu0
          %v2494 = vadd.f32 %v2453, %v2493
          %v2495 = vpop.f32.mrf.mxu0
          %v2496 = vadd.f32 %v2455, %v2495
          %v2497 = vpop.f32.mrf.mxu0
          %v2498 = vpop.f32.mrf.mxu0
          %2499 = vdwg.mxu0
          %v2500 = vmax.f32 %v2248, 0.0
          %v2501 = vmax.f32 %v2250, 0.0
          %v2502 = vmax.f32 %v2330, 0.0
          %v2503 = vmax.f32 %v2332, 0.0
          %v2504 = vmax.f32 %v2412, 0.0
          %v2505 = vmax.f32 %v2414, 0.0
          %v2506 = vmax.f32 %v2494, 0.0
          %v2507 = vmax.f32 %v2496, 0.0
          %v2508 = vpack.c.bf16 %v2500, %v2500
          %v2509 = vpack.c.bf16 %v2501, %v2501
          %v2510 = vpack.c.bf16 %v2502, %v2502
          %v2511 = vpack.c.bf16 %v2503, %v2503
          %v2512 = vpack.c.bf16 %v2504, %v2504
          %v2513 = vpack.c.bf16 %v2505, %v2505
          %v2514 = vpack.c.bf16 %v2506, %v2506
          %v2515 = vpack.c.bf16 %v2507, %v2507
          %v2524 = vunpack.c.l.b16 %v2508
          %v2525 = vunpack.c.l.b16 %v2509
          %v2526 = vunpack.c.l.b16 %v2510
          %v2527 = vunpack.c.l.b16 %v2511
          %v2528 = vunpack.c.l.b16 %v2512
          %v2529 = vunpack.c.l.b16 %v2513
          %v2530 = vunpack.c.l.b16 %v2514
          %v2531 = vunpack.c.l.b16 %v2515
          %v2532 = vpack.c.b16 %v2525, %v2524
          %v2533 = vpack.c.b16 %v2527, %v2526
          %v2534 = vpack.c.b16 %v2529, %v2528
          %v2535 = vpack.c.b16 %v2531, %v2530
          %2540 = vst [vmem:[#allocation2] sm:$0xff] %v2532
          %2541 = vst [vmem:[#allocation2 + $0x8] sm:$0xff] %v2533
          %2542 = vst [vmem:[#allocation2 + $0x10] sm:$0xff] %v2534
          %2543 = vst [vmem:[#allocation2 + $0x18] sm:$0xff] %v2535
        $region80: #{tpu_custom_call.1} parent=47 // pred_fallthru
          _
        %v2544 = vld [vmem:[#allocation2] sm:$0xff]
        %v2545 = vld [vmem:[#allocation2 + $0x8] sm:$0xff]
        %v2546 = vld [vmem:[#allocation2 + $0x10] sm:$0xff]
        %v2547 = vld [vmem:[#allocation2 + $0x18] sm:$0xff]
        %v2548 = vld [vmem:[%s375] sm:$0xff]
        %v2549 = vld [vmem:[%s375 + $0x8] sm:$0xff]
        %v2550 = vld [vmem:[%s375 + $0x10] sm:$0xff]
        %v2551 = vld [vmem:[%s375 + $0x18] sm:$0xff]
        %v2552 = vld [vmem:[%s375 + $0x20] sm:$0xff]
        %v2553 = vld [vmem:[%s375 + $0x28] sm:$0xff]
        %v2554 = vld [vmem:[%s375 + $0x30] sm:$0xff]
        %v2555 = vld [vmem:[%s375 + $0x38] sm:$0xff]
        %v2556 = vld [vmem:[%s375 + $0x40] sm:$0xff]
        %v2557 = vld [vmem:[%s375 + $0x48] sm:$0xff]
        %v2558 = vld [vmem:[%s375 + $0x50] sm:$0xf]
        %v2559 = vld [vmem:[%s375 + $0x54] sm:$0xff]
        %v2560 = vld [vmem:[%s375 + $0x5c] sm:$0xff]
        %v2561 = vld [vmem:[%s375 + $0x64] sm:$0xff]
        %v2562 = vld [vmem:[%s375 + $0x6c] sm:$0xff]
        %v2563 = vld [vmem:[%s375 + $0x74] sm:$0xff]
        %v2564 = vld [vmem:[%s375 + $0x7c] sm:$0xff]
        %v2565 = vld [vmem:[%s375 + $0x84] sm:$0xff]
        %v2566 = vld [vmem:[%s375 + $0x8c] sm:$0xff]
        %v2567 = vld [vmem:[%s375 + $0x94] sm:$0xff]
        %v2568 = vld [vmem:[%s375 + $0x9c] sm:$0xff]
        %v2569 = vld [vmem:[%s375 + $0xa4] sm:$0xf]
        %v2570 = vld [vmem:[%s375 + $0xa8] sm:$0xff]
        %v2571 = vld [vmem:[%s375 + $0xb0] sm:$0xff]
        %v2572 = vld [vmem:[%s375 + $0xb8] sm:$0xff]
        %v2573 = vld [vmem:[%s375 + $0xc0] sm:$0xff]
        %v2574 = vld [vmem:[%s375 + $0xc8] sm:$0xff]
        %v2575 = vld [vmem:[%s375 + $0xd0] sm:$0xff]
        %v2576 = vld [vmem:[%s375 + $0xd8] sm:$0xff]
        %v2577 = vld [vmem:[%s375 + $0xe0] sm:$0xff]
        %v2578 = vld [vmem:[%s375 + $0xe8] sm:$0xff]
        %v2579 = vld [vmem:[%s375 + $0xf0] sm:$0xff]
        %v2580 = vld [vmem:[%s375 + $0xf8] sm:$0xf]
        %v2581 = vld [vmem:[%s375 + $0xfc] sm:$0xff]
        %v2582 = vld [vmem:[%s375 + $0x104] sm:$0xff]
        %v2583 = vld [vmem:[%s375 + $0x10c] sm:$0xff]
        %v2584 = vld [vmem:[%s375 + $0x114] sm:$0xff]
        %v2585 = vld [vmem:[%s375 + $0x11c] sm:$0xff]
        %v2586 = vld [vmem:[%s375 + $0x124] sm:$0xff]
        %v2587 = vld [vmem:[%s375 + $0x12c] sm:$0xff]
        %v2588 = vld [vmem:[%s375 + $0x134] sm:$0xff]
        %v2589 = vld [vmem:[%s375 + $0x13c] sm:$0xff]
        %v2590 = vld [vmem:[%s375 + $0x144] sm:$0xff]
        %v2591 = vld [vmem:[%s375 + $0x14c] sm:$0xf]
        %v2592 = vld [vmem:[%s375 + $0x150] sm:$0xff]
        %v2593 = vld [vmem:[%s375 + $0x158] sm:$0xff]
        %v2594 = vld [vmem:[%s375 + $0x160] sm:$0xff]
        %v2595 = vld [vmem:[%s375 + $0x168] sm:$0xff]
        %v2596 = vld [vmem:[%s375 + $0x170] sm:$0xff]
        %v2597 = vld [vmem:[%s375 + $0x178] sm:$0xff]
        %v2598 = vld [vmem:[%s375 + $0x180] sm:$0xff]
        %v2599 = vld [vmem:[%s375 + $0x188] sm:$0xff]
        %v2600 = vld [vmem:[%s375 + $0x190] sm:$0xff]
        %v2601 = vld [vmem:[%s375 + $0x198] sm:$0xff]
        %v2602 = vld [vmem:[%s375 + $0x1a0] sm:$0xf]
        %v2603 = vld [vmem:[%s375 + $0x1a4] sm:$0xff]
        %v2604 = vld [vmem:[%s375 + $0x1ac] sm:$0xff]
        %v2605 = vld [vmem:[%s375 + $0x1b4] sm:$0xff]
        %v2606 = vld [vmem:[%s375 + $0x1bc] sm:$0xff]
        %v2607 = vld [vmem:[%s375 + $0x1c4] sm:$0xff]
        %v2608 = vld [vmem:[%s375 + $0x1cc] sm:$0xff]
        %v2609 = vld [vmem:[%s375 + $0x1d4] sm:$0xff]
        %v2610 = vld [vmem:[%s375 + $0x1dc] sm:$0xff]
        %v2611 = vld [vmem:[%s375 + $0x1e4] sm:$0xff]
        %v2612 = vld [vmem:[%s375 + $0x1ec] sm:$0xff]
        %v2613 = vld [vmem:[%s375 + $0x1f4] sm:$0xf]
        %v2614 = vld [vmem:[%s375 + $0x1f8] sm:$0xff]
        %v2615 = vld [vmem:[%s375 + $0x200] sm:$0xff]
        %v2616 = vld [vmem:[%s375 + $0x208] sm:$0xff]
        %v2617 = vld [vmem:[%s375 + $0x210] sm:$0xff]
        %v2618 = vld [vmem:[%s375 + $0x218] sm:$0xff]
        %v2619 = vld [vmem:[%s375 + $0x220] sm:$0xff]
        %v2620 = vld [vmem:[%s375 + $0x228] sm:$0xff]
        %v2621 = vld [vmem:[%s375 + $0x230] sm:$0xff]
        %v2622 = vld [vmem:[%s375 + $0x238] sm:$0xff]
        %v2623 = vld [vmem:[%s375 + $0x240] sm:$0xff]
        %v2624 = vld [vmem:[%s375 + $0x248] sm:$0xf]
        %v2625 = vld [vmem:[%s375 + $0x24c] sm:$0xff]
        %v2626 = vld [vmem:[%s375 + $0x254] sm:$0xff]
        %v2627 = vld [vmem:[%s375 + $0x25c] sm:$0xff]
        %v2628 = vld [vmem:[%s375 + $0x264] sm:$0xff]
        %v2629 = vld [vmem:[%s375 + $0x26c] sm:$0xff]
        %v2630 = vld [vmem:[%s375 + $0x274] sm:$0xff]
        %v2631 = vld [vmem:[%s375 + $0x27c] sm:$0xff]
        %v2632 = vld [vmem:[%s375 + $0x284] sm:$0xff]
        %v2633 = vld [vmem:[%s375 + $0x28c] sm:$0xff]
        %v2634 = vld [vmem:[%s375 + $0x294] sm:$0xff]
        %v2635 = vld [vmem:[%s375 + $0x29c] sm:$0xf]
        %v2636 = vld [vmem:[%s375 + $0x2a0] sm:$0xff]
        %v2637 = vld [vmem:[%s375 + $0x2a8] sm:$0xff]
        %v2638 = vld [vmem:[%s375 + $0x2b0] sm:$0xff]
        %v2639 = vld [vmem:[%s375 + $0x2b8] sm:$0xff]
        %v2640 = vld [vmem:[%s375 + $0x2c0] sm:$0xff]
        %v2641 = vld [vmem:[%s375 + $0x2c8] sm:$0xff]
        %v2642 = vld [vmem:[%s375 + $0x2d0] sm:$0xff]
        %v2643 = vld [vmem:[%s375 + $0x2d8] sm:$0xff]
        %v2644 = vld [vmem:[%s375 + $0x2e0] sm:$0xff]
        %v2645 = vld [vmem:[%s375 + $0x2e8] sm:$0xff]
        %v2646 = vld [vmem:[%s375 + $0x2f0] sm:$0xf]
        %v2647 = vld [vmem:[%s375 + $0x2f4] sm:$0xff]
        %v2648 = vld [vmem:[%s375 + $0x2fc] sm:$0xff]
        %v2649 = vld [vmem:[%s375 + $0x304] sm:$0xff]
        %v2650 = vld [vmem:[%s375 + $0x30c] sm:$0xff]
        %v2651 = vld [vmem:[%s375 + $0x314] sm:$0xff]
        %v2652 = vld [vmem:[%s375 + $0x31c] sm:$0xff]
        %v2653 = vld [vmem:[%s375 + $0x324] sm:$0xff]
        %v2654 = vld [vmem:[%s375 + $0x32c] sm:$0xff]
        %v2655 = vld [vmem:[%s375 + $0x334] sm:$0xff]
        %v2656 = vld [vmem:[%s375 + $0x33c] sm:$0xff]
        %v2657 = vld [vmem:[%s375 + $0x344] sm:$0xf]
        %v2658 = vld [vmem:[%s375 + $0x348] sm:$0xff]
        %v2659 = vld [vmem:[%s375 + $0x350] sm:$0xff]
        %v2660 = vld [vmem:[%s375 + $0x358] sm:$0xff]
        %v2661 = vld [vmem:[%s375 + $0x360] sm:$0xff]
        %v2662 = vld [vmem:[%s375 + $0x368] sm:$0xff]
        %v2663 = vld [vmem:[%s375 + $0x370] sm:$0xff]
        %v2664 = vld [vmem:[%s375 + $0x378] sm:$0xff]
        %v2665 = vld [vmem:[%s375 + $0x380] sm:$0xff]
        %v2666 = vld [vmem:[%s375 + $0x388] sm:$0xff]
        %v2667 = vld [vmem:[%s375 + $0x390] sm:$0xff]
        %v2668 = vld [vmem:[%s375 + $0x398] sm:$0xf]
        %v2669 = vld [vmem:[%s375 + $0x39c] sm:$0xff]
        %v2670 = vld [vmem:[%s375 + $0x3a4] sm:$0xff]
        %v2671 = vld [vmem:[%s375 + $0x3ac] sm:$0xff]
        %v2672 = vld [vmem:[%s375 + $0x3b4] sm:$0xff]
        %v2673 = vld [vmem:[%s375 + $0x3bc] sm:$0xff]
        %v2674 = vld [vmem:[%s375 + $0x3c4] sm:$0xff]
        %v2675 = vld [vmem:[%s375 + $0x3cc] sm:$0xff]
        %v2676 = vld [vmem:[%s375 + $0x3d4] sm:$0xff]
        %v2677 = vld [vmem:[%s375 + $0x3dc] sm:$0xff]
        %v2678 = vld [vmem:[%s375 + $0x3e4] sm:$0xff]
        %v2679 = vld [vmem:[%s375 + $0x3ec] sm:$0xf]
        %v2680 = vld [vmem:[%s375 + $0x3f0] sm:$0xff]
        %v2681 = vld [vmem:[%s375 + $0x3f8] sm:$0xff]
        %v2682 = vld [vmem:[%s375 + $0x400] sm:$0xff]
        %v2683 = vld [vmem:[%s375 + $0x408] sm:$0xff]
        %v2684 = vld [vmem:[%s375 + $0x410] sm:$0xff]
        %v2685 = vld [vmem:[%s375 + $0x418] sm:$0xff]
        %v2686 = vld [vmem:[%s375 + $0x420] sm:$0xff]
        %v2687 = vld [vmem:[%s375 + $0x428] sm:$0xff]
        %v2688 = vld [vmem:[%s375 + $0x430] sm:$0xff]
        %v2689 = vld [vmem:[%s375 + $0x438] sm:$0xff]
        %v2690 = vld [vmem:[%s375 + $0x440] sm:$0xf]
        %v2691 = vld [vmem:[%s375 + $0x444] sm:$0xff]
        %v2692 = vld [vmem:[%s375 + $0x44c] sm:$0xff]
        %v2693 = vld [vmem:[%s375 + $0x454] sm:$0xff]
        %v2694 = vld [vmem:[%s375 + $0x45c] sm:$0xff]
        %v2695 = vld [vmem:[%s375 + $0x464] sm:$0xff]
        %v2696 = vld [vmem:[%s375 + $0x46c] sm:$0xff]
        %v2697 = vld [vmem:[%s375 + $0x474] sm:$0xff]
        %v2698 = vld [vmem:[%s375 + $0x47c] sm:$0xff]
        %v2699 = vld [vmem:[%s375 + $0x484] sm:$0xff]
        %v2700 = vld [vmem:[%s375 + $0x48c] sm:$0xff]
        %v2701 = vld [vmem:[%s375 + $0x494] sm:$0xf]
        %v2702 = vld [vmem:[%s375 + $0x498] sm:$0xff]
        %v2703 = vld [vmem:[%s375 + $0x4a0] sm:$0xff]
        %v2704 = vld [vmem:[%s375 + $0x4a8] sm:$0xff]
        %v2705 = vld [vmem:[%s375 + $0x4b0] sm:$0xff]
        %v2706 = vld [vmem:[%s375 + $0x4b8] sm:$0xff]
        %v2707 = vld [vmem:[%s375 + $0x4c0] sm:$0xff]
        %v2708 = vld [vmem:[%s375 + $0x4c8] sm:$0xff]
        %v2709 = vld [vmem:[%s375 + $0x4d0] sm:$0xff]
        %v2710 = vld [vmem:[%s375 + $0x4d8] sm:$0xff]
        %v2711 = vld [vmem:[%s375 + $0x4e0] sm:$0xff]
        %v2712 = vld [vmem:[%s375 + $0x4e8] sm:$0xf]
        %v2713 = vld [vmem:[%s375 + $0x4ec] sm:$0xff]
        %v2714 = vld [vmem:[%s375 + $0x4f4] sm:$0xff]
        %v2715 = vld [vmem:[%s375 + $0x4fc] sm:$0xff]
        %v2716 = vld [vmem:[%s375 + $0x504] sm:$0xff]
        %v2717 = vld [vmem:[%s375 + $0x50c] sm:$0xff]
        %v2718 = vld [vmem:[%s375 + $0x514] sm:$0xff]
        %v2719 = vld [vmem:[%s375 + $0x51c] sm:$0xff]
        %v2720 = vld [vmem:[%s375 + $0x524] sm:$0xff]
        %v2721 = vld [vmem:[%s375 + $0x52c] sm:$0xff]
        %v2722 = vld [vmem:[%s375 + $0x534] sm:$0xff]
        %v2723 = vld [vmem:[%s375 + $0x53c] sm:$0xf]
        %v2724 = vld [vmem:[%s375 + $0x540] sm:$0xff]
        %v2725 = vld [vmem:[%s375 + $0x548] sm:$0xff]
        %v2726 = vld [vmem:[%s375 + $0x550] sm:$0xff]
        %v2727 = vld [vmem:[%s375 + $0x558] sm:$0xff]
        %v2728 = vld [vmem:[%s375 + $0x560] sm:$0xff]
        %v2729 = vld [vmem:[%s375 + $0x568] sm:$0xff]
        %v2730 = vld [vmem:[%s375 + $0x570] sm:$0xff]
        %v2731 = vld [vmem:[%s375 + $0x578] sm:$0xff]
        %v2732 = vld [vmem:[%s375 + $0x580] sm:$0xff]
        %v2733 = vld [vmem:[%s375 + $0x588] sm:$0xff]
        %v2734 = vld [vmem:[%s375 + $0x590] sm:$0xf]
        %v2735 = vld [vmem:[%s375 + $0x594] sm:$0xff]
        %v2736 = vld [vmem:[%s375 + $0x59c] sm:$0xff]
        %v2737 = vld [vmem:[%s375 + $0x5a4] sm:$0xff]
        %v2738 = vld [vmem:[%s375 + $0x5ac] sm:$0xff]
        %v2739 = vld [vmem:[%s375 + $0x5b4] sm:$0xff]
        %v2740 = vld [vmem:[%s375 + $0x5bc] sm:$0xff]
        %v2741 = vld [vmem:[%s375 + $0x5c4] sm:$0xff]
        %v2742 = vld [vmem:[%s375 + $0x5cc] sm:$0xff]
        %v2743 = vld [vmem:[%s375 + $0x5d4] sm:$0xff]
        %v2744 = vld [vmem:[%s375 + $0x5dc] sm:$0xff]
        %v2745 = vld [vmem:[%s375 + $0x5e4] sm:$0xf]
        %v2746 = vld [vmem:[%s375 + $0x5e8] sm:$0xff]
        %v2747 = vld [vmem:[%s375 + $0x5f0] sm:$0xff]
        %v2748 = vld [vmem:[%s375 + $0x5f8] sm:$0xff]
        %v2749 = vld [vmem:[%s375 + $0x600] sm:$0xff]
        %v2750 = vld [vmem:[%s375 + $0x608] sm:$0xff]
        %v2751 = vld [vmem:[%s375 + $0x610] sm:$0xff]
        %v2752 = vld [vmem:[%s375 + $0x618] sm:$0xff]
        %v2753 = vld [vmem:[%s375 + $0x620] sm:$0xff]
        %v2754 = vld [vmem:[%s375 + $0x628] sm:$0xff]
        %v2755 = vld [vmem:[%s375 + $0x630] sm:$0xff]
        %v2756 = vld [vmem:[%s375 + $0x638] sm:$0xf]
        %v2757 = vld [vmem:[%s375 + $0x63c] sm:$0xff]
        %v2758 = vld [vmem:[%s375 + $0x644] sm:$0xff]
        %v2759 = vld [vmem:[%s375 + $0x64c] sm:$0xff]
        %v2760 = vld [vmem:[%s375 + $0x654] sm:$0xff]
        %v2761 = vld [vmem:[%s375 + $0x65c] sm:$0xff]
        %v2762 = vld [vmem:[%s375 + $0x664] sm:$0xff]
        %v2763 = vld [vmem:[%s375 + $0x66c] sm:$0xff]
        %v2764 = vld [vmem:[%s375 + $0x674] sm:$0xff]
        %v2765 = vld [vmem:[%s375 + $0x67c] sm:$0xff]
        %v2766 = vld [vmem:[%s375 + $0x684] sm:$0xff]
        %v2767 = vld [vmem:[%s375 + $0x68c] sm:$0xf]
        %v2768 = vld [vmem:[%s375 + $0x690] sm:$0xff]
        %v2769 = vld [vmem:[%s375 + $0x698] sm:$0xff]
        %v2770 = vld [vmem:[%s375 + $0x6a0] sm:$0xff]
        %v2771 = vld [vmem:[%s375 + $0x6a8] sm:$0xff]
        %v2772 = vld [vmem:[%s375 + $0x6b0] sm:$0xff]
        %v2773 = vld [vmem:[%s375 + $0x6b8] sm:$0xff]
        %v2774 = vld [vmem:[%s375 + $0x6c0] sm:$0xff]
        %v2775 = vld [vmem:[%s375 + $0x6c8] sm:$0xff]
        %v2776 = vld [vmem:[%s375 + $0x6d0] sm:$0xff]
        %v2777 = vld [vmem:[%s375 + $0x6d8] sm:$0xff]
        %v2778 = vld [vmem:[%s375 + $0x6e0] sm:$0xf]
        %v2779 = vld [vmem:[%s375 + $0x6e4] sm:$0xff]
        %v2780 = vld [vmem:[%s375 + $0x6ec] sm:$0xff]
        %v2781 = vld [vmem:[%s375 + $0x6f4] sm:$0xff]
        %v2782 = vld [vmem:[%s375 + $0x6fc] sm:$0xff]
        %v2783 = vld [vmem:[%s375 + $0x704] sm:$0xff]
        %v2784 = vld [vmem:[%s375 + $0x70c] sm:$0xff]
        %v2785 = vld [vmem:[%s375 + $0x714] sm:$0xff]
        %v2786 = vld [vmem:[%s375 + $0x71c] sm:$0xff]
        %v2787 = vld [vmem:[%s375 + $0x724] sm:$0xff]
        %v2788 = vld [vmem:[%s375 + $0x72c] sm:$0xff]
        %v2789 = vld [vmem:[%s375 + $0x734] sm:$0xf]
        %v2790 = vld [vmem:[%s375 + $0x738] sm:$0xff]
        %v2791 = vld [vmem:[%s375 + $0x740] sm:$0xff]
        %v2792 = vld [vmem:[%s375 + $0x748] sm:$0xff]
        %v2793 = vld [vmem:[%s375 + $0x750] sm:$0xff]
        %v2794 = vld [vmem:[%s375 + $0x758] sm:$0xff]
        %v2795 = vld [vmem:[%s375 + $0x760] sm:$0xff]
        %v2796 = vld [vmem:[%s375 + $0x768] sm:$0xff]
        %v2797 = vld [vmem:[%s375 + $0x770] sm:$0xff]
        %v2798 = vld [vmem:[%s375 + $0x778] sm:$0xff]
        %v2799 = vld [vmem:[%s375 + $0x780] sm:$0xff]
        %v2800 = vld [vmem:[%s375 + $0x788] sm:$0xf]
        %v2801 = vld [vmem:[%s375 + $0x78c] sm:$0xff]
        %v2802 = vld [vmem:[%s375 + $0x794] sm:$0xff]
        %v2803 = vld [vmem:[%s375 + $0x79c] sm:$0xff]
        %v2804 = vld [vmem:[%s375 + $0x7a4] sm:$0xff]
        %v2805 = vld [vmem:[%s375 + $0x7ac] sm:$0xff]
        %v2806 = vld [vmem:[%s375 + $0x7b4] sm:$0xff]
        %v2807 = vld [vmem:[%s375 + $0x7bc] sm:$0xff]
        %v2808 = vld [vmem:[%s375 + $0x7c4] sm:$0xff]
        %v2809 = vld [vmem:[%s375 + $0x7cc] sm:$0xff]
        %v2810 = vld [vmem:[%s375 + $0x7d4] sm:$0xff]
        %v2811 = vld [vmem:[%s375 + $0x7dc] sm:$0xf]
        %v2812 = vld [vmem:[%s375 + $0x7e0] sm:$0xff]
        %v2813 = vld [vmem:[%s375 + $0x7e8] sm:$0xff]
        %v2814 = vld [vmem:[%s375 + $0x7f0] sm:$0xff]
        %v2815 = vld [vmem:[%s375 + $0x7f8] sm:$0xff]
        %v2816 = vld [vmem:[%s375 + $0x800] sm:$0xff]
        %v2817 = vld [vmem:[%s375 + $0x808] sm:$0xff]
        %v2818 = vld [vmem:[%s375 + $0x810] sm:$0xff]
        %v2819 = vld [vmem:[%s375 + $0x818] sm:$0xff]
        %v2820 = vld [vmem:[%s375 + $0x820] sm:$0xff]
        %v2821 = vld [vmem:[%s375 + $0x828] sm:$0xff]
        %v2822 = vld [vmem:[%s375 + $0x830] sm:$0xf]
        %v2823 = vld [vmem:[%s375 + $0x834] sm:$0xff]
        %v2824 = vld [vmem:[%s375 + $0x83c] sm:$0xff]
        %v2825 = vld [vmem:[%s375 + $0x844] sm:$0xff]
        %v2826 = vld [vmem:[%s375 + $0x84c] sm:$0xff]
        %v2827 = vld [vmem:[%s375 + $0x854] sm:$0xff]
        %v2828 = vld [vmem:[%s375 + $0x85c] sm:$0xff]
        %v2829 = vld [vmem:[%s375 + $0x864] sm:$0xff]
        %v2830 = vld [vmem:[%s375 + $0x86c] sm:$0xff]
        %v2831 = vld [vmem:[%s375 + $0x874] sm:$0xff]
        %v2832 = vld [vmem:[%s375 + $0x87c] sm:$0xff]
        %v2833 = vld [vmem:[%s375 + $0x884] sm:$0xf]
        %v2834 = vld [vmem:[%s375 + $0x888] sm:$0xff]
        %v2835 = vld [vmem:[%s375 + $0x890] sm:$0xff]
        %v2836 = vld [vmem:[%s375 + $0x898] sm:$0xff]
        %v2837 = vld [vmem:[%s375 + $0x8a0] sm:$0xff]
        %v2838 = vld [vmem:[%s375 + $0x8a8] sm:$0xff]
        %v2839 = vld [vmem:[%s375 + $0x8b0] sm:$0xff]
        %v2840 = vld [vmem:[%s375 + $0x8b8] sm:$0xff]
        %v2841 = vld [vmem:[%s375 + $0x8c0] sm:$0xff]
        %v2842 = vld [vmem:[%s375 + $0x8c8] sm:$0xff]
        %v2843 = vld [vmem:[%s375 + $0x8d0] sm:$0xff]
        %v2844 = vld [vmem:[%s375 + $0x8d8] sm:$0xf]
        %v2845 = vld [vmem:[%s375 + $0x8dc] sm:$0xff]
        %v2846 = vld [vmem:[%s375 + $0x8e4] sm:$0xff]
        %v2847 = vld [vmem:[%s375 + $0x8ec] sm:$0xff]
        %v2848 = vld [vmem:[%s375 + $0x8f4] sm:$0xff]
        %v2849 = vld [vmem:[%s375 + $0x8fc] sm:$0xff]
        %v2850 = vld [vmem:[%s375 + $0x904] sm:$0xff]
        %v2851 = vld [vmem:[%s375 + $0x90c] sm:$0xff]
        %v2852 = vld [vmem:[%s375 + $0x914] sm:$0xff]
        %v2853 = vld [vmem:[%s375 + $0x91c] sm:$0xff]
        %v2854 = vld [vmem:[%s375 + $0x924] sm:$0xff]
        %v2855 = vld [vmem:[%s375 + $0x92c] sm:$0xf]
        %v2856 = vld [vmem:[%s375 + $0x930] sm:$0xff]
        %v2857 = vld [vmem:[%s375 + $0x938] sm:$0xff]
        %v2858 = vld [vmem:[%s375 + $0x940] sm:$0xff]
        %v2859 = vld [vmem:[%s375 + $0x948] sm:$0xff]
        %v2860 = vld [vmem:[%s375 + $0x950] sm:$0xff]
        %v2861 = vld [vmem:[%s375 + $0x958] sm:$0xff]
        %v2862 = vld [vmem:[%s375 + $0x960] sm:$0xff]
        %v2863 = vld [vmem:[%s375 + $0x968] sm:$0xff]
        %v2864 = vld [vmem:[%s375 + $0x970] sm:$0xff]
        %v2865 = vld [vmem:[%s375 + $0x978] sm:$0xff]
        %v2866 = vld [vmem:[%s375 + $0x980] sm:$0xf]
        %v2867 = vld [vmem:[%s375 + $0x984] sm:$0xff]
        %v2868 = vld [vmem:[%s375 + $0x98c] sm:$0xff]
        %v2869 = vld [vmem:[%s375 + $0x994] sm:$0xff]
        %v2870 = vld [vmem:[%s375 + $0x99c] sm:$0xff]
        %v2871 = vld [vmem:[%s375 + $0x9a4] sm:$0xff]
        %v2872 = vld [vmem:[%s375 + $0x9ac] sm:$0xff]
        %v2873 = vld [vmem:[%s375 + $0x9b4] sm:$0xff]
        %v2874 = vld [vmem:[%s375 + $0x9bc] sm:$0xff]
        %v2875 = vld [vmem:[%s375 + $0x9c4] sm:$0xff]
        %v2876 = vld [vmem:[%s375 + $0x9cc] sm:$0xff]
        %v2877 = vld [vmem:[%s375 + $0x9d4] sm:$0xf]
        %v2878 = vld [vmem:[%s375 + $0x9d8] sm:$0xff]
        %v2879 = vld [vmem:[%s375 + $0x9e0] sm:$0xff]
        %v2880 = vld [vmem:[%s375 + $0x9e8] sm:$0xff]
        %v2881 = vld [vmem:[%s375 + $0x9f0] sm:$0xff]
        %v2882 = vld [vmem:[%s375 + $0x9f8] sm:$0xff]
        %v2883 = vld [vmem:[%s375 + $0xa00] sm:$0xff]
        %v2884 = vld [vmem:[%s375 + $0xa08] sm:$0xff]
        %v2885 = vld [vmem:[%s375 + $0xa10] sm:$0xff]
        %v2886 = vld [vmem:[%s375 + $0xa18] sm:$0xff]
        %v2887 = vld [vmem:[%s375 + $0xa20] sm:$0xff]
        %v2888 = vld [vmem:[%s375 + $0xa28] sm:$0xf]
        %v2889 = vld [vmem:[%s375 + $0xa2c] sm:$0xff]
        %v2890 = vld [vmem:[%s375 + $0xa34] sm:$0xff]
        %v2891 = vld [vmem:[%s375 + $0xa3c] sm:$0xff]
        %v2892 = vld [vmem:[%s375 + $0xa44] sm:$0xff]
        %v2893 = vld [vmem:[%s375 + $0xa4c] sm:$0xff]
        %v2894 = vld [vmem:[%s375 + $0xa54] sm:$0xff]
        %v2895 = vld [vmem:[%s375 + $0xa5c] sm:$0xff]
        %v2896 = vld [vmem:[%s375 + $0xa64] sm:$0xff]
        %v2897 = vld [vmem:[%s375 + $0xa6c] sm:$0xff]
        %v2898 = vld [vmem:[%s375 + $0xa74] sm:$0xff]
        %v2899 = vld [vmem:[%s375 + $0xa7c] sm:$0xf]
        %v2900 = vld [vmem:[%s375 + $0xa80] sm:$0xff]
        %v2901 = vld [vmem:[%s375 + $0xa88] sm:$0xff]
        %v2902 = vld [vmem:[%s375 + $0xa90] sm:$0xff]
        %v2903 = vld [vmem:[%s375 + $0xa98] sm:$0xff]
        %v2904 = vld [vmem:[%s375 + $0xaa0] sm:$0xff]
        %v2905 = vld [vmem:[%s375 + $0xaa8] sm:$0xff]
        %v2906 = vld [vmem:[%s375 + $0xab0] sm:$0xff]
        %v2907 = vld [vmem:[%s375 + $0xab8] sm:$0xff]
        %v2908 = vld [vmem:[%s375 + $0xac0] sm:$0xff]
        %v2909 = vld [vmem:[%s375 + $0xac8] sm:$0xff]
        %v2910 = vld [vmem:[%s375 + $0xad0] sm:$0xf]
        %v2911 = vld [vmem:[%s375 + $0xad4] sm:$0xff]
        %v2912 = vld [vmem:[%s375 + $0xadc] sm:$0xff]
        %v2913 = vld [vmem:[%s375 + $0xae4] sm:$0xff]
        %v2914 = vld [vmem:[%s375 + $0xaec] sm:$0xff]
        %v2915 = vld [vmem:[%s375 + $0xaf4] sm:$0xff]
        %v2916 = vld [vmem:[%s375 + $0xafc] sm:$0xff]
        %v2917 = vld [vmem:[%s375 + $0xb04] sm:$0xff]
        %v2918 = vld [vmem:[%s375 + $0xb0c] sm:$0xff]
        %v2919 = vld [vmem:[%s375 + $0xb14] sm:$0xff]
        %v2920 = vld [vmem:[%s375 + $0xb1c] sm:$0xff]
        %v2921 = vld [vmem:[%s375 + $0xb24] sm:$0xf]
        %v2922 = vld [vmem:[%s375 + $0xb28] sm:$0xff]
        %v2923 = vld [vmem:[%s375 + $0xb30] sm:$0xff]
        %v2924 = vld [vmem:[%s375 + $0xb38] sm:$0xff]
        %v2925 = vld [vmem:[%s375 + $0xb40] sm:$0xff]
        %v2926 = vld [vmem:[%s375 + $0xb48] sm:$0xff]
        %v2927 = vld [vmem:[%s375 + $0xb50] sm:$0xff]
        %v2928 = vld [vmem:[%s375 + $0xb58] sm:$0xff]
        %v2929 = vld [vmem:[%s375 + $0xb60] sm:$0xff]
        %v2930 = vld [vmem:[%s375 + $0xb68] sm:$0xff]
        %v2931 = vld [vmem:[%s375 + $0xb70] sm:$0xff]
        %v2932 = vld [vmem:[%s375 + $0xb78] sm:$0xf]
        %v2933 = vld [vmem:[%s375 + $0xb7c] sm:$0xff]
        %v2934 = vld [vmem:[%s375 + $0xb84] sm:$0xff]
        %v2935 = vld [vmem:[%s375 + $0xb8c] sm:$0xff]
        %v2936 = vld [vmem:[%s375 + $0xb94] sm:$0xff]
        %v2937 = vld [vmem:[%s375 + $0xb9c] sm:$0xff]
        %v2938 = vld [vmem:[%s375 + $0xba4] sm:$0xff]
        %v2939 = vld [vmem:[%s375 + $0xbac] sm:$0xff]
        %v2940 = vld [vmem:[%s375 + $0xbb4] sm:$0xff]
        %v2941 = vld [vmem:[%s375 + $0xbbc] sm:$0xff]
        %v2942 = vld [vmem:[%s375 + $0xbc4] sm:$0xff]
        %v2943 = vld [vmem:[%s375 + $0xbcc] sm:$0xf]
        %v2944 = vld [vmem:[%s375 + $0xbd0] sm:$0xff]
        %v2945 = vld [vmem:[%s375 + $0xbd8] sm:$0xff]
        %v2946 = vld [vmem:[%s375 + $0xbe0] sm:$0xff]
        %v2947 = vld [vmem:[%s375 + $0xbe8] sm:$0xff]
        %v2948 = vld [vmem:[%s375 + $0xbf0] sm:$0xff]
        %v2949 = vld [vmem:[%s375 + $0xbf8] sm:$0xff]
        %v2950 = vld [vmem:[%s375 + $0xc00] sm:$0xff]
        %v2951 = vld [vmem:[%s375 + $0xc08] sm:$0xff]
        %v2952 = vld [vmem:[%s375 + $0xc10] sm:$0xff]
        %v2953 = vld [vmem:[%s375 + $0xc18] sm:$0xff]
        %v2954 = vld [vmem:[%s375 + $0xc20] sm:$0xf]
        %v2955 = vld [vmem:[%s375 + $0xc24] sm:$0xff]
        %v2956 = vld [vmem:[%s375 + $0xc2c] sm:$0xff]
        %v2957 = vld [vmem:[%s375 + $0xc34] sm:$0xff]
        %v2958 = vld [vmem:[%s375 + $0xc3c] sm:$0xff]
        %v2959 = vld [vmem:[%s375 + $0xc44] sm:$0xff]
        %v2960 = vld [vmem:[%s375 + $0xc4c] sm:$0xff]
        %v2961 = vld [vmem:[%s375 + $0xc54] sm:$0xff]
        %v2962 = vld [vmem:[%s375 + $0xc5c] sm:$0xff]
        %v2963 = vld [vmem:[%s375 + $0xc64] sm:$0xff]
        %v2964 = vld [vmem:[%s375 + $0xc6c] sm:$0xff]
        %v2965 = vld [vmem:[%s375 + $0xc74] sm:$0xf]
        %v2966 = vld [vmem:[%s375 + $0xc78] sm:$0xff]
        %v2967 = vld [vmem:[%s375 + $0xc80] sm:$0xff]
        %v2968 = vld [vmem:[%s375 + $0xc88] sm:$0xff]
        %v2969 = vld [vmem:[%s375 + $0xc90] sm:$0xff]
        %v2970 = vld [vmem:[%s375 + $0xc98] sm:$0xff]
        %v2971 = vld [vmem:[%s375 + $0xca0] sm:$0xff]
        %v2972 = vld [vmem:[%s375 + $0xca8] sm:$0xff]
        %v2973 = vld [vmem:[%s375 + $0xcb0] sm:$0xff]
        %v2974 = vld [vmem:[%s375 + $0xcb8] sm:$0xff]
        %v2975 = vld [vmem:[%s375 + $0xcc0] sm:$0xff]
        %v2976 = vld [vmem:[%s375 + $0xcc8] sm:$0xf]
        %v2977 = vld [vmem:[%s375 + $0xccc] sm:$0xff]
        %v2978 = vld [vmem:[%s375 + $0xcd4] sm:$0xff]
        %v2979 = vld [vmem:[%s375 + $0xcdc] sm:$0xff]
        %v2980 = vld [vmem:[%s375 + $0xce4] sm:$0xff]
        %v2981 = vld [vmem:[%s375 + $0xcec] sm:$0xff]
        %v2982 = vld [vmem:[%s375 + $0xcf4] sm:$0xff]
        %v2983 = vld [vmem:[%s375 + $0xcfc] sm:$0xff]
        %v2984 = vld [vmem:[%s375 + $0xd04] sm:$0xff]
        %v2985 = vld [vmem:[%s375 + $0xd0c] sm:$0xff]
        %v2986 = vld [vmem:[%s375 + $0xd14] sm:$0xff]
        %v2987 = vld [vmem:[%s375 + $0xd1c] sm:$0xf]
        %v2988 = vld [vmem:[%s375 + $0xd20] sm:$0xff]
        %v2989 = vld [vmem:[%s375 + $0xd28] sm:$0xff]
        %v2990 = vld [vmem:[%s375 + $0xd30] sm:$0xff]
        %v2991 = vld [vmem:[%s375 + $0xd38] sm:$0xff]
        %v2992 = vld [vmem:[%s375 + $0xd40] sm:$0xff]
        %v2993 = vld [vmem:[%s375 + $0xd48] sm:$0xff]
        %v2994 = vld [vmem:[%s375 + $0xd50] sm:$0xff]
        %v2995 = vld [vmem:[%s375 + $0xd58] sm:$0xff]
        %v2996 = vld [vmem:[%s375 + $0xd60] sm:$0xff]
        %v2997 = vld [vmem:[%s375 + $0xd68] sm:$0xff]
        %v2998 = vld [vmem:[%s375 + $0xd70] sm:$0xf]
        %v2999 = vld [vmem:[%s375 + $0xd74] sm:$0xff]
        %v3000 = vld [vmem:[%s375 + $0xd7c] sm:$0xff]
        %v3001 = vld [vmem:[%s375 + $0xd84] sm:$0xff]
        %v3002 = vld [vmem:[%s375 + $0xd8c] sm:$0xff]
        %v3003 = vld [vmem:[%s375 + $0xd94] sm:$0xff]
        %v3004 = vld [vmem:[%s375 + $0xd9c] sm:$0xff]
        %v3005 = vld [vmem:[%s375 + $0xda4] sm:$0xff]
        %v3006 = vld [vmem:[%s375 + $0xdac] sm:$0xff]
        %v3007 = vld [vmem:[%s375 + $0xdb4] sm:$0xff]
        %v3008 = vld [vmem:[%s375 + $0xdbc] sm:$0xff]
        %v3009 = vld [vmem:[%s375 + $0xdc4] sm:$0xf]
        %v3010 = vld [vmem:[%s375 + $0xdc8] sm:$0xff]
        %v3011 = vld [vmem:[%s375 + $0xdd0] sm:$0xff]
        %v3012 = vld [vmem:[%s375 + $0xdd8] sm:$0xff]
        %v3013 = vld [vmem:[%s375 + $0xde0] sm:$0xff]
        %v3014 = vld [vmem:[%s375 + $0xde8] sm:$0xff]
        %v3015 = vld [vmem:[%s375 + $0xdf0] sm:$0xff]
        %v3016 = vld [vmem:[%s375 + $0xdf8] sm:$0xff]
        %v3017 = vld [vmem:[%s375 + $0xe00] sm:$0xff]
        %v3018 = vld [vmem:[%s375 + $0xe08] sm:$0xff]
        %v3019 = vld [vmem:[%s375 + $0xe10] sm:$0xff]
        %v3020 = vld [vmem:[%s375 + $0xe18] sm:$0xf]
        %v3021 = vld [vmem:[%s375 + $0xe1c] sm:$0xff]
        %v3022 = vld [vmem:[%s375 + $0xe24] sm:$0xff]
        %v3023 = vld [vmem:[%s375 + $0xe2c] sm:$0xff]
        %v3024 = vld [vmem:[%s375 + $0xe34] sm:$0xff]
        %v3025 = vld [vmem:[%s375 + $0xe3c] sm:$0xff]
        %v3026 = vld [vmem:[%s375 + $0xe44] sm:$0xff]
        %v3027 = vld [vmem:[%s375 + $0xe4c] sm:$0xff]
        %v3028 = vld [vmem:[%s375 + $0xe54] sm:$0xff]
        %v3029 = vld [vmem:[%s375 + $0xe5c] sm:$0xff]
        %v3030 = vld [vmem:[%s375 + $0xe64] sm:$0xff]
        %v3031 = vld [vmem:[%s375 + $0xe6c] sm:$0xf]
        %v3032 = vld [vmem:[%s375 + $0xe70] sm:$0xff]
        %v3033 = vld [vmem:[%s375 + $0xe78] sm:$0xff]
        %v3034 = vld [vmem:[%s375 + $0xe80] sm:$0xff]
        %v3035 = vld [vmem:[%s375 + $0xe88] sm:$0xff]
        %v3036 = vld [vmem:[%s375 + $0xe90] sm:$0xff]
        %v3037 = vld [vmem:[%s375 + $0xe98] sm:$0xff]
        %v3038 = vld [vmem:[%s375 + $0xea0] sm:$0xff]
        %v3039 = vld [vmem:[%s375 + $0xea8] sm:$0xff]
        %v3040 = vld [vmem:[%s375 + $0xeb0] sm:$0xff]
        %v3041 = vld [vmem:[%s375 + $0xeb8] sm:$0xff]
        %v3042 = vld [vmem:[%s375 + $0xec0] sm:$0xf]
        %v3043 = vld [vmem:[%s375 + $0xec4] sm:$0xff]
        %v3044 = vld [vmem:[%s375 + $0xecc] sm:$0xff]
        %v3045 = vld [vmem:[%s375 + $0xed4] sm:$0xff]
        %v3046 = vld [vmem:[%s375 + $0xedc] sm:$0xff]
        %v3047 = vld [vmem:[%s375 + $0xee4] sm:$0xff]
        %v3048 = vld [vmem:[%s375 + $0xeec] sm:$0xff]
        %v3049 = vld [vmem:[%s375 + $0xef4] sm:$0xff]
        %v3050 = vld [vmem:[%s375 + $0xefc] sm:$0xff]
        %v3051 = vld [vmem:[%s375 + $0xf04] sm:$0xff]
        %v3052 = vld [vmem:[%s375 + $0xf0c] sm:$0xff]
        %v3053 = vld [vmem:[%s375 + $0xf14] sm:$0xf]
        %v3054 = vld [vmem:[%s375 + $0xf18] sm:$0xff]
        %v3055 = vld [vmem:[%s375 + $0xf20] sm:$0xff]
        %v3056 = vld [vmem:[%s375 + $0xf28] sm:$0xff]
        %v3057 = vld [vmem:[%s375 + $0xf30] sm:$0xff]
        %v3058 = vld [vmem:[%s375 + $0xf38] sm:$0xff]
        %v3059 = vld [vmem:[%s375 + $0xf40] sm:$0xff]
        %v3060 = vld [vmem:[%s375 + $0xf48] sm:$0xff]
        %v3061 = vld [vmem:[%s375 + $0xf50] sm:$0xff]
        %v3062 = vld [vmem:[%s375 + $0xf58] sm:$0xff]
        %v3063 = vld [vmem:[%s375 + $0xf60] sm:$0xff]
        %v3064 = vld [vmem:[%s375 + $0xf68] sm:$0xf]
        %v3065 = vld [vmem:[%s375 + $0xf6c] sm:$0xff]
        %v3066 = vld [vmem:[%s375 + $0xf74] sm:$0xff]
        %v3067 = vld [vmem:[%s375 + $0xf7c] sm:$0xff]
        %v3068 = vld [vmem:[%s375 + $0xf84] sm:$0xff]
        %v3069 = vld [vmem:[%s375 + $0xf8c] sm:$0xff]
        %v3070 = vld [vmem:[%s375 + $0xf94] sm:$0xff]
        %v3071 = vld [vmem:[%s375 + $0xf9c] sm:$0xff]
        %v3072 = vld [vmem:[%s375 + $0xfa4] sm:$0xff]
        %v3073 = vld [vmem:[%s375 + $0xfac] sm:$0xff]
        %v3074 = vld [vmem:[%s375 + $0xfb4] sm:$0xff]
        %v3075 = vld [vmem:[%s375 + $0xfbc] sm:$0xf]
        %v3076 = vld [vmem:[%s375 + $0xfc0] sm:$0xff]
        %v3077 = vld [vmem:[%s375 + $0xfc8] sm:$0xff]
        %v3078 = vld [vmem:[%s375 + $0xfd0] sm:$0xff]
        %v3079 = vld [vmem:[%s375 + $0xfd8] sm:$0xff]
        %v3080 = vld [vmem:[%s375 + $0xfe0] sm:$0xff]
        %v3081 = vld [vmem:[%s375 + $0xfe8] sm:$0xff]
        %v3082 = vld [vmem:[%s375 + $0xff0] sm:$0xff]
        %v3083 = vld [vmem:[%s375 + $0xff8] sm:$0xff]
        %v3084 = vld [vmem:[%s375 + $0x1000] sm:$0xff]
        %v3085 = vld [vmem:[%s375 + $0x1008] sm:$0xff]
        %v3086 = vld [vmem:[%s375 + $0x1010] sm:$0xf]
        %v3087 = vld [vmem:[%s375 + $0x1014] sm:$0xff]
        %v3088 = vld [vmem:[%s375 + $0x101c] sm:$0xff]
        %v3089 = vld [vmem:[%s375 + $0x1024] sm:$0xff]
        %v3090 = vld [vmem:[%s375 + $0x102c] sm:$0xff]
        %v3091 = vld [vmem:[%s375 + $0x1034] sm:$0xff]
        %v3092 = vld [vmem:[%s375 + $0x103c] sm:$0xff]
        %v3093 = vld [vmem:[%s375 + $0x1044] sm:$0xff]
        %v3094 = vld [vmem:[%s375 + $0x104c] sm:$0xff]
        %v3095 = vld [vmem:[%s375 + $0x1054] sm:$0xff]
        %v3096 = vld [vmem:[%s375 + $0x105c] sm:$0xff]
        %v3097 = vld [vmem:[%s375 + $0x1064] sm:$0xf]
        %v3098 = vld [vmem:[%s375 + $0x1068] sm:$0xff]
        %v3099 = vld [vmem:[%s375 + $0x1070] sm:$0xff]
        %v3100 = vld [vmem:[%s375 + $0x1078] sm:$0xff]
        %v3101 = vld [vmem:[%s375 + $0x1080] sm:$0xff]
        %v3102 = vld [vmem:[%s375 + $0x1088] sm:$0xff]
        %v3103 = vld [vmem:[%s375 + $0x1090] sm:$0xff]
        %v3104 = vld [vmem:[%s375 + $0x1098] sm:$0xff]
        %v3105 = vld [vmem:[%s375 + $0x10a0] sm:$0xff]
        %v3106 = vld [vmem:[%s375 + $0x10a8] sm:$0xff]
        %v3107 = vld [vmem:[%s375 + $0x10b0] sm:$0xff]
        %v3108 = vld [vmem:[%s375 + $0x10b8] sm:$0xf]
        %v3109 = vld [vmem:[%s375 + $0x10bc] sm:$0xff]
        %v3110 = vld [vmem:[%s375 + $0x10c4] sm:$0xff]
        %v3111 = vld [vmem:[%s375 + $0x10cc] sm:$0xff]
        %v3112 = vld [vmem:[%s375 + $0x10d4] sm:$0xff]
        %v3113 = vld [vmem:[%s375 + $0x10dc] sm:$0xff]
        %v3114 = vld [vmem:[%s375 + $0x10e4] sm:$0xff]
        %v3115 = vld [vmem:[%s375 + $0x10ec] sm:$0xff]
        %v3116 = vld [vmem:[%s375 + $0x10f4] sm:$0xff]
        %v3117 = vld [vmem:[%s375 + $0x10fc] sm:$0xff]
        %v3118 = vld [vmem:[%s375 + $0x1104] sm:$0xff]
        %v3119 = vld [vmem:[%s375 + $0x110c] sm:$0xf]
        %v3120 = vld [vmem:[%s375 + $0x1110] sm:$0xff]
        %v3121 = vld [vmem:[%s375 + $0x1118] sm:$0xff]
        %v3122 = vld [vmem:[%s375 + $0x1120] sm:$0xff]
        %v3123 = vld [vmem:[%s375 + $0x1128] sm:$0xff]
        %v3124 = vld [vmem:[%s375 + $0x1130] sm:$0xff]
        %v3125 = vld [vmem:[%s375 + $0x1138] sm:$0xff]
        %v3126 = vld [vmem:[%s375 + $0x1140] sm:$0xff]
        %v3127 = vld [vmem:[%s375 + $0x1148] sm:$0xff]
        %v3128 = vld [vmem:[%s375 + $0x1150] sm:$0xff]
        %v3129 = vld [vmem:[%s375 + $0x1158] sm:$0xff]
        %v3130 = vld [vmem:[%s375 + $0x1160] sm:$0xf]
        %v3131 = vld [vmem:[%s375 + $0x1164] sm:$0xff]
        %v3132 = vld [vmem:[%s375 + $0x116c] sm:$0xff]
        %v3133 = vld [vmem:[%s375 + $0x1174] sm:$0xff]
        %v3134 = vld [vmem:[%s375 + $0x117c] sm:$0xff]
        %v3135 = vld [vmem:[%s375 + $0x1184] sm:$0xff]
        %v3136 = vld [vmem:[%s375 + $0x118c] sm:$0xff]
        %v3137 = vld [vmem:[%s375 + $0x1194] sm:$0xff]
        %v3138 = vld [vmem:[%s375 + $0x119c] sm:$0xff]
        %v3139 = vld [vmem:[%s375 + $0x11a4] sm:$0xff]
        %v3140 = vld [vmem:[%s375 + $0x11ac] sm:$0xff]
        %v3141 = vld [vmem:[%s375 + $0x11b4] sm:$0xf]
        %v3142 = vld [vmem:[%s375 + $0x11b8] sm:$0xff]
        %v3143 = vld [vmem:[%s375 + $0x11c0] sm:$0xff]
        %v3144 = vld [vmem:[%s375 + $0x11c8] sm:$0xff]
        %v3145 = vld [vmem:[%s375 + $0x11d0] sm:$0xff]
        %v3146 = vld [vmem:[%s375 + $0x11d8] sm:$0xff]
        %v3147 = vld [vmem:[%s375 + $0x11e0] sm:$0xff]
        %v3148 = vld [vmem:[%s375 + $0x11e8] sm:$0xff]
        %v3149 = vld [vmem:[%s375 + $0x11f0] sm:$0xff]
        %v3150 = vld [vmem:[%s375 + $0x11f8] sm:$0xff]
        %v3151 = vld [vmem:[%s375 + $0x1200] sm:$0xff]
        %v3152 = vld [vmem:[%s375 + $0x1208] sm:$0xf]
        %v3153 = vld [vmem:[%s375 + $0x120c] sm:$0xff]
        %v3154 = vld [vmem:[%s375 + $0x1214] sm:$0xff]
        %v3155 = vld [vmem:[%s375 + $0x121c] sm:$0xff]
        %v3156 = vld [vmem:[%s375 + $0x1224] sm:$0xff]
        %v3157 = vld [vmem:[%s375 + $0x122c] sm:$0xff]
        %v3158 = vld [vmem:[%s375 + $0x1234] sm:$0xff]
        %v3159 = vld [vmem:[%s375 + $0x123c] sm:$0xff]
        %v3160 = vld [vmem:[%s375 + $0x1244] sm:$0xff]
        %v3161 = vld [vmem:[%s375 + $0x124c] sm:$0xff]
        %v3162 = vld [vmem:[%s375 + $0x1254] sm:$0xff]
        %v3163 = vld [vmem:[%s375 + $0x125c] sm:$0xf]
        %v3164 = vld [vmem:[%s375 + $0x1260] sm:$0xff]
        %v3165 = vld [vmem:[%s375 + $0x1268] sm:$0xff]
        %v3166 = vld [vmem:[%s375 + $0x1270] sm:$0xff]
        %v3167 = vld [vmem:[%s375 + $0x1278] sm:$0xff]
        %v3168 = vld [vmem:[%s375 + $0x1280] sm:$0xff]
        %v3169 = vld [vmem:[%s375 + $0x1288] sm:$0xff]
        %v3170 = vld [vmem:[%s375 + $0x1290] sm:$0xff]
        %v3171 = vld [vmem:[%s375 + $0x1298] sm:$0xff]
        %v3172 = vld [vmem:[%s375 + $0x12a0] sm:$0xff]
        %v3173 = vld [vmem:[%s375 + $0x12a8] sm:$0xff]
        %v3174 = vld [vmem:[%s375 + $0x12b0] sm:$0xf]
        %v3175 = vld [vmem:[%s375 + $0x12b4] sm:$0xff]
        %v3176 = vld [vmem:[%s375 + $0x12bc] sm:$0xff]
        %v3177 = vld [vmem:[%s375 + $0x12c4] sm:$0xff]
        %v3178 = vld [vmem:[%s375 + $0x12cc] sm:$0xff]
        %v3179 = vld [vmem:[%s375 + $0x12d4] sm:$0xff]
        %v3180 = vld [vmem:[%s375 + $0x12dc] sm:$0xff]
        %v3181 = vld [vmem:[%s375 + $0x12e4] sm:$0xff]
        %v3182 = vld [vmem:[%s375 + $0x12ec] sm:$0xff]
        %v3183 = vld [vmem:[%s375 + $0x12f4] sm:$0xff]
        %v3184 = vld [vmem:[%s375 + $0x12fc] sm:$0xff]
        %v3185 = vld [vmem:[%s375 + $0x1304] sm:$0xf]
        %v3186 = vld [vmem:[%s375 + $0x1308] sm:$0xff]
        %v3187 = vld [vmem:[%s375 + $0x1310] sm:$0xff]
        %v3188 = vld [vmem:[%s375 + $0x1318] sm:$0xff]
        %v3189 = vld [vmem:[%s375 + $0x1320] sm:$0xff]
        %v3190 = vld [vmem:[%s375 + $0x1328] sm:$0xff]
        %v3191 = vld [vmem:[%s375 + $0x1330] sm:$0xff]
        %v3192 = vld [vmem:[%s375 + $0x1338] sm:$0xff]
        %v3193 = vld [vmem:[%s375 + $0x1340] sm:$0xff]
        %v3194 = vld [vmem:[%s375 + $0x1348] sm:$0xff]
        %v3195 = vld [vmem:[%s375 + $0x1350] sm:$0xff]
        %v3196 = vld [vmem:[%s375 + $0x1358] sm:$0xf]
        %v3197 = vld [vmem:[%s375 + $0x135c] sm:$0xff]
        %v3198 = vld [vmem:[%s375 + $0x1364] sm:$0xff]
        %v3199 = vld [vmem:[%s375 + $0x136c] sm:$0xff]
        %v3200 = vld [vmem:[%s375 + $0x1374] sm:$0xff]
        %v3201 = vld [vmem:[%s375 + $0x137c] sm:$0xff]
        %v3202 = vld [vmem:[%s375 + $0x1384] sm:$0xff]
        %v3203 = vld [vmem:[%s375 + $0x138c] sm:$0xff]
        %v3204 = vld [vmem:[%s375 + $0x1394] sm:$0xff]
        %v3205 = vld [vmem:[%s375 + $0x139c] sm:$0xff]
        %v3206 = vld [vmem:[%s375 + $0x13a4] sm:$0xff]
        %v3207 = vld [vmem:[%s375 + $0x13ac] sm:$0xf]
        %v3208 = vld [vmem:[%s375 + $0x13b0] sm:$0xff]
        %v3209 = vld [vmem:[%s375 + $0x13b8] sm:$0xff]
        %v3210 = vld [vmem:[%s375 + $0x13c0] sm:$0xff]
        %v3211 = vld [vmem:[%s375 + $0x13c8] sm:$0xff]
        %v3212 = vld [vmem:[%s375 + $0x13d0] sm:$0xff]
        %v3213 = vld [vmem:[%s375 + $0x13d8] sm:$0xff]
        %v3214 = vld [vmem:[%s375 + $0x13e0] sm:$0xff]
        %v3215 = vld [vmem:[%s375 + $0x13e8] sm:$0xff]
        %v3216 = vld [vmem:[%s375 + $0x13f0] sm:$0xff]
        %v3217 = vld [vmem:[%s375 + $0x13f8] sm:$0xff]
        %v3218 = vld [vmem:[%s375 + $0x1400] sm:$0xf]
        %v3219 = vld [vmem:[%s375 + $0x1404] sm:$0xff]
        %v3220 = vld [vmem:[%s375 + $0x140c] sm:$0xff]
        %v3221 = vld [vmem:[%s375 + $0x1414] sm:$0xff]
        %v3222 = vld [vmem:[%s375 + $0x141c] sm:$0xff]
        %v3223 = vld [vmem:[%s375 + $0x1424] sm:$0xff]
        %v3224 = vld [vmem:[%s375 + $0x142c] sm:$0xff]
        %v3225 = vld [vmem:[%s375 + $0x1434] sm:$0xff]
        %v3226 = vld [vmem:[%s375 + $0x143c] sm:$0xff]
        %v3227 = vld [vmem:[%s375 + $0x1444] sm:$0xff]
        %v3228 = vld [vmem:[%s375 + $0x144c] sm:$0xff]
        %v3229 = vld [vmem:[%s375 + $0x1454] sm:$0xf]
        %v3230 = vld [vmem:[%s375 + $0x1458] sm:$0xff]
        %v3231 = vld [vmem:[%s375 + $0x1460] sm:$0xff]
        %v3232 = vld [vmem:[%s375 + $0x1468] sm:$0xff]
        %v3233 = vld [vmem:[%s375 + $0x1470] sm:$0xff]
        %v3234 = vld [vmem:[%s375 + $0x1478] sm:$0xff]
        %v3235 = vld [vmem:[%s375 + $0x1480] sm:$0xff]
        %v3236 = vld [vmem:[%s375 + $0x1488] sm:$0xff]
        %v3237 = vld [vmem:[%s375 + $0x1490] sm:$0xff]
        %v3238 = vld [vmem:[%s375 + $0x1498] sm:$0xff]
        %v3239 = vld [vmem:[%s375 + $0x14a0] sm:$0xff]
        %v3240 = vld [vmem:[%s375 + $0x14a8] sm:$0xf]
        %v3241 = vld [vmem:[%s375 + $0x14ac] sm:$0xff]
        %v3242 = vld [vmem:[%s375 + $0x14b4] sm:$0xff]
        %v3243 = vld [vmem:[%s375 + $0x14bc] sm:$0xff]
        %v3244 = vld [vmem:[%s375 + $0x14c4] sm:$0xff]
        %v3245 = vld [vmem:[%s375 + $0x14cc] sm:$0xff]
        %v3246 = vld [vmem:[%s375 + $0x14d4] sm:$0xff]
        %v3247 = vld [vmem:[%s375 + $0x14dc] sm:$0xff]
        %v3248 = vld [vmem:[%s375 + $0x14e4] sm:$0xff]
        %v3249 = vld [vmem:[%s375 + $0x14ec] sm:$0xff]
        %v3250 = vld [vmem:[%s375 + $0x14f4] sm:$0xff]
        %v3251 = vld [vmem:[%s375 + $0x14fc] sm:$0xf]
        %v3252 = vld [vmem:[%s375 + $0x1500] sm:$0xff]
        %v3253 = vld [vmem:[%s375 + $0x1508] sm:$0xff]
        %v3254 = vld [vmem:[%s375 + $0x1510] sm:$0xff]
        %v3255 = vld [vmem:[%s375 + $0x1518] sm:$0xff]
        %v3256 = vld [vmem:[%s375 + $0x1520] sm:$0xff]
        %v3257 = vld [vmem:[%s375 + $0x1528] sm:$0xff]
        %v3258 = vld [vmem:[%s375 + $0x1530] sm:$0xff]
        %v3259 = vld [vmem:[%s375 + $0x1538] sm:$0xff]
        %v3260 = vld [vmem:[%s375 + $0x1540] sm:$0xff]
        %v3261 = vld [vmem:[%s375 + $0x1548] sm:$0xff]
        %v3262 = vld [vmem:[%s375 + $0x1550] sm:$0xf]
        %v3263 = vld [vmem:[%s375 + $0x1554] sm:$0xff]
        %v3264 = vld [vmem:[%s375 + $0x155c] sm:$0xff]
        %v3265 = vld [vmem:[%s375 + $0x1564] sm:$0xff]
        %v3266 = vld [vmem:[%s375 + $0x156c] sm:$0xff]
        %v3267 = vld [vmem:[%s375 + $0x1574] sm:$0xff]
        %v3268 = vld [vmem:[%s375 + $0x157c] sm:$0xff]
        %v3269 = vld [vmem:[%s375 + $0x1584] sm:$0xff]
        %v3270 = vld [vmem:[%s375 + $0x158c] sm:$0xff]
        %v3271 = vld [vmem:[%s375 + $0x1594] sm:$0xff]
        %v3272 = vld [vmem:[%s375 + $0x159c] sm:$0xff]
        %v3273 = vld [vmem:[%s375 + $0x15a4] sm:$0xf]
        %v3274 = vld [vmem:[%s375 + $0x15a8] sm:$0xff]
        %v3275 = vld [vmem:[%s375 + $0x15b0] sm:$0xff]
        %v3276 = vld [vmem:[%s375 + $0x15b8] sm:$0xff]
        %v3277 = vld [vmem:[%s375 + $0x15c0] sm:$0xff]
        %v3278 = vld [vmem:[%s375 + $0x15c8] sm:$0xff]
        %v3279 = vld [vmem:[%s375 + $0x15d0] sm:$0xff]
        %v3280 = vld [vmem:[%s375 + $0x15d8] sm:$0xff]
        %v3281 = vld [vmem:[%s375 + $0x15e0] sm:$0xff]
        %v3282 = vld [vmem:[%s375 + $0x15e8] sm:$0xff]
        %v3283 = vld [vmem:[%s375 + $0x15f0] sm:$0xff]
        %v3284 = vld [vmem:[%s375 + $0x15f8] sm:$0xf]
        %v3285 = vld [vmem:[%s375 + $0x15fc] sm:$0xff]
        %v3286 = vld [vmem:[%s375 + $0x1604] sm:$0xff]
        %v3287 = vld [vmem:[%s375 + $0x160c] sm:$0xff]
        %v3288 = vld [vmem:[%s375 + $0x1614] sm:$0xff]
        %v3289 = vld [vmem:[%s375 + $0x161c] sm:$0xff]
        %v3290 = vld [vmem:[%s375 + $0x1624] sm:$0xff]
        %v3291 = vld [vmem:[%s375 + $0x162c] sm:$0xff]
        %v3292 = vld [vmem:[%s375 + $0x1634] sm:$0xff]
        %v3293 = vld [vmem:[%s375 + $0x163c] sm:$0xff]
        %v3294 = vld [vmem:[%s375 + $0x1644] sm:$0xff]
        %v3295 = vld [vmem:[%s375 + $0x164c] sm:$0xf]
        %v3296 = vld [vmem:[%s375 + $0x1650] sm:$0xff]
        %v3297 = vld [vmem:[%s375 + $0x1658] sm:$0xff]
        %v3298 = vld [vmem:[%s375 + $0x1660] sm:$0xff]
        %v3299 = vld [vmem:[%s375 + $0x1668] sm:$0xff]
        %v3300 = vld [vmem:[%s375 + $0x1670] sm:$0xff]
        %v3301 = vld [vmem:[%s375 + $0x1678] sm:$0xff]
        %v3302 = vld [vmem:[%s375 + $0x1680] sm:$0xff]
        %v3303 = vld [vmem:[%s375 + $0x1688] sm:$0xff]
        %v3304 = vld [vmem:[%s375 + $0x1690] sm:$0xff]
        %v3305 = vld [vmem:[%s375 + $0x1698] sm:$0xff]
        %v3306 = vld [vmem:[%s375 + $0x16a0] sm:$0xf]
        %v3307 = vld [vmem:[%s375 + $0x16a4] sm:$0xff]
        %v3308 = vld [vmem:[%s375 + $0x16ac] sm:$0xff]
        %v3309 = vld [vmem:[%s375 + $0x16b4] sm:$0xff]
        %v3310 = vld [vmem:[%s375 + $0x16bc] sm:$0xff]
        %v3311 = vld [vmem:[%s375 + $0x16c4] sm:$0xff]
        %v3312 = vld [vmem:[%s375 + $0x16cc] sm:$0xff]
        %v3313 = vld [vmem:[%s375 + $0x16d4] sm:$0xff]
        %v3314 = vld [vmem:[%s375 + $0x16dc] sm:$0xff]
        %v3315 = vld [vmem:[%s375 + $0x16e4] sm:$0xff]
        %v3316 = vld [vmem:[%s375 + $0x16ec] sm:$0xff]
        %v3317 = vld [vmem:[%s375 + $0x16f4] sm:$0xf]
        %v3318 = vld [vmem:[%s375 + $0x16f8] sm:$0xff]
        %v3319 = vld [vmem:[%s375 + $0x1700] sm:$0xff]
        %v3320 = vld [vmem:[%s375 + $0x1708] sm:$0xff]
        %v3321 = vld [vmem:[%s375 + $0x1710] sm:$0xff]
        %v3322 = vld [vmem:[%s375 + $0x1718] sm:$0xff]
        %v3323 = vld [vmem:[%s375 + $0x1720] sm:$0xff]
        %v3324 = vld [vmem:[%s375 + $0x1728] sm:$0xff]
        %v3325 = vld [vmem:[%s375 + $0x1730] sm:$0xff]
        %v3326 = vld [vmem:[%s375 + $0x1738] sm:$0xff]
        %v3327 = vld [vmem:[%s375 + $0x1740] sm:$0xff]
        %v3328 = vld [vmem:[%s375 + $0x1748] sm:$0xf]
        %v3329 = vld [vmem:[%s375 + $0x174c] sm:$0xff]
        %v3330 = vld [vmem:[%s375 + $0x1754] sm:$0xff]
        %v3331 = vld [vmem:[%s375 + $0x175c] sm:$0xff]
        %v3332 = vld [vmem:[%s375 + $0x1764] sm:$0xff]
        %v3333 = vld [vmem:[%s375 + $0x176c] sm:$0xff]
        %v3334 = vld [vmem:[%s375 + $0x1774] sm:$0xff]
        %v3335 = vld [vmem:[%s375 + $0x177c] sm:$0xff]
        %v3336 = vld [vmem:[%s375 + $0x1784] sm:$0xff]
        %v3337 = vld [vmem:[%s375 + $0x178c] sm:$0xff]
        %v3338 = vld [vmem:[%s375 + $0x1794] sm:$0xff]
        %v3339 = vld [vmem:[%s375 + $0x179c] sm:$0xf]
        %v3340 = vld [vmem:[%s375 + $0x17a0] sm:$0xff]
        %v3341 = vld [vmem:[%s375 + $0x17a8] sm:$0xff]
        %v3342 = vld [vmem:[%s375 + $0x17b0] sm:$0xff]
        %v3343 = vld [vmem:[%s375 + $0x17b8] sm:$0xff]
        %v3344 = vld [vmem:[%s375 + $0x17c0] sm:$0xff]
        %v3345 = vld [vmem:[%s375 + $0x17c8] sm:$0xff]
        %v3346 = vld [vmem:[%s375 + $0x17d0] sm:$0xff]
        %v3347 = vld [vmem:[%s375 + $0x17d8] sm:$0xff]
        %v3348 = vld [vmem:[%s375 + $0x17e0] sm:$0xff]
        %v3349 = vld [vmem:[%s375 + $0x17e8] sm:$0xff]
        %v3350 = vld [vmem:[%s375 + $0x17f0] sm:$0xf]
        %v3351 = vld [vmem:[%s375 + $0x17f4] sm:$0xff]
        %v3352 = vld [vmem:[%s375 + $0x17fc] sm:$0xff]
        %v3353 = vld [vmem:[%s375 + $0x1804] sm:$0xff]
        %v3354 = vld [vmem:[%s375 + $0x180c] sm:$0xff]
        %v3355 = vld [vmem:[%s375 + $0x1814] sm:$0xff]
        %v3356 = vld [vmem:[%s375 + $0x181c] sm:$0xff]
        %v3357 = vld [vmem:[%s375 + $0x1824] sm:$0xff]
        %v3358 = vld [vmem:[%s375 + $0x182c] sm:$0xff]
        %v3359 = vld [vmem:[%s375 + $0x1834] sm:$0xff]
        %v3360 = vld [vmem:[%s375 + $0x183c] sm:$0xff]
        %v3361 = vld [vmem:[%s375 + $0x1844] sm:$0xf]
        %v3362 = vld [vmem:[%s375 + $0x1848] sm:$0xff]
        %v3363 = vld [vmem:[%s375 + $0x1850] sm:$0xff]
        %v3364 = vld [vmem:[%s375 + $0x1858] sm:$0xff]
        %v3365 = vld [vmem:[%s375 + $0x1860] sm:$0xff]
        %v3366 = vld [vmem:[%s375 + $0x1868] sm:$0xff]
        %v3367 = vld [vmem:[%s375 + $0x1870] sm:$0xff]
        %v3368 = vld [vmem:[%s375 + $0x1878] sm:$0xff]
        %v3369 = vld [vmem:[%s375 + $0x1880] sm:$0xff]
        %v3370 = vld [vmem:[%s375 + $0x1888] sm:$0xff]
        %v3371 = vld [vmem:[%s375 + $0x1890] sm:$0xff]
        %v3372 = vld [vmem:[%s375 + $0x1898] sm:$0xf]
        %v3373 = vld [vmem:[%s375 + $0x189c] sm:$0xff]
        %v3374 = vld [vmem:[%s375 + $0x18a4] sm:$0xff]
        %v3375 = vld [vmem:[%s375 + $0x18ac] sm:$0xff]
        %v3376 = vld [vmem:[%s375 + $0x18b4] sm:$0xff]
        %v3377 = vld [vmem:[%s375 + $0x18bc] sm:$0xff]
        %v3378 = vld [vmem:[%s375 + $0x18c4] sm:$0xff]
        %v3379 = vld [vmem:[%s375 + $0x18cc] sm:$0xff]
        %v3380 = vld [vmem:[%s375 + $0x18d4] sm:$0xff]
        %v3381 = vld [vmem:[%s375 + $0x18dc] sm:$0xff]
        %v3382 = vld [vmem:[%s375 + $0x18e4] sm:$0xff]
        %v3383 = vld [vmem:[%s375 + $0x18ec] sm:$0xf]
        %v3384 = vld [vmem:[%s375 + $0x18f0] sm:$0xff]
        %v3385 = vld [vmem:[%s375 + $0x18f8] sm:$0xff]
        %v3386 = vld [vmem:[%s375 + $0x1900] sm:$0xff]
        %v3387 = vld [vmem:[%s375 + $0x1908] sm:$0xff]
        %v3388 = vld [vmem:[%s375 + $0x1910] sm:$0xff]
        %v3389 = vld [vmem:[%s375 + $0x1918] sm:$0xff]
        %v3390 = vld [vmem:[%s375 + $0x1920] sm:$0xff]
        %v3391 = vld [vmem:[%s375 + $0x1928] sm:$0xff]
        %v3392 = vld [vmem:[%s375 + $0x1930] sm:$0xff]
        %v3393 = vld [vmem:[%s375 + $0x1938] sm:$0xff]
        %v3394 = vld [vmem:[%s375 + $0x1940] sm:$0xf]
        %v3395 = vld [vmem:[%s375 + $0x1944] sm:$0xff]
        %v3396 = vld [vmem:[%s375 + $0x194c] sm:$0xff]
        %v3397 = vld [vmem:[%s375 + $0x1954] sm:$0xff]
        %v3398 = vld [vmem:[%s375 + $0x195c] sm:$0xff]
        %v3399 = vld [vmem:[%s375 + $0x1964] sm:$0xff]
        %v3400 = vld [vmem:[%s375 + $0x196c] sm:$0xff]
        %v3401 = vld [vmem:[%s375 + $0x1974] sm:$0xff]
        %v3402 = vld [vmem:[%s375 + $0x197c] sm:$0xff]
        %v3403 = vld [vmem:[%s375 + $0x1984] sm:$0xff]
        %v3404 = vld [vmem:[%s375 + $0x198c] sm:$0xff]
        %v3405 = vld [vmem:[%s375 + $0x1994] sm:$0xf]
        %v3406 = vld [vmem:[%s375 + $0x1998] sm:$0xff]
        %v3407 = vld [vmem:[%s375 + $0x19a0] sm:$0xff]
        %v3408 = vld [vmem:[%s375 + $0x19a8] sm:$0xff]
        %v3409 = vld [vmem:[%s375 + $0x19b0] sm:$0xff]
        %v3410 = vld [vmem:[%s375 + $0x19b8] sm:$0xff]
        %v3411 = vld [vmem:[%s375 + $0x19c0] sm:$0xff]
        %v3412 = vld [vmem:[%s375 + $0x19c8] sm:$0xff]
        %v3413 = vld [vmem:[%s375 + $0x19d0] sm:$0xff]
        %v3414 = vld [vmem:[%s375 + $0x19d8] sm:$0xff]
        %v3415 = vld [vmem:[%s375 + $0x19e0] sm:$0xff]
        %v3416 = vld [vmem:[%s375 + $0x19e8] sm:$0xf]
        %v3417 = vld [vmem:[%s375 + $0x19ec] sm:$0xff]
        %v3418 = vld [vmem:[%s375 + $0x19f4] sm:$0xff]
        %v3419 = vld [vmem:[%s375 + $0x19fc] sm:$0xff]
        %v3420 = vld [vmem:[%s375 + $0x1a04] sm:$0xff]
        %v3421 = vld [vmem:[%s375 + $0x1a0c] sm:$0xff]
        %v3422 = vld [vmem:[%s375 + $0x1a14] sm:$0xff]
        %v3423 = vld [vmem:[%s375 + $0x1a1c] sm:$0xff]
        %v3424 = vld [vmem:[%s375 + $0x1a24] sm:$0xff]
        %v3425 = vld [vmem:[%s375 + $0x1a2c] sm:$0xff]
        %v3426 = vld [vmem:[%s375 + $0x1a34] sm:$0xff]
        %v3427 = vld [vmem:[%s375 + $0x1a3c] sm:$0xf]
        %v3428 = vld [vmem:[%s375 + $0x1a40] sm:$0xff]
        %v3429 = vld [vmem:[%s375 + $0x1a48] sm:$0xff]
        %v3430 = vld [vmem:[%s375 + $0x1a50] sm:$0xff]
        %v3431 = vld [vmem:[%s375 + $0x1a58] sm:$0xff]
        %v3432 = vld [vmem:[%s375 + $0x1a60] sm:$0xff]
        %v3433 = vld [vmem:[%s375 + $0x1a68] sm:$0xff]
        %v3434 = vld [vmem:[%s375 + $0x1a70] sm:$0xff]
        %v3435 = vld [vmem:[%s375 + $0x1a78] sm:$0xff]
        %v3436 = vld [vmem:[%s375 + $0x1a80] sm:$0xff]
        %v3437 = vld [vmem:[%s375 + $0x1a88] sm:$0xff]
        %v3438 = vld [vmem:[%s375 + $0x1a90] sm:$0xf]
        %v3439 = vld [vmem:[%s375 + $0x1a94] sm:$0xff]
        %v3440 = vld [vmem:[%s375 + $0x1a9c] sm:$0xff]
        %v3441 = vld [vmem:[%s375 + $0x1aa4] sm:$0xff]
        %v3442 = vld [vmem:[%s375 + $0x1aac] sm:$0xff]
        %v3443 = vld [vmem:[%s375 + $0x1ab4] sm:$0xff]
        %v3444 = vld [vmem:[%s375 + $0x1abc] sm:$0xff]
        %v3445 = vld [vmem:[%s375 + $0x1ac4] sm:$0xff]
        %v3446 = vld [vmem:[%s375 + $0x1acc] sm:$0xff]
        %v3447 = vld [vmem:[%s375 + $0x1ad4] sm:$0xff]
        %v3448 = vld [vmem:[%s375 + $0x1adc] sm:$0xff]
        %v3449 = vld [vmem:[%s375 + $0x1ae4] sm:$0xf]
        %v3450 = vld [vmem:[%s375 + $0x1ae8] sm:$0xff]
        %v3451 = vld [vmem:[%s375 + $0x1af0] sm:$0xff]
        %v3452 = vld [vmem:[%s375 + $0x1af8] sm:$0xff]
        %v3453 = vld [vmem:[%s375 + $0x1b00] sm:$0xff]
        %v3454 = vld [vmem:[%s375 + $0x1b08] sm:$0xff]
        %v3455 = vld [vmem:[%s375 + $0x1b10] sm:$0xff]
        %v3456 = vld [vmem:[%s375 + $0x1b18] sm:$0xff]
        %v3457 = vld [vmem:[%s375 + $0x1b20] sm:$0xff]
        %v3458 = vld [vmem:[%s375 + $0x1b28] sm:$0xff]
        %v3459 = vld [vmem:[%s375 + $0x1b30] sm:$0xff]
        %v3460 = vld [vmem:[%s375 + $0x1b38] sm:$0xf]
        %v3461 = vld [vmem:[%s375 + $0x1b3c] sm:$0xff]
        %v3462 = vld [vmem:[%s375 + $0x1b44] sm:$0xff]
        %v3463 = vld [vmem:[%s375 + $0x1b4c] sm:$0xff]
        %v3464 = vld [vmem:[%s375 + $0x1b54] sm:$0xff]
        %v3465 = vld [vmem:[%s375 + $0x1b5c] sm:$0xff]
        %v3466 = vld [vmem:[%s375 + $0x1b64] sm:$0xff]
        %v3467 = vld [vmem:[%s375 + $0x1b6c] sm:$0xff]
        %v3468 = vld [vmem:[%s375 + $0x1b74] sm:$0xff]
        %v3469 = vld [vmem:[%s375 + $0x1b7c] sm:$0xff]
        %v3470 = vld [vmem:[%s375 + $0x1b84] sm:$0xff]
        %v3471 = vld [vmem:[%s375 + $0x1b8c] sm:$0xf]
        %v3472 = vld [vmem:[%s375 + $0x1b90] sm:$0xff]
        %v3473 = vld [vmem:[%s375 + $0x1b98] sm:$0xff]
        %v3474 = vld [vmem:[%s375 + $0x1ba0] sm:$0xff]
        %v3475 = vld [vmem:[%s375 + $0x1ba8] sm:$0xff]
        %v3476 = vld [vmem:[%s375 + $0x1bb0] sm:$0xff]
        %v3477 = vld [vmem:[%s375 + $0x1bb8] sm:$0xff]
        %v3478 = vld [vmem:[%s375 + $0x1bc0] sm:$0xff]
        %v3479 = vld [vmem:[%s375 + $0x1bc8] sm:$0xff]
        %v3480 = vld [vmem:[%s375 + $0x1bd0] sm:$0xff]
        %v3481 = vld [vmem:[%s375 + $0x1bd8] sm:$0xff]
        %v3482 = vld [vmem:[%s375 + $0x1be0] sm:$0xf]
        %v3483 = vld [vmem:[%s375 + $0x1be4] sm:$0xff]
        %v3484 = vld [vmem:[%s375 + $0x1bec] sm:$0xff]
        %v3485 = vld [vmem:[%s375 + $0x1bf4] sm:$0xff]
        %v3486 = vld [vmem:[%s375 + $0x1bfc] sm:$0xff]
        %v3487 = vld [vmem:[%s375 + $0x1c04] sm:$0xff]
        %v3488 = vld [vmem:[%s375 + $0x1c0c] sm:$0xff]
        %v3489 = vld [vmem:[%s375 + $0x1c14] sm:$0xff]
        %v3490 = vld [vmem:[%s375 + $0x1c1c] sm:$0xff]
        %v3491 = vld [vmem:[%s375 + $0x1c24] sm:$0xff]
        %v3492 = vld [vmem:[%s375 + $0x1c2c] sm:$0xff]
        %v3493 = vld [vmem:[%s375 + $0x1c34] sm:$0xf]
        %v3494 = vld [vmem:[%s375 + $0x1c38] sm:$0xff]
        %v3495 = vld [vmem:[%s375 + $0x1c40] sm:$0xff]
        %v3496 = vld [vmem:[%s375 + $0x1c48] sm:$0xff]
        %v3497 = vld [vmem:[%s375 + $0x1c50] sm:$0xff]
        %v3498 = vld [vmem:[%s375 + $0x1c58] sm:$0xff]
        %v3499 = vld [vmem:[%s375 + $0x1c60] sm:$0xff]
        %v3500 = vld [vmem:[%s375 + $0x1c68] sm:$0xff]
        %v3501 = vld [vmem:[%s375 + $0x1c70] sm:$0xff]
        %v3502 = vld [vmem:[%s375 + $0x1c78] sm:$0xff]
        %v3503 = vld [vmem:[%s375 + $0x1c80] sm:$0xff]
        %v3504 = vld [vmem:[%s375 + $0x1c88] sm:$0xf]
        %v3505 = vld [vmem:[%s375 + $0x1c8c] sm:$0xff]
        %v3506 = vld [vmem:[%s375 + $0x1c94] sm:$0xff]
        %v3507 = vld [vmem:[%s375 + $0x1c9c] sm:$0xff]
        %v3508 = vld [vmem:[%s375 + $0x1ca4] sm:$0xff]
        %v3509 = vld [vmem:[%s375 + $0x1cac] sm:$0xff]
        %v3510 = vld [vmem:[%s375 + $0x1cb4] sm:$0xff]
        %v3511 = vld [vmem:[%s375 + $0x1cbc] sm:$0xff]
        %v3512 = vld [vmem:[%s375 + $0x1cc4] sm:$0xff]
        %v3513 = vld [vmem:[%s375 + $0x1ccc] sm:$0xff]
        %v3514 = vld [vmem:[%s375 + $0x1cd4] sm:$0xff]
        %v3515 = vld [vmem:[%s375 + $0x1cdc] sm:$0xf]
        %v3516 = vld [vmem:[%s375 + $0x1ce0] sm:$0xff]
        %v3517 = vld [vmem:[%s375 + $0x1ce8] sm:$0xff]
        %v3518 = vld [vmem:[%s375 + $0x1cf0] sm:$0xff]
        %v3519 = vld [vmem:[%s375 + $0x1cf8] sm:$0xff]
        %v3520 = vld [vmem:[%s375 + $0x1d00] sm:$0xff]
        %v3521 = vld [vmem:[%s375 + $0x1d08] sm:$0xff]
        %v3522 = vld [vmem:[%s375 + $0x1d10] sm:$0xff]
        %v3523 = vld [vmem:[%s375 + $0x1d18] sm:$0xff]
        %v3524 = vld [vmem:[%s375 + $0x1d20] sm:$0xff]
        %v3525 = vld [vmem:[%s375 + $0x1d28] sm:$0xff]
        %v3526 = vld [vmem:[%s375 + $0x1d30] sm:$0xf]
        %v3527 = vld [vmem:[%s375 + $0x1d34] sm:$0xff]
        %v3528 = vld [vmem:[%s375 + $0x1d3c] sm:$0xff]
        %v3529 = vld [vmem:[%s375 + $0x1d44] sm:$0xff]
        %v3530 = vld [vmem:[%s375 + $0x1d4c] sm:$0xff]
        %v3531 = vld [vmem:[%s375 + $0x1d54] sm:$0xff]
        %v3532 = vld [vmem:[%s375 + $0x1d5c] sm:$0xff]
        %v3533 = vld [vmem:[%s375 + $0x1d64] sm:$0xff]
        %v3534 = vld [vmem:[%s375 + $0x1d6c] sm:$0xff]
        %v3535 = vld [vmem:[%s375 + $0x1d74] sm:$0xff]
        %v3536 = vld [vmem:[%s375 + $0x1d7c] sm:$0xff]
        %v3537 = vld [vmem:[%s375 + $0x1d84] sm:$0xf]
        %v3538 = vld [vmem:[%s375 + $0x1d88] sm:$0xff]
        %v3539 = vld [vmem:[%s375 + $0x1d90] sm:$0xff]
        %v3540 = vld [vmem:[%s375 + $0x1d98] sm:$0xff]
        %v3541 = vld [vmem:[%s375 + $0x1da0] sm:$0xff]
        %v3542 = vld [vmem:[%s375 + $0x1da8] sm:$0xff]
        %v3543 = vld [vmem:[%s375 + $0x1db0] sm:$0xff]
        %v3544 = vld [vmem:[%s375 + $0x1db8] sm:$0xff]
        %v3545 = vld [vmem:[%s375 + $0x1dc0] sm:$0xff]
        %v3546 = vld [vmem:[%s375 + $0x1dc8] sm:$0xff]
        %v3547 = vld [vmem:[%s375 + $0x1dd0] sm:$0xff]
        %v3548 = vld [vmem:[%s375 + $0x1dd8] sm:$0xf]
        %v3549 = vld [vmem:[%s375 + $0x1ddc] sm:$0xff]
        %v3550 = vld [vmem:[%s375 + $0x1de4] sm:$0xff]
        %v3551 = vld [vmem:[%s375 + $0x1dec] sm:$0xff]
        %v3552 = vld [vmem:[%s375 + $0x1df4] sm:$0xff]
        %v3553 = vld [vmem:[%s375 + $0x1dfc] sm:$0xff]
        %v3554 = vld [vmem:[%s375 + $0x1e04] sm:$0xff]
        %v3555 = vld [vmem:[%s375 + $0x1e0c] sm:$0xff]
        %v3556 = vld [vmem:[%s375 + $0x1e14] sm:$0xff]
        %v3557 = vld [vmem:[%s375 + $0x1e1c] sm:$0xff]
        %v3558 = vld [vmem:[%s375 + $0x1e24] sm:$0xff]
        %v3559 = vld [vmem:[%s375 + $0x1e2c] sm:$0xf]
        %v3560 = vld [vmem:[%s375 + $0x1e30] sm:$0xff]
        %v3561 = vld [vmem:[%s375 + $0x1e38] sm:$0xff]
        %v3562 = vld [vmem:[%s375 + $0x1e40] sm:$0xff]
        %v3563 = vld [vmem:[%s375 + $0x1e48] sm:$0xff]
        %v3564 = vld [vmem:[%s375 + $0x1e50] sm:$0xff]
        %v3565 = vld [vmem:[%s375 + $0x1e58] sm:$0xff]
        %v3566 = vld [vmem:[%s375 + $0x1e60] sm:$0xff]
        %v3567 = vld [vmem:[%s375 + $0x1e68] sm:$0xff]
        %v3568 = vld [vmem:[%s375 + $0x1e70] sm:$0xff]
        %v3569 = vld [vmem:[%s375 + $0x1e78] sm:$0xff]
        %v3570 = vld [vmem:[%s375 + $0x1e80] sm:$0xf]
        %v3571 = vld [vmem:[%s375 + $0x1e84] sm:$0xff]
        %v3572 = vld [vmem:[%s375 + $0x1e8c] sm:$0xff]
        %v3573 = vld [vmem:[%s375 + $0x1e94] sm:$0xff]
        %v3574 = vld [vmem:[%s375 + $0x1e9c] sm:$0xff]
        %v3575 = vld [vmem:[%s375 + $0x1ea4] sm:$0xff]
        %v3576 = vld [vmem:[%s375 + $0x1eac] sm:$0xff]
        %v3577 = vld [vmem:[%s375 + $0x1eb4] sm:$0xff]
        %v3578 = vld [vmem:[%s375 + $0x1ebc] sm:$0xff]
        %v3579 = vld [vmem:[%s375 + $0x1ec4] sm:$0xff]
        %v3580 = vld [vmem:[%s375 + $0x1ecc] sm:$0xff]
        %v3581 = vld [vmem:[%s375 + $0x1ed4] sm:$0xf]
        %v3582 = vld [vmem:[%s375 + $0x1ed8] sm:$0xff]
        %v3583 = vld [vmem:[%s375 + $0x1ee0] sm:$0xff]
        %v3584 = vld [vmem:[%s375 + $0x1ee8] sm:$0xff]
        %v3585 = vld [vmem:[%s375 + $0x1ef0] sm:$0xff]
        %v3586 = vld [vmem:[%s375 + $0x1ef8] sm:$0xff]
        %v3587 = vld [vmem:[%s375 + $0x1f00] sm:$0xff]
        %v3588 = vld [vmem:[%s375 + $0x1f08] sm:$0xff]
        %v3589 = vld [vmem:[%s375 + $0x1f10] sm:$0xff]
        %v3590 = vld [vmem:[%s375 + $0x1f18] sm:$0xff]
        %v3591 = vld [vmem:[%s375 + $0x1f20] sm:$0xff]
        %v3592 = vld [vmem:[%s375 + $0x1f28] sm:$0xf]
        %v3593 = vld [vmem:[%s375 + $0x1f2c] sm:$0xff]
        %v3594 = vld [vmem:[%s375 + $0x1f34] sm:$0xff]
        %v3595 = vld [vmem:[%s375 + $0x1f3c] sm:$0xff]
        %v3596 = vld [vmem:[%s375 + $0x1f44] sm:$0xff]
        %v3597 = vld [vmem:[%s375 + $0x1f4c] sm:$0xff]
        %v3598 = vld [vmem:[%s375 + $0x1f54] sm:$0xff]
        %v3599 = vld [vmem:[%s375 + $0x1f5c] sm:$0xff]
        %v3600 = vld [vmem:[%s375 + $0x1f64] sm:$0xff]
        %v3601 = vld [vmem:[%s375 + $0x1f6c] sm:$0xff]
        %v3602 = vld [vmem:[%s375 + $0x1f74] sm:$0xff]
        %v3603 = vld [vmem:[%s375 + $0x1f7c] sm:$0xf]
        %v3604 = vld [vmem:[%s375 + $0x1f80] sm:$0xff]
        %v3605 = vld [vmem:[%s375 + $0x1f88] sm:$0xff]
        %v3606 = vld [vmem:[%s375 + $0x1f90] sm:$0xff]
        %v3607 = vld [vmem:[%s375 + $0x1f98] sm:$0xff]
        %v3608 = vld [vmem:[%s375 + $0x1fa0] sm:$0xff]
        %v3609 = vld [vmem:[%s375 + $0x1fa8] sm:$0xff]
        %v3610 = vld [vmem:[%s375 + $0x1fb0] sm:$0xff]
        %v3611 = vld [vmem:[%s375 + $0x1fb8] sm:$0xff]
        %v3612 = vld [vmem:[%s375 + $0x1fc0] sm:$0xff]
        %v3613 = vld [vmem:[%s375 + $0x1fc8] sm:$0xff]
        %v3614 = vld [vmem:[%s375 + $0x1fd0] sm:$0xf]
        %v3615 = vld [vmem:[%s375 + $0x1fd4] sm:$0xff]
        %v3616 = vld [vmem:[%s375 + $0x1fdc] sm:$0xff]
        %v3617 = vld [vmem:[%s375 + $0x1fe4] sm:$0xff]
        %v3618 = vld [vmem:[%s375 + $0x1fec] sm:$0xff]
        %v3619 = vld [vmem:[%s375 + $0x1ff4] sm:$0xff]
        %v3620 = vld [vmem:[%s375 + $0x1ffc] sm:$0xff]
        %v3621 = vld [vmem:[%s375 + $0x2004] sm:$0xff]
        %v3622 = vld [vmem:[%s375 + $0x200c] sm:$0xff]
        %v3623 = vld [vmem:[%s375 + $0x2014] sm:$0xff]
        %v3624 = vld [vmem:[%s375 + $0x201c] sm:$0xff]
        %v3625 = vld [vmem:[%s375 + $0x2024] sm:$0xf]
        %v3626 = vld [vmem:[%s375 + $0x2028] sm:$0xff]
        %v3627 = vld [vmem:[%s375 + $0x2030] sm:$0xff]
        %v3628 = vld [vmem:[%s375 + $0x2038] sm:$0xff]
        %v3629 = vld [vmem:[%s375 + $0x2040] sm:$0xff]
        %v3630 = vld [vmem:[%s375 + $0x2048] sm:$0xff]
        %v3631 = vld [vmem:[%s375 + $0x2050] sm:$0xff]
        %v3632 = vld [vmem:[%s375 + $0x2058] sm:$0xff]
        %v3633 = vld [vmem:[%s375 + $0x2060] sm:$0xff]
        %v3634 = vld [vmem:[%s375 + $0x2068] sm:$0xff]
        %v3635 = vld [vmem:[%s375 + $0x2070] sm:$0xff]
        %v3636 = vld [vmem:[%s375 + $0x2078] sm:$0xf]
        %v3637 = vld [vmem:[%s375 + $0x207c] sm:$0xff]
        %v3638 = vld [vmem:[%s375 + $0x2084] sm:$0xff]
        %v3639 = vld [vmem:[%s375 + $0x208c] sm:$0xff]
        %v3640 = vld [vmem:[%s375 + $0x2094] sm:$0xff]
        %v3641 = vld [vmem:[%s375 + $0x209c] sm:$0xff]
        %v3642 = vld [vmem:[%s375 + $0x20a4] sm:$0xff]
        %v3643 = vld [vmem:[%s375 + $0x20ac] sm:$0xff]
        %v3644 = vld [vmem:[%s375 + $0x20b4] sm:$0xff]
        %v3645 = vld [vmem:[%s375 + $0x20bc] sm:$0xff]
        %v3646 = vld [vmem:[%s375 + $0x20c4] sm:$0xff]
        %v3647 = vld [vmem:[%s375 + $0x20cc] sm:$0xf]
        %v3648 = vld [vmem:[%s375 + $0x20d0] sm:$0xff]
        %v3649 = vld [vmem:[%s375 + $0x20d8] sm:$0xff]
        %v3650 = vld [vmem:[%s375 + $0x20e0] sm:$0xff]
        %v3651 = vld [vmem:[%s375 + $0x20e8] sm:$0xff]
        %v3652 = vld [vmem:[%s375 + $0x20f0] sm:$0xff]
        %v3653 = vld [vmem:[%s375 + $0x20f8] sm:$0xff]
        %v3654 = vld [vmem:[%s375 + $0x2100] sm:$0xff]
        %v3655 = vld [vmem:[%s375 + $0x2108] sm:$0xff]
        %v3656 = vld [vmem:[%s375 + $0x2110] sm:$0xff]
        %v3657 = vld [vmem:[%s375 + $0x2118] sm:$0xff]
        %v3658 = vld [vmem:[%s375 + $0x2120] sm:$0xf]
        %v3659 = vld [vmem:[%s375 + $0x2124] sm:$0xff]
        %v3660 = vld [vmem:[%s375 + $0x212c] sm:$0xff]
        %v3661 = vld [vmem:[%s375 + $0x2134] sm:$0xff]
        %v3662 = vld [vmem:[%s375 + $0x213c] sm:$0xff]
        %v3663 = vld [vmem:[%s375 + $0x2144] sm:$0xff]
        %v3664 = vld [vmem:[%s375 + $0x214c] sm:$0xff]
        %v3665 = vld [vmem:[%s375 + $0x2154] sm:$0xff]
        %v3666 = vld [vmem:[%s375 + $0x215c] sm:$0xff]
        %v3667 = vld [vmem:[%s375 + $0x2164] sm:$0xff]
        %v3668 = vld [vmem:[%s375 + $0x216c] sm:$0xff]
        %v3669 = vld [vmem:[%s375 + $0x2174] sm:$0xf]
        %v3670 = vld [vmem:[%s375 + $0x2178] sm:$0xff]
        %v3671 = vld [vmem:[%s375 + $0x2180] sm:$0xff]
        %v3672 = vld [vmem:[%s375 + $0x2188] sm:$0xff]
        %v3673 = vld [vmem:[%s375 + $0x2190] sm:$0xff]
        %v3674 = vld [vmem:[%s375 + $0x2198] sm:$0xff]
        %v3675 = vld [vmem:[%s375 + $0x21a0] sm:$0xff]
        %v3676 = vld [vmem:[%s375 + $0x21a8] sm:$0xff]
        %v3677 = vld [vmem:[%s375 + $0x21b0] sm:$0xff]
        %v3678 = vld [vmem:[%s375 + $0x21b8] sm:$0xff]
        %v3679 = vld [vmem:[%s375 + $0x21c0] sm:$0xff]
        %v3680 = vld [vmem:[%s375 + $0x21c8] sm:$0xf]
        %v3681 = vld [vmem:[%s375 + $0x21cc] sm:$0xff]
        %v3682 = vld [vmem:[%s375 + $0x21d4] sm:$0xff]
        %v3683 = vld [vmem:[%s375 + $0x21dc] sm:$0xff]
        %v3684 = vld [vmem:[%s375 + $0x21e4] sm:$0xff]
        %v3685 = vld [vmem:[%s375 + $0x21ec] sm:$0xff]
        %v3686 = vld [vmem:[%s375 + $0x21f4] sm:$0xff]
        %v3687 = vld [vmem:[%s375 + $0x21fc] sm:$0xff]
        %v3688 = vld [vmem:[%s375 + $0x2204] sm:$0xff]
        %v3689 = vld [vmem:[%s375 + $0x220c] sm:$0xff]
        %v3690 = vld [vmem:[%s375 + $0x2214] sm:$0xff]
        %v3691 = vld [vmem:[%s375 + $0x221c] sm:$0xf]
        %v3692 = vld [vmem:[%s375 + $0x2220] sm:$0xff]
        %v3693 = vld [vmem:[%s375 + $0x2228] sm:$0xff]
        %v3694 = vld [vmem:[%s375 + $0x2230] sm:$0xff]
        %v3695 = vld [vmem:[%s375 + $0x2238] sm:$0xff]
        %v3696 = vld [vmem:[%s375 + $0x2240] sm:$0xff]
        %v3697 = vld [vmem:[%s375 + $0x2248] sm:$0xff]
        %v3698 = vld [vmem:[%s375 + $0x2250] sm:$0xff]
        %v3699 = vld [vmem:[%s375 + $0x2258] sm:$0xff]
        %v3700 = vld [vmem:[%s375 + $0x2260] sm:$0xff]
        %v3701 = vld [vmem:[%s375 + $0x2268] sm:$0xff]
        %v3702 = vld [vmem:[%s375 + $0x2270] sm:$0xf]
        %v3703 = vld [vmem:[%s375 + $0x2274] sm:$0xff]
        %v3704 = vld [vmem:[%s375 + $0x227c] sm:$0xff]
        %v3705 = vld [vmem:[%s375 + $0x2284] sm:$0xff]
        %v3706 = vld [vmem:[%s375 + $0x228c] sm:$0xff]
        %v3707 = vld [vmem:[%s375 + $0x2294] sm:$0xff]
        %v3708 = vld [vmem:[%s375 + $0x229c] sm:$0xff]
        %v3709 = vld [vmem:[%s375 + $0x22a4] sm:$0xff]
        %v3710 = vld [vmem:[%s375 + $0x22ac] sm:$0xff]
        %v3711 = vld [vmem:[%s375 + $0x22b4] sm:$0xff]
        %v3712 = vld [vmem:[%s375 + $0x22bc] sm:$0xff]
        %v3713 = vld [vmem:[%s375 + $0x22c4] sm:$0xf]
        %v3714 = vld [vmem:[%s375 + $0x22c8] sm:$0xff]
        %v3715 = vld [vmem:[%s375 + $0x22d0] sm:$0xff]
        %v3716 = vld [vmem:[%s375 + $0x22d8] sm:$0xff]
        %v3717 = vld [vmem:[%s375 + $0x22e0] sm:$0xff]
        %v3718 = vld [vmem:[%s375 + $0x22e8] sm:$0xff]
        %v3719 = vld [vmem:[%s375 + $0x22f0] sm:$0xff]
        %v3720 = vld [vmem:[%s375 + $0x22f8] sm:$0xff]
        %v3721 = vld [vmem:[%s375 + $0x2300] sm:$0xff]
        %v3722 = vld [vmem:[%s375 + $0x2308] sm:$0xff]
        %v3723 = vld [vmem:[%s375 + $0x2310] sm:$0xff]
        %v3724 = vld [vmem:[%s375 + $0x2318] sm:$0xf]
        %v3725 = vld [vmem:[%s375 + $0x231c] sm:$0xff]
        %v3726 = vld [vmem:[%s375 + $0x2324] sm:$0xff]
        %v3727 = vld [vmem:[%s375 + $0x232c] sm:$0xff]
        %v3728 = vld [vmem:[%s375 + $0x2334] sm:$0xff]
        %v3729 = vld [vmem:[%s375 + $0x233c] sm:$0xff]
        %v3730 = vld [vmem:[%s375 + $0x2344] sm:$0xff]
        %v3731 = vld [vmem:[%s375 + $0x234c] sm:$0xff]
        %v3732 = vld [vmem:[%s375 + $0x2354] sm:$0xff]
        %v3733 = vld [vmem:[%s375 + $0x235c] sm:$0xff]
        %v3734 = vld [vmem:[%s375 + $0x2364] sm:$0xff]
        %v3735 = vld [vmem:[%s375 + $0x236c] sm:$0xf]
        %v3736 = vld [vmem:[%s375 + $0x2370] sm:$0xff]
        %v3737 = vld [vmem:[%s375 + $0x2378] sm:$0xff]
        %v3738 = vld [vmem:[%s375 + $0x2380] sm:$0xff]
        %v3739 = vld [vmem:[%s375 + $0x2388] sm:$0xff]
        %v3740 = vld [vmem:[%s375 + $0x2390] sm:$0xff]
        %v3741 = vld [vmem:[%s375 + $0x2398] sm:$0xff]
        %v3742 = vld [vmem:[%s375 + $0x23a0] sm:$0xff]
        %v3743 = vld [vmem:[%s375 + $0x23a8] sm:$0xff]
        %v3744 = vld [vmem:[%s375 + $0x23b0] sm:$0xff]
        %v3745 = vld [vmem:[%s375 + $0x23b8] sm:$0xff]
        %v3746 = vld [vmem:[%s375 + $0x23c0] sm:$0xf]
        %v3747 = vld [vmem:[%s375 + $0x23c4] sm:$0xff]
        %v3748 = vld [vmem:[%s375 + $0x23cc] sm:$0xff]
        %v3749 = vld [vmem:[%s375 + $0x23d4] sm:$0xff]
        %v3750 = vld [vmem:[%s375 + $0x23dc] sm:$0xff]
        %v3751 = vld [vmem:[%s375 + $0x23e4] sm:$0xff]
        %v3752 = vld [vmem:[%s375 + $0x23ec] sm:$0xff]
        %v3753 = vld [vmem:[%s375 + $0x23f4] sm:$0xff]
        %v3754 = vld [vmem:[%s375 + $0x23fc] sm:$0xff]
        %v3755 = vld [vmem:[%s375 + $0x2404] sm:$0xff]
        %v3756 = vld [vmem:[%s375 + $0x240c] sm:$0xff]
        %v3757 = vld [vmem:[%s375 + $0x2414] sm:$0xf]
        %v3758 = vld [vmem:[%s375 + $0x2418] sm:$0xff]
        %v3759 = vld [vmem:[%s375 + $0x2420] sm:$0xff]
        %v3760 = vld [vmem:[%s375 + $0x2428] sm:$0xff]
        %v3761 = vld [vmem:[%s375 + $0x2430] sm:$0xff]
        %v3762 = vld [vmem:[%s375 + $0x2438] sm:$0xff]
        %v3763 = vld [vmem:[%s375 + $0x2440] sm:$0xff]
        %v3764 = vld [vmem:[%s375 + $0x2448] sm:$0xff]
        %v3765 = vld [vmem:[%s375 + $0x2450] sm:$0xff]
        %v3766 = vld [vmem:[%s375 + $0x2458] sm:$0xff]
        %v3767 = vld [vmem:[%s375 + $0x2460] sm:$0xff]
        %v3768 = vld [vmem:[%s375 + $0x2468] sm:$0xf]
        %v3769 = vld [vmem:[%s375 + $0x246c] sm:$0xff]
        %v3770 = vld [vmem:[%s375 + $0x2474] sm:$0xff]
        %v3771 = vld [vmem:[%s375 + $0x247c] sm:$0xff]
        %v3772 = vld [vmem:[%s375 + $0x2484] sm:$0xff]
        %v3773 = vld [vmem:[%s375 + $0x248c] sm:$0xff]
        %v3774 = vld [vmem:[%s375 + $0x2494] sm:$0xff]
        %v3775 = vld [vmem:[%s375 + $0x249c] sm:$0xff]
        %v3776 = vld [vmem:[%s375 + $0x24a4] sm:$0xff]
        %v3777 = vld [vmem:[%s375 + $0x24ac] sm:$0xff]
        %v3778 = vld [vmem:[%s375 + $0x24b4] sm:$0xff]
        %v3779 = vld [vmem:[%s375 + $0x24bc] sm:$0xf]
        %v3780 = vld [vmem:[%s375 + $0x24c0] sm:$0xff]
        %v3781 = vld [vmem:[%s375 + $0x24c8] sm:$0xff]
        %v3782 = vld [vmem:[%s375 + $0x24d0] sm:$0xff]
        %v3783 = vld [vmem:[%s375 + $0x24d8] sm:$0xff]
        %v3784 = vld [vmem:[%s375 + $0x24e0] sm:$0xff]
        %v3785 = vld [vmem:[%s375 + $0x24e8] sm:$0xff]
        %v3786 = vld [vmem:[%s375 + $0x24f0] sm:$0xff]
        %v3787 = vld [vmem:[%s375 + $0x24f8] sm:$0xff]
        %v3788 = vld [vmem:[%s375 + $0x2500] sm:$0xff]
        %v3789 = vld [vmem:[%s375 + $0x2508] sm:$0xff]
        %v3790 = vld [vmem:[%s375 + $0x2510] sm:$0xf]
        %v3791 = vld [vmem:[%s375 + $0x2514] sm:$0xff]
        %v3792 = vld [vmem:[%s375 + $0x251c] sm:$0xff]
        %v3793 = vld [vmem:[%s375 + $0x2524] sm:$0xff]
        %v3794 = vld [vmem:[%s375 + $0x252c] sm:$0xff]
        %v3795 = vld [vmem:[%s375 + $0x2534] sm:$0xff]
        %v3796 = vld [vmem:[%s375 + $0x253c] sm:$0xff]
        %v3797 = vld [vmem:[%s375 + $0x2544] sm:$0xff]
        %v3798 = vld [vmem:[%s375 + $0x254c] sm:$0xff]
        %v3799 = vld [vmem:[%s375 + $0x2554] sm:$0xff]
        %v3800 = vld [vmem:[%s375 + $0x255c] sm:$0xff]
        %v3801 = vld [vmem:[%s375 + $0x2564] sm:$0xf]
        %v3802 = vld [vmem:[%s375 + $0x2568] sm:$0xff]
        %v3803 = vld [vmem:[%s375 + $0x2570] sm:$0xff]
        %v3804 = vld [vmem:[%s375 + $0x2578] sm:$0xff]
        %v3805 = vld [vmem:[%s375 + $0x2580] sm:$0xff]
        %v3806 = vld [vmem:[%s375 + $0x2588] sm:$0xff]
        %v3807 = vld [vmem:[%s375 + $0x2590] sm:$0xff]
        %v3808 = vld [vmem:[%s375 + $0x2598] sm:$0xff]
        %v3809 = vld [vmem:[%s375 + $0x25a0] sm:$0xff]
        %v3810 = vld [vmem:[%s375 + $0x25a8] sm:$0xff]
        %v3811 = vld [vmem:[%s375 + $0x25b0] sm:$0xff]
        %v3812 = vld [vmem:[%s375 + $0x25b8] sm:$0xf]
        %v3813 = vld [vmem:[%s375 + $0x25bc] sm:$0xff]
        %v3814 = vld [vmem:[%s375 + $0x25c4] sm:$0xff]
        %v3815 = vld [vmem:[%s375 + $0x25cc] sm:$0xff]
        %v3816 = vld [vmem:[%s375 + $0x25d4] sm:$0xff]
        %v3817 = vld [vmem:[%s375 + $0x25dc] sm:$0xff]
        %v3818 = vld [vmem:[%s375 + $0x25e4] sm:$0xff]
        %v3819 = vld [vmem:[%s375 + $0x25ec] sm:$0xff]
        %v3820 = vld [vmem:[%s375 + $0x25f4] sm:$0xff]
        %v3821 = vld [vmem:[%s375 + $0x25fc] sm:$0xff]
        %v3822 = vld [vmem:[%s375 + $0x2604] sm:$0xff]
        %v3823 = vld [vmem:[%s375 + $0x260c] sm:$0xf]
        %v3824 = vld [vmem:[%s375 + $0x2610] sm:$0xff]
        %v3825 = vld [vmem:[%s375 + $0x2618] sm:$0xff]
        %v3826 = vld [vmem:[%s375 + $0x2620] sm:$0xff]
        %v3827 = vld [vmem:[%s375 + $0x2628] sm:$0xff]
        %v3828 = vld [vmem:[%s375 + $0x2630] sm:$0xff]
        %v3829 = vld [vmem:[%s375 + $0x2638] sm:$0xff]
        %v3830 = vld [vmem:[%s375 + $0x2640] sm:$0xff]
        %v3831 = vld [vmem:[%s375 + $0x2648] sm:$0xff]
        %v3832 = vld [vmem:[%s375 + $0x2650] sm:$0xff]
        %v3833 = vld [vmem:[%s375 + $0x2658] sm:$0xff]
        %v3834 = vld [vmem:[%s375 + $0x2660] sm:$0xf]
        %v3835 = vld [vmem:[%s375 + $0x2664] sm:$0xff]
        %v3836 = vld [vmem:[%s375 + $0x266c] sm:$0xff]
        %v3837 = vld [vmem:[%s375 + $0x2674] sm:$0xff]
        %v3838 = vld [vmem:[%s375 + $0x267c] sm:$0xff]
        %v3839 = vld [vmem:[%s375 + $0x2684] sm:$0xff]
        %v3840 = vld [vmem:[%s375 + $0x268c] sm:$0xff]
        %v3841 = vld [vmem:[%s375 + $0x2694] sm:$0xff]
        %v3842 = vld [vmem:[%s375 + $0x269c] sm:$0xff]
        %v3843 = vld [vmem:[%s375 + $0x26a4] sm:$0xff]
        %v3844 = vld [vmem:[%s375 + $0x26ac] sm:$0xff]
        %v3845 = vld [vmem:[%s375 + $0x26b4] sm:$0xf]
        %v3846 = vld [vmem:[%s375 + $0x26b8] sm:$0xff]
        %v3847 = vld [vmem:[%s375 + $0x26c0] sm:$0xff]
        %v3848 = vld [vmem:[%s375 + $0x26c8] sm:$0xff]
        %v3849 = vld [vmem:[%s375 + $0x26d0] sm:$0xff]
        %v3850 = vld [vmem:[%s375 + $0x26d8] sm:$0xff]
        %v3851 = vld [vmem:[%s375 + $0x26e0] sm:$0xff]
        %v3852 = vld [vmem:[%s375 + $0x26e8] sm:$0xff]
        %v3853 = vld [vmem:[%s375 + $0x26f0] sm:$0xff]
        %v3854 = vld [vmem:[%s375 + $0x26f8] sm:$0xff]
        %v3855 = vld [vmem:[%s375 + $0x2700] sm:$0xff]
        %v3856 = vld [vmem:[%s375 + $0x2708] sm:$0xf]
        %v3857 = vld [vmem:[%s375 + $0x270c] sm:$0xff]
        %v3858 = vld [vmem:[%s375 + $0x2714] sm:$0xff]
        %v3859 = vld [vmem:[%s375 + $0x271c] sm:$0xff]
        %v3860 = vld [vmem:[%s375 + $0x2724] sm:$0xff]
        %v3861 = vld [vmem:[%s375 + $0x272c] sm:$0xff]
        %v3862 = vld [vmem:[%s375 + $0x2734] sm:$0xff]
        %v3863 = vld [vmem:[%s375 + $0x273c] sm:$0xff]
        %v3864 = vld [vmem:[%s375 + $0x2744] sm:$0xff]
        %v3865 = vld [vmem:[%s375 + $0x274c] sm:$0xff]
        %v3866 = vld [vmem:[%s375 + $0x2754] sm:$0xff]
        %v3867 = vld [vmem:[%s375 + $0x275c] sm:$0xf]
        %v3868 = vld [vmem:[%s375 + $0x2760] sm:$0xff]
        %v3869 = vld [vmem:[%s375 + $0x2768] sm:$0xff]
        %v3870 = vld [vmem:[%s375 + $0x2770] sm:$0xff]
        %v3871 = vld [vmem:[%s375 + $0x2778] sm:$0xff]
        %v3872 = vld [vmem:[%s375 + $0x2780] sm:$0xff]
        %v3873 = vld [vmem:[%s375 + $0x2788] sm:$0xff]
        %v3874 = vld [vmem:[%s375 + $0x2790] sm:$0xff]
        %v3875 = vld [vmem:[%s375 + $0x2798] sm:$0xff]
        %v3876 = vld [vmem:[%s375 + $0x27a0] sm:$0xff]
        %v3877 = vld [vmem:[%s375 + $0x27a8] sm:$0xff]
        %v3878 = vld [vmem:[%s375 + $0x27b0] sm:$0xf]
        %v3879 = vld [vmem:[%s375 + $0x27b4] sm:$0xff]
        %v3880 = vld [vmem:[%s375 + $0x27bc] sm:$0xff]
        %v3881 = vld [vmem:[%s375 + $0x27c4] sm:$0xff]
        %v3882 = vld [vmem:[%s375 + $0x27cc] sm:$0xff]
        %v3883 = vld [vmem:[%s375 + $0x27d4] sm:$0xff]
        %v3884 = vld [vmem:[%s375 + $0x27dc] sm:$0xff]
        %v3885 = vld [vmem:[%s375 + $0x27e4] sm:$0xff]
        %v3886 = vld [vmem:[%s375 + $0x27ec] sm:$0xff]
        %v3887 = vld [vmem:[%s375 + $0x27f4] sm:$0xff]
        %v3888 = vld [vmem:[%s375 + $0x27fc] sm:$0xff]
        %v3889 = vld [vmem:[%s375 + $0x2804] sm:$0xf]
        %v3890 = vld [vmem:[%s375 + $0x2808] sm:$0xff]
        %v3891 = vld [vmem:[%s375 + $0x2810] sm:$0xff]
        %v3892 = vld [vmem:[%s375 + $0x2818] sm:$0xff]
        %v3893 = vld [vmem:[%s375 + $0x2820] sm:$0xff]
        %v3894 = vld [vmem:[%s375 + $0x2828] sm:$0xff]
        %v3895 = vld [vmem:[%s375 + $0x2830] sm:$0xff]
        %v3896 = vld [vmem:[%s375 + $0x2838] sm:$0xff]
        %v3897 = vld [vmem:[%s375 + $0x2840] sm:$0xff]
        %v3898 = vld [vmem:[%s375 + $0x2848] sm:$0xff]
        %v3899 = vld [vmem:[%s375 + $0x2850] sm:$0xff]
        %v3900 = vld [vmem:[%s375 + $0x2858] sm:$0xf]
        %v3901 = vld [vmem:[%s375 + $0x285c] sm:$0xff]
        %v3902 = vld [vmem:[%s375 + $0x2864] sm:$0xff]
        %v3903 = vld [vmem:[%s375 + $0x286c] sm:$0xff]
        %v3904 = vld [vmem:[%s375 + $0x2874] sm:$0xff]
        %v3905 = vld [vmem:[%s375 + $0x287c] sm:$0xff]
        %v3906 = vld [vmem:[%s375 + $0x2884] sm:$0xff]
        %v3907 = vld [vmem:[%s375 + $0x288c] sm:$0xff]
        %v3908 = vld [vmem:[%s375 + $0x2894] sm:$0xff]
        %v3909 = vld [vmem:[%s375 + $0x289c] sm:$0xff]
        %v3910 = vld [vmem:[%s375 + $0x28a4] sm:$0xff]
        %v3911 = vld [vmem:[%s375 + $0x28ac] sm:$0xf]
        %v3912 = vld [vmem:[%s375 + $0x28b0] sm:$0xff]
        %v3913 = vld [vmem:[%s375 + $0x28b8] sm:$0xff]
        %v3914 = vld [vmem:[%s375 + $0x28c0] sm:$0xff]
        %v3915 = vld [vmem:[%s375 + $0x28c8] sm:$0xff]
        %v3916 = vld [vmem:[%s375 + $0x28d0] sm:$0xff]
        %v3917 = vld [vmem:[%s375 + $0x28d8] sm:$0xff]
        %v3918 = vld [vmem:[%s375 + $0x28e0] sm:$0xff]
        %v3919 = vld [vmem:[%s375 + $0x28e8] sm:$0xff]
        %v3920 = vld [vmem:[%s375 + $0x28f0] sm:$0xff]
        %v3921 = vld [vmem:[%s375 + $0x28f8] sm:$0xff]
        %v3922 = vld [vmem:[%s375 + $0x2900] sm:$0xf]
        %v3923 = vld [vmem:[%s375 + $0x2904] sm:$0xff]
        %v3924 = vld [vmem:[%s375 + $0x290c] sm:$0xff]
        %v3925 = vld [vmem:[%s375 + $0x2914] sm:$0xff]
        %v3926 = vld [vmem:[%s375 + $0x291c] sm:$0xff]
        %v3927 = vld [vmem:[%s375 + $0x2924] sm:$0xff]
        %v3928 = vld [vmem:[%s375 + $0x292c] sm:$0xff]
        %v3929 = vld [vmem:[%s375 + $0x2934] sm:$0xff]
        %v3930 = vld [vmem:[%s375 + $0x293c] sm:$0xff]
        %v3931 = vld [vmem:[%s375 + $0x2944] sm:$0xff]
        %v3932 = vld [vmem:[%s375 + $0x294c] sm:$0xff]
        %v3933 = vld [vmem:[%s375 + $0x2954] sm:$0xf]
        %v3934 = vld [vmem:[%s375 + $0x2958] sm:$0xff]
        %v3935 = vld [vmem:[%s375 + $0x2960] sm:$0xff]
        %v3936 = vld [vmem:[%s375 + $0x2968] sm:$0xff]
        %v3937 = vld [vmem:[%s375 + $0x2970] sm:$0xff]
        %v3938 = vld [vmem:[%s375 + $0x2978] sm:$0xff]
        %v3939 = vld [vmem:[%s375 + $0x2980] sm:$0xff]
        %v3940 = vld [vmem:[%s375 + $0x2988] sm:$0xff]
        %v3941 = vld [vmem:[%s375 + $0x2990] sm:$0xff]
        %v3942 = vld [vmem:[%s375 + $0x2998] sm:$0xff]
        %v3943 = vld [vmem:[%s375 + $0x29a0] sm:$0xff]
        %v3944 = vld [vmem:[%s375 + $0x29a8] sm:$0xf]
        %v3945 = vld [vmem:[%s375 + $0x29ac] sm:$0xff]
        %v3946 = vld [vmem:[%s375 + $0x29b4] sm:$0xff]
        %v3947 = vld [vmem:[%s375 + $0x29bc] sm:$0xff]
        %v3948 = vld [vmem:[%s375 + $0x29c4] sm:$0xff]
        %v3949 = vld [vmem:[%s375 + $0x29cc] sm:$0xff]
        %v3950 = vld [vmem:[%s375 + $0x29d4] sm:$0xff]
        %v3951 = vld [vmem:[%s375 + $0x29dc] sm:$0xff]
        %v3952 = vld [vmem:[%s375 + $0x29e4] sm:$0xff]
        %v3953 = vld [vmem:[%s375 + $0x29ec] sm:$0xff]
        %v3954 = vld [vmem:[%s375 + $0x29f4] sm:$0xff]
        %v3955 = vld [vmem:[%s375 + $0x29fc] sm:$0xf]
        %v3956 = vld [vmem:[%s384] sm:$0xff]
        %v3957 = vld [vmem:[%s384 + $0x8] sm:$0xff]
        %v3958 = vld [vmem:[%s384 + $0x10] sm:$0x1f]
        %v3962 = vlaneseq
        %v3963 = vshrl.u32 %v3962, 7
        %v3964 = vsub.s32 0, %v3963
        %v3965 = vrot.slane %v3956, %v3964
        %v3966 = vlaneseq
        %v3967 = vshrl.u32 %v3966, 7
        %v3968 = vsub.s32 1, %v3967
        %v3969 = vrot.slane %v3956, %v3968
        %v3970 = vlaneseq
        %v3971 = vshrl.u32 %v3970, 7
        %v3972 = vsub.s32 2, %v3971
        %v3973 = vrot.slane %v3956, %v3972
        %v3974 = vlaneseq
        %v3975 = vshrl.u32 %v3974, 7
        %v3976 = vsub.s32 3, %v3975
        %v3977 = vrot.slane %v3956, %v3976
        %v3978 = vlaneseq
        %v3979 = vshrl.u32 %v3978, 7
        %v3980 = vsub.s32 4, %v3979
        %v3981 = vrot.slane %v3956, %v3980
        %v3982 = vlaneseq
        %v3983 = vshrl.u32 %v3982, 7
        %v3984 = vsub.s32 5, %v3983
        %v3985 = vrot.slane %v3956, %v3984
        %v3986 = vlaneseq
        %v3987 = vshrl.u32 %v3986, 7
        %v3988 = vsub.s32 6, %v3987
        %v3989 = vrot.slane %v3956, %v3988
        %v3990 = vlaneseq
        %v3991 = vshrl.u32 %v3990, 7
        %v3992 = vsub.s32 7, %v3991
        %v3993 = vrot.slane %v3956, %v3992
        %v3994 = vlaneseq
        %v3995 = vshrl.u32 %v3994, 7
        %v3996 = vsub.s32 0, %v3995
        %v3997 = vrot.slane %v3957, %v3996
        %v3998 = vlaneseq
        %v3999 = vshrl.u32 %v3998, 7
        %v4000 = vsub.s32 1, %v3999
        %v4001 = vrot.slane %v3957, %v4000
        %v4002 = vlaneseq
        %v4003 = vshrl.u32 %v4002, 7
        %v4004 = vsub.s32 2, %v4003
        %v4005 = vrot.slane %v3957, %v4004
        %v4006 = vlaneseq
        %v4007 = vshrl.u32 %v4006, 7
        %v4008 = vsub.s32 3, %v4007
        %v4009 = vrot.slane %v3957, %v4008
        %v4010 = vlaneseq
        %v4011 = vshrl.u32 %v4010, 7
        %v4012 = vsub.s32 4, %v4011
        %v4013 = vrot.slane %v3957, %v4012
        %v4014 = vlaneseq
        %v4015 = vshrl.u32 %v4014, 7
        %v4016 = vsub.s32 5, %v4015
        %v4017 = vrot.slane %v3957, %v4016
        %v4018 = vlaneseq
        %v4019 = vshrl.u32 %v4018, 7
        %v4020 = vsub.s32 6, %v4019
        %v4021 = vrot.slane %v3957, %v4020
        %v4022 = vlaneseq
        %v4023 = vshrl.u32 %v4022, 7
        %v4024 = vsub.s32 7, %v4023
        %v4025 = vrot.slane %v3957, %v4024
        %v4026 = vlaneseq
        %v4027 = vshrl.u32 %v4026, 7
        %v4028 = vsub.s32 0, %v4027
        %v4029 = vrot.slane %v3958, %v4028
        %v4030 = vlaneseq
        %v4031 = vshrl.u32 %v4030, 7
        %v4032 = vsub.s32 1, %v4031
        %v4033 = vrot.slane %v3958, %v4032
        %v4034 = vlaneseq
        %v4035 = vshrl.u32 %v4034, 7
        %v4036 = vsub.s32 2, %v4035
        %v4037 = vrot.slane %v3958, %v4036
        %v4038 = vlaneseq
        %v4039 = vshrl.u32 %v4038, 7
        %v4040 = vsub.s32 3, %v4039
        %v4041 = vrot.slane %v3958, %v4040
        %v4042 = vlaneseq
        %v4043 = vshrl.u32 %v4042, 7
        %v4044 = vsub.s32 4, %v4043
        %v4045 = vrot.slane %v3958, %v4044
        %v4071 = vunpack.c.l.b16 %v2544
        %v4072 = vunpack.c.h.b16 %v2544
        %v4073 = vunpack.c.l.b16 %v2545
        %v4074 = vunpack.c.h.b16 %v2545
        %v4075 = vunpack.c.l.b16 %v2546
        %v4076 = vunpack.c.h.b16 %v2546
        %v4077 = vunpack.c.l.b16 %v2547
        %v4078 = vunpack.c.h.b16 %v2547
        %v4079 = vpack.c.b16 %v4071, %v4071
        %v4080 = vpack.c.b16 %v4072, %v4072
        %v4081 = vpack.c.b16 %v4073, %v4073
        %v4082 = vpack.c.b16 %v4074, %v4074
        %v4083 = vpack.c.b16 %v4075, %v4075
        %v4084 = vpack.c.b16 %v4076, %v4076
        %v4085 = vpack.c.b16 %v4077, %v4077
        %v4086 = vpack.c.b16 %v4078, %v4078
        %v5503 = vunpack.c.l.b16 %v2548
        %v5504 = vunpack.c.h.b16 %v2548
        %v5505 = vunpack.c.l.b16 %v2549
        %v5506 = vunpack.c.h.b16 %v2549
        %v5507 = vunpack.c.l.b16 %v2550
        %v5508 = vunpack.c.h.b16 %v2550
        %v5509 = vunpack.c.l.b16 %v2551
        %v5510 = vunpack.c.h.b16 %v2551
        %v5511 = vunpack.c.l.b16 %v2552
        %v5512 = vunpack.c.h.b16 %v2552
        %v5513 = vunpack.c.l.b16 %v2553
        %v5514 = vunpack.c.h.b16 %v2553
        %v5515 = vunpack.c.l.b16 %v2554
        %v5516 = vunpack.c.h.b16 %v2554
        %v5517 = vunpack.c.l.b16 %v2555
        %v5518 = vunpack.c.h.b16 %v2555
        %v5519 = vunpack.c.l.b16 %v2556
        %v5520 = vunpack.c.h.b16 %v2556
        %v5521 = vunpack.c.l.b16 %v2557
        %v5522 = vunpack.c.h.b16 %v2557
        %v5523 = vunpack.c.l.b16 %v2558
        %v5524 = vunpack.c.l.b16 %v2559
        %v5525 = vunpack.c.h.b16 %v2559
        %v5526 = vunpack.c.l.b16 %v2560
        %v5527 = vunpack.c.h.b16 %v2560
        %v5528 = vunpack.c.l.b16 %v2561
        %v5529 = vunpack.c.h.b16 %v2561
        %v5530 = vunpack.c.l.b16 %v2562
        %v5531 = vunpack.c.h.b16 %v2562
        %v5532 = vunpack.c.l.b16 %v2563
        %v5533 = vunpack.c.h.b16 %v2563
        %v5534 = vunpack.c.l.b16 %v2564
        %v5535 = vunpack.c.h.b16 %v2564
        %v5536 = vunpack.c.l.b16 %v2565
        %v5537 = vunpack.c.h.b16 %v2565
        %v5538 = vunpack.c.l.b16 %v2566
        %v5539 = vunpack.c.h.b16 %v2566
        %v5540 = vunpack.c.l.b16 %v2567
        %v5541 = vunpack.c.h.b16 %v2567
        %v5542 = vunpack.c.l.b16 %v2568
        %v5543 = vunpack.c.h.b16 %v2568
        %v5544 = vunpack.c.l.b16 %v2569
        %v5545 = vunpack.c.l.b16 %v2570
        %v5546 = vunpack.c.h.b16 %v2570
        %v5547 = vunpack.c.l.b16 %v2571
        %v5548 = vunpack.c.h.b16 %v2571
        %v5549 = vunpack.c.l.b16 %v2572
        %v5550 = vunpack.c.h.b16 %v2572
        %v5551 = vunpack.c.l.b16 %v2573
        %v5552 = vunpack.c.h.b16 %v2573
        %v5553 = vunpack.c.l.b16 %v2574
        %v5554 = vunpack.c.h.b16 %v2574
        %v5555 = vunpack.c.l.b16 %v2575
        %v5556 = vunpack.c.h.b16 %v2575
        %v5557 = vunpack.c.l.b16 %v2576
        %v5558 = vunpack.c.h.b16 %v2576
        %v5559 = vunpack.c.l.b16 %v2577
        %v5560 = vunpack.c.h.b16 %v2577
        %v5561 = vunpack.c.l.b16 %v2578
        %v5562 = vunpack.c.h.b16 %v2578
        %v5563 = vunpack.c.l.b16 %v2579
        %v5564 = vunpack.c.h.b16 %v2579
        %v5565 = vunpack.c.l.b16 %v2580
        %v5566 = vunpack.c.l.b16 %v2581
        %v5567 = vunpack.c.h.b16 %v2581
        %v5568 = vunpack.c.l.b16 %v2582
        %v5569 = vunpack.c.h.b16 %v2582
        %v5570 = vunpack.c.l.b16 %v2583
        %v5571 = vunpack.c.h.b16 %v2583
        %v5572 = vunpack.c.l.b16 %v2584
        %v5573 = vunpack.c.h.b16 %v2584
        %v5574 = vunpack.c.l.b16 %v2585
        %v5575 = vunpack.c.h.b16 %v2585
        %v5576 = vunpack.c.l.b16 %v2586
        %v5577 = vunpack.c.h.b16 %v2586
        %v5578 = vunpack.c.l.b16 %v2587
        %v5579 = vunpack.c.h.b16 %v2587
        %v5580 = vunpack.c.l.b16 %v2588
        %v5581 = vunpack.c.h.b16 %v2588
        %v5582 = vunpack.c.l.b16 %v2589
        %v5583 = vunpack.c.h.b16 %v2589
        %v5584 = vunpack.c.l.b16 %v2590
        %v5585 = vunpack.c.h.b16 %v2590
        %v5586 = vunpack.c.l.b16 %v2591
        %v5587 = vunpack.c.l.b16 %v2592
        %v5588 = vunpack.c.h.b16 %v2592
        %v5589 = vunpack.c.l.b16 %v2593
        %v5590 = vunpack.c.h.b16 %v2593
        %v5591 = vunpack.c.l.b16 %v2594
        %v5592 = vunpack.c.h.b16 %v2594
        %v5593 = vunpack.c.l.b16 %v2595
        %v5594 = vunpack.c.h.b16 %v2595
        %v5595 = vunpack.c.l.b16 %v2596
        %v5596 = vunpack.c.h.b16 %v2596
        %v5597 = vunpack.c.l.b16 %v2597
        %v5598 = vunpack.c.h.b16 %v2597
        %v5599 = vunpack.c.l.b16 %v2598
        %v5600 = vunpack.c.h.b16 %v2598
        %v5601 = vunpack.c.l.b16 %v2599
        %v5602 = vunpack.c.h.b16 %v2599
        %v5603 = vunpack.c.l.b16 %v2600
        %v5604 = vunpack.c.h.b16 %v2600
        %v5605 = vunpack.c.l.b16 %v2601
        %v5606 = vunpack.c.h.b16 %v2601
        %v5607 = vunpack.c.l.b16 %v2602
        %v5608 = vunpack.c.l.b16 %v2603
        %v5609 = vunpack.c.h.b16 %v2603
        %v5610 = vunpack.c.l.b16 %v2604
        %v5611 = vunpack.c.h.b16 %v2604
        %v5612 = vunpack.c.l.b16 %v2605
        %v5613 = vunpack.c.h.b16 %v2605
        %v5614 = vunpack.c.l.b16 %v2606
        %v5615 = vunpack.c.h.b16 %v2606
        %v5616 = vunpack.c.l.b16 %v2607
        %v5617 = vunpack.c.h.b16 %v2607
        %v5618 = vunpack.c.l.b16 %v2608
        %v5619 = vunpack.c.h.b16 %v2608
        %v5620 = vunpack.c.l.b16 %v2609
        %v5621 = vunpack.c.h.b16 %v2609
        %v5622 = vunpack.c.l.b16 %v2610
        %v5623 = vunpack.c.h.b16 %v2610
        %v5624 = vunpack.c.l.b16 %v2611
        %v5625 = vunpack.c.h.b16 %v2611
        %v5626 = vunpack.c.l.b16 %v2612
        %v5627 = vunpack.c.h.b16 %v2612
        %v5628 = vunpack.c.l.b16 %v2613
        %v5629 = vunpack.c.l.b16 %v2614
        %v5630 = vunpack.c.h.b16 %v2614
        %v5631 = vunpack.c.l.b16 %v2615
        %v5632 = vunpack.c.h.b16 %v2615
        %v5633 = vunpack.c.l.b16 %v2616
        %v5634 = vunpack.c.h.b16 %v2616
        %v5635 = vunpack.c.l.b16 %v2617
        %v5636 = vunpack.c.h.b16 %v2617
        %v5637 = vunpack.c.l.b16 %v2618
        %v5638 = vunpack.c.h.b16 %v2618
        %v5639 = vunpack.c.l.b16 %v2619
        %v5640 = vunpack.c.h.b16 %v2619
        %v5641 = vunpack.c.l.b16 %v2620
        %v5642 = vunpack.c.h.b16 %v2620
        %v5643 = vunpack.c.l.b16 %v2621
        %v5644 = vunpack.c.h.b16 %v2621
        %v5645 = vunpack.c.l.b16 %v2622
        %v5646 = vunpack.c.h.b16 %v2622
        %v5647 = vunpack.c.l.b16 %v2623
        %v5648 = vunpack.c.h.b16 %v2623
        %v5649 = vunpack.c.l.b16 %v2624
        %v5650 = vunpack.c.l.b16 %v2625
        %v5651 = vunpack.c.h.b16 %v2625
        %v5652 = vunpack.c.l.b16 %v2626
        %v5653 = vunpack.c.h.b16 %v2626
        %v5654 = vunpack.c.l.b16 %v2627
        %v5655 = vunpack.c.h.b16 %v2627
        %v5656 = vunpack.c.l.b16 %v2628
        %v5657 = vunpack.c.h.b16 %v2628
        %v5658 = vunpack.c.l.b16 %v2629
        %v5659 = vunpack.c.h.b16 %v2629
        %v5660 = vunpack.c.l.b16 %v2630
        %v5661 = vunpack.c.h.b16 %v2630
        %v5662 = vunpack.c.l.b16 %v2631
        %v5663 = vunpack.c.h.b16 %v2631
        %v5664 = vunpack.c.l.b16 %v2632
        %v5665 = vunpack.c.h.b16 %v2632
        %v5666 = vunpack.c.l.b16 %v2633
        %v5667 = vunpack.c.h.b16 %v2633
        %v5668 = vunpack.c.l.b16 %v2634
        %v5669 = vunpack.c.h.b16 %v2634
        %v5670 = vunpack.c.l.b16 %v2635
        %v5671 = vunpack.c.l.b16 %v2636
        %v5672 = vunpack.c.h.b16 %v2636
        %v5673 = vunpack.c.l.b16 %v2637
        %v5674 = vunpack.c.h.b16 %v2637
        %v5675 = vunpack.c.l.b16 %v2638
        %v5676 = vunpack.c.h.b16 %v2638
        %v5677 = vunpack.c.l.b16 %v2639
        %v5678 = vunpack.c.h.b16 %v2639
        %v5679 = vunpack.c.l.b16 %v2640
        %v5680 = vunpack.c.h.b16 %v2640
        %v5681 = vunpack.c.l.b16 %v2641
        %v5682 = vunpack.c.h.b16 %v2641
        %v5683 = vunpack.c.l.b16 %v2642
        %v5684 = vunpack.c.h.b16 %v2642
        %v5685 = vunpack.c.l.b16 %v2643
        %v5686 = vunpack.c.h.b16 %v2643
        %v5687 = vunpack.c.l.b16 %v2644
        %v5688 = vunpack.c.h.b16 %v2644
        %v5689 = vunpack.c.l.b16 %v2645
        %v5690 = vunpack.c.h.b16 %v2645
        %v5691 = vunpack.c.l.b16 %v2646
        %v5692 = vunpack.c.l.b16 %v2647
        %v5693 = vunpack.c.h.b16 %v2647
        %v5694 = vunpack.c.l.b16 %v2648
        %v5695 = vunpack.c.h.b16 %v2648
        %v5696 = vunpack.c.l.b16 %v2649
        %v5697 = vunpack.c.h.b16 %v2649
        %v5698 = vunpack.c.l.b16 %v2650
        %v5699 = vunpack.c.h.b16 %v2650
        %v5700 = vunpack.c.l.b16 %v2651
        %v5701 = vunpack.c.h.b16 %v2651
        %v5702 = vunpack.c.l.b16 %v2652
        %v5703 = vunpack.c.h.b16 %v2652
        %v5704 = vunpack.c.l.b16 %v2653
        %v5705 = vunpack.c.h.b16 %v2653
        %v5706 = vunpack.c.l.b16 %v2654
        %v5707 = vunpack.c.h.b16 %v2654
        %v5708 = vunpack.c.l.b16 %v2655
        %v5709 = vunpack.c.h.b16 %v2655
        %v5710 = vunpack.c.l.b16 %v2656
        %v5711 = vunpack.c.h.b16 %v2656
        %v5712 = vunpack.c.l.b16 %v2657
        %v5713 = vunpack.c.l.b16 %v2658
        %v5714 = vunpack.c.h.b16 %v2658
        %v5715 = vunpack.c.l.b16 %v2659
        %v5716 = vunpack.c.h.b16 %v2659
        %v5717 = vunpack.c.l.b16 %v2660
        %v5718 = vunpack.c.h.b16 %v2660
        %v5719 = vunpack.c.l.b16 %v2661
        %v5720 = vunpack.c.h.b16 %v2661
        %v5721 = vunpack.c.l.b16 %v2662
        %v5722 = vunpack.c.h.b16 %v2662
        %v5723 = vunpack.c.l.b16 %v2663
        %v5724 = vunpack.c.h.b16 %v2663
        %v5725 = vunpack.c.l.b16 %v2664
        %v5726 = vunpack.c.h.b16 %v2664
        %v5727 = vunpack.c.l.b16 %v2665
        %v5728 = vunpack.c.h.b16 %v2665
        %v5729 = vunpack.c.l.b16 %v2666
        %v5730 = vunpack.c.h.b16 %v2666
        %v5731 = vunpack.c.l.b16 %v2667
        %v5732 = vunpack.c.h.b16 %v2667
        %v5733 = vunpack.c.l.b16 %v2668
        %v5734 = vunpack.c.l.b16 %v2669
        %v5735 = vunpack.c.h.b16 %v2669
        %v5736 = vunpack.c.l.b16 %v2670
        %v5737 = vunpack.c.h.b16 %v2670
        %v5738 = vunpack.c.l.b16 %v2671
        %v5739 = vunpack.c.h.b16 %v2671
        %v5740 = vunpack.c.l.b16 %v2672
        %v5741 = vunpack.c.h.b16 %v2672
        %v5742 = vunpack.c.l.b16 %v2673
        %v5743 = vunpack.c.h.b16 %v2673
        %v5744 = vunpack.c.l.b16 %v2674
        %v5745 = vunpack.c.h.b16 %v2674
        %v5746 = vunpack.c.l.b16 %v2675
        %v5747 = vunpack.c.h.b16 %v2675
        %v5748 = vunpack.c.l.b16 %v2676
        %v5749 = vunpack.c.h.b16 %v2676
        %v5750 = vunpack.c.l.b16 %v2677
        %v5751 = vunpack.c.h.b16 %v2677
        %v5752 = vunpack.c.l.b16 %v2678
        %v5753 = vunpack.c.h.b16 %v2678
        %v5754 = vunpack.c.l.b16 %v2679
        %v5755 = vunpack.c.l.b16 %v2680
        %v5756 = vunpack.c.h.b16 %v2680
        %v5757 = vunpack.c.l.b16 %v2681
        %v5758 = vunpack.c.h.b16 %v2681
        %v5759 = vunpack.c.l.b16 %v2682
        %v5760 = vunpack.c.h.b16 %v2682
        %v5761 = vunpack.c.l.b16 %v2683
        %v5762 = vunpack.c.h.b16 %v2683
        %v5763 = vunpack.c.l.b16 %v2684
        %v5764 = vunpack.c.h.b16 %v2684
        %v5765 = vunpack.c.l.b16 %v2685
        %v5766 = vunpack.c.h.b16 %v2685
        %v5767 = vunpack.c.l.b16 %v2686
        %v5768 = vunpack.c.h.b16 %v2686
        %v5769 = vunpack.c.l.b16 %v2687
        %v5770 = vunpack.c.h.b16 %v2687
        %v5771 = vunpack.c.l.b16 %v2688
        %v5772 = vunpack.c.h.b16 %v2688
        %v5773 = vunpack.c.l.b16 %v2689
        %v5774 = vunpack.c.h.b16 %v2689
        %v5775 = vunpack.c.l.b16 %v2690
        %v5776 = vunpack.c.l.b16 %v2691
        %v5777 = vunpack.c.h.b16 %v2691
        %v5778 = vunpack.c.l.b16 %v2692
        %v5779 = vunpack.c.h.b16 %v2692
        %v5780 = vunpack.c.l.b16 %v2693
        %v5781 = vunpack.c.h.b16 %v2693
        %v5782 = vunpack.c.l.b16 %v2694
        %v5783 = vunpack.c.h.b16 %v2694
        %v5784 = vunpack.c.l.b16 %v2695
        %v5785 = vunpack.c.h.b16 %v2695
        %v5786 = vunpack.c.l.b16 %v2696
        %v5787 = vunpack.c.h.b16 %v2696
        %v5788 = vunpack.c.l.b16 %v2697
        %v5789 = vunpack.c.h.b16 %v2697
        %v5790 = vunpack.c.l.b16 %v2698
        %v5791 = vunpack.c.h.b16 %v2698
        %v5792 = vunpack.c.l.b16 %v2699
        %v5793 = vunpack.c.h.b16 %v2699
        %v5794 = vunpack.c.l.b16 %v2700
        %v5795 = vunpack.c.h.b16 %v2700
        %v5796 = vunpack.c.l.b16 %v2701
        %v5797 = vunpack.c.l.b16 %v2702
        %v5798 = vunpack.c.h.b16 %v2702
        %v5799 = vunpack.c.l.b16 %v2703
        %v5800 = vunpack.c.h.b16 %v2703
        %v5801 = vunpack.c.l.b16 %v2704
        %v5802 = vunpack.c.h.b16 %v2704
        %v5803 = vunpack.c.l.b16 %v2705
        %v5804 = vunpack.c.h.b16 %v2705
        %v5805 = vunpack.c.l.b16 %v2706
        %v5806 = vunpack.c.h.b16 %v2706
        %v5807 = vunpack.c.l.b16 %v2707
        %v5808 = vunpack.c.h.b16 %v2707
        %v5809 = vunpack.c.l.b16 %v2708
        %v5810 = vunpack.c.h.b16 %v2708
        %v5811 = vunpack.c.l.b16 %v2709
        %v5812 = vunpack.c.h.b16 %v2709
        %v5813 = vunpack.c.l.b16 %v2710
        %v5814 = vunpack.c.h.b16 %v2710
        %v5815 = vunpack.c.l.b16 %v2711
        %v5816 = vunpack.c.h.b16 %v2711
        %v5817 = vunpack.c.l.b16 %v2712
        %v5818 = vunpack.c.l.b16 %v2713
        %v5819 = vunpack.c.h.b16 %v2713
        %v5820 = vunpack.c.l.b16 %v2714
        %v5821 = vunpack.c.h.b16 %v2714
        %v5822 = vunpack.c.l.b16 %v2715
        %v5823 = vunpack.c.h.b16 %v2715
        %v5824 = vunpack.c.l.b16 %v2716
        %v5825 = vunpack.c.h.b16 %v2716
        %v5826 = vunpack.c.l.b16 %v2717
        %v5827 = vunpack.c.h.b16 %v2717
        %v5828 = vunpack.c.l.b16 %v2718
        %v5829 = vunpack.c.h.b16 %v2718
        %v5830 = vunpack.c.l.b16 %v2719
        %v5831 = vunpack.c.h.b16 %v2719
        %v5832 = vunpack.c.l.b16 %v2720
        %v5833 = vunpack.c.h.b16 %v2720
        %v5834 = vunpack.c.l.b16 %v2721
        %v5835 = vunpack.c.h.b16 %v2721
        %v5836 = vunpack.c.l.b16 %v2722
        %v5837 = vunpack.c.h.b16 %v2722
        %v5838 = vunpack.c.l.b16 %v2723
        %v5839 = vunpack.c.l.b16 %v2724
        %v5840 = vunpack.c.h.b16 %v2724
        %v5841 = vunpack.c.l.b16 %v2725
        %v5842 = vunpack.c.h.b16 %v2725
        %v5843 = vunpack.c.l.b16 %v2726
        %v5844 = vunpack.c.h.b16 %v2726
        %v5845 = vunpack.c.l.b16 %v2727
        %v5846 = vunpack.c.h.b16 %v2727
        %v5847 = vunpack.c.l.b16 %v2728
        %v5848 = vunpack.c.h.b16 %v2728
        %v5849 = vunpack.c.l.b16 %v2729
        %v5850 = vunpack.c.h.b16 %v2729
        %v5851 = vunpack.c.l.b16 %v2730
        %v5852 = vunpack.c.h.b16 %v2730
        %v5853 = vunpack.c.l.b16 %v2731
        %v5854 = vunpack.c.h.b16 %v2731
        %v5855 = vunpack.c.l.b16 %v2732
        %v5856 = vunpack.c.h.b16 %v2732
        %v5857 = vunpack.c.l.b16 %v2733
        %v5858 = vunpack.c.h.b16 %v2733
        %v5859 = vunpack.c.l.b16 %v2734
        %v5860 = vunpack.c.l.b16 %v2735
        %v5861 = vunpack.c.h.b16 %v2735
        %v5862 = vunpack.c.l.b16 %v2736
        %v5863 = vunpack.c.h.b16 %v2736
        %v5864 = vunpack.c.l.b16 %v2737
        %v5865 = vunpack.c.h.b16 %v2737
        %v5866 = vunpack.c.l.b16 %v2738
        %v5867 = vunpack.c.h.b16 %v2738
        %v5868 = vunpack.c.l.b16 %v2739
        %v5869 = vunpack.c.h.b16 %v2739
        %v5870 = vunpack.c.l.b16 %v2740
        %v5871 = vunpack.c.h.b16 %v2740
        %v5872 = vunpack.c.l.b16 %v2741
        %v5873 = vunpack.c.h.b16 %v2741
        %v5874 = vunpack.c.l.b16 %v2742
        %v5875 = vunpack.c.h.b16 %v2742
        %v5876 = vunpack.c.l.b16 %v2743
        %v5877 = vunpack.c.h.b16 %v2743
        %v5878 = vunpack.c.l.b16 %v2744
        %v5879 = vunpack.c.h.b16 %v2744
        %v5880 = vunpack.c.l.b16 %v2745
        %v5881 = vunpack.c.l.b16 %v2746
        %v5882 = vunpack.c.h.b16 %v2746
        %v5883 = vunpack.c.l.b16 %v2747
        %v5884 = vunpack.c.h.b16 %v2747
        %v5885 = vunpack.c.l.b16 %v2748
        %v5886 = vunpack.c.h.b16 %v2748
        %v5887 = vunpack.c.l.b16 %v2749
        %v5888 = vunpack.c.h.b16 %v2749
        %v5889 = vunpack.c.l.b16 %v2750
        %v5890 = vunpack.c.h.b16 %v2750
        %v5891 = vunpack.c.l.b16 %v2751
        %v5892 = vunpack.c.h.b16 %v2751
        %v5893 = vunpack.c.l.b16 %v2752
        %v5894 = vunpack.c.h.b16 %v2752
        %v5895 = vunpack.c.l.b16 %v2753
        %v5896 = vunpack.c.h.b16 %v2753
        %v5897 = vunpack.c.l.b16 %v2754
        %v5898 = vunpack.c.h.b16 %v2754
        %v5899 = vunpack.c.l.b16 %v2755
        %v5900 = vunpack.c.h.b16 %v2755
        %v5901 = vunpack.c.l.b16 %v2756
        %v5902 = vunpack.c.l.b16 %v2757
        %v5903 = vunpack.c.h.b16 %v2757
        %v5904 = vunpack.c.l.b16 %v2758
        %v5905 = vunpack.c.h.b16 %v2758
        %v5906 = vunpack.c.l.b16 %v2759
        %v5907 = vunpack.c.h.b16 %v2759
        %v5908 = vunpack.c.l.b16 %v2760
        %v5909 = vunpack.c.h.b16 %v2760
        %v5910 = vunpack.c.l.b16 %v2761
        %v5911 = vunpack.c.h.b16 %v2761
        %v5912 = vunpack.c.l.b16 %v2762
        %v5913 = vunpack.c.h.b16 %v2762
        %v5914 = vunpack.c.l.b16 %v2763
        %v5915 = vunpack.c.h.b16 %v2763
        %v5916 = vunpack.c.l.b16 %v2764
        %v5917 = vunpack.c.h.b16 %v2764
        %v5918 = vunpack.c.l.b16 %v2765
        %v5919 = vunpack.c.h.b16 %v2765
        %v5920 = vunpack.c.l.b16 %v2766
        %v5921 = vunpack.c.h.b16 %v2766
        %v5922 = vunpack.c.l.b16 %v2767
        %v5923 = vunpack.c.l.b16 %v2768
        %v5924 = vunpack.c.h.b16 %v2768
        %v5925 = vunpack.c.l.b16 %v2769
        %v5926 = vunpack.c.h.b16 %v2769
        %v5927 = vunpack.c.l.b16 %v2770
        %v5928 = vunpack.c.h.b16 %v2770
        %v5929 = vunpack.c.l.b16 %v2771
        %v5930 = vunpack.c.h.b16 %v2771
        %v5931 = vunpack.c.l.b16 %v2772
        %v5932 = vunpack.c.h.b16 %v2772
        %v5933 = vunpack.c.l.b16 %v2773
        %v5934 = vunpack.c.h.b16 %v2773
        %v5935 = vunpack.c.l.b16 %v2774
        %v5936 = vunpack.c.h.b16 %v2774
        %v5937 = vunpack.c.l.b16 %v2775
        %v5938 = vunpack.c.h.b16 %v2775
        %v5939 = vunpack.c.l.b16 %v2776
        %v5940 = vunpack.c.h.b16 %v2776
        %v5941 = vunpack.c.l.b16 %v2777
        %v5942 = vunpack.c.h.b16 %v2777
        %v5943 = vunpack.c.l.b16 %v2778
        %v5944 = vunpack.c.l.b16 %v2779
        %v5945 = vunpack.c.h.b16 %v2779
        %v5946 = vunpack.c.l.b16 %v2780
        %v5947 = vunpack.c.h.b16 %v2780
        %v5948 = vunpack.c.l.b16 %v2781
        %v5949 = vunpack.c.h.b16 %v2781
        %v5950 = vunpack.c.l.b16 %v2782
        %v5951 = vunpack.c.h.b16 %v2782
        %v5952 = vunpack.c.l.b16 %v2783
        %v5953 = vunpack.c.h.b16 %v2783
        %v5954 = vunpack.c.l.b16 %v2784
        %v5955 = vunpack.c.h.b16 %v2784
        %v5956 = vunpack.c.l.b16 %v2785
        %v5957 = vunpack.c.h.b16 %v2785
        %v5958 = vunpack.c.l.b16 %v2786
        %v5959 = vunpack.c.h.b16 %v2786
        %v5960 = vunpack.c.l.b16 %v2787
        %v5961 = vunpack.c.h.b16 %v2787
        %v5962 = vunpack.c.l.b16 %v2788
        %v5963 = vunpack.c.h.b16 %v2788
        %v5964 = vunpack.c.l.b16 %v2789
        %v5965 = vunpack.c.l.b16 %v2790
        %v5966 = vunpack.c.h.b16 %v2790
        %v5967 = vunpack.c.l.b16 %v2791
        %v5968 = vunpack.c.h.b16 %v2791
        %v5969 = vunpack.c.l.b16 %v2792
        %v5970 = vunpack.c.h.b16 %v2792
        %v5971 = vunpack.c.l.b16 %v2793
        %v5972 = vunpack.c.h.b16 %v2793
        %v5973 = vunpack.c.l.b16 %v2794
        %v5974 = vunpack.c.h.b16 %v2794
        %v5975 = vunpack.c.l.b16 %v2795
        %v5976 = vunpack.c.h.b16 %v2795
        %v5977 = vunpack.c.l.b16 %v2796
        %v5978 = vunpack.c.h.b16 %v2796
        %v5979 = vunpack.c.l.b16 %v2797
        %v5980 = vunpack.c.h.b16 %v2797
        %v5981 = vunpack.c.l.b16 %v2798
        %v5982 = vunpack.c.h.b16 %v2798
        %v5983 = vunpack.c.l.b16 %v2799
        %v5984 = vunpack.c.h.b16 %v2799
        %v5985 = vunpack.c.l.b16 %v2800
        %v5986 = vunpack.c.l.b16 %v2801
        %v5987 = vunpack.c.h.b16 %v2801
        %v5988 = vunpack.c.l.b16 %v2802
        %v5989 = vunpack.c.h.b16 %v2802
        %v5990 = vunpack.c.l.b16 %v2803
        %v5991 = vunpack.c.h.b16 %v2803
        %v5992 = vunpack.c.l.b16 %v2804
        %v5993 = vunpack.c.h.b16 %v2804
        %v5994 = vunpack.c.l.b16 %v2805
        %v5995 = vunpack.c.h.b16 %v2805
        %v5996 = vunpack.c.l.b16 %v2806
        %v5997 = vunpack.c.h.b16 %v2806
        %v5998 = vunpack.c.l.b16 %v2807
        %v5999 = vunpack.c.h.b16 %v2807
        %v6000 = vunpack.c.l.b16 %v2808
        %v6001 = vunpack.c.h.b16 %v2808
        %v6002 = vunpack.c.l.b16 %v2809
        %v6003 = vunpack.c.h.b16 %v2809
        %v6004 = vunpack.c.l.b16 %v2810
        %v6005 = vunpack.c.h.b16 %v2810
        %v6006 = vunpack.c.l.b16 %v2811
        %v6007 = vunpack.c.l.b16 %v2812
        %v6008 = vunpack.c.h.b16 %v2812
        %v6009 = vunpack.c.l.b16 %v2813
        %v6010 = vunpack.c.h.b16 %v2813
        %v6011 = vunpack.c.l.b16 %v2814
        %v6012 = vunpack.c.h.b16 %v2814
        %v6013 = vunpack.c.l.b16 %v2815
        %v6014 = vunpack.c.h.b16 %v2815
        %v6015 = vunpack.c.l.b16 %v2816
        %v6016 = vunpack.c.h.b16 %v2816
        %v6017 = vunpack.c.l.b16 %v2817
        %v6018 = vunpack.c.h.b16 %v2817
        %v6019 = vunpack.c.l.b16 %v2818
        %v6020 = vunpack.c.h.b16 %v2818
        %v6021 = vunpack.c.l.b16 %v2819
        %v6022 = vunpack.c.h.b16 %v2819
        %v6023 = vunpack.c.l.b16 %v2820
        %v6024 = vunpack.c.h.b16 %v2820
        %v6025 = vunpack.c.l.b16 %v2821
        %v6026 = vunpack.c.h.b16 %v2821
        %v6027 = vunpack.c.l.b16 %v2822
        %v6028 = vunpack.c.l.b16 %v2823
        %v6029 = vunpack.c.h.b16 %v2823
        %v6030 = vunpack.c.l.b16 %v2824
        %v6031 = vunpack.c.h.b16 %v2824
        %v6032 = vunpack.c.l.b16 %v2825
        %v6033 = vunpack.c.h.b16 %v2825
        %v6034 = vunpack.c.l.b16 %v2826
        %v6035 = vunpack.c.h.b16 %v2826
        %v6036 = vunpack.c.l.b16 %v2827
        %v6037 = vunpack.c.h.b16 %v2827
        %v6038 = vunpack.c.l.b16 %v2828
        %v6039 = vunpack.c.h.b16 %v2828
        %v6040 = vunpack.c.l.b16 %v2829
        %v6041 = vunpack.c.h.b16 %v2829
        %v6042 = vunpack.c.l.b16 %v2830
        %v6043 = vunpack.c.h.b16 %v2830
        %v6044 = vunpack.c.l.b16 %v2831
        %v6045 = vunpack.c.h.b16 %v2831
        %v6046 = vunpack.c.l.b16 %v2832
        %v6047 = vunpack.c.h.b16 %v2832
        %v6048 = vunpack.c.l.b16 %v2833
        %v6049 = vunpack.c.l.b16 %v2834
        %v6050 = vunpack.c.h.b16 %v2834
        %v6051 = vunpack.c.l.b16 %v2835
        %v6052 = vunpack.c.h.b16 %v2835
        %v6053 = vunpack.c.l.b16 %v2836
        %v6054 = vunpack.c.h.b16 %v2836
        %v6055 = vunpack.c.l.b16 %v2837
        %v6056 = vunpack.c.h.b16 %v2837
        %v6057 = vunpack.c.l.b16 %v2838
        %v6058 = vunpack.c.h.b16 %v2838
        %v6059 = vunpack.c.l.b16 %v2839
        %v6060 = vunpack.c.h.b16 %v2839
        %v6061 = vunpack.c.l.b16 %v2840
        %v6062 = vunpack.c.h.b16 %v2840
        %v6063 = vunpack.c.l.b16 %v2841
        %v6064 = vunpack.c.h.b16 %v2841
        %v6065 = vunpack.c.l.b16 %v2842
        %v6066 = vunpack.c.h.b16 %v2842
        %v6067 = vunpack.c.l.b16 %v2843
        %v6068 = vunpack.c.h.b16 %v2843
        %v6069 = vunpack.c.l.b16 %v2844
        %v6070 = vunpack.c.l.b16 %v2845
        %v6071 = vunpack.c.h.b16 %v2845
        %v6072 = vunpack.c.l.b16 %v2846
        %v6073 = vunpack.c.h.b16 %v2846
        %v6074 = vunpack.c.l.b16 %v2847
        %v6075 = vunpack.c.h.b16 %v2847
        %v6076 = vunpack.c.l.b16 %v2848
        %v6077 = vunpack.c.h.b16 %v2848
        %v6078 = vunpack.c.l.b16 %v2849
        %v6079 = vunpack.c.h.b16 %v2849
        %v6080 = vunpack.c.l.b16 %v2850
        %v6081 = vunpack.c.h.b16 %v2850
        %v6082 = vunpack.c.l.b16 %v2851
        %v6083 = vunpack.c.h.b16 %v2851
        %v6084 = vunpack.c.l.b16 %v2852
        %v6085 = vunpack.c.h.b16 %v2852
        %v6086 = vunpack.c.l.b16 %v2853
        %v6087 = vunpack.c.h.b16 %v2853
        %v6088 = vunpack.c.l.b16 %v2854
        %v6089 = vunpack.c.h.b16 %v2854
        %v6090 = vunpack.c.l.b16 %v2855
        %v6091 = vunpack.c.l.b16 %v2856
        %v6092 = vunpack.c.h.b16 %v2856
        %v6093 = vunpack.c.l.b16 %v2857
        %v6094 = vunpack.c.h.b16 %v2857
        %v6095 = vunpack.c.l.b16 %v2858
        %v6096 = vunpack.c.h.b16 %v2858
        %v6097 = vunpack.c.l.b16 %v2859
        %v6098 = vunpack.c.h.b16 %v2859
        %v6099 = vunpack.c.l.b16 %v2860
        %v6100 = vunpack.c.h.b16 %v2860
        %v6101 = vunpack.c.l.b16 %v2861
        %v6102 = vunpack.c.h.b16 %v2861
        %v6103 = vunpack.c.l.b16 %v2862
        %v6104 = vunpack.c.h.b16 %v2862
        %v6105 = vunpack.c.l.b16 %v2863
        %v6106 = vunpack.c.h.b16 %v2863
        %v6107 = vunpack.c.l.b16 %v2864
        %v6108 = vunpack.c.h.b16 %v2864
        %v6109 = vunpack.c.l.b16 %v2865
        %v6110 = vunpack.c.h.b16 %v2865
        %v6111 = vunpack.c.l.b16 %v2866
        %v6112 = vunpack.c.l.b16 %v2867
        %v6113 = vunpack.c.h.b16 %v2867
        %v6114 = vunpack.c.l.b16 %v2868
        %v6115 = vunpack.c.h.b16 %v2868
        %v6116 = vunpack.c.l.b16 %v2869
        %v6117 = vunpack.c.h.b16 %v2869
        %v6118 = vunpack.c.l.b16 %v2870
        %v6119 = vunpack.c.h.b16 %v2870
        %v6120 = vunpack.c.l.b16 %v2871
        %v6121 = vunpack.c.h.b16 %v2871
        %v6122 = vunpack.c.l.b16 %v2872
        %v6123 = vunpack.c.h.b16 %v2872
        %v6124 = vunpack.c.l.b16 %v2873
        %v6125 = vunpack.c.h.b16 %v2873
        %v6126 = vunpack.c.l.b16 %v2874
        %v6127 = vunpack.c.h.b16 %v2874
        %v6128 = vunpack.c.l.b16 %v2875
        %v6129 = vunpack.c.h.b16 %v2875
        %v6130 = vunpack.c.l.b16 %v2876
        %v6131 = vunpack.c.h.b16 %v2876
        %v6132 = vunpack.c.l.b16 %v2877
        %v6133 = vunpack.c.l.b16 %v2878
        %v6134 = vunpack.c.h.b16 %v2878
        %v6135 = vunpack.c.l.b16 %v2879
        %v6136 = vunpack.c.h.b16 %v2879
        %v6137 = vunpack.c.l.b16 %v2880
        %v6138 = vunpack.c.h.b16 %v2880
        %v6139 = vunpack.c.l.b16 %v2881
        %v6140 = vunpack.c.h.b16 %v2881
        %v6141 = vunpack.c.l.b16 %v2882
        %v6142 = vunpack.c.h.b16 %v2882
        %v6143 = vunpack.c.l.b16 %v2883
        %v6144 = vunpack.c.h.b16 %v2883
        %v6145 = vunpack.c.l.b16 %v2884
        %v6146 = vunpack.c.h.b16 %v2884
        %v6147 = vunpack.c.l.b16 %v2885
        %v6148 = vunpack.c.h.b16 %v2885
        %v6149 = vunpack.c.l.b16 %v2886
        %v6150 = vunpack.c.h.b16 %v2886
        %v6151 = vunpack.c.l.b16 %v2887
        %v6152 = vunpack.c.h.b16 %v2887
        %v6153 = vunpack.c.l.b16 %v2888
        %v6154 = vunpack.c.l.b16 %v2889
        %v6155 = vunpack.c.h.b16 %v2889
        %v6156 = vunpack.c.l.b16 %v2890
        %v6157 = vunpack.c.h.b16 %v2890
        %v6158 = vunpack.c.l.b16 %v2891
        %v6159 = vunpack.c.h.b16 %v2891
        %v6160 = vunpack.c.l.b16 %v2892
        %v6161 = vunpack.c.h.b16 %v2892
        %v6162 = vunpack.c.l.b16 %v2893
        %v6163 = vunpack.c.h.b16 %v2893
        %v6164 = vunpack.c.l.b16 %v2894
        %v6165 = vunpack.c.h.b16 %v2894
        %v6166 = vunpack.c.l.b16 %v2895
        %v6167 = vunpack.c.h.b16 %v2895
        %v6168 = vunpack.c.l.b16 %v2896
        %v6169 = vunpack.c.h.b16 %v2896
        %v6170 = vunpack.c.l.b16 %v2897
        %v6171 = vunpack.c.h.b16 %v2897
        %v6172 = vunpack.c.l.b16 %v2898
        %v6173 = vunpack.c.h.b16 %v2898
        %v6174 = vunpack.c.l.b16 %v2899
        %v6175 = vunpack.c.l.b16 %v2900
        %v6176 = vunpack.c.h.b16 %v2900
        %v6177 = vunpack.c.l.b16 %v2901
        %v6178 = vunpack.c.h.b16 %v2901
        %v6179 = vunpack.c.l.b16 %v2902
        %v6180 = vunpack.c.h.b16 %v2902
        %v6181 = vunpack.c.l.b16 %v2903
        %v6182 = vunpack.c.h.b16 %v2903
        %v6183 = vunpack.c.l.b16 %v2904
        %v6184 = vunpack.c.h.b16 %v2904
        %v6185 = vunpack.c.l.b16 %v2905
        %v6186 = vunpack.c.h.b16 %v2905
        %v6187 = vunpack.c.l.b16 %v2906
        %v6188 = vunpack.c.h.b16 %v2906
        %v6189 = vunpack.c.l.b16 %v2907
        %v6190 = vunpack.c.h.b16 %v2907
        %v6191 = vunpack.c.l.b16 %v2908
        %v6192 = vunpack.c.h.b16 %v2908
        %v6193 = vunpack.c.l.b16 %v2909
        %v6194 = vunpack.c.h.b16 %v2909
        %v6195 = vunpack.c.l.b16 %v2910
        %v6196 = vunpack.c.l.b16 %v2911
        %v6197 = vunpack.c.h.b16 %v2911
        %v6198 = vunpack.c.l.b16 %v2912
        %v6199 = vunpack.c.h.b16 %v2912
        %v6200 = vunpack.c.l.b16 %v2913
        %v6201 = vunpack.c.h.b16 %v2913
        %v6202 = vunpack.c.l.b16 %v2914
        %v6203 = vunpack.c.h.b16 %v2914
        %v6204 = vunpack.c.l.b16 %v2915
        %v6205 = vunpack.c.h.b16 %v2915
        %v6206 = vunpack.c.l.b16 %v2916
        %v6207 = vunpack.c.h.b16 %v2916
        %v6208 = vunpack.c.l.b16 %v2917
        %v6209 = vunpack.c.h.b16 %v2917
        %v6210 = vunpack.c.l.b16 %v2918
        %v6211 = vunpack.c.h.b16 %v2918
        %v6212 = vunpack.c.l.b16 %v2919
        %v6213 = vunpack.c.h.b16 %v2919
        %v6214 = vunpack.c.l.b16 %v2920
        %v6215 = vunpack.c.h.b16 %v2920
        %v6216 = vunpack.c.l.b16 %v2921
        %v6217 = vunpack.c.l.b16 %v2922
        %v6218 = vunpack.c.h.b16 %v2922
        %v6219 = vunpack.c.l.b16 %v2923
        %v6220 = vunpack.c.h.b16 %v2923
        %v6221 = vunpack.c.l.b16 %v2924
        %v6222 = vunpack.c.h.b16 %v2924
        %v6223 = vunpack.c.l.b16 %v2925
        %v6224 = vunpack.c.h.b16 %v2925
        %v6225 = vunpack.c.l.b16 %v2926
        %v6226 = vunpack.c.h.b16 %v2926
        %v6227 = vunpack.c.l.b16 %v2927
        %v6228 = vunpack.c.h.b16 %v2927
        %v6229 = vunpack.c.l.b16 %v2928
        %v6230 = vunpack.c.h.b16 %v2928
        %v6231 = vunpack.c.l.b16 %v2929
        %v6232 = vunpack.c.h.b16 %v2929
        %v6233 = vunpack.c.l.b16 %v2930
        %v6234 = vunpack.c.h.b16 %v2930
        %v6235 = vunpack.c.l.b16 %v2931
        %v6236 = vunpack.c.h.b16 %v2931
        %v6237 = vunpack.c.l.b16 %v2932
        %v6238 = vunpack.c.l.b16 %v2933
        %v6239 = vunpack.c.h.b16 %v2933
        %v6240 = vunpack.c.l.b16 %v2934
        %v6241 = vunpack.c.h.b16 %v2934
        %v6242 = vunpack.c.l.b16 %v2935
        %v6243 = vunpack.c.h.b16 %v2935
        %v6244 = vunpack.c.l.b16 %v2936
        %v6245 = vunpack.c.h.b16 %v2936
        %v6246 = vunpack.c.l.b16 %v2937
        %v6247 = vunpack.c.h.b16 %v2937
        %v6248 = vunpack.c.l.b16 %v2938
        %v6249 = vunpack.c.h.b16 %v2938
        %v6250 = vunpack.c.l.b16 %v2939
        %v6251 = vunpack.c.h.b16 %v2939
        %v6252 = vunpack.c.l.b16 %v2940
        %v6253 = vunpack.c.h.b16 %v2940
        %v6254 = vunpack.c.l.b16 %v2941
        %v6255 = vunpack.c.h.b16 %v2941
        %v6256 = vunpack.c.l.b16 %v2942
        %v6257 = vunpack.c.h.b16 %v2942
        %v6258 = vunpack.c.l.b16 %v2943
        %v6259 = vunpack.c.l.b16 %v2944
        %v6260 = vunpack.c.h.b16 %v2944
        %v6261 = vunpack.c.l.b16 %v2945
        %v6262 = vunpack.c.h.b16 %v2945
        %v6263 = vunpack.c.l.b16 %v2946
        %v6264 = vunpack.c.h.b16 %v2946
        %v6265 = vunpack.c.l.b16 %v2947
        %v6266 = vunpack.c.h.b16 %v2947
        %v6267 = vunpack.c.l.b16 %v2948
        %v6268 = vunpack.c.h.b16 %v2948
        %v6269 = vunpack.c.l.b16 %v2949
        %v6270 = vunpack.c.h.b16 %v2949
        %v6271 = vunpack.c.l.b16 %v2950
        %v6272 = vunpack.c.h.b16 %v2950
        %v6273 = vunpack.c.l.b16 %v2951
        %v6274 = vunpack.c.h.b16 %v2951
        %v6275 = vunpack.c.l.b16 %v2952
        %v6276 = vunpack.c.h.b16 %v2952
        %v6277 = vunpack.c.l.b16 %v2953
        %v6278 = vunpack.c.h.b16 %v2953
        %v6279 = vunpack.c.l.b16 %v2954
        %v6280 = vunpack.c.l.b16 %v2955
        %v6281 = vunpack.c.h.b16 %v2955
        %v6282 = vunpack.c.l.b16 %v2956
        %v6283 = vunpack.c.h.b16 %v2956
        %v6284 = vunpack.c.l.b16 %v2957
        %v6285 = vunpack.c.h.b16 %v2957
        %v6286 = vunpack.c.l.b16 %v2958
        %v6287 = vunpack.c.h.b16 %v2958
        %v6288 = vunpack.c.l.b16 %v2959
        %v6289 = vunpack.c.h.b16 %v2959
        %v6290 = vunpack.c.l.b16 %v2960
        %v6291 = vunpack.c.h.b16 %v2960
        %v6292 = vunpack.c.l.b16 %v2961
        %v6293 = vunpack.c.h.b16 %v2961
        %v6294 = vunpack.c.l.b16 %v2962
        %v6295 = vunpack.c.h.b16 %v2962
        %v6296 = vunpack.c.l.b16 %v2963
        %v6297 = vunpack.c.h.b16 %v2963
        %v6298 = vunpack.c.l.b16 %v2964
        %v6299 = vunpack.c.h.b16 %v2964
        %v6300 = vunpack.c.l.b16 %v2965
        %v6301 = vunpack.c.l.b16 %v2966
        %v6302 = vunpack.c.h.b16 %v2966
        %v6303 = vunpack.c.l.b16 %v2967
        %v6304 = vunpack.c.h.b16 %v2967
        %v6305 = vunpack.c.l.b16 %v2968
        %v6306 = vunpack.c.h.b16 %v2968
        %v6307 = vunpack.c.l.b16 %v2969
        %v6308 = vunpack.c.h.b16 %v2969
        %v6309 = vunpack.c.l.b16 %v2970
        %v6310 = vunpack.c.h.b16 %v2970
        %v6311 = vunpack.c.l.b16 %v2971
        %v6312 = vunpack.c.h.b16 %v2971
        %v6313 = vunpack.c.l.b16 %v2972
        %v6314 = vunpack.c.h.b16 %v2972
        %v6315 = vunpack.c.l.b16 %v2973
        %v6316 = vunpack.c.h.b16 %v2973
        %v6317 = vunpack.c.l.b16 %v2974
        %v6318 = vunpack.c.h.b16 %v2974
        %v6319 = vunpack.c.l.b16 %v2975
        %v6320 = vunpack.c.h.b16 %v2975
        %v6321 = vunpack.c.l.b16 %v2976
        %v6322 = vunpack.c.l.b16 %v2977
        %v6323 = vunpack.c.h.b16 %v2977
        %v6324 = vunpack.c.l.b16 %v2978
        %v6325 = vunpack.c.h.b16 %v2978
        %v6326 = vunpack.c.l.b16 %v2979
        %v6327 = vunpack.c.h.b16 %v2979
        %v6328 = vunpack.c.l.b16 %v2980
        %v6329 = vunpack.c.h.b16 %v2980
        %v6330 = vunpack.c.l.b16 %v2981
        %v6331 = vunpack.c.h.b16 %v2981
        %v6332 = vunpack.c.l.b16 %v2982
        %v6333 = vunpack.c.h.b16 %v2982
        %v6334 = vunpack.c.l.b16 %v2983
        %v6335 = vunpack.c.h.b16 %v2983
        %v6336 = vunpack.c.l.b16 %v2984
        %v6337 = vunpack.c.h.b16 %v2984
        %v6338 = vunpack.c.l.b16 %v2985
        %v6339 = vunpack.c.h.b16 %v2985
        %v6340 = vunpack.c.l.b16 %v2986
        %v6341 = vunpack.c.h.b16 %v2986
        %v6342 = vunpack.c.l.b16 %v2987
        %v6343 = vunpack.c.l.b16 %v2988
        %v6344 = vunpack.c.h.b16 %v2988
        %v6345 = vunpack.c.l.b16 %v2989
        %v6346 = vunpack.c.h.b16 %v2989
        %v6347 = vunpack.c.l.b16 %v2990
        %v6348 = vunpack.c.h.b16 %v2990
        %v6349 = vunpack.c.l.b16 %v2991
        %v6350 = vunpack.c.h.b16 %v2991
        %v6351 = vunpack.c.l.b16 %v2992
        %v6352 = vunpack.c.h.b16 %v2992
        %v6353 = vunpack.c.l.b16 %v2993
        %v6354 = vunpack.c.h.b16 %v2993
        %v6355 = vunpack.c.l.b16 %v2994
        %v6356 = vunpack.c.h.b16 %v2994
        %v6357 = vunpack.c.l.b16 %v2995
        %v6358 = vunpack.c.h.b16 %v2995
        %v6359 = vunpack.c.l.b16 %v2996
        %v6360 = vunpack.c.h.b16 %v2996
        %v6361 = vunpack.c.l.b16 %v2997
        %v6362 = vunpack.c.h.b16 %v2997
        %v6363 = vunpack.c.l.b16 %v2998
        %v6364 = vunpack.c.l.b16 %v2999
        %v6365 = vunpack.c.h.b16 %v2999
        %v6366 = vunpack.c.l.b16 %v3000
        %v6367 = vunpack.c.h.b16 %v3000
        %v6368 = vunpack.c.l.b16 %v3001
        %v6369 = vunpack.c.h.b16 %v3001
        %v6370 = vunpack.c.l.b16 %v3002
        %v6371 = vunpack.c.h.b16 %v3002
        %v6372 = vunpack.c.l.b16 %v3003
        %v6373 = vunpack.c.h.b16 %v3003
        %v6374 = vunpack.c.l.b16 %v3004
        %v6375 = vunpack.c.h.b16 %v3004
        %v6376 = vunpack.c.l.b16 %v3005
        %v6377 = vunpack.c.h.b16 %v3005
        %v6378 = vunpack.c.l.b16 %v3006
        %v6379 = vunpack.c.h.b16 %v3006
        %v6380 = vunpack.c.l.b16 %v3007
        %v6381 = vunpack.c.h.b16 %v3007
        %v6382 = vunpack.c.l.b16 %v3008
        %v6383 = vunpack.c.h.b16 %v3008
        %v6384 = vunpack.c.l.b16 %v3009
        %v6385 = vunpack.c.l.b16 %v3010
        %v6386 = vunpack.c.h.b16 %v3010
        %v6387 = vunpack.c.l.b16 %v3011
        %v6388 = vunpack.c.h.b16 %v3011
        %v6389 = vunpack.c.l.b16 %v3012
        %v6390 = vunpack.c.h.b16 %v3012
        %v6391 = vunpack.c.l.b16 %v3013
        %v6392 = vunpack.c.h.b16 %v3013
        %v6393 = vunpack.c.l.b16 %v3014
        %v6394 = vunpack.c.h.b16 %v3014
        %v6395 = vunpack.c.l.b16 %v3015
        %v6396 = vunpack.c.h.b16 %v3015
        %v6397 = vunpack.c.l.b16 %v3016
        %v6398 = vunpack.c.h.b16 %v3016
        %v6399 = vunpack.c.l.b16 %v3017
        %v6400 = vunpack.c.h.b16 %v3017
        %v6401 = vunpack.c.l.b16 %v3018
        %v6402 = vunpack.c.h.b16 %v3018
        %v6403 = vunpack.c.l.b16 %v3019
        %v6404 = vunpack.c.h.b16 %v3019
        %v6405 = vunpack.c.l.b16 %v3020
        %v6406 = vunpack.c.l.b16 %v3021
        %v6407 = vunpack.c.h.b16 %v3021
        %v6408 = vunpack.c.l.b16 %v3022
        %v6409 = vunpack.c.h.b16 %v3022
        %v6410 = vunpack.c.l.b16 %v3023
        %v6411 = vunpack.c.h.b16 %v3023
        %v6412 = vunpack.c.l.b16 %v3024
        %v6413 = vunpack.c.h.b16 %v3024
        %v6414 = vunpack.c.l.b16 %v3025
        %v6415 = vunpack.c.h.b16 %v3025
        %v6416 = vunpack.c.l.b16 %v3026
        %v6417 = vunpack.c.h.b16 %v3026
        %v6418 = vunpack.c.l.b16 %v3027
        %v6419 = vunpack.c.h.b16 %v3027
        %v6420 = vunpack.c.l.b16 %v3028
        %v6421 = vunpack.c.h.b16 %v3028
        %v6422 = vunpack.c.l.b16 %v3029
        %v6423 = vunpack.c.h.b16 %v3029
        %v6424 = vunpack.c.l.b16 %v3030
        %v6425 = vunpack.c.h.b16 %v3030
        %v6426 = vunpack.c.l.b16 %v3031
        %v6427 = vunpack.c.l.b16 %v3032
        %v6428 = vunpack.c.h.b16 %v3032
        %v6429 = vunpack.c.l.b16 %v3033
        %v6430 = vunpack.c.h.b16 %v3033
        %v6431 = vunpack.c.l.b16 %v3034
        %v6432 = vunpack.c.h.b16 %v3034
        %v6433 = vunpack.c.l.b16 %v3035
        %v6434 = vunpack.c.h.b16 %v3035
        %v6435 = vunpack.c.l.b16 %v3036
        %v6436 = vunpack.c.h.b16 %v3036
        %v6437 = vunpack.c.l.b16 %v3037
        %v6438 = vunpack.c.h.b16 %v3037
        %v6439 = vunpack.c.l.b16 %v3038
        %v6440 = vunpack.c.h.b16 %v3038
        %v6441 = vunpack.c.l.b16 %v3039
        %v6442 = vunpack.c.h.b16 %v3039
        %v6443 = vunpack.c.l.b16 %v3040
        %v6444 = vunpack.c.h.b16 %v3040
        %v6445 = vunpack.c.l.b16 %v3041
        %v6446 = vunpack.c.h.b16 %v3041
        %v6447 = vunpack.c.l.b16 %v3042
        %v6448 = vunpack.c.l.b16 %v3043
        %v6449 = vunpack.c.h.b16 %v3043
        %v6450 = vunpack.c.l.b16 %v3044
        %v6451 = vunpack.c.h.b16 %v3044
        %v6452 = vunpack.c.l.b16 %v3045
        %v6453 = vunpack.c.h.b16 %v3045
        %v6454 = vunpack.c.l.b16 %v3046
        %v6455 = vunpack.c.h.b16 %v3046
        %v6456 = vunpack.c.l.b16 %v3047
        %v6457 = vunpack.c.h.b16 %v3047
        %v6458 = vunpack.c.l.b16 %v3048
        %v6459 = vunpack.c.h.b16 %v3048
        %v6460 = vunpack.c.l.b16 %v3049
        %v6461 = vunpack.c.h.b16 %v3049
        %v6462 = vunpack.c.l.b16 %v3050
        %v6463 = vunpack.c.h.b16 %v3050
        %v6464 = vunpack.c.l.b16 %v3051
        %v6465 = vunpack.c.h.b16 %v3051
        %v6466 = vunpack.c.l.b16 %v3052
        %v6467 = vunpack.c.h.b16 %v3052
        %v6468 = vunpack.c.l.b16 %v3053
        %v6469 = vunpack.c.l.b16 %v3054
        %v6470 = vunpack.c.h.b16 %v3054
        %v6471 = vunpack.c.l.b16 %v3055
        %v6472 = vunpack.c.h.b16 %v3055
        %v6473 = vunpack.c.l.b16 %v3056
        %v6474 = vunpack.c.h.b16 %v3056
        %v6475 = vunpack.c.l.b16 %v3057
        %v6476 = vunpack.c.h.b16 %v3057
        %v6477 = vunpack.c.l.b16 %v3058
        %v6478 = vunpack.c.h.b16 %v3058
        %v6479 = vunpack.c.l.b16 %v3059
        %v6480 = vunpack.c.h.b16 %v3059
        %v6481 = vunpack.c.l.b16 %v3060
        %v6482 = vunpack.c.h.b16 %v3060
        %v6483 = vunpack.c.l.b16 %v3061
        %v6484 = vunpack.c.h.b16 %v3061
        %v6485 = vunpack.c.l.b16 %v3062
        %v6486 = vunpack.c.h.b16 %v3062
        %v6487 = vunpack.c.l.b16 %v3063
        %v6488 = vunpack.c.h.b16 %v3063
        %v6489 = vunpack.c.l.b16 %v3064
        %v6490 = vunpack.c.l.b16 %v3065
        %v6491 = vunpack.c.h.b16 %v3065
        %v6492 = vunpack.c.l.b16 %v3066
        %v6493 = vunpack.c.h.b16 %v3066
        %v6494 = vunpack.c.l.b16 %v3067
        %v6495 = vunpack.c.h.b16 %v3067
        %v6496 = vunpack.c.l.b16 %v3068
        %v6497 = vunpack.c.h.b16 %v3068
        %v6498 = vunpack.c.l.b16 %v3069
        %v6499 = vunpack.c.h.b16 %v3069
        %v6500 = vunpack.c.l.b16 %v3070
        %v6501 = vunpack.c.h.b16 %v3070
        %v6502 = vunpack.c.l.b16 %v3071
        %v6503 = vunpack.c.h.b16 %v3071
        %v6504 = vunpack.c.l.b16 %v3072
        %v6505 = vunpack.c.h.b16 %v3072
        %v6506 = vunpack.c.l.b16 %v3073
        %v6507 = vunpack.c.h.b16 %v3073
        %v6508 = vunpack.c.l.b16 %v3074
        %v6509 = vunpack.c.h.b16 %v3074
        %v6510 = vunpack.c.l.b16 %v3075
        %v6511 = vunpack.c.l.b16 %v3076
        %v6512 = vunpack.c.h.b16 %v3076
        %v6513 = vunpack.c.l.b16 %v3077
        %v6514 = vunpack.c.h.b16 %v3077
        %v6515 = vunpack.c.l.b16 %v3078
        %v6516 = vunpack.c.h.b16 %v3078
        %v6517 = vunpack.c.l.b16 %v3079
        %v6518 = vunpack.c.h.b16 %v3079
        %v6519 = vunpack.c.l.b16 %v3080
        %v6520 = vunpack.c.h.b16 %v3080
        %v6521 = vunpack.c.l.b16 %v3081
        %v6522 = vunpack.c.h.b16 %v3081
        %v6523 = vunpack.c.l.b16 %v3082
        %v6524 = vunpack.c.h.b16 %v3082
        %v6525 = vunpack.c.l.b16 %v3083
        %v6526 = vunpack.c.h.b16 %v3083
        %v6527 = vunpack.c.l.b16 %v3084
        %v6528 = vunpack.c.h.b16 %v3084
        %v6529 = vunpack.c.l.b16 %v3085
        %v6530 = vunpack.c.h.b16 %v3085
        %v6531 = vunpack.c.l.b16 %v3086
        %v6532 = vunpack.c.l.b16 %v3087
        %v6533 = vunpack.c.h.b16 %v3087
        %v6534 = vunpack.c.l.b16 %v3088
        %v6535 = vunpack.c.h.b16 %v3088
        %v6536 = vunpack.c.l.b16 %v3089
        %v6537 = vunpack.c.h.b16 %v3089
        %v6538 = vunpack.c.l.b16 %v3090
        %v6539 = vunpack.c.h.b16 %v3090
        %v6540 = vunpack.c.l.b16 %v3091
        %v6541 = vunpack.c.h.b16 %v3091
        %v6542 = vunpack.c.l.b16 %v3092
        %v6543 = vunpack.c.h.b16 %v3092
        %v6544 = vunpack.c.l.b16 %v3093
        %v6545 = vunpack.c.h.b16 %v3093
        %v6546 = vunpack.c.l.b16 %v3094
        %v6547 = vunpack.c.h.b16 %v3094
        %v6548 = vunpack.c.l.b16 %v3095
        %v6549 = vunpack.c.h.b16 %v3095
        %v6550 = vunpack.c.l.b16 %v3096
        %v6551 = vunpack.c.h.b16 %v3096
        %v6552 = vunpack.c.l.b16 %v3097
        %v6553 = vunpack.c.l.b16 %v3098
        %v6554 = vunpack.c.h.b16 %v3098
        %v6555 = vunpack.c.l.b16 %v3099
        %v6556 = vunpack.c.h.b16 %v3099
        %v6557 = vunpack.c.l.b16 %v3100
        %v6558 = vunpack.c.h.b16 %v3100
        %v6559 = vunpack.c.l.b16 %v3101
        %v6560 = vunpack.c.h.b16 %v3101
        %v6561 = vunpack.c.l.b16 %v3102
        %v6562 = vunpack.c.h.b16 %v3102
        %v6563 = vunpack.c.l.b16 %v3103
        %v6564 = vunpack.c.h.b16 %v3103
        %v6565 = vunpack.c.l.b16 %v3104
        %v6566 = vunpack.c.h.b16 %v3104
        %v6567 = vunpack.c.l.b16 %v3105
        %v6568 = vunpack.c.h.b16 %v3105
        %v6569 = vunpack.c.l.b16 %v3106
        %v6570 = vunpack.c.h.b16 %v3106
        %v6571 = vunpack.c.l.b16 %v3107
        %v6572 = vunpack.c.h.b16 %v3107
        %v6573 = vunpack.c.l.b16 %v3108
        %v6574 = vunpack.c.l.b16 %v3109
        %v6575 = vunpack.c.h.b16 %v3109
        %v6576 = vunpack.c.l.b16 %v3110
        %v6577 = vunpack.c.h.b16 %v3110
        %v6578 = vunpack.c.l.b16 %v3111
        %v6579 = vunpack.c.h.b16 %v3111
        %v6580 = vunpack.c.l.b16 %v3112
        %v6581 = vunpack.c.h.b16 %v3112
        %v6582 = vunpack.c.l.b16 %v3113
        %v6583 = vunpack.c.h.b16 %v3113
        %v6584 = vunpack.c.l.b16 %v3114
        %v6585 = vunpack.c.h.b16 %v3114
        %v6586 = vunpack.c.l.b16 %v3115
        %v6587 = vunpack.c.h.b16 %v3115
        %v6588 = vunpack.c.l.b16 %v3116
        %v6589 = vunpack.c.h.b16 %v3116
        %v6590 = vunpack.c.l.b16 %v3117
        %v6591 = vunpack.c.h.b16 %v3117
        %v6592 = vunpack.c.l.b16 %v3118
        %v6593 = vunpack.c.h.b16 %v3118
        %v6594 = vunpack.c.l.b16 %v3119
        %v6595 = vunpack.c.l.b16 %v3120
        %v6596 = vunpack.c.h.b16 %v3120
        %v6597 = vunpack.c.l.b16 %v3121
        %v6598 = vunpack.c.h.b16 %v3121
        %v6599 = vunpack.c.l.b16 %v3122
        %v6600 = vunpack.c.h.b16 %v3122
        %v6601 = vunpack.c.l.b16 %v3123
        %v6602 = vunpack.c.h.b16 %v3123
        %v6603 = vunpack.c.l.b16 %v3124
        %v6604 = vunpack.c.h.b16 %v3124
        %v6605 = vunpack.c.l.b16 %v3125
        %v6606 = vunpack.c.h.b16 %v3125
        %v6607 = vunpack.c.l.b16 %v3126
        %v6608 = vunpack.c.h.b16 %v3126
        %v6609 = vunpack.c.l.b16 %v3127
        %v6610 = vunpack.c.h.b16 %v3127
        %v6611 = vunpack.c.l.b16 %v3128
        %v6612 = vunpack.c.h.b16 %v3128
        %v6613 = vunpack.c.l.b16 %v3129
        %v6614 = vunpack.c.h.b16 %v3129
        %v6615 = vunpack.c.l.b16 %v3130
        %v6616 = vunpack.c.l.b16 %v3131
        %v6617 = vunpack.c.h.b16 %v3131
        %v6618 = vunpack.c.l.b16 %v3132
        %v6619 = vunpack.c.h.b16 %v3132
        %v6620 = vunpack.c.l.b16 %v3133
        %v6621 = vunpack.c.h.b16 %v3133
        %v6622 = vunpack.c.l.b16 %v3134
        %v6623 = vunpack.c.h.b16 %v3134
        %v6624 = vunpack.c.l.b16 %v3135
        %v6625 = vunpack.c.h.b16 %v3135
        %v6626 = vunpack.c.l.b16 %v3136
        %v6627 = vunpack.c.h.b16 %v3136
        %v6628 = vunpack.c.l.b16 %v3137
        %v6629 = vunpack.c.h.b16 %v3137
        %v6630 = vunpack.c.l.b16 %v3138
        %v6631 = vunpack.c.h.b16 %v3138
        %v6632 = vunpack.c.l.b16 %v3139
        %v6633 = vunpack.c.h.b16 %v3139
        %v6634 = vunpack.c.l.b16 %v3140
        %v6635 = vunpack.c.h.b16 %v3140
        %v6636 = vunpack.c.l.b16 %v3141
        %v6637 = vunpack.c.l.b16 %v3142
        %v6638 = vunpack.c.h.b16 %v3142
        %v6639 = vunpack.c.l.b16 %v3143
        %v6640 = vunpack.c.h.b16 %v3143
        %v6641 = vunpack.c.l.b16 %v3144
        %v6642 = vunpack.c.h.b16 %v3144
        %v6643 = vunpack.c.l.b16 %v3145
        %v6644 = vunpack.c.h.b16 %v3145
        %v6645 = vunpack.c.l.b16 %v3146
        %v6646 = vunpack.c.h.b16 %v3146
        %v6647 = vunpack.c.l.b16 %v3147
        %v6648 = vunpack.c.h.b16 %v3147
        %v6649 = vunpack.c.l.b16 %v3148
        %v6650 = vunpack.c.h.b16 %v3148
        %v6651 = vunpack.c.l.b16 %v3149
        %v6652 = vunpack.c.h.b16 %v3149
        %v6653 = vunpack.c.l.b16 %v3150
        %v6654 = vunpack.c.h.b16 %v3150
        %v6655 = vunpack.c.l.b16 %v3151
        %v6656 = vunpack.c.h.b16 %v3151
        %v6657 = vunpack.c.l.b16 %v3152
        %v6658 = vunpack.c.l.b16 %v3153
        %v6659 = vunpack.c.h.b16 %v3153
        %v6660 = vunpack.c.l.b16 %v3154
        %v6661 = vunpack.c.h.b16 %v3154
        %v6662 = vunpack.c.l.b16 %v3155
        %v6663 = vunpack.c.h.b16 %v3155
        %v6664 = vunpack.c.l.b16 %v3156
        %v6665 = vunpack.c.h.b16 %v3156
        %v6666 = vunpack.c.l.b16 %v3157
        %v6667 = vunpack.c.h.b16 %v3157
        %v6668 = vunpack.c.l.b16 %v3158
        %v6669 = vunpack.c.h.b16 %v3158
        %v6670 = vunpack.c.l.b16 %v3159
        %v6671 = vunpack.c.h.b16 %v3159
        %v6672 = vunpack.c.l.b16 %v3160
        %v6673 = vunpack.c.h.b16 %v3160
        %v6674 = vunpack.c.l.b16 %v3161
        %v6675 = vunpack.c.h.b16 %v3161
        %v6676 = vunpack.c.l.b16 %v3162
        %v6677 = vunpack.c.h.b16 %v3162
        %v6678 = vunpack.c.l.b16 %v3163
        %v6679 = vunpack.c.l.b16 %v3164
        %v6680 = vunpack.c.h.b16 %v3164
        %v6681 = vunpack.c.l.b16 %v3165
        %v6682 = vunpack.c.h.b16 %v3165
        %v6683 = vunpack.c.l.b16 %v3166
        %v6684 = vunpack.c.h.b16 %v3166
        %v6685 = vunpack.c.l.b16 %v3167
        %v6686 = vunpack.c.h.b16 %v3167
        %v6687 = vunpack.c.l.b16 %v3168
        %v6688 = vunpack.c.h.b16 %v3168
        %v6689 = vunpack.c.l.b16 %v3169
        %v6690 = vunpack.c.h.b16 %v3169
        %v6691 = vunpack.c.l.b16 %v3170
        %v6692 = vunpack.c.h.b16 %v3170
        %v6693 = vunpack.c.l.b16 %v3171
        %v6694 = vunpack.c.h.b16 %v3171
        %v6695 = vunpack.c.l.b16 %v3172
        %v6696 = vunpack.c.h.b16 %v3172
        %v6697 = vunpack.c.l.b16 %v3173
        %v6698 = vunpack.c.h.b16 %v3173
        %v6699 = vunpack.c.l.b16 %v3174
        %v6700 = vunpack.c.l.b16 %v3175
        %v6701 = vunpack.c.h.b16 %v3175
        %v6702 = vunpack.c.l.b16 %v3176
        %v6703 = vunpack.c.h.b16 %v3176
        %v6704 = vunpack.c.l.b16 %v3177
        %v6705 = vunpack.c.h.b16 %v3177
        %v6706 = vunpack.c.l.b16 %v3178
        %v6707 = vunpack.c.h.b16 %v3178
        %v6708 = vunpack.c.l.b16 %v3179
        %v6709 = vunpack.c.h.b16 %v3179
        %v6710 = vunpack.c.l.b16 %v3180
        %v6711 = vunpack.c.h.b16 %v3180
        %v6712 = vunpack.c.l.b16 %v3181
        %v6713 = vunpack.c.h.b16 %v3181
        %v6714 = vunpack.c.l.b16 %v3182
        %v6715 = vunpack.c.h.b16 %v3182
        %v6716 = vunpack.c.l.b16 %v3183
        %v6717 = vunpack.c.h.b16 %v3183
        %v6718 = vunpack.c.l.b16 %v3184
        %v6719 = vunpack.c.h.b16 %v3184
        %v6720 = vunpack.c.l.b16 %v3185
        %v6721 = vunpack.c.l.b16 %v3186
        %v6722 = vunpack.c.h.b16 %v3186
        %v6723 = vunpack.c.l.b16 %v3187
        %v6724 = vunpack.c.h.b16 %v3187
        %v6725 = vunpack.c.l.b16 %v3188
        %v6726 = vunpack.c.h.b16 %v3188
        %v6727 = vunpack.c.l.b16 %v3189
        %v6728 = vunpack.c.h.b16 %v3189
        %v6729 = vunpack.c.l.b16 %v3190
        %v6730 = vunpack.c.h.b16 %v3190
        %v6731 = vunpack.c.l.b16 %v3191
        %v6732 = vunpack.c.h.b16 %v3191
        %v6733 = vunpack.c.l.b16 %v3192
        %v6734 = vunpack.c.h.b16 %v3192
        %v6735 = vunpack.c.l.b16 %v3193
        %v6736 = vunpack.c.h.b16 %v3193
        %v6737 = vunpack.c.l.b16 %v3194
        %v6738 = vunpack.c.h.b16 %v3194
        %v6739 = vunpack.c.l.b16 %v3195
        %v6740 = vunpack.c.h.b16 %v3195
        %v6741 = vunpack.c.l.b16 %v3196
        %v6742 = vunpack.c.l.b16 %v3197
        %v6743 = vunpack.c.h.b16 %v3197
        %v6744 = vunpack.c.l.b16 %v3198
        %v6745 = vunpack.c.h.b16 %v3198
        %v6746 = vunpack.c.l.b16 %v3199
        %v6747 = vunpack.c.h.b16 %v3199
        %v6748 = vunpack.c.l.b16 %v3200
        %v6749 = vunpack.c.h.b16 %v3200
        %v6750 = vunpack.c.l.b16 %v3201
        %v6751 = vunpack.c.h.b16 %v3201
        %v6752 = vunpack.c.l.b16 %v3202
        %v6753 = vunpack.c.h.b16 %v3202
        %v6754 = vunpack.c.l.b16 %v3203
        %v6755 = vunpack.c.h.b16 %v3203
        %v6756 = vunpack.c.l.b16 %v3204
        %v6757 = vunpack.c.h.b16 %v3204
        %v6758 = vunpack.c.l.b16 %v3205
        %v6759 = vunpack.c.h.b16 %v3205
        %v6760 = vunpack.c.l.b16 %v3206
        %v6761 = vunpack.c.h.b16 %v3206
        %v6762 = vunpack.c.l.b16 %v3207
        %v6763 = vunpack.c.l.b16 %v3208
        %v6764 = vunpack.c.h.b16 %v3208
        %v6765 = vunpack.c.l.b16 %v3209
        %v6766 = vunpack.c.h.b16 %v3209
        %v6767 = vunpack.c.l.b16 %v3210
        %v6768 = vunpack.c.h.b16 %v3210
        %v6769 = vunpack.c.l.b16 %v3211
        %v6770 = vunpack.c.h.b16 %v3211
        %v6771 = vunpack.c.l.b16 %v3212
        %v6772 = vunpack.c.h.b16 %v3212
        %v6773 = vunpack.c.l.b16 %v3213
        %v6774 = vunpack.c.h.b16 %v3213
        %v6775 = vunpack.c.l.b16 %v3214
        %v6776 = vunpack.c.h.b16 %v3214
        %v6777 = vunpack.c.l.b16 %v3215
        %v6778 = vunpack.c.h.b16 %v3215
        %v6779 = vunpack.c.l.b16 %v3216
        %v6780 = vunpack.c.h.b16 %v3216
        %v6781 = vunpack.c.l.b16 %v3217
        %v6782 = vunpack.c.h.b16 %v3217
        %v6783 = vunpack.c.l.b16 %v3218
        %v6784 = vunpack.c.l.b16 %v3219
        %v6785 = vunpack.c.h.b16 %v3219
        %v6786 = vunpack.c.l.b16 %v3220
        %v6787 = vunpack.c.h.b16 %v3220
        %v6788 = vunpack.c.l.b16 %v3221
        %v6789 = vunpack.c.h.b16 %v3221
        %v6790 = vunpack.c.l.b16 %v3222
        %v6791 = vunpack.c.h.b16 %v3222
        %v6792 = vunpack.c.l.b16 %v3223
        %v6793 = vunpack.c.h.b16 %v3223
        %v6794 = vunpack.c.l.b16 %v3224
        %v6795 = vunpack.c.h.b16 %v3224
        %v6796 = vunpack.c.l.b16 %v3225
        %v6797 = vunpack.c.h.b16 %v3225
        %v6798 = vunpack.c.l.b16 %v3226
        %v6799 = vunpack.c.h.b16 %v3226
        %v6800 = vunpack.c.l.b16 %v3227
        %v6801 = vunpack.c.h.b16 %v3227
        %v6802 = vunpack.c.l.b16 %v3228
        %v6803 = vunpack.c.h.b16 %v3228
        %v6804 = vunpack.c.l.b16 %v3229
        %v6805 = vunpack.c.l.b16 %v3230
        %v6806 = vunpack.c.h.b16 %v3230
        %v6807 = vunpack.c.l.b16 %v3231
        %v6808 = vunpack.c.h.b16 %v3231
        %v6809 = vunpack.c.l.b16 %v3232
        %v6810 = vunpack.c.h.b16 %v3232
        %v6811 = vunpack.c.l.b16 %v3233
        %v6812 = vunpack.c.h.b16 %v3233
        %v6813 = vunpack.c.l.b16 %v3234
        %v6814 = vunpack.c.h.b16 %v3234
        %v6815 = vunpack.c.l.b16 %v3235
        %v6816 = vunpack.c.h.b16 %v3235
        %v6817 = vunpack.c.l.b16 %v3236
        %v6818 = vunpack.c.h.b16 %v3236
        %v6819 = vunpack.c.l.b16 %v3237
        %v6820 = vunpack.c.h.b16 %v3237
        %v6821 = vunpack.c.l.b16 %v3238
        %v6822 = vunpack.c.h.b16 %v3238
        %v6823 = vunpack.c.l.b16 %v3239
        %v6824 = vunpack.c.h.b16 %v3239
        %v6825 = vunpack.c.l.b16 %v3240
        %v6826 = vunpack.c.l.b16 %v3241
        %v6827 = vunpack.c.h.b16 %v3241
        %v6828 = vunpack.c.l.b16 %v3242
        %v6829 = vunpack.c.h.b16 %v3242
        %v6830 = vunpack.c.l.b16 %v3243
        %v6831 = vunpack.c.h.b16 %v3243
        %v6832 = vunpack.c.l.b16 %v3244
        %v6833 = vunpack.c.h.b16 %v3244
        %v6834 = vunpack.c.l.b16 %v3245
        %v6835 = vunpack.c.h.b16 %v3245
        %v6836 = vunpack.c.l.b16 %v3246
        %v6837 = vunpack.c.h.b16 %v3246
        %v6838 = vunpack.c.l.b16 %v3247
        %v6839 = vunpack.c.h.b16 %v3247
        %v6840 = vunpack.c.l.b16 %v3248
        %v6841 = vunpack.c.h.b16 %v3248
        %v6842 = vunpack.c.l.b16 %v3249
        %v6843 = vunpack.c.h.b16 %v3249
        %v6844 = vunpack.c.l.b16 %v3250
        %v6845 = vunpack.c.h.b16 %v3250
        %v6846 = vunpack.c.l.b16 %v3251
        %v6847 = vunpack.c.l.b16 %v3252
        %v6848 = vunpack.c.h.b16 %v3252
        %v6849 = vunpack.c.l.b16 %v3253
        %v6850 = vunpack.c.h.b16 %v3253
        %v6851 = vunpack.c.l.b16 %v3254
        %v6852 = vunpack.c.h.b16 %v3254
        %v6853 = vunpack.c.l.b16 %v3255
        %v6854 = vunpack.c.h.b16 %v3255
        %v6855 = vunpack.c.l.b16 %v3256
        %v6856 = vunpack.c.h.b16 %v3256
        %v6857 = vunpack.c.l.b16 %v3257
        %v6858 = vunpack.c.h.b16 %v3257
        %v6859 = vunpack.c.l.b16 %v3258
        %v6860 = vunpack.c.h.b16 %v3258
        %v6861 = vunpack.c.l.b16 %v3259
        %v6862 = vunpack.c.h.b16 %v3259
        %v6863 = vunpack.c.l.b16 %v3260
        %v6864 = vunpack.c.h.b16 %v3260
        %v6865 = vunpack.c.l.b16 %v3261
        %v6866 = vunpack.c.h.b16 %v3261
        %v6867 = vunpack.c.l.b16 %v3262
        %v6868 = vunpack.c.l.b16 %v3263
        %v6869 = vunpack.c.h.b16 %v3263
        %v6870 = vunpack.c.l.b16 %v3264
        %v6871 = vunpack.c.h.b16 %v3264
        %v6872 = vunpack.c.l.b16 %v3265
        %v6873 = vunpack.c.h.b16 %v3265
        %v6874 = vunpack.c.l.b16 %v3266
        %v6875 = vunpack.c.h.b16 %v3266
        %v6876 = vunpack.c.l.b16 %v3267
        %v6877 = vunpack.c.h.b16 %v3267
        %v6878 = vunpack.c.l.b16 %v3268
        %v6879 = vunpack.c.h.b16 %v3268
        %v6880 = vunpack.c.l.b16 %v3269
        %v6881 = vunpack.c.h.b16 %v3269
        %v6882 = vunpack.c.l.b16 %v3270
        %v6883 = vunpack.c.h.b16 %v3270
        %v6884 = vunpack.c.l.b16 %v3271
        %v6885 = vunpack.c.h.b16 %v3271
        %v6886 = vunpack.c.l.b16 %v3272
        %v6887 = vunpack.c.h.b16 %v3272
        %v6888 = vunpack.c.l.b16 %v3273
        %v6889 = vunpack.c.l.b16 %v3274
        %v6890 = vunpack.c.h.b16 %v3274
        %v6891 = vunpack.c.l.b16 %v3275
        %v6892 = vunpack.c.h.b16 %v3275
        %v6893 = vunpack.c.l.b16 %v3276
        %v6894 = vunpack.c.h.b16 %v3276
        %v6895 = vunpack.c.l.b16 %v3277
        %v6896 = vunpack.c.h.b16 %v3277
        %v6897 = vunpack.c.l.b16 %v3278
        %v6898 = vunpack.c.h.b16 %v3278
        %v6899 = vunpack.c.l.b16 %v3279
        %v6900 = vunpack.c.h.b16 %v3279
        %v6901 = vunpack.c.l.b16 %v3280
        %v6902 = vunpack.c.h.b16 %v3280
        %v6903 = vunpack.c.l.b16 %v3281
        %v6904 = vunpack.c.h.b16 %v3281
        %v6905 = vunpack.c.l.b16 %v3282
        %v6906 = vunpack.c.h.b16 %v3282
        %v6907 = vunpack.c.l.b16 %v3283
        %v6908 = vunpack.c.h.b16 %v3283
        %v6909 = vunpack.c.l.b16 %v3284
        %v6910 = vunpack.c.l.b16 %v3285
        %v6911 = vunpack.c.h.b16 %v3285
        %v6912 = vunpack.c.l.b16 %v3286
        %v6913 = vunpack.c.h.b16 %v3286
        %v6914 = vunpack.c.l.b16 %v3287
        %v6915 = vunpack.c.h.b16 %v3287
        %v6916 = vunpack.c.l.b16 %v3288
        %v6917 = vunpack.c.h.b16 %v3288
        %v6918 = vunpack.c.l.b16 %v3289
        %v6919 = vunpack.c.h.b16 %v3289
        %v6920 = vunpack.c.l.b16 %v3290
        %v6921 = vunpack.c.h.b16 %v3290
        %v6922 = vunpack.c.l.b16 %v3291
        %v6923 = vunpack.c.h.b16 %v3291
        %v6924 = vunpack.c.l.b16 %v3292
        %v6925 = vunpack.c.h.b16 %v3292
        %v6926 = vunpack.c.l.b16 %v3293
        %v6927 = vunpack.c.h.b16 %v3293
        %v6928 = vunpack.c.l.b16 %v3294
        %v6929 = vunpack.c.h.b16 %v3294
        %v6930 = vunpack.c.l.b16 %v3295
        %v6931 = vunpack.c.l.b16 %v3296
        %v6932 = vunpack.c.h.b16 %v3296
        %v6933 = vunpack.c.l.b16 %v3297
        %v6934 = vunpack.c.h.b16 %v3297
        %v6935 = vunpack.c.l.b16 %v3298
        %v6936 = vunpack.c.h.b16 %v3298
        %v6937 = vunpack.c.l.b16 %v3299
        %v6938 = vunpack.c.h.b16 %v3299
        %v6939 = vunpack.c.l.b16 %v3300
        %v6940 = vunpack.c.h.b16 %v3300
        %v6941 = vunpack.c.l.b16 %v3301
        %v6942 = vunpack.c.h.b16 %v3301
        %v6943 = vunpack.c.l.b16 %v3302
        %v6944 = vunpack.c.h.b16 %v3302
        %v6945 = vunpack.c.l.b16 %v3303
        %v6946 = vunpack.c.h.b16 %v3303
        %v6947 = vunpack.c.l.b16 %v3304
        %v6948 = vunpack.c.h.b16 %v3304
        %v6949 = vunpack.c.l.b16 %v3305
        %v6950 = vunpack.c.h.b16 %v3305
        %v6951 = vunpack.c.l.b16 %v3306
        %v6952 = vunpack.c.l.b16 %v3307
        %v6953 = vunpack.c.h.b16 %v3307
        %v6954 = vunpack.c.l.b16 %v3308
        %v6955 = vunpack.c.h.b16 %v3308
        %v6956 = vunpack.c.l.b16 %v3309
        %v6957 = vunpack.c.h.b16 %v3309
        %v6958 = vunpack.c.l.b16 %v3310
        %v6959 = vunpack.c.h.b16 %v3310
        %v6960 = vunpack.c.l.b16 %v3311
        %v6961 = vunpack.c.h.b16 %v3311
        %v6962 = vunpack.c.l.b16 %v3312
        %v6963 = vunpack.c.h.b16 %v3312
        %v6964 = vunpack.c.l.b16 %v3313
        %v6965 = vunpack.c.h.b16 %v3313
        %v6966 = vunpack.c.l.b16 %v3314
        %v6967 = vunpack.c.h.b16 %v3314
        %v6968 = vunpack.c.l.b16 %v3315
        %v6969 = vunpack.c.h.b16 %v3315
        %v6970 = vunpack.c.l.b16 %v3316
        %v6971 = vunpack.c.h.b16 %v3316
        %v6972 = vunpack.c.l.b16 %v3317
        %v6973 = vunpack.c.l.b16 %v3318
        %v6974 = vunpack.c.h.b16 %v3318
        %v6975 = vunpack.c.l.b16 %v3319
        %v6976 = vunpack.c.h.b16 %v3319
        %v6977 = vunpack.c.l.b16 %v3320
        %v6978 = vunpack.c.h.b16 %v3320
        %v6979 = vunpack.c.l.b16 %v3321
        %v6980 = vunpack.c.h.b16 %v3321
        %v6981 = vunpack.c.l.b16 %v3322
        %v6982 = vunpack.c.h.b16 %v3322
        %v6983 = vunpack.c.l.b16 %v3323
        %v6984 = vunpack.c.h.b16 %v3323
        %v6985 = vunpack.c.l.b16 %v3324
        %v6986 = vunpack.c.h.b16 %v3324
        %v6987 = vunpack.c.l.b16 %v3325
        %v6988 = vunpack.c.h.b16 %v3325
        %v6989 = vunpack.c.l.b16 %v3326
        %v6990 = vunpack.c.h.b16 %v3326
        %v6991 = vunpack.c.l.b16 %v3327
        %v6992 = vunpack.c.h.b16 %v3327
        %v6993 = vunpack.c.l.b16 %v3328
        %v6994 = vunpack.c.l.b16 %v3329
        %v6995 = vunpack.c.h.b16 %v3329
        %v6996 = vunpack.c.l.b16 %v3330
        %v6997 = vunpack.c.h.b16 %v3330
        %v6998 = vunpack.c.l.b16 %v3331
        %v6999 = vunpack.c.h.b16 %v3331
        %v7000 = vunpack.c.l.b16 %v3332
        %v7001 = vunpack.c.h.b16 %v3332
        %v7002 = vunpack.c.l.b16 %v3333
        %v7003 = vunpack.c.h.b16 %v3333
        %v7004 = vunpack.c.l.b16 %v3334
        %v7005 = vunpack.c.h.b16 %v3334
        %v7006 = vunpack.c.l.b16 %v3335
        %v7007 = vunpack.c.h.b16 %v3335
        %v7008 = vunpack.c.l.b16 %v3336
        %v7009 = vunpack.c.h.b16 %v3336
        %v7010 = vunpack.c.l.b16 %v3337
        %v7011 = vunpack.c.h.b16 %v3337
        %v7012 = vunpack.c.l.b16 %v3338
        %v7013 = vunpack.c.h.b16 %v3338
        %v7014 = vunpack.c.l.b16 %v3339
        %v7015 = vunpack.c.l.b16 %v3340
        %v7016 = vunpack.c.h.b16 %v3340
        %v7017 = vunpack.c.l.b16 %v3341
        %v7018 = vunpack.c.h.b16 %v3341
        %v7019 = vunpack.c.l.b16 %v3342
        %v7020 = vunpack.c.h.b16 %v3342
        %v7021 = vunpack.c.l.b16 %v3343
        %v7022 = vunpack.c.h.b16 %v3343
        %v7023 = vunpack.c.l.b16 %v3344
        %v7024 = vunpack.c.h.b16 %v3344
        %v7025 = vunpack.c.l.b16 %v3345
        %v7026 = vunpack.c.h.b16 %v3345
        %v7027 = vunpack.c.l.b16 %v3346
        %v7028 = vunpack.c.h.b16 %v3346
        %v7029 = vunpack.c.l.b16 %v3347
        %v7030 = vunpack.c.h.b16 %v3347
        %v7031 = vunpack.c.l.b16 %v3348
        %v7032 = vunpack.c.h.b16 %v3348
        %v7033 = vunpack.c.l.b16 %v3349
        %v7034 = vunpack.c.h.b16 %v3349
        %v7035 = vunpack.c.l.b16 %v3350
        %v7036 = vunpack.c.l.b16 %v3351
        %v7037 = vunpack.c.h.b16 %v3351
        %v7038 = vunpack.c.l.b16 %v3352
        %v7039 = vunpack.c.h.b16 %v3352
        %v7040 = vunpack.c.l.b16 %v3353
        %v7041 = vunpack.c.h.b16 %v3353
        %v7042 = vunpack.c.l.b16 %v3354
        %v7043 = vunpack.c.h.b16 %v3354
        %v7044 = vunpack.c.l.b16 %v3355
        %v7045 = vunpack.c.h.b16 %v3355
        %v7046 = vunpack.c.l.b16 %v3356
        %v7047 = vunpack.c.h.b16 %v3356
        %v7048 = vunpack.c.l.b16 %v3357
        %v7049 = vunpack.c.h.b16 %v3357
        %v7050 = vunpack.c.l.b16 %v3358
        %v7051 = vunpack.c.h.b16 %v3358
        %v7052 = vunpack.c.l.b16 %v3359
        %v7053 = vunpack.c.h.b16 %v3359
        %v7054 = vunpack.c.l.b16 %v3360
        %v7055 = vunpack.c.h.b16 %v3360
        %v7056 = vunpack.c.l.b16 %v3361
        %v7057 = vunpack.c.l.b16 %v3362
        %v7058 = vunpack.c.h.b16 %v3362
        %v7059 = vunpack.c.l.b16 %v3363
        %v7060 = vunpack.c.h.b16 %v3363
        %v7061 = vunpack.c.l.b16 %v3364
        %v7062 = vunpack.c.h.b16 %v3364
        %v7063 = vunpack.c.l.b16 %v3365
        %v7064 = vunpack.c.h.b16 %v3365
        %v7065 = vunpack.c.l.b16 %v3366
        %v7066 = vunpack.c.h.b16 %v3366
        %v7067 = vunpack.c.l.b16 %v3367
        %v7068 = vunpack.c.h.b16 %v3367
        %v7069 = vunpack.c.l.b16 %v3368
        %v7070 = vunpack.c.h.b16 %v3368
        %v7071 = vunpack.c.l.b16 %v3369
        %v7072 = vunpack.c.h.b16 %v3369
        %v7073 = vunpack.c.l.b16 %v3370
        %v7074 = vunpack.c.h.b16 %v3370
        %v7075 = vunpack.c.l.b16 %v3371
        %v7076 = vunpack.c.h.b16 %v3371
        %v7077 = vunpack.c.l.b16 %v3372
        %v7078 = vunpack.c.l.b16 %v3373
        %v7079 = vunpack.c.h.b16 %v3373
        %v7080 = vunpack.c.l.b16 %v3374
        %v7081 = vunpack.c.h.b16 %v3374
        %v7082 = vunpack.c.l.b16 %v3375
        %v7083 = vunpack.c.h.b16 %v3375
        %v7084 = vunpack.c.l.b16 %v3376
        %v7085 = vunpack.c.h.b16 %v3376
        %v7086 = vunpack.c.l.b16 %v3377
        %v7087 = vunpack.c.h.b16 %v3377
        %v7088 = vunpack.c.l.b16 %v3378
        %v7089 = vunpack.c.h.b16 %v3378
        %v7090 = vunpack.c.l.b16 %v3379
        %v7091 = vunpack.c.h.b16 %v3379
        %v7092 = vunpack.c.l.b16 %v3380
        %v7093 = vunpack.c.h.b16 %v3380
        %v7094 = vunpack.c.l.b16 %v3381
        %v7095 = vunpack.c.h.b16 %v3381
        %v7096 = vunpack.c.l.b16 %v3382
        %v7097 = vunpack.c.h.b16 %v3382
        %v7098 = vunpack.c.l.b16 %v3383
        %v7099 = vunpack.c.l.b16 %v3384
        %v7100 = vunpack.c.h.b16 %v3384
        %v7101 = vunpack.c.l.b16 %v3385
        %v7102 = vunpack.c.h.b16 %v3385
        %v7103 = vunpack.c.l.b16 %v3386
        %v7104 = vunpack.c.h.b16 %v3386
        %v7105 = vunpack.c.l.b16 %v3387
        %v7106 = vunpack.c.h.b16 %v3387
        %v7107 = vunpack.c.l.b16 %v3388
        %v7108 = vunpack.c.h.b16 %v3388
        %v7109 = vunpack.c.l.b16 %v3389
        %v7110 = vunpack.c.h.b16 %v3389
        %v7111 = vunpack.c.l.b16 %v3390
        %v7112 = vunpack.c.h.b16 %v3390
        %v7113 = vunpack.c.l.b16 %v3391
        %v7114 = vunpack.c.h.b16 %v3391
        %v7115 = vunpack.c.l.b16 %v3392
        %v7116 = vunpack.c.h.b16 %v3392
        %v7117 = vunpack.c.l.b16 %v3393
        %v7118 = vunpack.c.h.b16 %v3393
        %v7119 = vunpack.c.l.b16 %v3394
        %v7120 = vunpack.c.l.b16 %v3395
        %v7121 = vunpack.c.h.b16 %v3395
        %v7122 = vunpack.c.l.b16 %v3396
        %v7123 = vunpack.c.h.b16 %v3396
        %v7124 = vunpack.c.l.b16 %v3397
        %v7125 = vunpack.c.h.b16 %v3397
        %v7126 = vunpack.c.l.b16 %v3398
        %v7127 = vunpack.c.h.b16 %v3398
        %v7128 = vunpack.c.l.b16 %v3399
        %v7129 = vunpack.c.h.b16 %v3399
        %v7130 = vunpack.c.l.b16 %v3400
        %v7131 = vunpack.c.h.b16 %v3400
        %v7132 = vunpack.c.l.b16 %v3401
        %v7133 = vunpack.c.h.b16 %v3401
        %v7134 = vunpack.c.l.b16 %v3402
        %v7135 = vunpack.c.h.b16 %v3402
        %v7136 = vunpack.c.l.b16 %v3403
        %v7137 = vunpack.c.h.b16 %v3403
        %v7138 = vunpack.c.l.b16 %v3404
        %v7139 = vunpack.c.h.b16 %v3404
        %v7140 = vunpack.c.l.b16 %v3405
        %v7141 = vunpack.c.l.b16 %v3406
        %v7142 = vunpack.c.h.b16 %v3406
        %v7143 = vunpack.c.l.b16 %v3407
        %v7144 = vunpack.c.h.b16 %v3407
        %v7145 = vunpack.c.l.b16 %v3408
        %v7146 = vunpack.c.h.b16 %v3408
        %v7147 = vunpack.c.l.b16 %v3409
        %v7148 = vunpack.c.h.b16 %v3409
        %v7149 = vunpack.c.l.b16 %v3410
        %v7150 = vunpack.c.h.b16 %v3410
        %v7151 = vunpack.c.l.b16 %v3411
        %v7152 = vunpack.c.h.b16 %v3411
        %v7153 = vunpack.c.l.b16 %v3412
        %v7154 = vunpack.c.h.b16 %v3412
        %v7155 = vunpack.c.l.b16 %v3413
        %v7156 = vunpack.c.h.b16 %v3413
        %v7157 = vunpack.c.l.b16 %v3414
        %v7158 = vunpack.c.h.b16 %v3414
        %v7159 = vunpack.c.l.b16 %v3415
        %v7160 = vunpack.c.h.b16 %v3415
        %v7161 = vunpack.c.l.b16 %v3416
        %v7162 = vunpack.c.l.b16 %v3417
        %v7163 = vunpack.c.h.b16 %v3417
        %v7164 = vunpack.c.l.b16 %v3418
        %v7165 = vunpack.c.h.b16 %v3418
        %v7166 = vunpack.c.l.b16 %v3419
        %v7167 = vunpack.c.h.b16 %v3419
        %v7168 = vunpack.c.l.b16 %v3420
        %v7169 = vunpack.c.h.b16 %v3420
        %v7170 = vunpack.c.l.b16 %v3421
        %v7171 = vunpack.c.h.b16 %v3421
        %v7172 = vunpack.c.l.b16 %v3422
        %v7173 = vunpack.c.h.b16 %v3422
        %v7174 = vunpack.c.l.b16 %v3423
        %v7175 = vunpack.c.h.b16 %v3423
        %v7176 = vunpack.c.l.b16 %v3424
        %v7177 = vunpack.c.h.b16 %v3424
        %v7178 = vunpack.c.l.b16 %v3425
        %v7179 = vunpack.c.h.b16 %v3425
        %v7180 = vunpack.c.l.b16 %v3426
        %v7181 = vunpack.c.h.b16 %v3426
        %v7182 = vunpack.c.l.b16 %v3427
        %v7183 = vunpack.c.l.b16 %v3428
        %v7184 = vunpack.c.h.b16 %v3428
        %v7185 = vunpack.c.l.b16 %v3429
        %v7186 = vunpack.c.h.b16 %v3429
        %v7187 = vunpack.c.l.b16 %v3430
        %v7188 = vunpack.c.h.b16 %v3430
        %v7189 = vunpack.c.l.b16 %v3431
        %v7190 = vunpack.c.h.b16 %v3431
        %v7191 = vunpack.c.l.b16 %v3432
        %v7192 = vunpack.c.h.b16 %v3432
        %v7193 = vunpack.c.l.b16 %v3433
        %v7194 = vunpack.c.h.b16 %v3433
        %v7195 = vunpack.c.l.b16 %v3434
        %v7196 = vunpack.c.h.b16 %v3434
        %v7197 = vunpack.c.l.b16 %v3435
        %v7198 = vunpack.c.h.b16 %v3435
        %v7199 = vunpack.c.l.b16 %v3436
        %v7200 = vunpack.c.h.b16 %v3436
        %v7201 = vunpack.c.l.b16 %v3437
        %v7202 = vunpack.c.h.b16 %v3437
        %v7203 = vunpack.c.l.b16 %v3438
        %v7204 = vunpack.c.l.b16 %v3439
        %v7205 = vunpack.c.h.b16 %v3439
        %v7206 = vunpack.c.l.b16 %v3440
        %v7207 = vunpack.c.h.b16 %v3440
        %v7208 = vunpack.c.l.b16 %v3441
        %v7209 = vunpack.c.h.b16 %v3441
        %v7210 = vunpack.c.l.b16 %v3442
        %v7211 = vunpack.c.h.b16 %v3442
        %v7212 = vunpack.c.l.b16 %v3443
        %v7213 = vunpack.c.h.b16 %v3443
        %v7214 = vunpack.c.l.b16 %v3444
        %v7215 = vunpack.c.h.b16 %v3444
        %v7216 = vunpack.c.l.b16 %v3445
        %v7217 = vunpack.c.h.b16 %v3445
        %v7218 = vunpack.c.l.b16 %v3446
        %v7219 = vunpack.c.h.b16 %v3446
        %v7220 = vunpack.c.l.b16 %v3447
        %v7221 = vunpack.c.h.b16 %v3447
        %v7222 = vunpack.c.l.b16 %v3448
        %v7223 = vunpack.c.h.b16 %v3448
        %v7224 = vunpack.c.l.b16 %v3449
        %v7225 = vunpack.c.l.b16 %v3450
        %v7226 = vunpack.c.h.b16 %v3450
        %v7227 = vunpack.c.l.b16 %v3451
        %v7228 = vunpack.c.h.b16 %v3451
        %v7229 = vunpack.c.l.b16 %v3452
        %v7230 = vunpack.c.h.b16 %v3452
        %v7231 = vunpack.c.l.b16 %v3453
        %v7232 = vunpack.c.h.b16 %v3453
        %v7233 = vunpack.c.l.b16 %v3454
        %v7234 = vunpack.c.h.b16 %v3454
        %v7235 = vunpack.c.l.b16 %v3455
        %v7236 = vunpack.c.h.b16 %v3455
        %v7237 = vunpack.c.l.b16 %v3456
        %v7238 = vunpack.c.h.b16 %v3456
        %v7239 = vunpack.c.l.b16 %v3457
        %v7240 = vunpack.c.h.b16 %v3457
        %v7241 = vunpack.c.l.b16 %v3458
        %v7242 = vunpack.c.h.b16 %v3458
        %v7243 = vunpack.c.l.b16 %v3459
        %v7244 = vunpack.c.h.b16 %v3459
        %v7245 = vunpack.c.l.b16 %v3460
        %v7246 = vunpack.c.l.b16 %v3461
        %v7247 = vunpack.c.h.b16 %v3461
        %v7248 = vunpack.c.l.b16 %v3462
        %v7249 = vunpack.c.h.b16 %v3462
        %v7250 = vunpack.c.l.b16 %v3463
        %v7251 = vunpack.c.h.b16 %v3463
        %v7252 = vunpack.c.l.b16 %v3464
        %v7253 = vunpack.c.h.b16 %v3464
        %v7254 = vunpack.c.l.b16 %v3465
        %v7255 = vunpack.c.h.b16 %v3465
        %v7256 = vunpack.c.l.b16 %v3466
        %v7257 = vunpack.c.h.b16 %v3466
        %v7258 = vunpack.c.l.b16 %v3467
        %v7259 = vunpack.c.h.b16 %v3467
        %v7260 = vunpack.c.l.b16 %v3468
        %v7261 = vunpack.c.h.b16 %v3468
        %v7262 = vunpack.c.l.b16 %v3469
        %v7263 = vunpack.c.h.b16 %v3469
        %v7264 = vunpack.c.l.b16 %v3470
        %v7265 = vunpack.c.h.b16 %v3470
        %v7266 = vunpack.c.l.b16 %v3471
        %v7267 = vunpack.c.l.b16 %v3472
        %v7268 = vunpack.c.h.b16 %v3472
        %v7269 = vunpack.c.l.b16 %v3473
        %v7270 = vunpack.c.h.b16 %v3473
        %v7271 = vunpack.c.l.b16 %v3474
        %v7272 = vunpack.c.h.b16 %v3474
        %v7273 = vunpack.c.l.b16 %v3475
        %v7274 = vunpack.c.h.b16 %v3475
        %v7275 = vunpack.c.l.b16 %v3476
        %v7276 = vunpack.c.h.b16 %v3476
        %v7277 = vunpack.c.l.b16 %v3477
        %v7278 = vunpack.c.h.b16 %v3477
        %v7279 = vunpack.c.l.b16 %v3478
        %v7280 = vunpack.c.h.b16 %v3478
        %v7281 = vunpack.c.l.b16 %v3479
        %v7282 = vunpack.c.h.b16 %v3479
        %v7283 = vunpack.c.l.b16 %v3480
        %v7284 = vunpack.c.h.b16 %v3480
        %v7285 = vunpack.c.l.b16 %v3481
        %v7286 = vunpack.c.h.b16 %v3481
        %v7287 = vunpack.c.l.b16 %v3482
        %v7288 = vunpack.c.l.b16 %v3483
        %v7289 = vunpack.c.h.b16 %v3483
        %v7290 = vunpack.c.l.b16 %v3484
        %v7291 = vunpack.c.h.b16 %v3484
        %v7292 = vunpack.c.l.b16 %v3485
        %v7293 = vunpack.c.h.b16 %v3485
        %v7294 = vunpack.c.l.b16 %v3486
        %v7295 = vunpack.c.h.b16 %v3486
        %v7296 = vunpack.c.l.b16 %v3487
        %v7297 = vunpack.c.h.b16 %v3487
        %v7298 = vunpack.c.l.b16 %v3488
        %v7299 = vunpack.c.h.b16 %v3488
        %v7300 = vunpack.c.l.b16 %v3489
        %v7301 = vunpack.c.h.b16 %v3489
        %v7302 = vunpack.c.l.b16 %v3490
        %v7303 = vunpack.c.h.b16 %v3490
        %v7304 = vunpack.c.l.b16 %v3491
        %v7305 = vunpack.c.h.b16 %v3491
        %v7306 = vunpack.c.l.b16 %v3492
        %v7307 = vunpack.c.h.b16 %v3492
        %v7308 = vunpack.c.l.b16 %v3493
        %v7309 = vunpack.c.l.b16 %v3494
        %v7310 = vunpack.c.h.b16 %v3494
        %v7311 = vunpack.c.l.b16 %v3495
        %v7312 = vunpack.c.h.b16 %v3495
        %v7313 = vunpack.c.l.b16 %v3496
        %v7314 = vunpack.c.h.b16 %v3496
        %v7315 = vunpack.c.l.b16 %v3497
        %v7316 = vunpack.c.h.b16 %v3497
        %v7317 = vunpack.c.l.b16 %v3498
        %v7318 = vunpack.c.h.b16 %v3498
        %v7319 = vunpack.c.l.b16 %v3499
        %v7320 = vunpack.c.h.b16 %v3499
        %v7321 = vunpack.c.l.b16 %v3500
        %v7322 = vunpack.c.h.b16 %v3500
        %v7323 = vunpack.c.l.b16 %v3501
        %v7324 = vunpack.c.h.b16 %v3501
        %v7325 = vunpack.c.l.b16 %v3502
        %v7326 = vunpack.c.h.b16 %v3502
        %v7327 = vunpack.c.l.b16 %v3503
        %v7328 = vunpack.c.h.b16 %v3503
        %v7329 = vunpack.c.l.b16 %v3504
        %v7330 = vunpack.c.l.b16 %v3505
        %v7331 = vunpack.c.h.b16 %v3505
        %v7332 = vunpack.c.l.b16 %v3506
        %v7333 = vunpack.c.h.b16 %v3506
        %v7334 = vunpack.c.l.b16 %v3507
        %v7335 = vunpack.c.h.b16 %v3507
        %v7336 = vunpack.c.l.b16 %v3508
        %v7337 = vunpack.c.h.b16 %v3508
        %v7338 = vunpack.c.l.b16 %v3509
        %v7339 = vunpack.c.h.b16 %v3509
        %v7340 = vunpack.c.l.b16 %v3510
        %v7341 = vunpack.c.h.b16 %v3510
        %v7342 = vunpack.c.l.b16 %v3511
        %v7343 = vunpack.c.h.b16 %v3511
        %v7344 = vunpack.c.l.b16 %v3512
        %v7345 = vunpack.c.h.b16 %v3512
        %v7346 = vunpack.c.l.b16 %v3513
        %v7347 = vunpack.c.h.b16 %v3513
        %v7348 = vunpack.c.l.b16 %v3514
        %v7349 = vunpack.c.h.b16 %v3514
        %v7350 = vunpack.c.l.b16 %v3515
        %v7351 = vunpack.c.l.b16 %v3516
        %v7352 = vunpack.c.h.b16 %v3516
        %v7353 = vunpack.c.l.b16 %v3517
        %v7354 = vunpack.c.h.b16 %v3517
        %v7355 = vunpack.c.l.b16 %v3518
        %v7356 = vunpack.c.h.b16 %v3518
        %v7357 = vunpack.c.l.b16 %v3519
        %v7358 = vunpack.c.h.b16 %v3519
        %v7359 = vunpack.c.l.b16 %v3520
        %v7360 = vunpack.c.h.b16 %v3520
        %v7361 = vunpack.c.l.b16 %v3521
        %v7362 = vunpack.c.h.b16 %v3521
        %v7363 = vunpack.c.l.b16 %v3522
        %v7364 = vunpack.c.h.b16 %v3522
        %v7365 = vunpack.c.l.b16 %v3523
        %v7366 = vunpack.c.h.b16 %v3523
        %v7367 = vunpack.c.l.b16 %v3524
        %v7368 = vunpack.c.h.b16 %v3524
        %v7369 = vunpack.c.l.b16 %v3525
        %v7370 = vunpack.c.h.b16 %v3525
        %v7371 = vunpack.c.l.b16 %v3526
        %v7372 = vunpack.c.l.b16 %v3527
        %v7373 = vunpack.c.h.b16 %v3527
        %v7374 = vunpack.c.l.b16 %v3528
        %v7375 = vunpack.c.h.b16 %v3528
        %v7376 = vunpack.c.l.b16 %v3529
        %v7377 = vunpack.c.h.b16 %v3529
        %v7378 = vunpack.c.l.b16 %v3530
        %v7379 = vunpack.c.h.b16 %v3530
        %v7380 = vunpack.c.l.b16 %v3531
        %v7381 = vunpack.c.h.b16 %v3531
        %v7382 = vunpack.c.l.b16 %v3532
        %v7383 = vunpack.c.h.b16 %v3532
        %v7384 = vunpack.c.l.b16 %v3533
        %v7385 = vunpack.c.h.b16 %v3533
        %v7386 = vunpack.c.l.b16 %v3534
        %v7387 = vunpack.c.h.b16 %v3534
        %v7388 = vunpack.c.l.b16 %v3535
        %v7389 = vunpack.c.h.b16 %v3535
        %v7390 = vunpack.c.l.b16 %v3536
        %v7391 = vunpack.c.h.b16 %v3536
        %v7392 = vunpack.c.l.b16 %v3537
        %v7393 = vunpack.c.l.b16 %v3538
        %v7394 = vunpack.c.h.b16 %v3538
        %v7395 = vunpack.c.l.b16 %v3539
        %v7396 = vunpack.c.h.b16 %v3539
        %v7397 = vunpack.c.l.b16 %v3540
        %v7398 = vunpack.c.h.b16 %v3540
        %v7399 = vunpack.c.l.b16 %v3541
        %v7400 = vunpack.c.h.b16 %v3541
        %v7401 = vunpack.c.l.b16 %v3542
        %v7402 = vunpack.c.h.b16 %v3542
        %v7403 = vunpack.c.l.b16 %v3543
        %v7404 = vunpack.c.h.b16 %v3543
        %v7405 = vunpack.c.l.b16 %v3544
        %v7406 = vunpack.c.h.b16 %v3544
        %v7407 = vunpack.c.l.b16 %v3545
        %v7408 = vunpack.c.h.b16 %v3545
        %v7409 = vunpack.c.l.b16 %v3546
        %v7410 = vunpack.c.h.b16 %v3546
        %v7411 = vunpack.c.l.b16 %v3547
        %v7412 = vunpack.c.h.b16 %v3547
        %v7413 = vunpack.c.l.b16 %v3548
        %v7414 = vunpack.c.l.b16 %v3549
        %v7415 = vunpack.c.h.b16 %v3549
        %v7416 = vunpack.c.l.b16 %v3550
        %v7417 = vunpack.c.h.b16 %v3550
        %v7418 = vunpack.c.l.b16 %v3551
        %v7419 = vunpack.c.h.b16 %v3551
        %v7420 = vunpack.c.l.b16 %v3552
        %v7421 = vunpack.c.h.b16 %v3552
        %v7422 = vunpack.c.l.b16 %v3553
        %v7423 = vunpack.c.h.b16 %v3553
        %v7424 = vunpack.c.l.b16 %v3554
        %v7425 = vunpack.c.h.b16 %v3554
        %v7426 = vunpack.c.l.b16 %v3555
        %v7427 = vunpack.c.h.b16 %v3555
        %v7428 = vunpack.c.l.b16 %v3556
        %v7429 = vunpack.c.h.b16 %v3556
        %v7430 = vunpack.c.l.b16 %v3557
        %v7431 = vunpack.c.h.b16 %v3557
        %v7432 = vunpack.c.l.b16 %v3558
        %v7433 = vunpack.c.h.b16 %v3558
        %v7434 = vunpack.c.l.b16 %v3559
        %v7435 = vunpack.c.l.b16 %v3560
        %v7436 = vunpack.c.h.b16 %v3560
        %v7437 = vunpack.c.l.b16 %v3561
        %v7438 = vunpack.c.h.b16 %v3561
        %v7439 = vunpack.c.l.b16 %v3562
        %v7440 = vunpack.c.h.b16 %v3562
        %v7441 = vunpack.c.l.b16 %v3563
        %v7442 = vunpack.c.h.b16 %v3563
        %v7443 = vunpack.c.l.b16 %v3564
        %v7444 = vunpack.c.h.b16 %v3564
        %v7445 = vunpack.c.l.b16 %v3565
        %v7446 = vunpack.c.h.b16 %v3565
        %v7447 = vunpack.c.l.b16 %v3566
        %v7448 = vunpack.c.h.b16 %v3566
        %v7449 = vunpack.c.l.b16 %v3567
        %v7450 = vunpack.c.h.b16 %v3567
        %v7451 = vunpack.c.l.b16 %v3568
        %v7452 = vunpack.c.h.b16 %v3568
        %v7453 = vunpack.c.l.b16 %v3569
        %v7454 = vunpack.c.h.b16 %v3569
        %v7455 = vunpack.c.l.b16 %v3570
        %v7456 = vunpack.c.l.b16 %v3571
        %v7457 = vunpack.c.h.b16 %v3571
        %v7458 = vunpack.c.l.b16 %v3572
        %v7459 = vunpack.c.h.b16 %v3572
        %v7460 = vunpack.c.l.b16 %v3573
        %v7461 = vunpack.c.h.b16 %v3573
        %v7462 = vunpack.c.l.b16 %v3574
        %v7463 = vunpack.c.h.b16 %v3574
        %v7464 = vunpack.c.l.b16 %v3575
        %v7465 = vunpack.c.h.b16 %v3575
        %v7466 = vunpack.c.l.b16 %v3576
        %v7467 = vunpack.c.h.b16 %v3576
        %v7468 = vunpack.c.l.b16 %v3577
        %v7469 = vunpack.c.h.b16 %v3577
        %v7470 = vunpack.c.l.b16 %v3578
        %v7471 = vunpack.c.h.b16 %v3578
        %v7472 = vunpack.c.l.b16 %v3579
        %v7473 = vunpack.c.h.b16 %v3579
        %v7474 = vunpack.c.l.b16 %v3580
        %v7475 = vunpack.c.h.b16 %v3580
        %v7476 = vunpack.c.l.b16 %v3581
        %v7477 = vunpack.c.l.b16 %v3582
        %v7478 = vunpack.c.h.b16 %v3582
        %v7479 = vunpack.c.l.b16 %v3583
        %v7480 = vunpack.c.h.b16 %v3583
        %v7481 = vunpack.c.l.b16 %v3584
        %v7482 = vunpack.c.h.b16 %v3584
        %v7483 = vunpack.c.l.b16 %v3585
        %v7484 = vunpack.c.h.b16 %v3585
        %v7485 = vunpack.c.l.b16 %v3586
        %v7486 = vunpack.c.h.b16 %v3586
        %v7487 = vunpack.c.l.b16 %v3587
        %v7488 = vunpack.c.h.b16 %v3587
        %v7489 = vunpack.c.l.b16 %v3588
        %v7490 = vunpack.c.h.b16 %v3588
        %v7491 = vunpack.c.l.b16 %v3589
        %v7492 = vunpack.c.h.b16 %v3589
        %v7493 = vunpack.c.l.b16 %v3590
        %v7494 = vunpack.c.h.b16 %v3590
        %v7495 = vunpack.c.l.b16 %v3591
        %v7496 = vunpack.c.h.b16 %v3591
        %v7497 = vunpack.c.l.b16 %v3592
        %v7498 = vunpack.c.l.b16 %v3593
        %v7499 = vunpack.c.h.b16 %v3593
        %v7500 = vunpack.c.l.b16 %v3594
        %v7501 = vunpack.c.h.b16 %v3594
        %v7502 = vunpack.c.l.b16 %v3595
        %v7503 = vunpack.c.h.b16 %v3595
        %v7504 = vunpack.c.l.b16 %v3596
        %v7505 = vunpack.c.h.b16 %v3596
        %v7506 = vunpack.c.l.b16 %v3597
        %v7507 = vunpack.c.h.b16 %v3597
        %v7508 = vunpack.c.l.b16 %v3598
        %v7509 = vunpack.c.h.b16 %v3598
        %v7510 = vunpack.c.l.b16 %v3599
        %v7511 = vunpack.c.h.b16 %v3599
        %v7512 = vunpack.c.l.b16 %v3600
        %v7513 = vunpack.c.h.b16 %v3600
        %v7514 = vunpack.c.l.b16 %v3601
        %v7515 = vunpack.c.h.b16 %v3601
        %v7516 = vunpack.c.l.b16 %v3602
        %v7517 = vunpack.c.h.b16 %v3602
        %v7518 = vunpack.c.l.b16 %v3603
        %v7519 = vunpack.c.l.b16 %v3604
        %v7520 = vunpack.c.h.b16 %v3604
        %v7521 = vunpack.c.l.b16 %v3605
        %v7522 = vunpack.c.h.b16 %v3605
        %v7523 = vunpack.c.l.b16 %v3606
        %v7524 = vunpack.c.h.b16 %v3606
        %v7525 = vunpack.c.l.b16 %v3607
        %v7526 = vunpack.c.h.b16 %v3607
        %v7527 = vunpack.c.l.b16 %v3608
        %v7528 = vunpack.c.h.b16 %v3608
        %v7529 = vunpack.c.l.b16 %v3609
        %v7530 = vunpack.c.h.b16 %v3609
        %v7531 = vunpack.c.l.b16 %v3610
        %v7532 = vunpack.c.h.b16 %v3610
        %v7533 = vunpack.c.l.b16 %v3611
        %v7534 = vunpack.c.h.b16 %v3611
        %v7535 = vunpack.c.l.b16 %v3612
        %v7536 = vunpack.c.h.b16 %v3612
        %v7537 = vunpack.c.l.b16 %v3613
        %v7538 = vunpack.c.h.b16 %v3613
        %v7539 = vunpack.c.l.b16 %v3614
        %v7540 = vunpack.c.l.b16 %v3615
        %v7541 = vunpack.c.h.b16 %v3615
        %v7542 = vunpack.c.l.b16 %v3616
        %v7543 = vunpack.c.h.b16 %v3616
        %v7544 = vunpack.c.l.b16 %v3617
        %v7545 = vunpack.c.h.b16 %v3617
        %v7546 = vunpack.c.l.b16 %v3618
        %v7547 = vunpack.c.h.b16 %v3618
        %v7548 = vunpack.c.l.b16 %v3619
        %v7549 = vunpack.c.h.b16 %v3619
        %v7550 = vunpack.c.l.b16 %v3620
        %v7551 = vunpack.c.h.b16 %v3620
        %v7552 = vunpack.c.l.b16 %v3621
        %v7553 = vunpack.c.h.b16 %v3621
        %v7554 = vunpack.c.l.b16 %v3622
        %v7555 = vunpack.c.h.b16 %v3622
        %v7556 = vunpack.c.l.b16 %v3623
        %v7557 = vunpack.c.h.b16 %v3623
        %v7558 = vunpack.c.l.b16 %v3624
        %v7559 = vunpack.c.h.b16 %v3624
        %v7560 = vunpack.c.l.b16 %v3625
        %v7561 = vunpack.c.l.b16 %v3626
        %v7562 = vunpack.c.h.b16 %v3626
        %v7563 = vunpack.c.l.b16 %v3627
        %v7564 = vunpack.c.h.b16 %v3627
        %v7565 = vunpack.c.l.b16 %v3628
        %v7566 = vunpack.c.h.b16 %v3628
        %v7567 = vunpack.c.l.b16 %v3629
        %v7568 = vunpack.c.h.b16 %v3629
        %v7569 = vunpack.c.l.b16 %v3630
        %v7570 = vunpack.c.h.b16 %v3630
        %v7571 = vunpack.c.l.b16 %v3631
        %v7572 = vunpack.c.h.b16 %v3631
        %v7573 = vunpack.c.l.b16 %v3632
        %v7574 = vunpack.c.h.b16 %v3632
        %v7575 = vunpack.c.l.b16 %v3633
        %v7576 = vunpack.c.h.b16 %v3633
        %v7577 = vunpack.c.l.b16 %v3634
        %v7578 = vunpack.c.h.b16 %v3634
        %v7579 = vunpack.c.l.b16 %v3635
        %v7580 = vunpack.c.h.b16 %v3635
        %v7581 = vunpack.c.l.b16 %v3636
        %v7582 = vunpack.c.l.b16 %v3637
        %v7583 = vunpack.c.h.b16 %v3637
        %v7584 = vunpack.c.l.b16 %v3638
        %v7585 = vunpack.c.h.b16 %v3638
        %v7586 = vunpack.c.l.b16 %v3639
        %v7587 = vunpack.c.h.b16 %v3639
        %v7588 = vunpack.c.l.b16 %v3640
        %v7589 = vunpack.c.h.b16 %v3640
        %v7590 = vunpack.c.l.b16 %v3641
        %v7591 = vunpack.c.h.b16 %v3641
        %v7592 = vunpack.c.l.b16 %v3642
        %v7593 = vunpack.c.h.b16 %v3642
        %v7594 = vunpack.c.l.b16 %v3643
        %v7595 = vunpack.c.h.b16 %v3643
        %v7596 = vunpack.c.l.b16 %v3644
        %v7597 = vunpack.c.h.b16 %v3644
        %v7598 = vunpack.c.l.b16 %v3645
        %v7599 = vunpack.c.h.b16 %v3645
        %v7600 = vunpack.c.l.b16 %v3646
        %v7601 = vunpack.c.h.b16 %v3646
        %v7602 = vunpack.c.l.b16 %v3647
        %v7603 = vunpack.c.l.b16 %v3648
        %v7604 = vunpack.c.h.b16 %v3648
        %v7605 = vunpack.c.l.b16 %v3649
        %v7606 = vunpack.c.h.b16 %v3649
        %v7607 = vunpack.c.l.b16 %v3650
        %v7608 = vunpack.c.h.b16 %v3650
        %v7609 = vunpack.c.l.b16 %v3651
        %v7610 = vunpack.c.h.b16 %v3651
        %v7611 = vunpack.c.l.b16 %v3652
        %v7612 = vunpack.c.h.b16 %v3652
        %v7613 = vunpack.c.l.b16 %v3653
        %v7614 = vunpack.c.h.b16 %v3653
        %v7615 = vunpack.c.l.b16 %v3654
        %v7616 = vunpack.c.h.b16 %v3654
        %v7617 = vunpack.c.l.b16 %v3655
        %v7618 = vunpack.c.h.b16 %v3655
        %v7619 = vunpack.c.l.b16 %v3656
        %v7620 = vunpack.c.h.b16 %v3656
        %v7621 = vunpack.c.l.b16 %v3657
        %v7622 = vunpack.c.h.b16 %v3657
        %v7623 = vunpack.c.l.b16 %v3658
        %v7624 = vunpack.c.l.b16 %v3659
        %v7625 = vunpack.c.h.b16 %v3659
        %v7626 = vunpack.c.l.b16 %v3660
        %v7627 = vunpack.c.h.b16 %v3660
        %v7628 = vunpack.c.l.b16 %v3661
        %v7629 = vunpack.c.h.b16 %v3661
        %v7630 = vunpack.c.l.b16 %v3662
        %v7631 = vunpack.c.h.b16 %v3662
        %v7632 = vunpack.c.l.b16 %v3663
        %v7633 = vunpack.c.h.b16 %v3663
        %v7634 = vunpack.c.l.b16 %v3664
        %v7635 = vunpack.c.h.b16 %v3664
        %v7636 = vunpack.c.l.b16 %v3665
        %v7637 = vunpack.c.h.b16 %v3665
        %v7638 = vunpack.c.l.b16 %v3666
        %v7639 = vunpack.c.h.b16 %v3666
        %v7640 = vunpack.c.l.b16 %v3667
        %v7641 = vunpack.c.h.b16 %v3667
        %v7642 = vunpack.c.l.b16 %v3668
        %v7643 = vunpack.c.h.b16 %v3668
        %v7644 = vunpack.c.l.b16 %v3669
        %v7645 = vunpack.c.l.b16 %v3670
        %v7646 = vunpack.c.h.b16 %v3670
        %v7647 = vunpack.c.l.b16 %v3671
        %v7648 = vunpack.c.h.b16 %v3671
        %v7649 = vunpack.c.l.b16 %v3672
        %v7650 = vunpack.c.h.b16 %v3672
        %v7651 = vunpack.c.l.b16 %v3673
        %v7652 = vunpack.c.h.b16 %v3673
        %v7653 = vunpack.c.l.b16 %v3674
        %v7654 = vunpack.c.h.b16 %v3674
        %v7655 = vunpack.c.l.b16 %v3675
        %v7656 = vunpack.c.h.b16 %v3675
        %v7657 = vunpack.c.l.b16 %v3676
        %v7658 = vunpack.c.h.b16 %v3676
        %v7659 = vunpack.c.l.b16 %v3677
        %v7660 = vunpack.c.h.b16 %v3677
        %v7661 = vunpack.c.l.b16 %v3678
        %v7662 = vunpack.c.h.b16 %v3678
        %v7663 = vunpack.c.l.b16 %v3679
        %v7664 = vunpack.c.h.b16 %v3679
        %v7665 = vunpack.c.l.b16 %v3680
        %v7666 = vunpack.c.l.b16 %v3681
        %v7667 = vunpack.c.h.b16 %v3681
        %v7668 = vunpack.c.l.b16 %v3682
        %v7669 = vunpack.c.h.b16 %v3682
        %v7670 = vunpack.c.l.b16 %v3683
        %v7671 = vunpack.c.h.b16 %v3683
        %v7672 = vunpack.c.l.b16 %v3684
        %v7673 = vunpack.c.h.b16 %v3684
        %v7674 = vunpack.c.l.b16 %v3685
        %v7675 = vunpack.c.h.b16 %v3685
        %v7676 = vunpack.c.l.b16 %v3686
        %v7677 = vunpack.c.h.b16 %v3686
        %v7678 = vunpack.c.l.b16 %v3687
        %v7679 = vunpack.c.h.b16 %v3687
        %v7680 = vunpack.c.l.b16 %v3688
        %v7681 = vunpack.c.h.b16 %v3688
        %v7682 = vunpack.c.l.b16 %v3689
        %v7683 = vunpack.c.h.b16 %v3689
        %v7684 = vunpack.c.l.b16 %v3690
        %v7685 = vunpack.c.h.b16 %v3690
        %v7686 = vunpack.c.l.b16 %v3691
        %v7687 = vunpack.c.l.b16 %v3692
        %v7688 = vunpack.c.h.b16 %v3692
        %v7689 = vunpack.c.l.b16 %v3693
        %v7690 = vunpack.c.h.b16 %v3693
        %v7691 = vunpack.c.l.b16 %v3694
        %v7692 = vunpack.c.h.b16 %v3694
        %v7693 = vunpack.c.l.b16 %v3695
        %v7694 = vunpack.c.h.b16 %v3695
        %v7695 = vunpack.c.l.b16 %v3696
        %v7696 = vunpack.c.h.b16 %v3696
        %v7697 = vunpack.c.l.b16 %v3697
        %v7698 = vunpack.c.h.b16 %v3697
        %v7699 = vunpack.c.l.b16 %v3698
        %v7700 = vunpack.c.h.b16 %v3698
        %v7701 = vunpack.c.l.b16 %v3699
        %v7702 = vunpack.c.h.b16 %v3699
        %v7703 = vunpack.c.l.b16 %v3700
        %v7704 = vunpack.c.h.b16 %v3700
        %v7705 = vunpack.c.l.b16 %v3701
        %v7706 = vunpack.c.h.b16 %v3701
        %v7707 = vunpack.c.l.b16 %v3702
        %v7708 = vunpack.c.l.b16 %v3703
        %v7709 = vunpack.c.h.b16 %v3703
        %v7710 = vunpack.c.l.b16 %v3704
        %v7711 = vunpack.c.h.b16 %v3704
        %v7712 = vunpack.c.l.b16 %v3705
        %v7713 = vunpack.c.h.b16 %v3705
        %v7714 = vunpack.c.l.b16 %v3706
        %v7715 = vunpack.c.h.b16 %v3706
        %v7716 = vunpack.c.l.b16 %v3707
        %v7717 = vunpack.c.h.b16 %v3707
        %v7718 = vunpack.c.l.b16 %v3708
        %v7719 = vunpack.c.h.b16 %v3708
        %v7720 = vunpack.c.l.b16 %v3709
        %v7721 = vunpack.c.h.b16 %v3709
        %v7722 = vunpack.c.l.b16 %v3710
        %v7723 = vunpack.c.h.b16 %v3710
        %v7724 = vunpack.c.l.b16 %v3711
        %v7725 = vunpack.c.h.b16 %v3711
        %v7726 = vunpack.c.l.b16 %v3712
        %v7727 = vunpack.c.h.b16 %v3712
        %v7728 = vunpack.c.l.b16 %v3713
        %v7729 = vunpack.c.l.b16 %v3714
        %v7730 = vunpack.c.h.b16 %v3714
        %v7731 = vunpack.c.l.b16 %v3715
        %v7732 = vunpack.c.h.b16 %v3715
        %v7733 = vunpack.c.l.b16 %v3716
        %v7734 = vunpack.c.h.b16 %v3716
        %v7735 = vunpack.c.l.b16 %v3717
        %v7736 = vunpack.c.h.b16 %v3717
        %v7737 = vunpack.c.l.b16 %v3718
        %v7738 = vunpack.c.h.b16 %v3718
        %v7739 = vunpack.c.l.b16 %v3719
        %v7740 = vunpack.c.h.b16 %v3719
        %v7741 = vunpack.c.l.b16 %v3720
        %v7742 = vunpack.c.h.b16 %v3720
        %v7743 = vunpack.c.l.b16 %v3721
        %v7744 = vunpack.c.h.b16 %v3721
        %v7745 = vunpack.c.l.b16 %v3722
        %v7746 = vunpack.c.h.b16 %v3722
        %v7747 = vunpack.c.l.b16 %v3723
        %v7748 = vunpack.c.h.b16 %v3723
        %v7749 = vunpack.c.l.b16 %v3724
        %v7750 = vunpack.c.l.b16 %v3725
        %v7751 = vunpack.c.h.b16 %v3725
        %v7752 = vunpack.c.l.b16 %v3726
        %v7753 = vunpack.c.h.b16 %v3726
        %v7754 = vunpack.c.l.b16 %v3727
        %v7755 = vunpack.c.h.b16 %v3727
        %v7756 = vunpack.c.l.b16 %v3728
        %v7757 = vunpack.c.h.b16 %v3728
        %v7758 = vunpack.c.l.b16 %v3729
        %v7759 = vunpack.c.h.b16 %v3729
        %v7760 = vunpack.c.l.b16 %v3730
        %v7761 = vunpack.c.h.b16 %v3730
        %v7762 = vunpack.c.l.b16 %v3731
        %v7763 = vunpack.c.h.b16 %v3731
        %v7764 = vunpack.c.l.b16 %v3732
        %v7765 = vunpack.c.h.b16 %v3732
        %v7766 = vunpack.c.l.b16 %v3733
        %v7767 = vunpack.c.h.b16 %v3733
        %v7768 = vunpack.c.l.b16 %v3734
        %v7769 = vunpack.c.h.b16 %v3734
        %v7770 = vunpack.c.l.b16 %v3735
        %v7771 = vunpack.c.l.b16 %v3736
        %v7772 = vunpack.c.h.b16 %v3736
        %v7773 = vunpack.c.l.b16 %v3737
        %v7774 = vunpack.c.h.b16 %v3737
        %v7775 = vunpack.c.l.b16 %v3738
        %v7776 = vunpack.c.h.b16 %v3738
        %v7777 = vunpack.c.l.b16 %v3739
        %v7778 = vunpack.c.h.b16 %v3739
        %v7779 = vunpack.c.l.b16 %v3740
        %v7780 = vunpack.c.h.b16 %v3740
        %v7781 = vunpack.c.l.b16 %v3741
        %v7782 = vunpack.c.h.b16 %v3741
        %v7783 = vunpack.c.l.b16 %v3742
        %v7784 = vunpack.c.h.b16 %v3742
        %v7785 = vunpack.c.l.b16 %v3743
        %v7786 = vunpack.c.h.b16 %v3743
        %v7787 = vunpack.c.l.b16 %v3744
        %v7788 = vunpack.c.h.b16 %v3744
        %v7789 = vunpack.c.l.b16 %v3745
        %v7790 = vunpack.c.h.b16 %v3745
        %v7791 = vunpack.c.l.b16 %v3746
        %v7792 = vunpack.c.l.b16 %v3747
        %v7793 = vunpack.c.h.b16 %v3747
        %v7794 = vunpack.c.l.b16 %v3748
        %v7795 = vunpack.c.h.b16 %v3748
        %v7796 = vunpack.c.l.b16 %v3749
        %v7797 = vunpack.c.h.b16 %v3749
        %v7798 = vunpack.c.l.b16 %v3750
        %v7799 = vunpack.c.h.b16 %v3750
        %v7800 = vunpack.c.l.b16 %v3751
        %v7801 = vunpack.c.h.b16 %v3751
        %v7802 = vunpack.c.l.b16 %v3752
        %v7803 = vunpack.c.h.b16 %v3752
        %v7804 = vunpack.c.l.b16 %v3753
        %v7805 = vunpack.c.h.b16 %v3753
        %v7806 = vunpack.c.l.b16 %v3754
        %v7807 = vunpack.c.h.b16 %v3754
        %v7808 = vunpack.c.l.b16 %v3755
        %v7809 = vunpack.c.h.b16 %v3755
        %v7810 = vunpack.c.l.b16 %v3756
        %v7811 = vunpack.c.h.b16 %v3756
        %v7812 = vunpack.c.l.b16 %v3757
        %v7813 = vunpack.c.l.b16 %v3758
        %v7814 = vunpack.c.h.b16 %v3758
        %v7815 = vunpack.c.l.b16 %v3759
        %v7816 = vunpack.c.h.b16 %v3759
        %v7817 = vunpack.c.l.b16 %v3760
        %v7818 = vunpack.c.h.b16 %v3760
        %v7819 = vunpack.c.l.b16 %v3761
        %v7820 = vunpack.c.h.b16 %v3761
        %v7821 = vunpack.c.l.b16 %v3762
        %v7822 = vunpack.c.h.b16 %v3762
        %v7823 = vunpack.c.l.b16 %v3763
        %v7824 = vunpack.c.h.b16 %v3763
        %v7825 = vunpack.c.l.b16 %v3764
        %v7826 = vunpack.c.h.b16 %v3764
        %v7827 = vunpack.c.l.b16 %v3765
        %v7828 = vunpack.c.h.b16 %v3765
        %v7829 = vunpack.c.l.b16 %v3766
        %v7830 = vunpack.c.h.b16 %v3766
        %v7831 = vunpack.c.l.b16 %v3767
        %v7832 = vunpack.c.h.b16 %v3767
        %v7833 = vunpack.c.l.b16 %v3768
        %v7834 = vunpack.c.l.b16 %v3769
        %v7835 = vunpack.c.h.b16 %v3769
        %v7836 = vunpack.c.l.b16 %v3770
        %v7837 = vunpack.c.h.b16 %v3770
        %v7838 = vunpack.c.l.b16 %v3771
        %v7839 = vunpack.c.h.b16 %v3771
        %v7840 = vunpack.c.l.b16 %v3772
        %v7841 = vunpack.c.h.b16 %v3772
        %v7842 = vunpack.c.l.b16 %v3773
        %v7843 = vunpack.c.h.b16 %v3773
        %v7844 = vunpack.c.l.b16 %v3774
        %v7845 = vunpack.c.h.b16 %v3774
        %v7846 = vunpack.c.l.b16 %v3775
        %v7847 = vunpack.c.h.b16 %v3775
        %v7848 = vunpack.c.l.b16 %v3776
        %v7849 = vunpack.c.h.b16 %v3776
        %v7850 = vunpack.c.l.b16 %v3777
        %v7851 = vunpack.c.h.b16 %v3777
        %v7852 = vunpack.c.l.b16 %v3778
        %v7853 = vunpack.c.h.b16 %v3778
        %v7854 = vunpack.c.l.b16 %v3779
        %v7855 = vunpack.c.l.b16 %v3780
        %v7856 = vunpack.c.h.b16 %v3780
        %v7857 = vunpack.c.l.b16 %v3781
        %v7858 = vunpack.c.h.b16 %v3781
        %v7859 = vunpack.c.l.b16 %v3782
        %v7860 = vunpack.c.h.b16 %v3782
        %v7861 = vunpack.c.l.b16 %v3783
        %v7862 = vunpack.c.h.b16 %v3783
        %v7863 = vunpack.c.l.b16 %v3784
        %v7864 = vunpack.c.h.b16 %v3784
        %v7865 = vunpack.c.l.b16 %v3785
        %v7866 = vunpack.c.h.b16 %v3785
        %v7867 = vunpack.c.l.b16 %v3786
        %v7868 = vunpack.c.h.b16 %v3786
        %v7869 = vunpack.c.l.b16 %v3787
        %v7870 = vunpack.c.h.b16 %v3787
        %v7871 = vunpack.c.l.b16 %v3788
        %v7872 = vunpack.c.h.b16 %v3788
        %v7873 = vunpack.c.l.b16 %v3789
        %v7874 = vunpack.c.h.b16 %v3789
        %v7875 = vunpack.c.l.b16 %v3790
        %v7876 = vunpack.c.l.b16 %v3791
        %v7877 = vunpack.c.h.b16 %v3791
        %v7878 = vunpack.c.l.b16 %v3792
        %v7879 = vunpack.c.h.b16 %v3792
        %v7880 = vunpack.c.l.b16 %v3793
        %v7881 = vunpack.c.h.b16 %v3793
        %v7882 = vunpack.c.l.b16 %v3794
        %v7883 = vunpack.c.h.b16 %v3794
        %v7884 = vunpack.c.l.b16 %v3795
        %v7885 = vunpack.c.h.b16 %v3795
        %v7886 = vunpack.c.l.b16 %v3796
        %v7887 = vunpack.c.h.b16 %v3796
        %v7888 = vunpack.c.l.b16 %v3797
        %v7889 = vunpack.c.h.b16 %v3797
        %v7890 = vunpack.c.l.b16 %v3798
        %v7891 = vunpack.c.h.b16 %v3798
        %v7892 = vunpack.c.l.b16 %v3799
        %v7893 = vunpack.c.h.b16 %v3799
        %v7894 = vunpack.c.l.b16 %v3800
        %v7895 = vunpack.c.h.b16 %v3800
        %v7896 = vunpack.c.l.b16 %v3801
        %v7897 = vunpack.c.l.b16 %v3802
        %v7898 = vunpack.c.h.b16 %v3802
        %v7899 = vunpack.c.l.b16 %v3803
        %v7900 = vunpack.c.h.b16 %v3803
        %v7901 = vunpack.c.l.b16 %v3804
        %v7902 = vunpack.c.h.b16 %v3804
        %v7903 = vunpack.c.l.b16 %v3805
        %v7904 = vunpack.c.h.b16 %v3805
        %v7905 = vunpack.c.l.b16 %v3806
        %v7906 = vunpack.c.h.b16 %v3806
        %v7907 = vunpack.c.l.b16 %v3807
        %v7908 = vunpack.c.h.b16 %v3807
        %v7909 = vunpack.c.l.b16 %v3808
        %v7910 = vunpack.c.h.b16 %v3808
        %v7911 = vunpack.c.l.b16 %v3809
        %v7912 = vunpack.c.h.b16 %v3809
        %v7913 = vunpack.c.l.b16 %v3810
        %v7914 = vunpack.c.h.b16 %v3810
        %v7915 = vunpack.c.l.b16 %v3811
        %v7916 = vunpack.c.h.b16 %v3811
        %v7917 = vunpack.c.l.b16 %v3812
        %v7918 = vunpack.c.l.b16 %v3813
        %v7919 = vunpack.c.h.b16 %v3813
        %v7920 = vunpack.c.l.b16 %v3814
        %v7921 = vunpack.c.h.b16 %v3814
        %v7922 = vunpack.c.l.b16 %v3815
        %v7923 = vunpack.c.h.b16 %v3815
        %v7924 = vunpack.c.l.b16 %v3816
        %v7925 = vunpack.c.h.b16 %v3816
        %v7926 = vunpack.c.l.b16 %v3817
        %v7927 = vunpack.c.h.b16 %v3817
        %v7928 = vunpack.c.l.b16 %v3818
        %v7929 = vunpack.c.h.b16 %v3818
        %v7930 = vunpack.c.l.b16 %v3819
        %v7931 = vunpack.c.h.b16 %v3819
        %v7932 = vunpack.c.l.b16 %v3820
        %v7933 = vunpack.c.h.b16 %v3820
        %v7934 = vunpack.c.l.b16 %v3821
        %v7935 = vunpack.c.h.b16 %v3821
        %v7936 = vunpack.c.l.b16 %v3822
        %v7937 = vunpack.c.h.b16 %v3822
        %v7938 = vunpack.c.l.b16 %v3823
        %v7939 = vunpack.c.l.b16 %v3824
        %v7940 = vunpack.c.h.b16 %v3824
        %v7941 = vunpack.c.l.b16 %v3825
        %v7942 = vunpack.c.h.b16 %v3825
        %v7943 = vunpack.c.l.b16 %v3826
        %v7944 = vunpack.c.h.b16 %v3826
        %v7945 = vunpack.c.l.b16 %v3827
        %v7946 = vunpack.c.h.b16 %v3827
        %v7947 = vunpack.c.l.b16 %v3828
        %v7948 = vunpack.c.h.b16 %v3828
        %v7949 = vunpack.c.l.b16 %v3829
        %v7950 = vunpack.c.h.b16 %v3829
        %v7951 = vunpack.c.l.b16 %v3830
        %v7952 = vunpack.c.h.b16 %v3830
        %v7953 = vunpack.c.l.b16 %v3831
        %v7954 = vunpack.c.h.b16 %v3831
        %v7955 = vunpack.c.l.b16 %v3832
        %v7956 = vunpack.c.h.b16 %v3832
        %v7957 = vunpack.c.l.b16 %v3833
        %v7958 = vunpack.c.h.b16 %v3833
        %v7959 = vunpack.c.l.b16 %v3834
        %v7960 = vunpack.c.l.b16 %v3835
        %v7961 = vunpack.c.h.b16 %v3835
        %v7962 = vunpack.c.l.b16 %v3836
        %v7963 = vunpack.c.h.b16 %v3836
        %v7964 = vunpack.c.l.b16 %v3837
        %v7965 = vunpack.c.h.b16 %v3837
        %v7966 = vunpack.c.l.b16 %v3838
        %v7967 = vunpack.c.h.b16 %v3838
        %v7968 = vunpack.c.l.b16 %v3839
        %v7969 = vunpack.c.h.b16 %v3839
        %v7970 = vunpack.c.l.b16 %v3840
        %v7971 = vunpack.c.h.b16 %v3840
        %v7972 = vunpack.c.l.b16 %v3841
        %v7973 = vunpack.c.h.b16 %v3841
        %v7974 = vunpack.c.l.b16 %v3842
        %v7975 = vunpack.c.h.b16 %v3842
        %v7976 = vunpack.c.l.b16 %v3843
        %v7977 = vunpack.c.h.b16 %v3843
        %v7978 = vunpack.c.l.b16 %v3844
        %v7979 = vunpack.c.h.b16 %v3844
        %v7980 = vunpack.c.l.b16 %v3845
        %v7981 = vunpack.c.l.b16 %v3846
        %v7982 = vunpack.c.h.b16 %v3846
        %v7983 = vunpack.c.l.b16 %v3847
        %v7984 = vunpack.c.h.b16 %v3847
        %v7985 = vunpack.c.l.b16 %v3848
        %v7986 = vunpack.c.h.b16 %v3848
        %v7987 = vunpack.c.l.b16 %v3849
        %v7988 = vunpack.c.h.b16 %v3849
        %v7989 = vunpack.c.l.b16 %v3850
        %v7990 = vunpack.c.h.b16 %v3850
        %v7991 = vunpack.c.l.b16 %v3851
        %v7992 = vunpack.c.h.b16 %v3851
        %v7993 = vunpack.c.l.b16 %v3852
        %v7994 = vunpack.c.h.b16 %v3852
        %v7995 = vunpack.c.l.b16 %v3853
        %v7996 = vunpack.c.h.b16 %v3853
        %v7997 = vunpack.c.l.b16 %v3854
        %v7998 = vunpack.c.h.b16 %v3854
        %v7999 = vunpack.c.l.b16 %v3855
        %v8000 = vunpack.c.h.b16 %v3855
        %v8001 = vunpack.c.l.b16 %v3856
        %v8002 = vunpack.c.l.b16 %v3857
        %v8003 = vunpack.c.h.b16 %v3857
        %v8004 = vunpack.c.l.b16 %v3858
        %v8005 = vunpack.c.h.b16 %v3858
        %v8006 = vunpack.c.l.b16 %v3859
        %v8007 = vunpack.c.h.b16 %v3859
        %v8008 = vunpack.c.l.b16 %v3860
        %v8009 = vunpack.c.h.b16 %v3860
        %v8010 = vunpack.c.l.b16 %v3861
        %v8011 = vunpack.c.h.b16 %v3861
        %v8012 = vunpack.c.l.b16 %v3862
        %v8013 = vunpack.c.h.b16 %v3862
        %v8014 = vunpack.c.l.b16 %v3863
        %v8015 = vunpack.c.h.b16 %v3863
        %v8016 = vunpack.c.l.b16 %v3864
        %v8017 = vunpack.c.h.b16 %v3864
        %v8018 = vunpack.c.l.b16 %v3865
        %v8019 = vunpack.c.h.b16 %v3865
        %v8020 = vunpack.c.l.b16 %v3866
        %v8021 = vunpack.c.h.b16 %v3866
        %v8022 = vunpack.c.l.b16 %v3867
        %v8023 = vunpack.c.l.b16 %v3868
        %v8024 = vunpack.c.h.b16 %v3868
        %v8025 = vunpack.c.l.b16 %v3869
        %v8026 = vunpack.c.h.b16 %v3869
        %v8027 = vunpack.c.l.b16 %v3870
        %v8028 = vunpack.c.h.b16 %v3870
        %v8029 = vunpack.c.l.b16 %v3871
        %v8030 = vunpack.c.h.b16 %v3871
        %v8031 = vunpack.c.l.b16 %v3872
        %v8032 = vunpack.c.h.b16 %v3872
        %v8033 = vunpack.c.l.b16 %v3873
        %v8034 = vunpack.c.h.b16 %v3873
        %v8035 = vunpack.c.l.b16 %v3874
        %v8036 = vunpack.c.h.b16 %v3874
        %v8037 = vunpack.c.l.b16 %v3875
        %v8038 = vunpack.c.h.b16 %v3875
        %v8039 = vunpack.c.l.b16 %v3876
        %v8040 = vunpack.c.h.b16 %v3876
        %v8041 = vunpack.c.l.b16 %v3877
        %v8042 = vunpack.c.h.b16 %v3877
        %v8043 = vunpack.c.l.b16 %v3878
        %v8044 = vunpack.c.l.b16 %v3879
        %v8045 = vunpack.c.h.b16 %v3879
        %v8046 = vunpack.c.l.b16 %v3880
        %v8047 = vunpack.c.h.b16 %v3880
        %v8048 = vunpack.c.l.b16 %v3881
        %v8049 = vunpack.c.h.b16 %v3881
        %v8050 = vunpack.c.l.b16 %v3882
        %v8051 = vunpack.c.h.b16 %v3882
        %v8052 = vunpack.c.l.b16 %v3883
        %v8053 = vunpack.c.h.b16 %v3883
        %v8054 = vunpack.c.l.b16 %v3884
        %v8055 = vunpack.c.h.b16 %v3884
        %v8056 = vunpack.c.l.b16 %v3885
        %v8057 = vunpack.c.h.b16 %v3885
        %v8058 = vunpack.c.l.b16 %v3886
        %v8059 = vunpack.c.h.b16 %v3886
        %v8060 = vunpack.c.l.b16 %v3887
        %v8061 = vunpack.c.h.b16 %v3887
        %v8062 = vunpack.c.l.b16 %v3888
        %v8063 = vunpack.c.h.b16 %v3888
        %v8064 = vunpack.c.l.b16 %v3889
        %v8065 = vunpack.c.l.b16 %v3890
        %v8066 = vunpack.c.h.b16 %v3890
        %v8067 = vunpack.c.l.b16 %v3891
        %v8068 = vunpack.c.h.b16 %v3891
        %v8069 = vunpack.c.l.b16 %v3892
        %v8070 = vunpack.c.h.b16 %v3892
        %v8071 = vunpack.c.l.b16 %v3893
        %v8072 = vunpack.c.h.b16 %v3893
        %v8073 = vunpack.c.l.b16 %v3894
        %v8074 = vunpack.c.h.b16 %v3894
        %v8075 = vunpack.c.l.b16 %v3895
        %v8076 = vunpack.c.h.b16 %v3895
        %v8077 = vunpack.c.l.b16 %v3896
        %v8078 = vunpack.c.h.b16 %v3896
        %v8079 = vunpack.c.l.b16 %v3897
        %v8080 = vunpack.c.h.b16 %v3897
        %v8081 = vunpack.c.l.b16 %v3898
        %v8082 = vunpack.c.h.b16 %v3898
        %v8083 = vunpack.c.l.b16 %v3899
        %v8084 = vunpack.c.h.b16 %v3899
        %v8085 = vunpack.c.l.b16 %v3900
        %v8086 = vunpack.c.l.b16 %v3901
        %v8087 = vunpack.c.h.b16 %v3901
        %v8088 = vunpack.c.l.b16 %v3902
        %v8089 = vunpack.c.h.b16 %v3902
        %v8090 = vunpack.c.l.b16 %v3903
        %v8091 = vunpack.c.h.b16 %v3903
        %v8092 = vunpack.c.l.b16 %v3904
        %v8093 = vunpack.c.h.b16 %v3904
        %v8094 = vunpack.c.l.b16 %v3905
        %v8095 = vunpack.c.h.b16 %v3905
        %v8096 = vunpack.c.l.b16 %v3906
        %v8097 = vunpack.c.h.b16 %v3906
        %v8098 = vunpack.c.l.b16 %v3907
        %v8099 = vunpack.c.h.b16 %v3907
        %v8100 = vunpack.c.l.b16 %v3908
        %v8101 = vunpack.c.h.b16 %v3908
        %v8102 = vunpack.c.l.b16 %v3909
        %v8103 = vunpack.c.h.b16 %v3909
        %v8104 = vunpack.c.l.b16 %v3910
        %v8105 = vunpack.c.h.b16 %v3910
        %v8106 = vunpack.c.l.b16 %v3911
        %v8107 = vunpack.c.l.b16 %v3912
        %v8108 = vunpack.c.h.b16 %v3912
        %v8109 = vunpack.c.l.b16 %v3913
        %v8110 = vunpack.c.h.b16 %v3913
        %v8111 = vunpack.c.l.b16 %v3914
        %v8112 = vunpack.c.h.b16 %v3914
        %v8113 = vunpack.c.l.b16 %v3915
        %v8114 = vunpack.c.h.b16 %v3915
        %v8115 = vunpack.c.l.b16 %v3916
        %v8116 = vunpack.c.h.b16 %v3916
        %v8117 = vunpack.c.l.b16 %v3917
        %v8118 = vunpack.c.h.b16 %v3917
        %v8119 = vunpack.c.l.b16 %v3918
        %v8120 = vunpack.c.h.b16 %v3918
        %v8121 = vunpack.c.l.b16 %v3919
        %v8122 = vunpack.c.h.b16 %v3919
        %v8123 = vunpack.c.l.b16 %v3920
        %v8124 = vunpack.c.h.b16 %v3920
        %v8125 = vunpack.c.l.b16 %v3921
        %v8126 = vunpack.c.h.b16 %v3921
        %v8127 = vunpack.c.l.b16 %v3922
        %v8128 = vunpack.c.l.b16 %v3923
        %v8129 = vunpack.c.h.b16 %v3923
        %v8130 = vunpack.c.l.b16 %v3924
        %v8131 = vunpack.c.h.b16 %v3924
        %v8132 = vunpack.c.l.b16 %v3925
        %v8133 = vunpack.c.h.b16 %v3925
        %v8134 = vunpack.c.l.b16 %v3926
        %v8135 = vunpack.c.h.b16 %v3926
        %v8136 = vunpack.c.l.b16 %v3927
        %v8137 = vunpack.c.h.b16 %v3927
        %v8138 = vunpack.c.l.b16 %v3928
        %v8139 = vunpack.c.h.b16 %v3928
        %v8140 = vunpack.c.l.b16 %v3929
        %v8141 = vunpack.c.h.b16 %v3929
        %v8142 = vunpack.c.l.b16 %v3930
        %v8143 = vunpack.c.h.b16 %v3930
        %v8144 = vunpack.c.l.b16 %v3931
        %v8145 = vunpack.c.h.b16 %v3931
        %v8146 = vunpack.c.l.b16 %v3932
        %v8147 = vunpack.c.h.b16 %v3932
        %v8148 = vunpack.c.l.b16 %v3933
        %v8149 = vunpack.c.l.b16 %v3934
        %v8150 = vunpack.c.h.b16 %v3934
        %v8151 = vunpack.c.l.b16 %v3935
        %v8152 = vunpack.c.h.b16 %v3935
        %v8153 = vunpack.c.l.b16 %v3936
        %v8154 = vunpack.c.h.b16 %v3936
        %v8155 = vunpack.c.l.b16 %v3937
        %v8156 = vunpack.c.h.b16 %v3937
        %v8157 = vunpack.c.l.b16 %v3938
        %v8158 = vunpack.c.h.b16 %v3938
        %v8159 = vunpack.c.l.b16 %v3939
        %v8160 = vunpack.c.h.b16 %v3939
        %v8161 = vunpack.c.l.b16 %v3940
        %v8162 = vunpack.c.h.b16 %v3940
        %v8163 = vunpack.c.l.b16 %v3941
        %v8164 = vunpack.c.h.b16 %v3941
        %v8165 = vunpack.c.l.b16 %v3942
        %v8166 = vunpack.c.h.b16 %v3942
        %v8167 = vunpack.c.l.b16 %v3943
        %v8168 = vunpack.c.h.b16 %v3943
        %v8169 = vunpack.c.l.b16 %v3944
        %v8170 = vunpack.c.l.b16 %v3945
        %v8171 = vunpack.c.h.b16 %v3945
        %v8172 = vunpack.c.l.b16 %v3946
        %v8173 = vunpack.c.h.b16 %v3946
        %v8174 = vunpack.c.l.b16 %v3947
        %v8175 = vunpack.c.h.b16 %v3947
        %v8176 = vunpack.c.l.b16 %v3948
        %v8177 = vunpack.c.h.b16 %v3948
        %v8178 = vunpack.c.l.b16 %v3949
        %v8179 = vunpack.c.h.b16 %v3949
        %v8180 = vunpack.c.l.b16 %v3950
        %v8181 = vunpack.c.h.b16 %v3950
        %v8182 = vunpack.c.l.b16 %v3951
        %v8183 = vunpack.c.h.b16 %v3951
        %v8184 = vunpack.c.l.b16 %v3952
        %v8185 = vunpack.c.h.b16 %v3952
        %v8186 = vunpack.c.l.b16 %v3953
        %v8187 = vunpack.c.h.b16 %v3953
        %v8188 = vunpack.c.l.b16 %v3954
        %v8189 = vunpack.c.h.b16 %v3954
        %v8190 = vunpack.c.l.b16 %v3955
        %v8191 = vpack.c.b16 %v5524, %v5503
        %v8192 = vpack.c.b16 %v5525, %v5504
        %v8193 = vpack.c.b16 %v5526, %v5505
        %v8194 = vpack.c.b16 %v5527, %v5506
        %v8195 = vpack.c.b16 %v5528, %v5507
        %v8196 = vpack.c.b16 %v5529, %v5508
        %v8197 = vpack.c.b16 %v5530, %v5509
        %v8198 = vpack.c.b16 %v5531, %v5510
        %v8199 = vpack.c.b16 %v5532, %v5511
        %v8200 = vpack.c.b16 %v5533, %v5512
        %v8201 = vpack.c.b16 %v5534, %v5513
        %v8202 = vpack.c.b16 %v5535, %v5514
        %v8203 = vpack.c.b16 %v5536, %v5515
        %v8204 = vpack.c.b16 %v5537, %v5516
        %v8205 = vpack.c.b16 %v5538, %v5517
        %v8206 = vpack.c.b16 %v5539, %v5518
        %v8207 = vpack.c.b16 %v5540, %v5519
        %v8208 = vpack.c.b16 %v5541, %v5520
        %v8209 = vpack.c.b16 %v5542, %v5521
        %v8210 = vpack.c.b16 %v5543, %v5522
        %v8211 = vpack.c.b16 %v5544, %v5523
        %v8212 = vpack.c.b16 %v5566, %v5545
        %v8213 = vpack.c.b16 %v5567, %v5546
        %v8214 = vpack.c.b16 %v5568, %v5547
        %v8215 = vpack.c.b16 %v5569, %v5548
        %v8216 = vpack.c.b16 %v5570, %v5549
        %v8217 = vpack.c.b16 %v5571, %v5550
        %v8218 = vpack.c.b16 %v5572, %v5551
        %v8219 = vpack.c.b16 %v5573, %v5552
        %v8220 = vpack.c.b16 %v5574, %v5553
        %v8221 = vpack.c.b16 %v5575, %v5554
        %v8222 = vpack.c.b16 %v5576, %v5555
        %v8223 = vpack.c.b16 %v5577, %v5556
        %v8224 = vpack.c.b16 %v5578, %v5557
        %v8225 = vpack.c.b16 %v5579, %v5558
        %v8226 = vpack.c.b16 %v5580, %v5559
        %v8227 = vpack.c.b16 %v5581, %v5560
        %v8228 = vpack.c.b16 %v5582, %v5561
        %v8229 = vpack.c.b16 %v5583, %v5562
        %v8230 = vpack.c.b16 %v5584, %v5563
        %v8231 = vpack.c.b16 %v5585, %v5564
        %v8232 = vpack.c.b16 %v5586, %v5565
        %v8233 = vpack.c.b16 %v5608, %v5587
        %v8234 = vpack.c.b16 %v5609, %v5588
        %v8235 = vpack.c.b16 %v5610, %v5589
        %v8236 = vpack.c.b16 %v5611, %v5590
        %v8237 = vpack.c.b16 %v5612, %v5591
        %v8238 = vpack.c.b16 %v5613, %v5592
        %v8239 = vpack.c.b16 %v5614, %v5593
        %v8240 = vpack.c.b16 %v5615, %v5594
        %v8241 = vpack.c.b16 %v5616, %v5595
        %v8242 = vpack.c.b16 %v5617, %v5596
        %v8243 = vpack.c.b16 %v5618, %v5597
        %v8244 = vpack.c.b16 %v5619, %v5598
        %v8245 = vpack.c.b16 %v5620, %v5599
        %v8246 = vpack.c.b16 %v5621, %v5600
        %v8247 = vpack.c.b16 %v5622, %v5601
        %v8248 = vpack.c.b16 %v5623, %v5602
        %v8249 = vpack.c.b16 %v5624, %v5603
        %v8250 = vpack.c.b16 %v5625, %v5604
        %v8251 = vpack.c.b16 %v5626, %v5605
        %v8252 = vpack.c.b16 %v5627, %v5606
        %v8253 = vpack.c.b16 %v5628, %v5607
        %v8254 = vpack.c.b16 %v5650, %v5629
        %v8255 = vpack.c.b16 %v5651, %v5630
        %v8256 = vpack.c.b16 %v5652, %v5631
        %v8257 = vpack.c.b16 %v5653, %v5632
        %v8258 = vpack.c.b16 %v5654, %v5633
        %v8259 = vpack.c.b16 %v5655, %v5634
        %v8260 = vpack.c.b16 %v5656, %v5635
        %v8261 = vpack.c.b16 %v5657, %v5636
        %v8262 = vpack.c.b16 %v5658, %v5637
        %v8263 = vpack.c.b16 %v5659, %v5638
        %v8264 = vpack.c.b16 %v5660, %v5639
        %v8265 = vpack.c.b16 %v5661, %v5640
        %v8266 = vpack.c.b16 %v5662, %v5641
        %v8267 = vpack.c.b16 %v5663, %v5642
        %v8268 = vpack.c.b16 %v5664, %v5643
        %v8269 = vpack.c.b16 %v5665, %v5644
        %v8270 = vpack.c.b16 %v5666, %v5645
        %v8271 = vpack.c.b16 %v5667, %v5646
        %v8272 = vpack.c.b16 %v5668, %v5647
        %v8273 = vpack.c.b16 %v5669, %v5648
        %v8274 = vpack.c.b16 %v5670, %v5649
        %v8275 = vpack.c.b16 %v5692, %v5671
        %v8276 = vpack.c.b16 %v5693, %v5672
        %v8277 = vpack.c.b16 %v5694, %v5673
        %v8278 = vpack.c.b16 %v5695, %v5674
        %v8279 = vpack.c.b16 %v5696, %v5675
        %v8280 = vpack.c.b16 %v5697, %v5676
        %v8281 = vpack.c.b16 %v5698, %v5677
        %v8282 = vpack.c.b16 %v5699, %v5678
        %v8283 = vpack.c.b16 %v5700, %v5679
        %v8284 = vpack.c.b16 %v5701, %v5680
        %v8285 = vpack.c.b16 %v5702, %v5681
        %v8286 = vpack.c.b16 %v5703, %v5682
        %v8287 = vpack.c.b16 %v5704, %v5683
        %v8288 = vpack.c.b16 %v5705, %v5684
        %v8289 = vpack.c.b16 %v5706, %v5685
        %v8290 = vpack.c.b16 %v5707, %v5686
        %v8291 = vpack.c.b16 %v5708, %v5687
        %v8292 = vpack.c.b16 %v5709, %v5688
        %v8293 = vpack.c.b16 %v5710, %v5689
        %v8294 = vpack.c.b16 %v5711, %v5690
        %v8295 = vpack.c.b16 %v5712, %v5691
        %v8296 = vpack.c.b16 %v5734, %v5713
        %v8297 = vpack.c.b16 %v5735, %v5714
        %v8298 = vpack.c.b16 %v5736, %v5715
        %v8299 = vpack.c.b16 %v5737, %v5716
        %v8300 = vpack.c.b16 %v5738, %v5717
        %v8301 = vpack.c.b16 %v5739, %v5718
        %v8302 = vpack.c.b16 %v5740, %v5719
        %v8303 = vpack.c.b16 %v5741, %v5720
        %v8304 = vpack.c.b16 %v5742, %v5721
        %v8305 = vpack.c.b16 %v5743, %v5722
        %v8306 = vpack.c.b16 %v5744, %v5723
        %v8307 = vpack.c.b16 %v5745, %v5724
        %v8308 = vpack.c.b16 %v5746, %v5725
        %v8309 = vpack.c.b16 %v5747, %v5726
        %v8310 = vpack.c.b16 %v5748, %v5727
        %v8311 = vpack.c.b16 %v5749, %v5728
        %v8312 = vpack.c.b16 %v5750, %v5729
        %v8313 = vpack.c.b16 %v5751, %v5730
        %v8314 = vpack.c.b16 %v5752, %v5731
        %v8315 = vpack.c.b16 %v5753, %v5732
        %v8316 = vpack.c.b16 %v5754, %v5733
        %v8317 = vpack.c.b16 %v5776, %v5755
        %v8318 = vpack.c.b16 %v5777, %v5756
        %v8319 = vpack.c.b16 %v5778, %v5757
        %v8320 = vpack.c.b16 %v5779, %v5758
        %v8321 = vpack.c.b16 %v5780, %v5759
        %v8322 = vpack.c.b16 %v5781, %v5760
        %v8323 = vpack.c.b16 %v5782, %v5761
        %v8324 = vpack.c.b16 %v5783, %v5762
        %v8325 = vpack.c.b16 %v5784, %v5763
        %v8326 = vpack.c.b16 %v5785, %v5764
        %v8327 = vpack.c.b16 %v5786, %v5765
        %v8328 = vpack.c.b16 %v5787, %v5766
        %v8329 = vpack.c.b16 %v5788, %v5767
        %v8330 = vpack.c.b16 %v5789, %v5768
        %v8331 = vpack.c.b16 %v5790, %v5769
        %v8332 = vpack.c.b16 %v5791, %v5770
        %v8333 = vpack.c.b16 %v5792, %v5771
        %v8334 = vpack.c.b16 %v5793, %v5772
        %v8335 = vpack.c.b16 %v5794, %v5773
        %v8336 = vpack.c.b16 %v5795, %v5774
        %v8337 = vpack.c.b16 %v5796, %v5775
        %v8338 = vpack.c.b16 %v5818, %v5797
        %v8339 = vpack.c.b16 %v5819, %v5798
        %v8340 = vpack.c.b16 %v5820, %v5799
        %v8341 = vpack.c.b16 %v5821, %v5800
        %v8342 = vpack.c.b16 %v5822, %v5801
        %v8343 = vpack.c.b16 %v5823, %v5802
        %v8344 = vpack.c.b16 %v5824, %v5803
        %v8345 = vpack.c.b16 %v5825, %v5804
        %v8346 = vpack.c.b16 %v5826, %v5805
        %v8347 = vpack.c.b16 %v5827, %v5806
        %v8348 = vpack.c.b16 %v5828, %v5807
        %v8349 = vpack.c.b16 %v5829, %v5808
        %v8350 = vpack.c.b16 %v5830, %v5809
        %v8351 = vpack.c.b16 %v5831, %v5810
        %v8352 = vpack.c.b16 %v5832, %v5811
        %v8353 = vpack.c.b16 %v5833, %v5812
        %v8354 = vpack.c.b16 %v5834, %v5813
        %v8355 = vpack.c.b16 %v5835, %v5814
        %v8356 = vpack.c.b16 %v5836, %v5815
        %v8357 = vpack.c.b16 %v5837, %v5816
        %v8358 = vpack.c.b16 %v5838, %v5817
        %v8359 = vpack.c.b16 %v5860, %v5839
        %v8360 = vpack.c.b16 %v5861, %v5840
        %v8361 = vpack.c.b16 %v5862, %v5841
        %v8362 = vpack.c.b16 %v5863, %v5842
        %v8363 = vpack.c.b16 %v5864, %v5843
        %v8364 = vpack.c.b16 %v5865, %v5844
        %v8365 = vpack.c.b16 %v5866, %v5845
        %v8366 = vpack.c.b16 %v5867, %v5846
        %v8367 = vpack.c.b16 %v5868, %v5847
        %v8368 = vpack.c.b16 %v5869, %v5848
        %v8369 = vpack.c.b16 %v5870, %v5849
        %v8370 = vpack.c.b16 %v5871, %v5850
        %v8371 = vpack.c.b16 %v5872, %v5851
        %v8372 = vpack.c.b16 %v5873, %v5852
        %v8373 = vpack.c.b16 %v5874, %v5853
        %v8374 = vpack.c.b16 %v5875, %v5854
        %v8375 = vpack.c.b16 %v5876, %v5855
        %v8376 = vpack.c.b16 %v5877, %v5856
        %v8377 = vpack.c.b16 %v5878, %v5857
        %v8378 = vpack.c.b16 %v5879, %v5858
        %v8379 = vpack.c.b16 %v5880, %v5859
        %v8380 = vpack.c.b16 %v5902, %v5881
        %v8381 = vpack.c.b16 %v5903, %v5882
        %v8382 = vpack.c.b16 %v5904, %v5883
        %v8383 = vpack.c.b16 %v5905, %v5884
        %v8384 = vpack.c.b16 %v5906, %v5885
        %v8385 = vpack.c.b16 %v5907, %v5886
        %v8386 = vpack.c.b16 %v5908, %v5887
        %v8387 = vpack.c.b16 %v5909, %v5888
        %v8388 = vpack.c.b16 %v5910, %v5889
        %v8389 = vpack.c.b16 %v5911, %v5890
        %v8390 = vpack.c.b16 %v5912, %v5891
        %v8391 = vpack.c.b16 %v5913, %v5892
        %v8392 = vpack.c.b16 %v5914, %v5893
        %v8393 = vpack.c.b16 %v5915, %v5894
        %v8394 = vpack.c.b16 %v5916, %v5895
        %v8395 = vpack.c.b16 %v5917, %v5896
        %v8396 = vpack.c.b16 %v5918, %v5897
        %v8397 = vpack.c.b16 %v5919, %v5898
        %v8398 = vpack.c.b16 %v5920, %v5899
        %v8399 = vpack.c.b16 %v5921, %v5900
        %v8400 = vpack.c.b16 %v5922, %v5901
        %v8401 = vpack.c.b16 %v5944, %v5923
        %v8402 = vpack.c.b16 %v5945, %v5924
        %v8403 = vpack.c.b16 %v5946, %v5925
        %v8404 = vpack.c.b16 %v5947, %v5926
        %v8405 = vpack.c.b16 %v5948, %v5927
        %v8406 = vpack.c.b16 %v5949, %v5928
        %v8407 = vpack.c.b16 %v5950, %v5929
        %v8408 = vpack.c.b16 %v5951, %v5930
        %v8409 = vpack.c.b16 %v5952, %v5931
        %v8410 = vpack.c.b16 %v5953, %v5932
        %v8411 = vpack.c.b16 %v5954, %v5933
        %v8412 = vpack.c.b16 %v5955, %v5934
        %v8413 = vpack.c.b16 %v5956, %v5935
        %v8414 = vpack.c.b16 %v5957, %v5936
        %v8415 = vpack.c.b16 %v5958, %v5937
        %v8416 = vpack.c.b16 %v5959, %v5938
        %v8417 = vpack.c.b16 %v5960, %v5939
        %v8418 = vpack.c.b16 %v5961, %v5940
        %v8419 = vpack.c.b16 %v5962, %v5941
        %v8420 = vpack.c.b16 %v5963, %v5942
        %v8421 = vpack.c.b16 %v5964, %v5943
        %v8422 = vpack.c.b16 %v5986, %v5965
        %v8423 = vpack.c.b16 %v5987, %v5966
        %v8424 = vpack.c.b16 %v5988, %v5967
        %v8425 = vpack.c.b16 %v5989, %v5968
        %v8426 = vpack.c.b16 %v5990, %v5969
        %v8427 = vpack.c.b16 %v5991, %v5970
        %v8428 = vpack.c.b16 %v5992, %v5971
        %v8429 = vpack.c.b16 %v5993, %v5972
        %v8430 = vpack.c.b16 %v5994, %v5973
        %v8431 = vpack.c.b16 %v5995, %v5974
        %v8432 = vpack.c.b16 %v5996, %v5975
        %v8433 = vpack.c.b16 %v5997, %v5976
        %v8434 = vpack.c.b16 %v5998, %v5977
        %v8435 = vpack.c.b16 %v5999, %v5978
        %v8436 = vpack.c.b16 %v6000, %v5979
        %v8437 = vpack.c.b16 %v6001, %v5980
        %v8438 = vpack.c.b16 %v6002, %v5981
        %v8439 = vpack.c.b16 %v6003, %v5982
        %v8440 = vpack.c.b16 %v6004, %v5983
        %v8441 = vpack.c.b16 %v6005, %v5984
        %v8442 = vpack.c.b16 %v6006, %v5985
        %v8443 = vpack.c.b16 %v6028, %v6007
        %v8444 = vpack.c.b16 %v6029, %v6008
        %v8445 = vpack.c.b16 %v6030, %v6009
        %v8446 = vpack.c.b16 %v6031, %v6010
        %v8447 = vpack.c.b16 %v6032, %v6011
        %v8448 = vpack.c.b16 %v6033, %v6012
        %v8449 = vpack.c.b16 %v6034, %v6013
        %v8450 = vpack.c.b16 %v6035, %v6014
        %v8451 = vpack.c.b16 %v6036, %v6015
        %v8452 = vpack.c.b16 %v6037, %v6016
        %v8453 = vpack.c.b16 %v6038, %v6017
        %v8454 = vpack.c.b16 %v6039, %v6018
        %v8455 = vpack.c.b16 %v6040, %v6019
        %v8456 = vpack.c.b16 %v6041, %v6020
        %v8457 = vpack.c.b16 %v6042, %v6021
        %v8458 = vpack.c.b16 %v6043, %v6022
        %v8459 = vpack.c.b16 %v6044, %v6023
        %v8460 = vpack.c.b16 %v6045, %v6024
        %v8461 = vpack.c.b16 %v6046, %v6025
        %v8462 = vpack.c.b16 %v6047, %v6026
        %v8463 = vpack.c.b16 %v6048, %v6027
        %v8464 = vpack.c.b16 %v6070, %v6049
        %v8465 = vpack.c.b16 %v6071, %v6050
        %v8466 = vpack.c.b16 %v6072, %v6051
        %v8467 = vpack.c.b16 %v6073, %v6052
        %v8468 = vpack.c.b16 %v6074, %v6053
        %v8469 = vpack.c.b16 %v6075, %v6054
        %v8470 = vpack.c.b16 %v6076, %v6055
        %v8471 = vpack.c.b16 %v6077, %v6056
        %v8472 = vpack.c.b16 %v6078, %v6057
        %v8473 = vpack.c.b16 %v6079, %v6058
        %v8474 = vpack.c.b16 %v6080, %v6059
        %v8475 = vpack.c.b16 %v6081, %v6060
        %v8476 = vpack.c.b16 %v6082, %v6061
        %v8477 = vpack.c.b16 %v6083, %v6062
        %v8478 = vpack.c.b16 %v6084, %v6063
        %v8479 = vpack.c.b16 %v6085, %v6064
        %v8480 = vpack.c.b16 %v6086, %v6065
        %v8481 = vpack.c.b16 %v6087, %v6066
        %v8482 = vpack.c.b16 %v6088, %v6067
        %v8483 = vpack.c.b16 %v6089, %v6068
        %v8484 = vpack.c.b16 %v6090, %v6069
        %v8485 = vpack.c.b16 %v6112, %v6091
        %v8486 = vpack.c.b16 %v6113, %v6092
        %v8487 = vpack.c.b16 %v6114, %v6093
        %v8488 = vpack.c.b16 %v6115, %v6094
        %v8489 = vpack.c.b16 %v6116, %v6095
        %v8490 = vpack.c.b16 %v6117, %v6096
        %v8491 = vpack.c.b16 %v6118, %v6097
        %v8492 = vpack.c.b16 %v6119, %v6098
        %v8493 = vpack.c.b16 %v6120, %v6099
        %v8494 = vpack.c.b16 %v6121, %v6100
        %v8495 = vpack.c.b16 %v6122, %v6101
        %v8496 = vpack.c.b16 %v6123, %v6102
        %v8497 = vpack.c.b16 %v6124, %v6103
        %v8498 = vpack.c.b16 %v6125, %v6104
        %v8499 = vpack.c.b16 %v6126, %v6105
        %v8500 = vpack.c.b16 %v6127, %v6106
        %v8501 = vpack.c.b16 %v6128, %v6107
        %v8502 = vpack.c.b16 %v6129, %v6108
        %v8503 = vpack.c.b16 %v6130, %v6109
        %v8504 = vpack.c.b16 %v6131, %v6110
        %v8505 = vpack.c.b16 %v6132, %v6111
        %v8506 = vpack.c.b16 %v6154, %v6133
        %v8507 = vpack.c.b16 %v6155, %v6134
        %v8508 = vpack.c.b16 %v6156, %v6135
        %v8509 = vpack.c.b16 %v6157, %v6136
        %v8510 = vpack.c.b16 %v6158, %v6137
        %v8511 = vpack.c.b16 %v6159, %v6138
        %v8512 = vpack.c.b16 %v6160, %v6139
        %v8513 = vpack.c.b16 %v6161, %v6140
        %v8514 = vpack.c.b16 %v6162, %v6141
        %v8515 = vpack.c.b16 %v6163, %v6142
        %v8516 = vpack.c.b16 %v6164, %v6143
        %v8517 = vpack.c.b16 %v6165, %v6144
        %v8518 = vpack.c.b16 %v6166, %v6145
        %v8519 = vpack.c.b16 %v6167, %v6146
        %v8520 = vpack.c.b16 %v6168, %v6147
        %v8521 = vpack.c.b16 %v6169, %v6148
        %v8522 = vpack.c.b16 %v6170, %v6149
        %v8523 = vpack.c.b16 %v6171, %v6150
        %v8524 = vpack.c.b16 %v6172, %v6151
        %v8525 = vpack.c.b16 %v6173, %v6152
        %v8526 = vpack.c.b16 %v6174, %v6153
        %v8527 = vpack.c.b16 %v6196, %v6175
        %v8528 = vpack.c.b16 %v6197, %v6176
        %v8529 = vpack.c.b16 %v6198, %v6177
        %v8530 = vpack.c.b16 %v6199, %v6178
        %v8531 = vpack.c.b16 %v6200, %v6179
        %v8532 = vpack.c.b16 %v6201, %v6180
        %v8533 = vpack.c.b16 %v6202, %v6181
        %v8534 = vpack.c.b16 %v6203, %v6182
        %v8535 = vpack.c.b16 %v6204, %v6183
        %v8536 = vpack.c.b16 %v6205, %v6184
        %v8537 = vpack.c.b16 %v6206, %v6185
        %v8538 = vpack.c.b16 %v6207, %v6186
        %v8539 = vpack.c.b16 %v6208, %v6187
        %v8540 = vpack.c.b16 %v6209, %v6188
        %v8541 = vpack.c.b16 %v6210, %v6189
        %v8542 = vpack.c.b16 %v6211, %v6190
        %v8543 = vpack.c.b16 %v6212, %v6191
        %v8544 = vpack.c.b16 %v6213, %v6192
        %v8545 = vpack.c.b16 %v6214, %v6193
        %v8546 = vpack.c.b16 %v6215, %v6194
        %v8547 = vpack.c.b16 %v6216, %v6195
        %v8548 = vpack.c.b16 %v6238, %v6217
        %v8549 = vpack.c.b16 %v6239, %v6218
        %v8550 = vpack.c.b16 %v6240, %v6219
        %v8551 = vpack.c.b16 %v6241, %v6220
        %v8552 = vpack.c.b16 %v6242, %v6221
        %v8553 = vpack.c.b16 %v6243, %v6222
        %v8554 = vpack.c.b16 %v6244, %v6223
        %v8555 = vpack.c.b16 %v6245, %v6224
        %v8556 = vpack.c.b16 %v6246, %v6225
        %v8557 = vpack.c.b16 %v6247, %v6226
        %v8558 = vpack.c.b16 %v6248, %v6227
        %v8559 = vpack.c.b16 %v6249, %v6228
        %v8560 = vpack.c.b16 %v6250, %v6229
        %v8561 = vpack.c.b16 %v6251, %v6230
        %v8562 = vpack.c.b16 %v6252, %v6231
        %v8563 = vpack.c.b16 %v6253, %v6232
        %v8564 = vpack.c.b16 %v6254, %v6233
        %v8565 = vpack.c.b16 %v6255, %v6234
        %v8566 = vpack.c.b16 %v6256, %v6235
        %v8567 = vpack.c.b16 %v6257, %v6236
        %v8568 = vpack.c.b16 %v6258, %v6237
        %v8569 = vpack.c.b16 %v6280, %v6259
        %v8570 = vpack.c.b16 %v6281, %v6260
        %v8571 = vpack.c.b16 %v6282, %v6261
        %v8572 = vpack.c.b16 %v6283, %v6262
        %v8573 = vpack.c.b16 %v6284, %v6263
        %v8574 = vpack.c.b16 %v6285, %v6264
        %v8575 = vpack.c.b16 %v6286, %v6265
        %v8576 = vpack.c.b16 %v6287, %v6266
        %v8577 = vpack.c.b16 %v6288, %v6267
        %v8578 = vpack.c.b16 %v6289, %v6268
        %v8579 = vpack.c.b16 %v6290, %v6269
        %v8580 = vpack.c.b16 %v6291, %v6270
        %v8581 = vpack.c.b16 %v6292, %v6271
        %v8582 = vpack.c.b16 %v6293, %v6272
        %v8583 = vpack.c.b16 %v6294, %v6273
        %v8584 = vpack.c.b16 %v6295, %v6274
        %v8585 = vpack.c.b16 %v6296, %v6275
        %v8586 = vpack.c.b16 %v6297, %v6276
        %v8587 = vpack.c.b16 %v6298, %v6277
        %v8588 = vpack.c.b16 %v6299, %v6278
        %v8589 = vpack.c.b16 %v6300, %v6279
        %v8590 = vpack.c.b16 %v6322, %v6301
        %v8591 = vpack.c.b16 %v6323, %v6302
        %v8592 = vpack.c.b16 %v6324, %v6303
        %v8593 = vpack.c.b16 %v6325, %v6304
        %v8594 = vpack.c.b16 %v6326, %v6305
        %v8595 = vpack.c.b16 %v6327, %v6306
        %v8596 = vpack.c.b16 %v6328, %v6307
        %v8597 = vpack.c.b16 %v6329, %v6308
        %v8598 = vpack.c.b16 %v6330, %v6309
        %v8599 = vpack.c.b16 %v6331, %v6310
        %v8600 = vpack.c.b16 %v6332, %v6311
        %v8601 = vpack.c.b16 %v6333, %v6312
        %v8602 = vpack.c.b16 %v6334, %v6313
        %v8603 = vpack.c.b16 %v6335, %v6314
        %v8604 = vpack.c.b16 %v6336, %v6315
        %v8605 = vpack.c.b16 %v6337, %v6316
        %v8606 = vpack.c.b16 %v6338, %v6317
        %v8607 = vpack.c.b16 %v6339, %v6318
        %v8608 = vpack.c.b16 %v6340, %v6319
        %v8609 = vpack.c.b16 %v6341, %v6320
        %v8610 = vpack.c.b16 %v6342, %v6321
        %v8611 = vpack.c.b16 %v6364, %v6343
        %v8612 = vpack.c.b16 %v6365, %v6344
        %v8613 = vpack.c.b16 %v6366, %v6345
        %v8614 = vpack.c.b16 %v6367, %v6346
        %v8615 = vpack.c.b16 %v6368, %v6347
        %v8616 = vpack.c.b16 %v6369, %v6348
        %v8617 = vpack.c.b16 %v6370, %v6349
        %v8618 = vpack.c.b16 %v6371, %v6350
        %v8619 = vpack.c.b16 %v6372, %v6351
        %v8620 = vpack.c.b16 %v6373, %v6352
        %v8621 = vpack.c.b16 %v6374, %v6353
        %v8622 = vpack.c.b16 %v6375, %v6354
        %v8623 = vpack.c.b16 %v6376, %v6355
        %v8624 = vpack.c.b16 %v6377, %v6356
        %v8625 = vpack.c.b16 %v6378, %v6357
        %v8626 = vpack.c.b16 %v6379, %v6358
        %v8627 = vpack.c.b16 %v6380, %v6359
        %v8628 = vpack.c.b16 %v6381, %v6360
        %v8629 = vpack.c.b16 %v6382, %v6361
        %v8630 = vpack.c.b16 %v6383, %v6362
        %v8631 = vpack.c.b16 %v6384, %v6363
        %v8632 = vpack.c.b16 %v6406, %v6385
        %v8633 = vpack.c.b16 %v6407, %v6386
        %v8634 = vpack.c.b16 %v6408, %v6387
        %v8635 = vpack.c.b16 %v6409, %v6388
        %v8636 = vpack.c.b16 %v6410, %v6389
        %v8637 = vpack.c.b16 %v6411, %v6390
        %v8638 = vpack.c.b16 %v6412, %v6391
        %v8639 = vpack.c.b16 %v6413, %v6392
        %v8640 = vpack.c.b16 %v6414, %v6393
        %v8641 = vpack.c.b16 %v6415, %v6394
        %v8642 = vpack.c.b16 %v6416, %v6395
        %v8643 = vpack.c.b16 %v6417, %v6396
        %v8644 = vpack.c.b16 %v6418, %v6397
        %v8645 = vpack.c.b16 %v6419, %v6398
        %v8646 = vpack.c.b16 %v6420, %v6399
        %v8647 = vpack.c.b16 %v6421, %v6400
        %v8648 = vpack.c.b16 %v6422, %v6401
        %v8649 = vpack.c.b16 %v6423, %v6402
        %v8650 = vpack.c.b16 %v6424, %v6403
        %v8651 = vpack.c.b16 %v6425, %v6404
        %v8652 = vpack.c.b16 %v6426, %v6405
        %v8653 = vpack.c.b16 %v6448, %v6427
        %v8654 = vpack.c.b16 %v6449, %v6428
        %v8655 = vpack.c.b16 %v6450, %v6429
        %v8656 = vpack.c.b16 %v6451, %v6430
        %v8657 = vpack.c.b16 %v6452, %v6431
        %v8658 = vpack.c.b16 %v6453, %v6432
        %v8659 = vpack.c.b16 %v6454, %v6433
        %v8660 = vpack.c.b16 %v6455, %v6434
        %v8661 = vpack.c.b16 %v6456, %v6435
        %v8662 = vpack.c.b16 %v6457, %v6436
        %v8663 = vpack.c.b16 %v6458, %v6437
        %v8664 = vpack.c.b16 %v6459, %v6438
        %v8665 = vpack.c.b16 %v6460, %v6439
        %v8666 = vpack.c.b16 %v6461, %v6440
        %v8667 = vpack.c.b16 %v6462, %v6441
        %v8668 = vpack.c.b16 %v6463, %v6442
        %v8669 = vpack.c.b16 %v6464, %v6443
        %v8670 = vpack.c.b16 %v6465, %v6444
        %v8671 = vpack.c.b16 %v6466, %v6445
        %v8672 = vpack.c.b16 %v6467, %v6446
        %v8673 = vpack.c.b16 %v6468, %v6447
        %v8674 = vpack.c.b16 %v6490, %v6469
        %v8675 = vpack.c.b16 %v6491, %v6470
        %v8676 = vpack.c.b16 %v6492, %v6471
        %v8677 = vpack.c.b16 %v6493, %v6472
        %v8678 = vpack.c.b16 %v6494, %v6473
        %v8679 = vpack.c.b16 %v6495, %v6474
        %v8680 = vpack.c.b16 %v6496, %v6475
        %v8681 = vpack.c.b16 %v6497, %v6476
        %v8682 = vpack.c.b16 %v6498, %v6477
        %v8683 = vpack.c.b16 %v6499, %v6478
        %v8684 = vpack.c.b16 %v6500, %v6479
        %v8685 = vpack.c.b16 %v6501, %v6480
        %v8686 = vpack.c.b16 %v6502, %v6481
        %v8687 = vpack.c.b16 %v6503, %v6482
        %v8688 = vpack.c.b16 %v6504, %v6483
        %v8689 = vpack.c.b16 %v6505, %v6484
        %v8690 = vpack.c.b16 %v6506, %v6485
        %v8691 = vpack.c.b16 %v6507, %v6486
        %v8692 = vpack.c.b16 %v6508, %v6487
        %v8693 = vpack.c.b16 %v6509, %v6488
        %v8694 = vpack.c.b16 %v6510, %v6489
        %v8695 = vpack.c.b16 %v6532, %v6511
        %v8696 = vpack.c.b16 %v6533, %v6512
        %v8697 = vpack.c.b16 %v6534, %v6513
        %v8698 = vpack.c.b16 %v6535, %v6514
        %v8699 = vpack.c.b16 %v6536, %v6515
        %v8700 = vpack.c.b16 %v6537, %v6516
        %v8701 = vpack.c.b16 %v6538, %v6517
        %v8702 = vpack.c.b16 %v6539, %v6518
        %v8703 = vpack.c.b16 %v6540, %v6519
        %v8704 = vpack.c.b16 %v6541, %v6520
        %v8705 = vpack.c.b16 %v6542, %v6521
        %v8706 = vpack.c.b16 %v6543, %v6522
        %v8707 = vpack.c.b16 %v6544, %v6523
        %v8708 = vpack.c.b16 %v6545, %v6524
        %v8709 = vpack.c.b16 %v6546, %v6525
        %v8710 = vpack.c.b16 %v6547, %v6526
        %v8711 = vpack.c.b16 %v6548, %v6527
        %v8712 = vpack.c.b16 %v6549, %v6528
        %v8713 = vpack.c.b16 %v6550, %v6529
        %v8714 = vpack.c.b16 %v6551, %v6530
        %v8715 = vpack.c.b16 %v6552, %v6531
        %v8716 = vpack.c.b16 %v6574, %v6553
        %v8717 = vpack.c.b16 %v6575, %v6554
        %v8718 = vpack.c.b16 %v6576, %v6555
        %v8719 = vpack.c.b16 %v6577, %v6556
        %v8720 = vpack.c.b16 %v6578, %v6557
        %v8721 = vpack.c.b16 %v6579, %v6558
        %v8722 = vpack.c.b16 %v6580, %v6559
        %v8723 = vpack.c.b16 %v6581, %v6560
        %v8724 = vpack.c.b16 %v6582, %v6561
        %v8725 = vpack.c.b16 %v6583, %v6562
        %v8726 = vpack.c.b16 %v6584, %v6563
        %v8727 = vpack.c.b16 %v6585, %v6564
        %v8728 = vpack.c.b16 %v6586, %v6565
        %v8729 = vpack.c.b16 %v6587, %v6566
        %v8730 = vpack.c.b16 %v6588, %v6567
        %v8731 = vpack.c.b16 %v6589, %v6568
        %v8732 = vpack.c.b16 %v6590, %v6569
        %v8733 = vpack.c.b16 %v6591, %v6570
        %v8734 = vpack.c.b16 %v6592, %v6571
        %v8735 = vpack.c.b16 %v6593, %v6572
        %v8736 = vpack.c.b16 %v6594, %v6573
        %v8737 = vpack.c.b16 %v6616, %v6595
        %v8738 = vpack.c.b16 %v6617, %v6596
        %v8739 = vpack.c.b16 %v6618, %v6597
        %v8740 = vpack.c.b16 %v6619, %v6598
        %v8741 = vpack.c.b16 %v6620, %v6599
        %v8742 = vpack.c.b16 %v6621, %v6600
        %v8743 = vpack.c.b16 %v6622, %v6601
        %v8744 = vpack.c.b16 %v6623, %v6602
        %v8745 = vpack.c.b16 %v6624, %v6603
        %v8746 = vpack.c.b16 %v6625, %v6604
        %v8747 = vpack.c.b16 %v6626, %v6605
        %v8748 = vpack.c.b16 %v6627, %v6606
        %v8749 = vpack.c.b16 %v6628, %v6607
        %v8750 = vpack.c.b16 %v6629, %v6608
        %v8751 = vpack.c.b16 %v6630, %v6609
        %v8752 = vpack.c.b16 %v6631, %v6610
        %v8753 = vpack.c.b16 %v6632, %v6611
        %v8754 = vpack.c.b16 %v6633, %v6612
        %v8755 = vpack.c.b16 %v6634, %v6613
        %v8756 = vpack.c.b16 %v6635, %v6614
        %v8757 = vpack.c.b16 %v6636, %v6615
        %v8758 = vpack.c.b16 %v6658, %v6637
        %v8759 = vpack.c.b16 %v6659, %v6638
        %v8760 = vpack.c.b16 %v6660, %v6639
        %v8761 = vpack.c.b16 %v6661, %v6640
        %v8762 = vpack.c.b16 %v6662, %v6641
        %v8763 = vpack.c.b16 %v6663, %v6642
        %v8764 = vpack.c.b16 %v6664, %v6643
        %v8765 = vpack.c.b16 %v6665, %v6644
        %v8766 = vpack.c.b16 %v6666, %v6645
        %v8767 = vpack.c.b16 %v6667, %v6646
        %v8768 = vpack.c.b16 %v6668, %v6647
        %v8769 = vpack.c.b16 %v6669, %v6648
        %v8770 = vpack.c.b16 %v6670, %v6649
        %v8771 = vpack.c.b16 %v6671, %v6650
        %v8772 = vpack.c.b16 %v6672, %v6651
        %v8773 = vpack.c.b16 %v6673, %v6652
        %v8774 = vpack.c.b16 %v6674, %v6653
        %v8775 = vpack.c.b16 %v6675, %v6654
        %v8776 = vpack.c.b16 %v6676, %v6655
        %v8777 = vpack.c.b16 %v6677, %v6656
        %v8778 = vpack.c.b16 %v6678, %v6657
        %v8779 = vpack.c.b16 %v6700, %v6679
        %v8780 = vpack.c.b16 %v6701, %v6680
        %v8781 = vpack.c.b16 %v6702, %v6681
        %v8782 = vpack.c.b16 %v6703, %v6682
        %v8783 = vpack.c.b16 %v6704, %v6683
        %v8784 = vpack.c.b16 %v6705, %v6684
        %v8785 = vpack.c.b16 %v6706, %v6685
        %v8786 = vpack.c.b16 %v6707, %v6686
        %v8787 = vpack.c.b16 %v6708, %v6687
        %v8788 = vpack.c.b16 %v6709, %v6688
        %v8789 = vpack.c.b16 %v6710, %v6689
        %v8790 = vpack.c.b16 %v6711, %v6690
        %v8791 = vpack.c.b16 %v6712, %v6691
        %v8792 = vpack.c.b16 %v6713, %v6692
        %v8793 = vpack.c.b16 %v6714, %v6693
        %v8794 = vpack.c.b16 %v6715, %v6694
        %v8795 = vpack.c.b16 %v6716, %v6695
        %v8796 = vpack.c.b16 %v6717, %v6696
        %v8797 = vpack.c.b16 %v6718, %v6697
        %v8798 = vpack.c.b16 %v6719, %v6698
        %v8799 = vpack.c.b16 %v6720, %v6699
        %v8800 = vpack.c.b16 %v6742, %v6721
        %v8801 = vpack.c.b16 %v6743, %v6722
        %v8802 = vpack.c.b16 %v6744, %v6723
        %v8803 = vpack.c.b16 %v6745, %v6724
        %v8804 = vpack.c.b16 %v6746, %v6725
        %v8805 = vpack.c.b16 %v6747, %v6726
        %v8806 = vpack.c.b16 %v6748, %v6727
        %v8807 = vpack.c.b16 %v6749, %v6728
        %v8808 = vpack.c.b16 %v6750, %v6729
        %v8809 = vpack.c.b16 %v6751, %v6730
        %v8810 = vpack.c.b16 %v6752, %v6731
        %v8811 = vpack.c.b16 %v6753, %v6732
        %v8812 = vpack.c.b16 %v6754, %v6733
        %v8813 = vpack.c.b16 %v6755, %v6734
        %v8814 = vpack.c.b16 %v6756, %v6735
        %v8815 = vpack.c.b16 %v6757, %v6736
        %v8816 = vpack.c.b16 %v6758, %v6737
        %v8817 = vpack.c.b16 %v6759, %v6738
        %v8818 = vpack.c.b16 %v6760, %v6739
        %v8819 = vpack.c.b16 %v6761, %v6740
        %v8820 = vpack.c.b16 %v6762, %v6741
        %v8821 = vpack.c.b16 %v6784, %v6763
        %v8822 = vpack.c.b16 %v6785, %v6764
        %v8823 = vpack.c.b16 %v6786, %v6765
        %v8824 = vpack.c.b16 %v6787, %v6766
        %v8825 = vpack.c.b16 %v6788, %v6767
        %v8826 = vpack.c.b16 %v6789, %v6768
        %v8827 = vpack.c.b16 %v6790, %v6769
        %v8828 = vpack.c.b16 %v6791, %v6770
        %v8829 = vpack.c.b16 %v6792, %v6771
        %v8830 = vpack.c.b16 %v6793, %v6772
        %v8831 = vpack.c.b16 %v6794, %v6773
        %v8832 = vpack.c.b16 %v6795, %v6774
        %v8833 = vpack.c.b16 %v6796, %v6775
        %v8834 = vpack.c.b16 %v6797, %v6776
        %v8835 = vpack.c.b16 %v6798, %v6777
        %v8836 = vpack.c.b16 %v6799, %v6778
        %v8837 = vpack.c.b16 %v6800, %v6779
        %v8838 = vpack.c.b16 %v6801, %v6780
        %v8839 = vpack.c.b16 %v6802, %v6781
        %v8840 = vpack.c.b16 %v6803, %v6782
        %v8841 = vpack.c.b16 %v6804, %v6783
        %v8842 = vpack.c.b16 %v6826, %v6805
        %v8843 = vpack.c.b16 %v6827, %v6806
        %v8844 = vpack.c.b16 %v6828, %v6807
        %v8845 = vpack.c.b16 %v6829, %v6808
        %v8846 = vpack.c.b16 %v6830, %v6809
        %v8847 = vpack.c.b16 %v6831, %v6810
        %v8848 = vpack.c.b16 %v6832, %v6811
        %v8849 = vpack.c.b16 %v6833, %v6812
        %v8850 = vpack.c.b16 %v6834, %v6813
        %v8851 = vpack.c.b16 %v6835, %v6814
        %v8852 = vpack.c.b16 %v6836, %v6815
        %v8853 = vpack.c.b16 %v6837, %v6816
        %v8854 = vpack.c.b16 %v6838, %v6817
        %v8855 = vpack.c.b16 %v6839, %v6818
        %v8856 = vpack.c.b16 %v6840, %v6819
        %v8857 = vpack.c.b16 %v6841, %v6820
        %v8858 = vpack.c.b16 %v6842, %v6821
        %v8859 = vpack.c.b16 %v6843, %v6822
        %v8860 = vpack.c.b16 %v6844, %v6823
        %v8861 = vpack.c.b16 %v6845, %v6824
        %v8862 = vpack.c.b16 %v6846, %v6825
        %v8863 = vpack.c.b16 %v6868, %v6847
        %v8864 = vpack.c.b16 %v6869, %v6848
        %v8865 = vpack.c.b16 %v6870, %v6849
        %v8866 = vpack.c.b16 %v6871, %v6850
        %v8867 = vpack.c.b16 %v6872, %v6851
        %v8868 = vpack.c.b16 %v6873, %v6852
        %v8869 = vpack.c.b16 %v6874, %v6853
        %v8870 = vpack.c.b16 %v6875, %v6854
        %v8871 = vpack.c.b16 %v6876, %v6855
        %v8872 = vpack.c.b16 %v6877, %v6856
        %v8873 = vpack.c.b16 %v6878, %v6857
        %v8874 = vpack.c.b16 %v6879, %v6858
        %v8875 = vpack.c.b16 %v6880, %v6859
        %v8876 = vpack.c.b16 %v6881, %v6860
        %v8877 = vpack.c.b16 %v6882, %v6861
        %v8878 = vpack.c.b16 %v6883, %v6862
        %v8879 = vpack.c.b16 %v6884, %v6863
        %v8880 = vpack.c.b16 %v6885, %v6864
        %v8881 = vpack.c.b16 %v6886, %v6865
        %v8882 = vpack.c.b16 %v6887, %v6866
        %v8883 = vpack.c.b16 %v6888, %v6867
        %v8884 = vpack.c.b16 %v6910, %v6889
        %v8885 = vpack.c.b16 %v6911, %v6890
        %v8886 = vpack.c.b16 %v6912, %v6891
        %v8887 = vpack.c.b16 %v6913, %v6892
        %v8888 = vpack.c.b16 %v6914, %v6893
        %v8889 = vpack.c.b16 %v6915, %v6894
        %v8890 = vpack.c.b16 %v6916, %v6895
        %v8891 = vpack.c.b16 %v6917, %v6896
        %v8892 = vpack.c.b16 %v6918, %v6897
        %v8893 = vpack.c.b16 %v6919, %v6898
        %v8894 = vpack.c.b16 %v6920, %v6899
        %v8895 = vpack.c.b16 %v6921, %v6900
        %v8896 = vpack.c.b16 %v6922, %v6901
        %v8897 = vpack.c.b16 %v6923, %v6902
        %v8898 = vpack.c.b16 %v6924, %v6903
        %v8899 = vpack.c.b16 %v6925, %v6904
        %v8900 = vpack.c.b16 %v6926, %v6905
        %v8901 = vpack.c.b16 %v6927, %v6906
        %v8902 = vpack.c.b16 %v6928, %v6907
        %v8903 = vpack.c.b16 %v6929, %v6908
        %v8904 = vpack.c.b16 %v6930, %v6909
        %v8905 = vpack.c.b16 %v6952, %v6931
        %v8906 = vpack.c.b16 %v6953, %v6932
        %v8907 = vpack.c.b16 %v6954, %v6933
        %v8908 = vpack.c.b16 %v6955, %v6934
        %v8909 = vpack.c.b16 %v6956, %v6935
        %v8910 = vpack.c.b16 %v6957, %v6936
        %v8911 = vpack.c.b16 %v6958, %v6937
        %v8912 = vpack.c.b16 %v6959, %v6938
        %v8913 = vpack.c.b16 %v6960, %v6939
        %v8914 = vpack.c.b16 %v6961, %v6940
        %v8915 = vpack.c.b16 %v6962, %v6941
        %v8916 = vpack.c.b16 %v6963, %v6942
        %v8917 = vpack.c.b16 %v6964, %v6943
        %v8918 = vpack.c.b16 %v6965, %v6944
        %v8919 = vpack.c.b16 %v6966, %v6945
        %v8920 = vpack.c.b16 %v6967, %v6946
        %v8921 = vpack.c.b16 %v6968, %v6947
        %v8922 = vpack.c.b16 %v6969, %v6948
        %v8923 = vpack.c.b16 %v6970, %v6949
        %v8924 = vpack.c.b16 %v6971, %v6950
        %v8925 = vpack.c.b16 %v6972, %v6951
        %v8926 = vpack.c.b16 %v6994, %v6973
        %v8927 = vpack.c.b16 %v6995, %v6974
        %v8928 = vpack.c.b16 %v6996, %v6975
        %v8929 = vpack.c.b16 %v6997, %v6976
        %v8930 = vpack.c.b16 %v6998, %v6977
        %v8931 = vpack.c.b16 %v6999, %v6978
        %v8932 = vpack.c.b16 %v7000, %v6979
        %v8933 = vpack.c.b16 %v7001, %v6980
        %v8934 = vpack.c.b16 %v7002, %v6981
        %v8935 = vpack.c.b16 %v7003, %v6982
        %v8936 = vpack.c.b16 %v7004, %v6983
        %v8937 = vpack.c.b16 %v7005, %v6984
        %v8938 = vpack.c.b16 %v7006, %v6985
        %v8939 = vpack.c.b16 %v7007, %v6986
        %v8940 = vpack.c.b16 %v7008, %v6987
        %v8941 = vpack.c.b16 %v7009, %v6988
        %v8942 = vpack.c.b16 %v7010, %v6989
        %v8943 = vpack.c.b16 %v7011, %v6990
        %v8944 = vpack.c.b16 %v7012, %v6991
        %v8945 = vpack.c.b16 %v7013, %v6992
        %v8946 = vpack.c.b16 %v7014, %v6993
        %v8947 = vpack.c.b16 %v7036, %v7015
        %v8948 = vpack.c.b16 %v7037, %v7016
        %v8949 = vpack.c.b16 %v7038, %v7017
        %v8950 = vpack.c.b16 %v7039, %v7018
        %v8951 = vpack.c.b16 %v7040, %v7019
        %v8952 = vpack.c.b16 %v7041, %v7020
        %v8953 = vpack.c.b16 %v7042, %v7021
        %v8954 = vpack.c.b16 %v7043, %v7022
        %v8955 = vpack.c.b16 %v7044, %v7023
        %v8956 = vpack.c.b16 %v7045, %v7024
        %v8957 = vpack.c.b16 %v7046, %v7025
        %v8958 = vpack.c.b16 %v7047, %v7026
        %v8959 = vpack.c.b16 %v7048, %v7027
        %v8960 = vpack.c.b16 %v7049, %v7028
        %v8961 = vpack.c.b16 %v7050, %v7029
        %v8962 = vpack.c.b16 %v7051, %v7030
        %v8963 = vpack.c.b16 %v7052, %v7031
        %v8964 = vpack.c.b16 %v7053, %v7032
        %v8965 = vpack.c.b16 %v7054, %v7033
        %v8966 = vpack.c.b16 %v7055, %v7034
        %v8967 = vpack.c.b16 %v7056, %v7035
        %v8968 = vpack.c.b16 %v7078, %v7057
        %v8969 = vpack.c.b16 %v7079, %v7058
        %v8970 = vpack.c.b16 %v7080, %v7059
        %v8971 = vpack.c.b16 %v7081, %v7060
        %v8972 = vpack.c.b16 %v7082, %v7061
        %v8973 = vpack.c.b16 %v7083, %v7062
        %v8974 = vpack.c.b16 %v7084, %v7063
        %v8975 = vpack.c.b16 %v7085, %v7064
        %v8976 = vpack.c.b16 %v7086, %v7065
        %v8977 = vpack.c.b16 %v7087, %v7066
        %v8978 = vpack.c.b16 %v7088, %v7067
        %v8979 = vpack.c.b16 %v7089, %v7068
        %v8980 = vpack.c.b16 %v7090, %v7069
        %v8981 = vpack.c.b16 %v7091, %v7070
        %v8982 = vpack.c.b16 %v7092, %v7071
        %v8983 = vpack.c.b16 %v7093, %v7072
        %v8984 = vpack.c.b16 %v7094, %v7073
        %v8985 = vpack.c.b16 %v7095, %v7074
        %v8986 = vpack.c.b16 %v7096, %v7075
        %v8987 = vpack.c.b16 %v7097, %v7076
        %v8988 = vpack.c.b16 %v7098, %v7077
        %v8989 = vpack.c.b16 %v7120, %v7099
        %v8990 = vpack.c.b16 %v7121, %v7100
        %v8991 = vpack.c.b16 %v7122, %v7101
        %v8992 = vpack.c.b16 %v7123, %v7102
        %v8993 = vpack.c.b16 %v7124, %v7103
        %v8994 = vpack.c.b16 %v7125, %v7104
        %v8995 = vpack.c.b16 %v7126, %v7105
        %v8996 = vpack.c.b16 %v7127, %v7106
        %v8997 = vpack.c.b16 %v7128, %v7107
        %v8998 = vpack.c.b16 %v7129, %v7108
        %v8999 = vpack.c.b16 %v7130, %v7109
        %v9000 = vpack.c.b16 %v7131, %v7110
        %v9001 = vpack.c.b16 %v7132, %v7111
        %v9002 = vpack.c.b16 %v7133, %v7112
        %v9003 = vpack.c.b16 %v7134, %v7113
        %v9004 = vpack.c.b16 %v7135, %v7114
        %v9005 = vpack.c.b16 %v7136, %v7115
        %v9006 = vpack.c.b16 %v7137, %v7116
        %v9007 = vpack.c.b16 %v7138, %v7117
        %v9008 = vpack.c.b16 %v7139, %v7118
        %v9009 = vpack.c.b16 %v7140, %v7119
        %v9010 = vpack.c.b16 %v7162, %v7141
        %v9011 = vpack.c.b16 %v7163, %v7142
        %v9012 = vpack.c.b16 %v7164, %v7143
        %v9013 = vpack.c.b16 %v7165, %v7144
        %v9014 = vpack.c.b16 %v7166, %v7145
        %v9015 = vpack.c.b16 %v7167, %v7146
        %v9016 = vpack.c.b16 %v7168, %v7147
        %v9017 = vpack.c.b16 %v7169, %v7148
        %v9018 = vpack.c.b16 %v7170, %v7149
        %v9019 = vpack.c.b16 %v7171, %v7150
        %v9020 = vpack.c.b16 %v7172, %v7151
        %v9021 = vpack.c.b16 %v7173, %v7152
        %v9022 = vpack.c.b16 %v7174, %v7153
        %v9023 = vpack.c.b16 %v7175, %v7154
        %v9024 = vpack.c.b16 %v7176, %v7155
        %v9025 = vpack.c.b16 %v7177, %v7156
        %v9026 = vpack.c.b16 %v7178, %v7157
        %v9027 = vpack.c.b16 %v7179, %v7158
        %v9028 = vpack.c.b16 %v7180, %v7159
        %v9029 = vpack.c.b16 %v7181, %v7160
        %v9030 = vpack.c.b16 %v7182, %v7161
        %v9031 = vpack.c.b16 %v7204, %v7183
        %v9032 = vpack.c.b16 %v7205, %v7184
        %v9033 = vpack.c.b16 %v7206, %v7185
        %v9034 = vpack.c.b16 %v7207, %v7186
        %v9035 = vpack.c.b16 %v7208, %v7187
        %v9036 = vpack.c.b16 %v7209, %v7188
        %v9037 = vpack.c.b16 %v7210, %v7189
        %v9038 = vpack.c.b16 %v7211, %v7190
        %v9039 = vpack.c.b16 %v7212, %v7191
        %v9040 = vpack.c.b16 %v7213, %v7192
        %v9041 = vpack.c.b16 %v7214, %v7193
        %v9042 = vpack.c.b16 %v7215, %v7194
        %v9043 = vpack.c.b16 %v7216, %v7195
        %v9044 = vpack.c.b16 %v7217, %v7196
        %v9045 = vpack.c.b16 %v7218, %v7197
        %v9046 = vpack.c.b16 %v7219, %v7198
        %v9047 = vpack.c.b16 %v7220, %v7199
        %v9048 = vpack.c.b16 %v7221, %v7200
        %v9049 = vpack.c.b16 %v7222, %v7201
        %v9050 = vpack.c.b16 %v7223, %v7202
        %v9051 = vpack.c.b16 %v7224, %v7203
        %v9052 = vpack.c.b16 %v7246, %v7225
        %v9053 = vpack.c.b16 %v7247, %v7226
        %v9054 = vpack.c.b16 %v7248, %v7227
        %v9055 = vpack.c.b16 %v7249, %v7228
        %v9056 = vpack.c.b16 %v7250, %v7229
        %v9057 = vpack.c.b16 %v7251, %v7230
        %v9058 = vpack.c.b16 %v7252, %v7231
        %v9059 = vpack.c.b16 %v7253, %v7232
        %v9060 = vpack.c.b16 %v7254, %v7233
        %v9061 = vpack.c.b16 %v7255, %v7234
        %v9062 = vpack.c.b16 %v7256, %v7235
        %v9063 = vpack.c.b16 %v7257, %v7236
        %v9064 = vpack.c.b16 %v7258, %v7237
        %v9065 = vpack.c.b16 %v7259, %v7238
        %v9066 = vpack.c.b16 %v7260, %v7239
        %v9067 = vpack.c.b16 %v7261, %v7240
        %v9068 = vpack.c.b16 %v7262, %v7241
        %v9069 = vpack.c.b16 %v7263, %v7242
        %v9070 = vpack.c.b16 %v7264, %v7243
        %v9071 = vpack.c.b16 %v7265, %v7244
        %v9072 = vpack.c.b16 %v7266, %v7245
        %v9073 = vpack.c.b16 %v7288, %v7267
        %v9074 = vpack.c.b16 %v7289, %v7268
        %v9075 = vpack.c.b16 %v7290, %v7269
        %v9076 = vpack.c.b16 %v7291, %v7270
        %v9077 = vpack.c.b16 %v7292, %v7271
        %v9078 = vpack.c.b16 %v7293, %v7272
        %v9079 = vpack.c.b16 %v7294, %v7273
        %v9080 = vpack.c.b16 %v7295, %v7274
        %v9081 = vpack.c.b16 %v7296, %v7275
        %v9082 = vpack.c.b16 %v7297, %v7276
        %v9083 = vpack.c.b16 %v7298, %v7277
        %v9084 = vpack.c.b16 %v7299, %v7278
        %v9085 = vpack.c.b16 %v7300, %v7279
        %v9086 = vpack.c.b16 %v7301, %v7280
        %v9087 = vpack.c.b16 %v7302, %v7281
        %v9088 = vpack.c.b16 %v7303, %v7282
        %v9089 = vpack.c.b16 %v7304, %v7283
        %v9090 = vpack.c.b16 %v7305, %v7284
        %v9091 = vpack.c.b16 %v7306, %v7285
        %v9092 = vpack.c.b16 %v7307, %v7286
        %v9093 = vpack.c.b16 %v7308, %v7287
        %v9094 = vpack.c.b16 %v7330, %v7309
        %v9095 = vpack.c.b16 %v7331, %v7310
        %v9096 = vpack.c.b16 %v7332, %v7311
        %v9097 = vpack.c.b16 %v7333, %v7312
        %v9098 = vpack.c.b16 %v7334, %v7313
        %v9099 = vpack.c.b16 %v7335, %v7314
        %v9100 = vpack.c.b16 %v7336, %v7315
        %v9101 = vpack.c.b16 %v7337, %v7316
        %v9102 = vpack.c.b16 %v7338, %v7317
        %v9103 = vpack.c.b16 %v7339, %v7318
        %v9104 = vpack.c.b16 %v7340, %v7319
        %v9105 = vpack.c.b16 %v7341, %v7320
        %v9106 = vpack.c.b16 %v7342, %v7321
        %v9107 = vpack.c.b16 %v7343, %v7322
        %v9108 = vpack.c.b16 %v7344, %v7323
        %v9109 = vpack.c.b16 %v7345, %v7324
        %v9110 = vpack.c.b16 %v7346, %v7325
        %v9111 = vpack.c.b16 %v7347, %v7326
        %v9112 = vpack.c.b16 %v7348, %v7327
        %v9113 = vpack.c.b16 %v7349, %v7328
        %v9114 = vpack.c.b16 %v7350, %v7329
        %v9115 = vpack.c.b16 %v7372, %v7351
        %v9116 = vpack.c.b16 %v7373, %v7352
        %v9117 = vpack.c.b16 %v7374, %v7353
        %v9118 = vpack.c.b16 %v7375, %v7354
        %v9119 = vpack.c.b16 %v7376, %v7355
        %v9120 = vpack.c.b16 %v7377, %v7356
        %v9121 = vpack.c.b16 %v7378, %v7357
        %v9122 = vpack.c.b16 %v7379, %v7358
        %v9123 = vpack.c.b16 %v7380, %v7359
        %v9124 = vpack.c.b16 %v7381, %v7360
        %v9125 = vpack.c.b16 %v7382, %v7361
        %v9126 = vpack.c.b16 %v7383, %v7362
        %v9127 = vpack.c.b16 %v7384, %v7363
        %v9128 = vpack.c.b16 %v7385, %v7364
        %v9129 = vpack.c.b16 %v7386, %v7365
        %v9130 = vpack.c.b16 %v7387, %v7366
        %v9131 = vpack.c.b16 %v7388, %v7367
        %v9132 = vpack.c.b16 %v7389, %v7368
        %v9133 = vpack.c.b16 %v7390, %v7369
        %v9134 = vpack.c.b16 %v7391, %v7370
        %v9135 = vpack.c.b16 %v7392, %v7371
        %v9136 = vpack.c.b16 %v7414, %v7393
        %v9137 = vpack.c.b16 %v7415, %v7394
        %v9138 = vpack.c.b16 %v7416, %v7395
        %v9139 = vpack.c.b16 %v7417, %v7396
        %v9140 = vpack.c.b16 %v7418, %v7397
        %v9141 = vpack.c.b16 %v7419, %v7398
        %v9142 = vpack.c.b16 %v7420, %v7399
        %v9143 = vpack.c.b16 %v7421, %v7400
        %v9144 = vpack.c.b16 %v7422, %v7401
        %v9145 = vpack.c.b16 %v7423, %v7402
        %v9146 = vpack.c.b16 %v7424, %v7403
        %v9147 = vpack.c.b16 %v7425, %v7404
        %v9148 = vpack.c.b16 %v7426, %v7405
        %v9149 = vpack.c.b16 %v7427, %v7406
        %v9150 = vpack.c.b16 %v7428, %v7407
        %v9151 = vpack.c.b16 %v7429, %v7408
        %v9152 = vpack.c.b16 %v7430, %v7409
        %v9153 = vpack.c.b16 %v7431, %v7410
        %v9154 = vpack.c.b16 %v7432, %v7411
        %v9155 = vpack.c.b16 %v7433, %v7412
        %v9156 = vpack.c.b16 %v7434, %v7413
        %v9157 = vpack.c.b16 %v7456, %v7435
        %v9158 = vpack.c.b16 %v7457, %v7436
        %v9159 = vpack.c.b16 %v7458, %v7437
        %v9160 = vpack.c.b16 %v7459, %v7438
        %v9161 = vpack.c.b16 %v7460, %v7439
        %v9162 = vpack.c.b16 %v7461, %v7440
        %v9163 = vpack.c.b16 %v7462, %v7441
        %v9164 = vpack.c.b16 %v7463, %v7442
        %v9165 = vpack.c.b16 %v7464, %v7443
        %v9166 = vpack.c.b16 %v7465, %v7444
        %v9167 = vpack.c.b16 %v7466, %v7445
        %v9168 = vpack.c.b16 %v7467, %v7446
        %v9169 = vpack.c.b16 %v7468, %v7447
        %v9170 = vpack.c.b16 %v7469, %v7448
        %v9171 = vpack.c.b16 %v7470, %v7449
        %v9172 = vpack.c.b16 %v7471, %v7450
        %v9173 = vpack.c.b16 %v7472, %v7451
        %v9174 = vpack.c.b16 %v7473, %v7452
        %v9175 = vpack.c.b16 %v7474, %v7453
        %v9176 = vpack.c.b16 %v7475, %v7454
        %v9177 = vpack.c.b16 %v7476, %v7455
        %v9178 = vpack.c.b16 %v7498, %v7477
        %v9179 = vpack.c.b16 %v7499, %v7478
        %v9180 = vpack.c.b16 %v7500, %v7479
        %v9181 = vpack.c.b16 %v7501, %v7480
        %v9182 = vpack.c.b16 %v7502, %v7481
        %v9183 = vpack.c.b16 %v7503, %v7482
        %v9184 = vpack.c.b16 %v7504, %v7483
        %v9185 = vpack.c.b16 %v7505, %v7484
        %v9186 = vpack.c.b16 %v7506, %v7485
        %v9187 = vpack.c.b16 %v7507, %v7486
        %v9188 = vpack.c.b16 %v7508, %v7487
        %v9189 = vpack.c.b16 %v7509, %v7488
        %v9190 = vpack.c.b16 %v7510, %v7489
        %v9191 = vpack.c.b16 %v7511, %v7490
        %v9192 = vpack.c.b16 %v7512, %v7491
        %v9193 = vpack.c.b16 %v7513, %v7492
        %v9194 = vpack.c.b16 %v7514, %v7493
        %v9195 = vpack.c.b16 %v7515, %v7494
        %v9196 = vpack.c.b16 %v7516, %v7495
        %v9197 = vpack.c.b16 %v7517, %v7496
        %v9198 = vpack.c.b16 %v7518, %v7497
        %v9199 = vpack.c.b16 %v7540, %v7519
        %v9200 = vpack.c.b16 %v7541, %v7520
        %v9201 = vpack.c.b16 %v7542, %v7521
        %v9202 = vpack.c.b16 %v7543, %v7522
        %v9203 = vpack.c.b16 %v7544, %v7523
        %v9204 = vpack.c.b16 %v7545, %v7524
        %v9205 = vpack.c.b16 %v7546, %v7525
        %v9206 = vpack.c.b16 %v7547, %v7526
        %v9207 = vpack.c.b16 %v7548, %v7527
        %v9208 = vpack.c.b16 %v7549, %v7528
        %v9209 = vpack.c.b16 %v7550, %v7529
        %v9210 = vpack.c.b16 %v7551, %v7530
        %v9211 = vpack.c.b16 %v7552, %v7531
        %v9212 = vpack.c.b16 %v7553, %v7532
        %v9213 = vpack.c.b16 %v7554, %v7533
        %v9214 = vpack.c.b16 %v7555, %v7534
        %v9215 = vpack.c.b16 %v7556, %v7535
        %v9216 = vpack.c.b16 %v7557, %v7536
        %v9217 = vpack.c.b16 %v7558, %v7537
        %v9218 = vpack.c.b16 %v7559, %v7538
        %v9219 = vpack.c.b16 %v7560, %v7539
        %v9220 = vpack.c.b16 %v7582, %v7561
        %v9221 = vpack.c.b16 %v7583, %v7562
        %v9222 = vpack.c.b16 %v7584, %v7563
        %v9223 = vpack.c.b16 %v7585, %v7564
        %v9224 = vpack.c.b16 %v7586, %v7565
        %v9225 = vpack.c.b16 %v7587, %v7566
        %v9226 = vpack.c.b16 %v7588, %v7567
        %v9227 = vpack.c.b16 %v7589, %v7568
        %v9228 = vpack.c.b16 %v7590, %v7569
        %v9229 = vpack.c.b16 %v7591, %v7570
        %v9230 = vpack.c.b16 %v7592, %v7571
        %v9231 = vpack.c.b16 %v7593, %v7572
        %v9232 = vpack.c.b16 %v7594, %v7573
        %v9233 = vpack.c.b16 %v7595, %v7574
        %v9234 = vpack.c.b16 %v7596, %v7575
        %v9235 = vpack.c.b16 %v7597, %v7576
        %v9236 = vpack.c.b16 %v7598, %v7577
        %v9237 = vpack.c.b16 %v7599, %v7578
        %v9238 = vpack.c.b16 %v7600, %v7579
        %v9239 = vpack.c.b16 %v7601, %v7580
        %v9240 = vpack.c.b16 %v7602, %v7581
        %v9241 = vpack.c.b16 %v7624, %v7603
        %v9242 = vpack.c.b16 %v7625, %v7604
        %v9243 = vpack.c.b16 %v7626, %v7605
        %v9244 = vpack.c.b16 %v7627, %v7606
        %v9245 = vpack.c.b16 %v7628, %v7607
        %v9246 = vpack.c.b16 %v7629, %v7608
        %v9247 = vpack.c.b16 %v7630, %v7609
        %v9248 = vpack.c.b16 %v7631, %v7610
        %v9249 = vpack.c.b16 %v7632, %v7611
        %v9250 = vpack.c.b16 %v7633, %v7612
        %v9251 = vpack.c.b16 %v7634, %v7613
        %v9252 = vpack.c.b16 %v7635, %v7614
        %v9253 = vpack.c.b16 %v7636, %v7615
        %v9254 = vpack.c.b16 %v7637, %v7616
        %v9255 = vpack.c.b16 %v7638, %v7617
        %v9256 = vpack.c.b16 %v7639, %v7618
        %v9257 = vpack.c.b16 %v7640, %v7619
        %v9258 = vpack.c.b16 %v7641, %v7620
        %v9259 = vpack.c.b16 %v7642, %v7621
        %v9260 = vpack.c.b16 %v7643, %v7622
        %v9261 = vpack.c.b16 %v7644, %v7623
        %v9262 = vpack.c.b16 %v7666, %v7645
        %v9263 = vpack.c.b16 %v7667, %v7646
        %v9264 = vpack.c.b16 %v7668, %v7647
        %v9265 = vpack.c.b16 %v7669, %v7648
        %v9266 = vpack.c.b16 %v7670, %v7649
        %v9267 = vpack.c.b16 %v7671, %v7650
        %v9268 = vpack.c.b16 %v7672, %v7651
        %v9269 = vpack.c.b16 %v7673, %v7652
        %v9270 = vpack.c.b16 %v7674, %v7653
        %v9271 = vpack.c.b16 %v7675, %v7654
        %v9272 = vpack.c.b16 %v7676, %v7655
        %v9273 = vpack.c.b16 %v7677, %v7656
        %v9274 = vpack.c.b16 %v7678, %v7657
        %v9275 = vpack.c.b16 %v7679, %v7658
        %v9276 = vpack.c.b16 %v7680, %v7659
        %v9277 = vpack.c.b16 %v7681, %v7660
        %v9278 = vpack.c.b16 %v7682, %v7661
        %v9279 = vpack.c.b16 %v7683, %v7662
        %v9280 = vpack.c.b16 %v7684, %v7663
        %v9281 = vpack.c.b16 %v7685, %v7664
        %v9282 = vpack.c.b16 %v7686, %v7665
        %v9283 = vpack.c.b16 %v7708, %v7687
        %v9284 = vpack.c.b16 %v7709, %v7688
        %v9285 = vpack.c.b16 %v7710, %v7689
        %v9286 = vpack.c.b16 %v7711, %v7690
        %v9287 = vpack.c.b16 %v7712, %v7691
        %v9288 = vpack.c.b16 %v7713, %v7692
        %v9289 = vpack.c.b16 %v7714, %v7693
        %v9290 = vpack.c.b16 %v7715, %v7694
        %v9291 = vpack.c.b16 %v7716, %v7695
        %v9292 = vpack.c.b16 %v7717, %v7696
        %v9293 = vpack.c.b16 %v7718, %v7697
        %v9294 = vpack.c.b16 %v7719, %v7698
        %v9295 = vpack.c.b16 %v7720, %v7699
        %v9296 = vpack.c.b16 %v7721, %v7700
        %v9297 = vpack.c.b16 %v7722, %v7701
        %v9298 = vpack.c.b16 %v7723, %v7702
        %v9299 = vpack.c.b16 %v7724, %v7703
        %v9300 = vpack.c.b16 %v7725, %v7704
        %v9301 = vpack.c.b16 %v7726, %v7705
        %v9302 = vpack.c.b16 %v7727, %v7706
        %v9303 = vpack.c.b16 %v7728, %v7707
        %v9304 = vpack.c.b16 %v7750, %v7729
        %v9305 = vpack.c.b16 %v7751, %v7730
        %v9306 = vpack.c.b16 %v7752, %v7731
        %v9307 = vpack.c.b16 %v7753, %v7732
        %v9308 = vpack.c.b16 %v7754, %v7733
        %v9309 = vpack.c.b16 %v7755, %v7734
        %v9310 = vpack.c.b16 %v7756, %v7735
        %v9311 = vpack.c.b16 %v7757, %v7736
        %v9312 = vpack.c.b16 %v7758, %v7737
        %v9313 = vpack.c.b16 %v7759, %v7738
        %v9314 = vpack.c.b16 %v7760, %v7739
        %v9315 = vpack.c.b16 %v7761, %v7740
        %v9316 = vpack.c.b16 %v7762, %v7741
        %v9317 = vpack.c.b16 %v7763, %v7742
        %v9318 = vpack.c.b16 %v7764, %v7743
        %v9319 = vpack.c.b16 %v7765, %v7744
        %v9320 = vpack.c.b16 %v7766, %v7745
        %v9321 = vpack.c.b16 %v7767, %v7746
        %v9322 = vpack.c.b16 %v7768, %v7747
        %v9323 = vpack.c.b16 %v7769, %v7748
        %v9324 = vpack.c.b16 %v7770, %v7749
        %v9325 = vpack.c.b16 %v7792, %v7771
        %v9326 = vpack.c.b16 %v7793, %v7772
        %v9327 = vpack.c.b16 %v7794, %v7773
        %v9328 = vpack.c.b16 %v7795, %v7774
        %v9329 = vpack.c.b16 %v7796, %v7775
        %v9330 = vpack.c.b16 %v7797, %v7776
        %v9331 = vpack.c.b16 %v7798, %v7777
        %v9332 = vpack.c.b16 %v7799, %v7778
        %v9333 = vpack.c.b16 %v7800, %v7779
        %v9334 = vpack.c.b16 %v7801, %v7780
        %v9335 = vpack.c.b16 %v7802, %v7781
        %v9336 = vpack.c.b16 %v7803, %v7782
        %v9337 = vpack.c.b16 %v7804, %v7783
        %v9338 = vpack.c.b16 %v7805, %v7784
        %v9339 = vpack.c.b16 %v7806, %v7785
        %v9340 = vpack.c.b16 %v7807, %v7786
        %v9341 = vpack.c.b16 %v7808, %v7787
        %v9342 = vpack.c.b16 %v7809, %v7788
        %v9343 = vpack.c.b16 %v7810, %v7789
        %v9344 = vpack.c.b16 %v7811, %v7790
        %v9345 = vpack.c.b16 %v7812, %v7791
        %v9346 = vpack.c.b16 %v7834, %v7813
        %v9347 = vpack.c.b16 %v7835, %v7814
        %v9348 = vpack.c.b16 %v7836, %v7815
        %v9349 = vpack.c.b16 %v7837, %v7816
        %v9350 = vpack.c.b16 %v7838, %v7817
        %v9351 = vpack.c.b16 %v7839, %v7818
        %v9352 = vpack.c.b16 %v7840, %v7819
        %v9353 = vpack.c.b16 %v7841, %v7820
        %v9354 = vpack.c.b16 %v7842, %v7821
        %v9355 = vpack.c.b16 %v7843, %v7822
        %v9356 = vpack.c.b16 %v7844, %v7823
        %v9357 = vpack.c.b16 %v7845, %v7824
        %v9358 = vpack.c.b16 %v7846, %v7825
        %v9359 = vpack.c.b16 %v7847, %v7826
        %v9360 = vpack.c.b16 %v7848, %v7827
        %v9361 = vpack.c.b16 %v7849, %v7828
        %v9362 = vpack.c.b16 %v7850, %v7829
        %v9363 = vpack.c.b16 %v7851, %v7830
        %v9364 = vpack.c.b16 %v7852, %v7831
        %v9365 = vpack.c.b16 %v7853, %v7832
        %v9366 = vpack.c.b16 %v7854, %v7833
        %v9367 = vpack.c.b16 %v7876, %v7855
        %v9368 = vpack.c.b16 %v7877, %v7856
        %v9369 = vpack.c.b16 %v7878, %v7857
        %v9370 = vpack.c.b16 %v7879, %v7858
        %v9371 = vpack.c.b16 %v7880, %v7859
        %v9372 = vpack.c.b16 %v7881, %v7860
        %v9373 = vpack.c.b16 %v7882, %v7861
        %v9374 = vpack.c.b16 %v7883, %v7862
        %v9375 = vpack.c.b16 %v7884, %v7863
        %v9376 = vpack.c.b16 %v7885, %v7864
        %v9377 = vpack.c.b16 %v7886, %v7865
        %v9378 = vpack.c.b16 %v7887, %v7866
        %v9379 = vpack.c.b16 %v7888, %v7867
        %v9380 = vpack.c.b16 %v7889, %v7868
        %v9381 = vpack.c.b16 %v7890, %v7869
        %v9382 = vpack.c.b16 %v7891, %v7870
        %v9383 = vpack.c.b16 %v7892, %v7871
        %v9384 = vpack.c.b16 %v7893, %v7872
        %v9385 = vpack.c.b16 %v7894, %v7873
        %v9386 = vpack.c.b16 %v7895, %v7874
        %v9387 = vpack.c.b16 %v7896, %v7875
        %v9388 = vpack.c.b16 %v7918, %v7897
        %v9389 = vpack.c.b16 %v7919, %v7898
        %v9390 = vpack.c.b16 %v7920, %v7899
        %v9391 = vpack.c.b16 %v7921, %v7900
        %v9392 = vpack.c.b16 %v7922, %v7901
        %v9393 = vpack.c.b16 %v7923, %v7902
        %v9394 = vpack.c.b16 %v7924, %v7903
        %v9395 = vpack.c.b16 %v7925, %v7904
        %v9396 = vpack.c.b16 %v7926, %v7905
        %v9397 = vpack.c.b16 %v7927, %v7906
        %v9398 = vpack.c.b16 %v7928, %v7907
        %v9399 = vpack.c.b16 %v7929, %v7908
        %v9400 = vpack.c.b16 %v7930, %v7909
        %v9401 = vpack.c.b16 %v7931, %v7910
        %v9402 = vpack.c.b16 %v7932, %v7911
        %v9403 = vpack.c.b16 %v7933, %v7912
        %v9404 = vpack.c.b16 %v7934, %v7913
        %v9405 = vpack.c.b16 %v7935, %v7914
        %v9406 = vpack.c.b16 %v7936, %v7915
        %v9407 = vpack.c.b16 %v7937, %v7916
        %v9408 = vpack.c.b16 %v7938, %v7917
        %v9409 = vpack.c.b16 %v7960, %v7939
        %v9410 = vpack.c.b16 %v7961, %v7940
        %v9411 = vpack.c.b16 %v7962, %v7941
        %v9412 = vpack.c.b16 %v7963, %v7942
        %v9413 = vpack.c.b16 %v7964, %v7943
        %v9414 = vpack.c.b16 %v7965, %v7944
        %v9415 = vpack.c.b16 %v7966, %v7945
        %v9416 = vpack.c.b16 %v7967, %v7946
        %v9417 = vpack.c.b16 %v7968, %v7947
        %v9418 = vpack.c.b16 %v7969, %v7948
        %v9419 = vpack.c.b16 %v7970, %v7949
        %v9420 = vpack.c.b16 %v7971, %v7950
        %v9421 = vpack.c.b16 %v7972, %v7951
        %v9422 = vpack.c.b16 %v7973, %v7952
        %v9423 = vpack.c.b16 %v7974, %v7953
        %v9424 = vpack.c.b16 %v7975, %v7954
        %v9425 = vpack.c.b16 %v7976, %v7955
        %v9426 = vpack.c.b16 %v7977, %v7956
        %v9427 = vpack.c.b16 %v7978, %v7957
        %v9428 = vpack.c.b16 %v7979, %v7958
        %v9429 = vpack.c.b16 %v7980, %v7959
        %v9430 = vpack.c.b16 %v8002, %v7981
        %v9431 = vpack.c.b16 %v8003, %v7982
        %v9432 = vpack.c.b16 %v8004, %v7983
        %v9433 = vpack.c.b16 %v8005, %v7984
        %v9434 = vpack.c.b16 %v8006, %v7985
        %v9435 = vpack.c.b16 %v8007, %v7986
        %v9436 = vpack.c.b16 %v8008, %v7987
        %v9437 = vpack.c.b16 %v8009, %v7988
        %v9438 = vpack.c.b16 %v8010, %v7989
        %v9439 = vpack.c.b16 %v8011, %v7990
        %v9440 = vpack.c.b16 %v8012, %v7991
        %v9441 = vpack.c.b16 %v8013, %v7992
        %v9442 = vpack.c.b16 %v8014, %v7993
        %v9443 = vpack.c.b16 %v8015, %v7994
        %v9444 = vpack.c.b16 %v8016, %v7995
        %v9445 = vpack.c.b16 %v8017, %v7996
        %v9446 = vpack.c.b16 %v8018, %v7997
        %v9447 = vpack.c.b16 %v8019, %v7998
        %v9448 = vpack.c.b16 %v8020, %v7999
        %v9449 = vpack.c.b16 %v8021, %v8000
        %v9450 = vpack.c.b16 %v8022, %v8001
        %v9451 = vpack.c.b16 %v8044, %v8023
        %v9452 = vpack.c.b16 %v8045, %v8024
        %v9453 = vpack.c.b16 %v8046, %v8025
        %v9454 = vpack.c.b16 %v8047, %v8026
        %v9455 = vpack.c.b16 %v8048, %v8027
        %v9456 = vpack.c.b16 %v8049, %v8028
        %v9457 = vpack.c.b16 %v8050, %v8029
        %v9458 = vpack.c.b16 %v8051, %v8030
        %v9459 = vpack.c.b16 %v8052, %v8031
        %v9460 = vpack.c.b16 %v8053, %v8032
        %v9461 = vpack.c.b16 %v8054, %v8033
        %v9462 = vpack.c.b16 %v8055, %v8034
        %v9463 = vpack.c.b16 %v8056, %v8035
        %v9464 = vpack.c.b16 %v8057, %v8036
        %v9465 = vpack.c.b16 %v8058, %v8037
        %v9466 = vpack.c.b16 %v8059, %v8038
        %v9467 = vpack.c.b16 %v8060, %v8039
        %v9468 = vpack.c.b16 %v8061, %v8040
        %v9469 = vpack.c.b16 %v8062, %v8041
        %v9470 = vpack.c.b16 %v8063, %v8042
        %v9471 = vpack.c.b16 %v8064, %v8043
        %v9472 = vpack.c.b16 %v8086, %v8065
        %v9473 = vpack.c.b16 %v8087, %v8066
        %v9474 = vpack.c.b16 %v8088, %v8067
        %v9475 = vpack.c.b16 %v8089, %v8068
        %v9476 = vpack.c.b16 %v8090, %v8069
        %v9477 = vpack.c.b16 %v8091, %v8070
        %v9478 = vpack.c.b16 %v8092, %v8071
        %v9479 = vpack.c.b16 %v8093, %v8072
        %v9480 = vpack.c.b16 %v8094, %v8073
        %v9481 = vpack.c.b16 %v8095, %v8074
        %v9482 = vpack.c.b16 %v8096, %v8075
        %v9483 = vpack.c.b16 %v8097, %v8076
        %v9484 = vpack.c.b16 %v8098, %v8077
        %v9485 = vpack.c.b16 %v8099, %v8078
        %v9486 = vpack.c.b16 %v8100, %v8079
        %v9487 = vpack.c.b16 %v8101, %v8080
        %v9488 = vpack.c.b16 %v8102, %v8081
        %v9489 = vpack.c.b16 %v8103, %v8082
        %v9490 = vpack.c.b16 %v8104, %v8083
        %v9491 = vpack.c.b16 %v8105, %v8084
        %v9492 = vpack.c.b16 %v8106, %v8085
        %v9493 = vpack.c.b16 %v8128, %v8107
        %v9494 = vpack.c.b16 %v8129, %v8108
        %v9495 = vpack.c.b16 %v8130, %v8109
        %v9496 = vpack.c.b16 %v8131, %v8110
        %v9497 = vpack.c.b16 %v8132, %v8111
        %v9498 = vpack.c.b16 %v8133, %v8112
        %v9499 = vpack.c.b16 %v8134, %v8113
        %v9500 = vpack.c.b16 %v8135, %v8114
        %v9501 = vpack.c.b16 %v8136, %v8115
        %v9502 = vpack.c.b16 %v8137, %v8116
        %v9503 = vpack.c.b16 %v8138, %v8117
        %v9504 = vpack.c.b16 %v8139, %v8118
        %v9505 = vpack.c.b16 %v8140, %v8119
        %v9506 = vpack.c.b16 %v8141, %v8120
        %v9507 = vpack.c.b16 %v8142, %v8121
        %v9508 = vpack.c.b16 %v8143, %v8122
        %v9509 = vpack.c.b16 %v8144, %v8123
        %v9510 = vpack.c.b16 %v8145, %v8124
        %v9511 = vpack.c.b16 %v8146, %v8125
        %v9512 = vpack.c.b16 %v8147, %v8126
        %v9513 = vpack.c.b16 %v8148, %v8127
        %v9514 = vpack.c.b16 %v8170, %v8149
        %v9515 = vpack.c.b16 %v8171, %v8150
        %v9516 = vpack.c.b16 %v8172, %v8151
        %v9517 = vpack.c.b16 %v8173, %v8152
        %v9518 = vpack.c.b16 %v8174, %v8153
        %v9519 = vpack.c.b16 %v8175, %v8154
        %v9520 = vpack.c.b16 %v8176, %v8155
        %v9521 = vpack.c.b16 %v8177, %v8156
        %v9522 = vpack.c.b16 %v8178, %v8157
        %v9523 = vpack.c.b16 %v8179, %v8158
        %v9524 = vpack.c.b16 %v8180, %v8159
        %v9525 = vpack.c.b16 %v8181, %v8160
        %v9526 = vpack.c.b16 %v8182, %v8161
        %v9527 = vpack.c.b16 %v8183, %v8162
        %v9528 = vpack.c.b16 %v8184, %v8163
        %v9529 = vpack.c.b16 %v8185, %v8164
        %v9530 = vpack.c.b16 %v8186, %v8165
        %v9531 = vpack.c.b16 %v8187, %v8166
        %v9532 = vpack.c.b16 %v8188, %v8167
        %v9533 = vpack.c.b16 %v8189, %v8168
        %v9534 = vpack.c.b16 %v8190, %v8169
        %10879 = vmatprep.subr.bf16.mxu0 %v8339
        %10880 = vmatpush1.bf16.msra.mxu0 %v8338
        %10881 = vmatprep.subr.bf16.mxu0 %v8318
        %10882 = vmatpush1.bf16.msra.mxu0 %v8317
        %10883 = vmatprep.subr.bf16.mxu0 %v8297
        %10884 = vmatpush1.bf16.msra.mxu0 %v8296
        %10885 = vmatprep.subr.bf16.mxu0 %v8276
        %10886 = vmatpush1.bf16.msra.mxu0 %v8275
        %10887 = vmatprep.subr.bf16.mxu0 %v8255
        %10888 = vmatpush1.bf16.msra.mxu0 %v8254
        %10889 = vmatprep.subr.bf16.mxu0 %v8234
        %10890 = vmatpush1.bf16.msra.mxu0 %v8233
        %10891 = vmatprep.subr.bf16.mxu0 %v8213
        %10892 = vmatpush1.bf16.msra.mxu0 %v8212
        %10893 = vmatprep.subr.bf16.mxu0 %v8192
        %10894 = vmatpush1.bf16.msra.mxu0 %v8191
        %10895 = vmatprep.subr.bf16.mxu0 %v8507
        %10896 = vmatpush2.bf16.msra.mxu0 %v8506
        %10897 = vmatprep.subr.bf16.mxu0 %v8486
        %10898 = vmatpush2.bf16.msra.mxu0 %v8485
        %10899 = vmatprep.subr.bf16.mxu0 %v8465
        %10900 = vmatpush2.bf16.msra.mxu0 %v8464
        %10901 = vmatprep.subr.bf16.mxu0 %v8444
        %10902 = vmatpush2.bf16.msra.mxu0 %v8443
        %10903 = vmatprep.subr.bf16.mxu0 %v8423
        %10904 = vmatpush2.bf16.msra.mxu0 %v8422
        %10905 = vmatprep.subr.bf16.mxu0 %v8402
        %10906 = vmatpush2.bf16.msra.mxu0 %v8401
        %10907 = vmatprep.subr.bf16.mxu0 %v8381
        %10908 = vmatpush2.bf16.msra.mxu0 %v8380
        %10909 = vmatprep.subr.bf16.mxu0 %v8360
        %10910 = vmatpush2.bf16.msra.mxu0 %v8359
        %10911 = vmatprep.mubr.bf16.mxu0 %v4080
        %10912 = vmatmul.mubr.bf16.gmra.mxu0 %v4079
        %v10913 = vpop.f32.mrf.mxu0
        %v10914 = vadd.f32 %v3965, %v10913
        %v10915 = vpop.f32.mrf.mxu0
        %v10916 = vadd.f32 %v3969, %v10915
        %v10917 = vpop.f32.mrf.mxu0
        %v10918 = vpop.f32.mrf.mxu0
        %10919 = vdwg.mxu0
        %10920 = vmatprep.subr.bf16.mxu0 %v8675
        %10921 = vmatpush1.bf16.msra.mxu0 %v8674
        %10922 = vmatprep.subr.bf16.mxu0 %v8654
        %10923 = vmatpush1.bf16.msra.mxu0 %v8653
        %10924 = vmatprep.subr.bf16.mxu0 %v8633
        %10925 = vmatpush1.bf16.msra.mxu0 %v8632
        %10926 = vmatprep.subr.bf16.mxu0 %v8612
        %10927 = vmatpush1.bf16.msra.mxu0 %v8611
        %10928 = vmatprep.subr.bf16.mxu0 %v8591
        %10929 = vmatpush1.bf16.msra.mxu0 %v8590
        %10930 = vmatprep.subr.bf16.mxu0 %v8570
        %10931 = vmatpush1.bf16.msra.mxu0 %v8569
        %10932 = vmatprep.subr.bf16.mxu0 %v8549
        %10933 = vmatpush1.bf16.msra.mxu0 %v8548
        %10934 = vmatprep.subr.bf16.mxu0 %v8528
        %10935 = vmatpush1.bf16.msra.mxu0 %v8527
        %10936 = vmatprep.subr.bf16.mxu0 %v8843
        %10937 = vmatpush2.bf16.msra.mxu0 %v8842
        %10938 = vmatprep.subr.bf16.mxu0 %v8822
        %10939 = vmatpush2.bf16.msra.mxu0 %v8821
        %10940 = vmatprep.subr.bf16.mxu0 %v8801
        %10941 = vmatpush2.bf16.msra.mxu0 %v8800
        %10942 = vmatprep.subr.bf16.mxu0 %v8780
        %10943 = vmatpush2.bf16.msra.mxu0 %v8779
        %10944 = vmatprep.subr.bf16.mxu0 %v8759
        %10945 = vmatpush2.bf16.msra.mxu0 %v8758
        %10946 = vmatprep.subr.bf16.mxu0 %v8738
        %10947 = vmatpush2.bf16.msra.mxu0 %v8737
        %10948 = vmatprep.subr.bf16.mxu0 %v8717
        %10949 = vmatpush2.bf16.msra.mxu0 %v8716
        %10950 = vmatprep.subr.bf16.mxu0 %v8696
        %10951 = vmatpush2.bf16.msra.mxu0 %v8695
        %10952 = vmatprep.mubr.bf16.mxu0 %v4082
        %10953 = vmatmul.mubr.bf16.gmra.mxu0 %v4081
        %v10954 = vpop.f32.mrf.mxu0
        %v10955 = vadd.f32 %v10914, %v10954
        %v10956 = vpop.f32.mrf.mxu0
        %v10957 = vadd.f32 %v10916, %v10956
        %v10958 = vpop.f32.mrf.mxu0
        %v10959 = vpop.f32.mrf.mxu0
        %10960 = vdwg.mxu0
        %10961 = vmatprep.subr.bf16.mxu0 %v9011
        %10962 = vmatpush1.bf16.msra.mxu0 %v9010
        %10963 = vmatprep.subr.bf16.mxu0 %v8990
        %10964 = vmatpush1.bf16.msra.mxu0 %v8989
        %10965 = vmatprep.subr.bf16.mxu0 %v8969
        %10966 = vmatpush1.bf16.msra.mxu0 %v8968
        %10967 = vmatprep.subr.bf16.mxu0 %v8948
        %10968 = vmatpush1.bf16.msra.mxu0 %v8947
        %10969 = vmatprep.subr.bf16.mxu0 %v8927
        %10970 = vmatpush1.bf16.msra.mxu0 %v8926
        %10971 = vmatprep.subr.bf16.mxu0 %v8906
        %10972 = vmatpush1.bf16.msra.mxu0 %v8905
        %10973 = vmatprep.subr.bf16.mxu0 %v8885
        %10974 = vmatpush1.bf16.msra.mxu0 %v8884
        %10975 = vmatprep.subr.bf16.mxu0 %v8864
        %10976 = vmatpush1.bf16.msra.mxu0 %v8863
        %10977 = vmatprep.subr.bf16.mxu0 %v9179
        %10978 = vmatpush2.bf16.msra.mxu0 %v9178
        %10979 = vmatprep.subr.bf16.mxu0 %v9158
        %10980 = vmatpush2.bf16.msra.mxu0 %v9157
        %10981 = vmatprep.subr.bf16.mxu0 %v9137
        %10982 = vmatpush2.bf16.msra.mxu0 %v9136
        %10983 = vmatprep.subr.bf16.mxu0 %v9116
        %10984 = vmatpush2.bf16.msra.mxu0 %v9115
        %10985 = vmatprep.subr.bf16.mxu0 %v9095
        %10986 = vmatpush2.bf16.msra.mxu0 %v9094
        %10987 = vmatprep.subr.bf16.mxu0 %v9074
        %10988 = vmatpush2.bf16.msra.mxu0 %v9073
        %10989 = vmatprep.subr.bf16.mxu0 %v9053
        %10990 = vmatpush2.bf16.msra.mxu0 %v9052
        %10991 = vmatprep.subr.bf16.mxu0 %v9032
        %10992 = vmatpush2.bf16.msra.mxu0 %v9031
        %10993 = vmatprep.mubr.bf16.mxu0 %v4084
        %10994 = vmatmul.mubr.bf16.gmra.mxu0 %v4083
        %v10995 = vpop.f32.mrf.mxu0
        %v10996 = vadd.f32 %v10955, %v10995
        %v10997 = vpop.f32.mrf.mxu0
        %v10998 = vadd.f32 %v10957, %v10997
        %v10999 = vpop.f32.mrf.mxu0
        %v11000 = vpop.f32.mrf.mxu0
        %11001 = vdwg.mxu0
        %11002 = vmatprep.subr.bf16.mxu0 %v9347
        %11003 = vmatpush1.bf16.msra.mxu0 %v9346
        %11004 = vmatprep.subr.bf16.mxu0 %v9326
        %11005 = vmatpush1.bf16.msra.mxu0 %v9325
        %11006 = vmatprep.subr.bf16.mxu0 %v9305
        %11007 = vmatpush1.bf16.msra.mxu0 %v9304
        %11008 = vmatprep.subr.bf16.mxu0 %v9284
        %11009 = vmatpush1.bf16.msra.mxu0 %v9283
        %11010 = vmatprep.subr.bf16.mxu0 %v9263
        %11011 = vmatpush1.bf16.msra.mxu0 %v9262
        %11012 = vmatprep.subr.bf16.mxu0 %v9242
        %11013 = vmatpush1.bf16.msra.mxu0 %v9241
        %11014 = vmatprep.subr.bf16.mxu0 %v9221
        %11015 = vmatpush1.bf16.msra.mxu0 %v9220
        %11016 = vmatprep.subr.bf16.mxu0 %v9200
        %11017 = vmatpush1.bf16.msra.mxu0 %v9199
        %11018 = vmatprep.subr.bf16.mxu0 %v9515
        %11019 = vmatpush2.bf16.msra.mxu0 %v9514
        %11020 = vmatprep.subr.bf16.mxu0 %v9494
        %11021 = vmatpush2.bf16.msra.mxu0 %v9493
        %11022 = vmatprep.subr.bf16.mxu0 %v9473
        %11023 = vmatpush2.bf16.msra.mxu0 %v9472
        %11024 = vmatprep.subr.bf16.mxu0 %v9452
        %11025 = vmatpush2.bf16.msra.mxu0 %v9451
        %11026 = vmatprep.subr.bf16.mxu0 %v9431
        %11027 = vmatpush2.bf16.msra.mxu0 %v9430
        %11028 = vmatprep.subr.bf16.mxu0 %v9410
        %11029 = vmatpush2.bf16.msra.mxu0 %v9409
        %11030 = vmatprep.subr.bf16.mxu0 %v9389
        %11031 = vmatpush2.bf16.msra.mxu0 %v9388
        %11032 = vmatprep.subr.bf16.mxu0 %v9368
        %11033 = vmatpush2.bf16.msra.mxu0 %v9367
        %11034 = vmatprep.mubr.bf16.mxu0 %v4086
        %11035 = vmatmul.mubr.bf16.gmra.mxu0 %v4085
        %v11036 = vpop.f32.mrf.mxu0
        %v11037 = vadd.f32 %v10996, %v11036
        %v11038 = vpop.f32.mrf.mxu0
        %v11039 = vadd.f32 %v10998, %v11038
        %v11040 = vpop.f32.mrf.mxu0
        %v11041 = vpop.f32.mrf.mxu0
        %11042 = vdwg.mxu0
        %11043 = vmatprep.subr.bf16.mxu0 %v8341
        %11044 = vmatpush1.bf16.msra.mxu0 %v8340
        %11045 = vmatprep.subr.bf16.mxu0 %v8320
        %11046 = vmatpush1.bf16.msra.mxu0 %v8319
        %11047 = vmatprep.subr.bf16.mxu0 %v8299
        %11048 = vmatpush1.bf16.msra.mxu0 %v8298
        %11049 = vmatprep.subr.bf16.mxu0 %v8278
        %11050 = vmatpush1.bf16.msra.mxu0 %v8277
        %11051 = vmatprep.subr.bf16.mxu0 %v8257
        %11052 = vmatpush1.bf16.msra.mxu0 %v8256
        %11053 = vmatprep.subr.bf16.mxu0 %v8236
        %11054 = vmatpush1.bf16.msra.mxu0 %v8235
        %11055 = vmatprep.subr.bf16.mxu0 %v8215
        %11056 = vmatpush1.bf16.msra.mxu0 %v8214
        %11057 = vmatprep.subr.bf16.mxu0 %v8194
        %11058 = vmatpush1.bf16.msra.mxu0 %v8193
        %11059 = vmatprep.subr.bf16.mxu0 %v8509
        %11060 = vmatpush2.bf16.msra.mxu0 %v8508
        %11061 = vmatprep.subr.bf16.mxu0 %v8488
        %11062 = vmatpush2.bf16.msra.mxu0 %v8487
        %11063 = vmatprep.subr.bf16.mxu0 %v8467
        %11064 = vmatpush2.bf16.msra.mxu0 %v8466
        %11065 = vmatprep.subr.bf16.mxu0 %v8446
        %11066 = vmatpush2.bf16.msra.mxu0 %v8445
        %11067 = vmatprep.subr.bf16.mxu0 %v8425
        %11068 = vmatpush2.bf16.msra.mxu0 %v8424
        %11069 = vmatprep.subr.bf16.mxu0 %v8404
        %11070 = vmatpush2.bf16.msra.mxu0 %v8403
        %11071 = vmatprep.subr.bf16.mxu0 %v8383
        %11072 = vmatpush2.bf16.msra.mxu0 %v8382
        %11073 = vmatprep.subr.bf16.mxu0 %v8362
        %11074 = vmatpush2.bf16.msra.mxu0 %v8361
        %11075 = vmatprep.mubr.bf16.mxu0 %v4080
        %11076 = vmatmul.mubr.bf16.gmra.mxu0 %v4079
        %v11077 = vpop.f32.mrf.mxu0
        %v11078 = vadd.f32 %v3973, %v11077
        %v11079 = vpop.f32.mrf.mxu0
        %v11080 = vadd.f32 %v3977, %v11079
        %v11081 = vpop.f32.mrf.mxu0
        %v11082 = vpop.f32.mrf.mxu0
        %11083 = vdwg.mxu0
        %11084 = vmatprep.subr.bf16.mxu0 %v8677
        %11085 = vmatpush1.bf16.msra.mxu0 %v8676
        %11086 = vmatprep.subr.bf16.mxu0 %v8656
        %11087 = vmatpush1.bf16.msra.mxu0 %v8655
        %11088 = vmatprep.subr.bf16.mxu0 %v8635
        %11089 = vmatpush1.bf16.msra.mxu0 %v8634
        %11090 = vmatprep.subr.bf16.mxu0 %v8614
        %11091 = vmatpush1.bf16.msra.mxu0 %v8613
        %11092 = vmatprep.subr.bf16.mxu0 %v8593
        %11093 = vmatpush1.bf16.msra.mxu0 %v8592
        %11094 = vmatprep.subr.bf16.mxu0 %v8572
        %11095 = vmatpush1.bf16.msra.mxu0 %v8571
        %11096 = vmatprep.subr.bf16.mxu0 %v8551
        %11097 = vmatpush1.bf16.msra.mxu0 %v8550
        %11098 = vmatprep.subr.bf16.mxu0 %v8530
        %11099 = vmatpush1.bf16.msra.mxu0 %v8529
        %11100 = vmatprep.subr.bf16.mxu0 %v8845
        %11101 = vmatpush2.bf16.msra.mxu0 %v8844
        %11102 = vmatprep.subr.bf16.mxu0 %v8824
        %11103 = vmatpush2.bf16.msra.mxu0 %v8823
        %11104 = vmatprep.subr.bf16.mxu0 %v8803
        %11105 = vmatpush2.bf16.msra.mxu0 %v8802
        %11106 = vmatprep.subr.bf16.mxu0 %v8782
        %11107 = vmatpush2.bf16.msra.mxu0 %v8781
        %11108 = vmatprep.subr.bf16.mxu0 %v8761
        %11109 = vmatpush2.bf16.msra.mxu0 %v8760
        %11110 = vmatprep.subr.bf16.mxu0 %v8740
        %11111 = vmatpush2.bf16.msra.mxu0 %v8739
        %11112 = vmatprep.subr.bf16.mxu0 %v8719
        %11113 = vmatpush2.bf16.msra.mxu0 %v8718
        %11114 = vmatprep.subr.bf16.mxu0 %v8698
        %11115 = vmatpush2.bf16.msra.mxu0 %v8697
        %11116 = vmatprep.mubr.bf16.mxu0 %v4082
        %11117 = vmatmul.mubr.bf16.gmra.mxu0 %v4081
        %v11118 = vpop.f32.mrf.mxu0
        %v11119 = vadd.f32 %v11078, %v11118
        %v11120 = vpop.f32.mrf.mxu0
        %v11121 = vadd.f32 %v11080, %v11120
        %v11122 = vpop.f32.mrf.mxu0
        %v11123 = vpop.f32.mrf.mxu0
        %11124 = vdwg.mxu0
        %11125 = vmatprep.subr.bf16.mxu0 %v9013
        %11126 = vmatpush1.bf16.msra.mxu0 %v9012
        %11127 = vmatprep.subr.bf16.mxu0 %v8992
        %11128 = vmatpush1.bf16.msra.mxu0 %v8991
        %11129 = vmatprep.subr.bf16.mxu0 %v8971
        %11130 = vmatpush1.bf16.msra.mxu0 %v8970
        %11131 = vmatprep.subr.bf16.mxu0 %v8950
        %11132 = vmatpush1.bf16.msra.mxu0 %v8949
        %11133 = vmatprep.subr.bf16.mxu0 %v8929
        %11134 = vmatpush1.bf16.msra.mxu0 %v8928
        %11135 = vmatprep.subr.bf16.mxu0 %v8908
        %11136 = vmatpush1.bf16.msra.mxu0 %v8907
        %11137 = vmatprep.subr.bf16.mxu0 %v8887
        %11138 = vmatpush1.bf16.msra.mxu0 %v8886
        %11139 = vmatprep.subr.bf16.mxu0 %v8866
        %11140 = vmatpush1.bf16.msra.mxu0 %v8865
        %11141 = vmatprep.subr.bf16.mxu0 %v9181
        %11142 = vmatpush2.bf16.msra.mxu0 %v9180
        %11143 = vmatprep.subr.bf16.mxu0 %v9160
        %11144 = vmatpush2.bf16.msra.mxu0 %v9159
        %11145 = vmatprep.subr.bf16.mxu0 %v9139
        %11146 = vmatpush2.bf16.msra.mxu0 %v9138
        %11147 = vmatprep.subr.bf16.mxu0 %v9118
        %11148 = vmatpush2.bf16.msra.mxu0 %v9117
        %11149 = vmatprep.subr.bf16.mxu0 %v9097
        %11150 = vmatpush2.bf16.msra.mxu0 %v9096
        %11151 = vmatprep.subr.bf16.mxu0 %v9076
        %11152 = vmatpush2.bf16.msra.mxu0 %v9075
        %11153 = vmatprep.subr.bf16.mxu0 %v9055
        %11154 = vmatpush2.bf16.msra.mxu0 %v9054
        %11155 = vmatprep.subr.bf16.mxu0 %v9034
        %11156 = vmatpush2.bf16.msra.mxu0 %v9033
        %11157 = vmatprep.mubr.bf16.mxu0 %v4084
        %11158 = vmatmul.mubr.bf16.gmra.mxu0 %v4083
        %v11159 = vpop.f32.mrf.mxu0
        %v11160 = vadd.f32 %v11119, %v11159
        %v11161 = vpop.f32.mrf.mxu0
        %v11162 = vadd.f32 %v11121, %v11161
        %v11163 = vpop.f32.mrf.mxu0
        %v11164 = vpop.f32.mrf.mxu0
        %11165 = vdwg.mxu0
        %11166 = vmatprep.subr.bf16.mxu0 %v9349
        %11167 = vmatpush1.bf16.msra.mxu0 %v9348
        %11168 = vmatprep.subr.bf16.mxu0 %v9328
        %11169 = vmatpush1.bf16.msra.mxu0 %v9327
        %11170 = vmatprep.subr.bf16.mxu0 %v9307
        %11171 = vmatpush1.bf16.msra.mxu0 %v9306
        %11172 = vmatprep.subr.bf16.mxu0 %v9286
        %11173 = vmatpush1.bf16.msra.mxu0 %v9285
        %11174 = vmatprep.subr.bf16.mxu0 %v9265
        %11175 = vmatpush1.bf16.msra.mxu0 %v9264
        %11176 = vmatprep.subr.bf16.mxu0 %v9244
        %11177 = vmatpush1.bf16.msra.mxu0 %v9243
        %11178 = vmatprep.subr.bf16.mxu0 %v9223
        %11179 = vmatpush1.bf16.msra.mxu0 %v9222
        %11180 = vmatprep.subr.bf16.mxu0 %v9202
        %11181 = vmatpush1.bf16.msra.mxu0 %v9201
        %11182 = vmatprep.subr.bf16.mxu0 %v9517
        %11183 = vmatpush2.bf16.msra.mxu0 %v9516
        %11184 = vmatprep.subr.bf16.mxu0 %v9496
        %11185 = vmatpush2.bf16.msra.mxu0 %v9495
        %11186 = vmatprep.subr.bf16.mxu0 %v9475
        %11187 = vmatpush2.bf16.msra.mxu0 %v9474
        %11188 = vmatprep.subr.bf16.mxu0 %v9454
        %11189 = vmatpush2.bf16.msra.mxu0 %v9453
        %11190 = vmatprep.subr.bf16.mxu0 %v9433
        %11191 = vmatpush2.bf16.msra.mxu0 %v9432
        %11192 = vmatprep.subr.bf16.mxu0 %v9412
        %11193 = vmatpush2.bf16.msra.mxu0 %v9411
        %11194 = vmatprep.subr.bf16.mxu0 %v9391
        %11195 = vmatpush2.bf16.msra.mxu0 %v9390
        %11196 = vmatprep.subr.bf16.mxu0 %v9370
        %11197 = vmatpush2.bf16.msra.mxu0 %v9369
        %11198 = vmatprep.mubr.bf16.mxu0 %v4086
        %11199 = vmatmul.mubr.bf16.gmra.mxu0 %v4085
        %v11200 = vpop.f32.mrf.mxu0
        %v11201 = vadd.f32 %v11160, %v11200
        %v11202 = vpop.f32.mrf.mxu0
        %v11203 = vadd.f32 %v11162, %v11202
        %v11204 = vpop.f32.mrf.mxu0
        %v11205 = vpop.f32.mrf.mxu0
        %11206 = vdwg.mxu0
        %11207 = vmatprep.subr.bf16.mxu0 %v8343
        %11208 = vmatpush1.bf16.msra.mxu0 %v8342
        %11209 = vmatprep.subr.bf16.mxu0 %v8322
        %11210 = vmatpush1.bf16.msra.mxu0 %v8321
        %11211 = vmatprep.subr.bf16.mxu0 %v8301
        %11212 = vmatpush1.bf16.msra.mxu0 %v8300
        %11213 = vmatprep.subr.bf16.mxu0 %v8280
        %11214 = vmatpush1.bf16.msra.mxu0 %v8279
        %11215 = vmatprep.subr.bf16.mxu0 %v8259
        %11216 = vmatpush1.bf16.msra.mxu0 %v8258
        %11217 = vmatprep.subr.bf16.mxu0 %v8238
        %11218 = vmatpush1.bf16.msra.mxu0 %v8237
        %11219 = vmatprep.subr.bf16.mxu0 %v8217
        %11220 = vmatpush1.bf16.msra.mxu0 %v8216
        %11221 = vmatprep.subr.bf16.mxu0 %v8196
        %11222 = vmatpush1.bf16.msra.mxu0 %v8195
        %11223 = vmatprep.subr.bf16.mxu0 %v8511
        %11224 = vmatpush2.bf16.msra.mxu0 %v8510
        %11225 = vmatprep.subr.bf16.mxu0 %v8490
        %11226 = vmatpush2.bf16.msra.mxu0 %v8489
        %11227 = vmatprep.subr.bf16.mxu0 %v8469
        %11228 = vmatpush2.bf16.msra.mxu0 %v8468
        %11229 = vmatprep.subr.bf16.mxu0 %v8448
        %11230 = vmatpush2.bf16.msra.mxu0 %v8447
        %11231 = vmatprep.subr.bf16.mxu0 %v8427
        %11232 = vmatpush2.bf16.msra.mxu0 %v8426
        %11233 = vmatprep.subr.bf16.mxu0 %v8406
        %11234 = vmatpush2.bf16.msra.mxu0 %v8405
        %11235 = vmatprep.subr.bf16.mxu0 %v8385
        %11236 = vmatpush2.bf16.msra.mxu0 %v8384
        %11237 = vmatprep.subr.bf16.mxu0 %v8364
        %11238 = vmatpush2.bf16.msra.mxu0 %v8363
        %11239 = vmatprep.mubr.bf16.mxu0 %v4080
        %11240 = vmatmul.mubr.bf16.gmra.mxu0 %v4079
        %v11241 = vpop.f32.mrf.mxu0
        %v11242 = vadd.f32 %v3981, %v11241
        %v11243 = vpop.f32.mrf.mxu0
        %v11244 = vadd.f32 %v3985, %v11243
        %v11245 = vpop.f32.mrf.mxu0
        %v11246 = vpop.f32.mrf.mxu0
        %11247 = vdwg.mxu0
        %11248 = vmatprep.subr.bf16.mxu0 %v8679
        %11249 = vmatpush1.bf16.msra.mxu0 %v8678
        %11250 = vmatprep.subr.bf16.mxu0 %v8658
        %11251 = vmatpush1.bf16.msra.mxu0 %v8657
        %11252 = vmatprep.subr.bf16.mxu0 %v8637
        %11253 = vmatpush1.bf16.msra.mxu0 %v8636
        %11254 = vmatprep.subr.bf16.mxu0 %v8616
        %11255 = vmatpush1.bf16.msra.mxu0 %v8615
        %11256 = vmatprep.subr.bf16.mxu0 %v8595
        %11257 = vmatpush1.bf16.msra.mxu0 %v8594
        %11258 = vmatprep.subr.bf16.mxu0 %v8574
        %11259 = vmatpush1.bf16.msra.mxu0 %v8573
        %11260 = vmatprep.subr.bf16.mxu0 %v8553
        %11261 = vmatpush1.bf16.msra.mxu0 %v8552
        %11262 = vmatprep.subr.bf16.mxu0 %v8532
        %11263 = vmatpush1.bf16.msra.mxu0 %v8531
        %11264 = vmatprep.subr.bf16.mxu0 %v8847
        %11265 = vmatpush2.bf16.msra.mxu0 %v8846
        %11266 = vmatprep.subr.bf16.mxu0 %v8826
        %11267 = vmatpush2.bf16.msra.mxu0 %v8825
        %11268 = vmatprep.subr.bf16.mxu0 %v8805
        %11269 = vmatpush2.bf16.msra.mxu0 %v8804
        %11270 = vmatprep.subr.bf16.mxu0 %v8784
        %11271 = vmatpush2.bf16.msra.mxu0 %v8783
        %11272 = vmatprep.subr.bf16.mxu0 %v8763
        %11273 = vmatpush2.bf16.msra.mxu0 %v8762
        %11274 = vmatprep.subr.bf16.mxu0 %v8742
        %11275 = vmatpush2.bf16.msra.mxu0 %v8741
        %11276 = vmatprep.subr.bf16.mxu0 %v8721
        %11277 = vmatpush2.bf16.msra.mxu0 %v8720
        %11278 = vmatprep.subr.bf16.mxu0 %v8700
        %11279 = vmatpush2.bf16.msra.mxu0 %v8699
        %11280 = vmatprep.mubr.bf16.mxu0 %v4082
        %11281 = vmatmul.mubr.bf16.gmra.mxu0 %v4081
        %v11282 = vpop.f32.mrf.mxu0
        %v11283 = vadd.f32 %v11242, %v11282
        %v11284 = vpop.f32.mrf.mxu0
        %v11285 = vadd.f32 %v11244, %v11284
        %v11286 = vpop.f32.mrf.mxu0
        %v11287 = vpop.f32.mrf.mxu0
        %11288 = vdwg.mxu0
        %11289 = vmatprep.subr.bf16.mxu0 %v9015
        %11290 = vmatpush1.bf16.msra.mxu0 %v9014
        %11291 = vmatprep.subr.bf16.mxu0 %v8994
        %11292 = vmatpush1.bf16.msra.mxu0 %v8993
        %11293 = vmatprep.subr.bf16.mxu0 %v8973
        %11294 = vmatpush1.bf16.msra.mxu0 %v8972
        %11295 = vmatprep.subr.bf16.mxu0 %v8952
        %11296 = vmatpush1.bf16.msra.mxu0 %v8951
        %11297 = vmatprep.subr.bf16.mxu0 %v8931
        %11298 = vmatpush1.bf16.msra.mxu0 %v8930
        %11299 = vmatprep.subr.bf16.mxu0 %v8910
        %11300 = vmatpush1.bf16.msra.mxu0 %v8909
        %11301 = vmatprep.subr.bf16.mxu0 %v8889
        %11302 = vmatpush1.bf16.msra.mxu0 %v8888
        %11303 = vmatprep.subr.bf16.mxu0 %v8868
        %11304 = vmatpush1.bf16.msra.mxu0 %v8867
        %11305 = vmatprep.subr.bf16.mxu0 %v9183
        %11306 = vmatpush2.bf16.msra.mxu0 %v9182
        %11307 = vmatprep.subr.bf16.mxu0 %v9162
        %11308 = vmatpush2.bf16.msra.mxu0 %v9161
        %11309 = vmatprep.subr.bf16.mxu0 %v9141
        %11310 = vmatpush2.bf16.msra.mxu0 %v9140
        %11311 = vmatprep.subr.bf16.mxu0 %v9120
        %11312 = vmatpush2.bf16.msra.mxu0 %v9119
        %11313 = vmatprep.subr.bf16.mxu0 %v9099
        %11314 = vmatpush2.bf16.msra.mxu0 %v9098
        %11315 = vmatprep.subr.bf16.mxu0 %v9078
        %11316 = vmatpush2.bf16.msra.mxu0 %v9077
        %11317 = vmatprep.subr.bf16.mxu0 %v9057
        %11318 = vmatpush2.bf16.msra.mxu0 %v9056
        %11319 = vmatprep.subr.bf16.mxu0 %v9036
        %11320 = vmatpush2.bf16.msra.mxu0 %v9035
        %11321 = vmatprep.mubr.bf16.mxu0 %v4084
        %11322 = vmatmul.mubr.bf16.gmra.mxu0 %v4083
        %v11323 = vpop.f32.mrf.mxu0
        %v11324 = vadd.f32 %v11283, %v11323
        %v11325 = vpop.f32.mrf.mxu0
        %v11326 = vadd.f32 %v11285, %v11325
        %v11327 = vpop.f32.mrf.mxu0
        %v11328 = vpop.f32.mrf.mxu0
        %11329 = vdwg.mxu0
        %11330 = vmatprep.subr.bf16.mxu0 %v9351
        %11331 = vmatpush1.bf16.msra.mxu0 %v9350
        %11332 = vmatprep.subr.bf16.mxu0 %v9330
        %11333 = vmatpush1.bf16.msra.mxu0 %v9329
        %11334 = vmatprep.subr.bf16.mxu0 %v9309
        %11335 = vmatpush1.bf16.msra.mxu0 %v9308
        %11336 = vmatprep.subr.bf16.mxu0 %v9288
        %11337 = vmatpush1.bf16.msra.mxu0 %v9287
        %11338 = vmatprep.subr.bf16.mxu0 %v9267
        %11339 = vmatpush1.bf16.msra.mxu0 %v9266
        %11340 = vmatprep.subr.bf16.mxu0 %v9246
        %11341 = vmatpush1.bf16.msra.mxu0 %v9245
        %11342 = vmatprep.subr.bf16.mxu0 %v9225
        %11343 = vmatpush1.bf16.msra.mxu0 %v9224
        %11344 = vmatprep.subr.bf16.mxu0 %v9204
        %11345 = vmatpush1.bf16.msra.mxu0 %v9203
        %11346 = vmatprep.subr.bf16.mxu0 %v9519
        %11347 = vmatpush2.bf16.msra.mxu0 %v9518
        %11348 = vmatprep.subr.bf16.mxu0 %v9498
        %11349 = vmatpush2.bf16.msra.mxu0 %v9497
        %11350 = vmatprep.subr.bf16.mxu0 %v9477
        %11351 = vmatpush2.bf16.msra.mxu0 %v9476
        %11352 = vmatprep.subr.bf16.mxu0 %v9456
        %11353 = vmatpush2.bf16.msra.mxu0 %v9455
        %11354 = vmatprep.subr.bf16.mxu0 %v9435
        %11355 = vmatpush2.bf16.msra.mxu0 %v9434
        %11356 = vmatprep.subr.bf16.mxu0 %v9414
        %11357 = vmatpush2.bf16.msra.mxu0 %v9413
        %11358 = vmatprep.subr.bf16.mxu0 %v9393
        %11359 = vmatpush2.bf16.msra.mxu0 %v9392
        %11360 = vmatprep.subr.bf16.mxu0 %v9372
        %11361 = vmatpush2.bf16.msra.mxu0 %v9371
        %11362 = vmatprep.mubr.bf16.mxu0 %v4086
        %11363 = vmatmul.mubr.bf16.gmra.mxu0 %v4085
        %v11364 = vpop.f32.mrf.mxu0
        %v11365 = vadd.f32 %v11324, %v11364
        %v11366 = vpop.f32.mrf.mxu0
        %v11367 = vadd.f32 %v11326, %v11366
        %v11368 = vpop.f32.mrf.mxu0
        %v11369 = vpop.f32.mrf.mxu0
        %11370 = vdwg.mxu0
        %11371 = vmatprep.subr.bf16.mxu0 %v8345
        %11372 = vmatpush1.bf16.msra.mxu0 %v8344
        %11373 = vmatprep.subr.bf16.mxu0 %v8324
        %11374 = vmatpush1.bf16.msra.mxu0 %v8323
        %11375 = vmatprep.subr.bf16.mxu0 %v8303
        %11376 = vmatpush1.bf16.msra.mxu0 %v8302
        %11377 = vmatprep.subr.bf16.mxu0 %v8282
        %11378 = vmatpush1.bf16.msra.mxu0 %v8281
        %11379 = vmatprep.subr.bf16.mxu0 %v8261
        %11380 = vmatpush1.bf16.msra.mxu0 %v8260
        %11381 = vmatprep.subr.bf16.mxu0 %v8240
        %11382 = vmatpush1.bf16.msra.mxu0 %v8239
        %11383 = vmatprep.subr.bf16.mxu0 %v8219
        %11384 = vmatpush1.bf16.msra.mxu0 %v8218
        %11385 = vmatprep.subr.bf16.mxu0 %v8198
        %11386 = vmatpush1.bf16.msra.mxu0 %v8197
        %11387 = vmatprep.subr.bf16.mxu0 %v8513
        %11388 = vmatpush2.bf16.msra.mxu0 %v8512
        %11389 = vmatprep.subr.bf16.mxu0 %v8492
        %11390 = vmatpush2.bf16.msra.mxu0 %v8491
        %11391 = vmatprep.subr.bf16.mxu0 %v8471
        %11392 = vmatpush2.bf16.msra.mxu0 %v8470
        %11393 = vmatprep.subr.bf16.mxu0 %v8450
        %11394 = vmatpush2.bf16.msra.mxu0 %v8449
        %11395 = vmatprep.subr.bf16.mxu0 %v8429
        %11396 = vmatpush2.bf16.msra.mxu0 %v8428
        %11397 = vmatprep.subr.bf16.mxu0 %v8408
        %11398 = vmatpush2.bf16.msra.mxu0 %v8407
        %11399 = vmatprep.subr.bf16.mxu0 %v8387
        %11400 = vmatpush2.bf16.msra.mxu0 %v8386
        %11401 = vmatprep.subr.bf16.mxu0 %v8366
        %11402 = vmatpush2.bf16.msra.mxu0 %v8365
        %11403 = vmatprep.mubr.bf16.mxu0 %v4080
        %11404 = vmatmul.mubr.bf16.gmra.mxu0 %v4079
        %v11405 = vpop.f32.mrf.mxu0
        %v11406 = vadd.f32 %v3989, %v11405
        %v11407 = vpop.f32.mrf.mxu0
        %v11408 = vadd.f32 %v3993, %v11407
        %v11409 = vpop.f32.mrf.mxu0
        %v11410 = vpop.f32.mrf.mxu0
        %11411 = vdwg.mxu0
        %11412 = vmatprep.subr.bf16.mxu0 %v8681
        %11413 = vmatpush1.bf16.msra.mxu0 %v8680
        %11414 = vmatprep.subr.bf16.mxu0 %v8660
        %11415 = vmatpush1.bf16.msra.mxu0 %v8659
        %11416 = vmatprep.subr.bf16.mxu0 %v8639
        %11417 = vmatpush1.bf16.msra.mxu0 %v8638
        %11418 = vmatprep.subr.bf16.mxu0 %v8618
        %11419 = vmatpush1.bf16.msra.mxu0 %v8617
        %11420 = vmatprep.subr.bf16.mxu0 %v8597
        %11421 = vmatpush1.bf16.msra.mxu0 %v8596
        %11422 = vmatprep.subr.bf16.mxu0 %v8576
        %11423 = vmatpush1.bf16.msra.mxu0 %v8575
        %11424 = vmatprep.subr.bf16.mxu0 %v8555
        %11425 = vmatpush1.bf16.msra.mxu0 %v8554
        %11426 = vmatprep.subr.bf16.mxu0 %v8534
        %11427 = vmatpush1.bf16.msra.mxu0 %v8533
        %11428 = vmatprep.subr.bf16.mxu0 %v8849
        %11429 = vmatpush2.bf16.msra.mxu0 %v8848
        %11430 = vmatprep.subr.bf16.mxu0 %v8828
        %11431 = vmatpush2.bf16.msra.mxu0 %v8827
        %11432 = vmatprep.subr.bf16.mxu0 %v8807
        %11433 = vmatpush2.bf16.msra.mxu0 %v8806
        %11434 = vmatprep.subr.bf16.mxu0 %v8786
        %11435 = vmatpush2.bf16.msra.mxu0 %v8785
        %11436 = vmatprep.subr.bf16.mxu0 %v8765
        %11437 = vmatpush2.bf16.msra.mxu0 %v8764
        %11438 = vmatprep.subr.bf16.mxu0 %v8744
        %11439 = vmatpush2.bf16.msra.mxu0 %v8743
        %11440 = vmatprep.subr.bf16.mxu0 %v8723
        %11441 = vmatpush2.bf16.msra.mxu0 %v8722
        %11442 = vmatprep.subr.bf16.mxu0 %v8702
        %11443 = vmatpush2.bf16.msra.mxu0 %v8701
        %11444 = vmatprep.mubr.bf16.mxu0 %v4082
        %11445 = vmatmul.mubr.bf16.gmra.mxu0 %v4081
        %v11446 = vpop.f32.mrf.mxu0
        %v11447 = vadd.f32 %v11406, %v11446
        %v11448 = vpop.f32.mrf.mxu0
        %v11449 = vadd.f32 %v11408, %v11448
        %v11450 = vpop.f32.mrf.mxu0
        %v11451 = vpop.f32.mrf.mxu0
        %11452 = vdwg.mxu0
        %11453 = vmatprep.subr.bf16.mxu0 %v9017
        %11454 = vmatpush1.bf16.msra.mxu0 %v9016
        %11455 = vmatprep.subr.bf16.mxu0 %v8996
        %11456 = vmatpush1.bf16.msra.mxu0 %v8995
        %11457 = vmatprep.subr.bf16.mxu0 %v8975
        %11458 = vmatpush1.bf16.msra.mxu0 %v8974
        %11459 = vmatprep.subr.bf16.mxu0 %v8954
        %11460 = vmatpush1.bf16.msra.mxu0 %v8953
        %11461 = vmatprep.subr.bf16.mxu0 %v8933
        %11462 = vmatpush1.bf16.msra.mxu0 %v8932
        %11463 = vmatprep.subr.bf16.mxu0 %v8912
        %11464 = vmatpush1.bf16.msra.mxu0 %v8911
        %11465 = vmatprep.subr.bf16.mxu0 %v8891
        %11466 = vmatpush1.bf16.msra.mxu0 %v8890
        %11467 = vmatprep.subr.bf16.mxu0 %v8870
        %11468 = vmatpush1.bf16.msra.mxu0 %v8869
        %11469 = vmatprep.subr.bf16.mxu0 %v9185
        %11470 = vmatpush2.bf16.msra.mxu0 %v9184
        %11471 = vmatprep.subr.bf16.mxu0 %v9164
        %11472 = vmatpush2.bf16.msra.mxu0 %v9163
        %11473 = vmatprep.subr.bf16.mxu0 %v9143
        %11474 = vmatpush2.bf16.msra.mxu0 %v9142
        %11475 = vmatprep.subr.bf16.mxu0 %v9122
        %11476 = vmatpush2.bf16.msra.mxu0 %v9121
        %11477 = vmatprep.subr.bf16.mxu0 %v9101
        %11478 = vmatpush2.bf16.msra.mxu0 %v9100
        %11479 = vmatprep.subr.bf16.mxu0 %v9080
        %11480 = vmatpush2.bf16.msra.mxu0 %v9079
        %11481 = vmatprep.subr.bf16.mxu0 %v9059
        %11482 = vmatpush2.bf16.msra.mxu0 %v9058
        %11483 = vmatprep.subr.bf16.mxu0 %v9038
        %11484 = vmatpush2.bf16.msra.mxu0 %v9037
        %11485 = vmatprep.mubr.bf16.mxu0 %v4084
        %11486 = vmatmul.mubr.bf16.gmra.mxu0 %v4083
        %v11487 = vpop.f32.mrf.mxu0
        %v11488 = vadd.f32 %v11447, %v11487
        %v11489 = vpop.f32.mrf.mxu0
        %v11490 = vadd.f32 %v11449, %v11489
        %v11491 = vpop.f32.mrf.mxu0
        %v11492 = vpop.f32.mrf.mxu0
        %11493 = vdwg.mxu0
        %11494 = vmatprep.subr.bf16.mxu0 %v9353
        %11495 = vmatpush1.bf16.msra.mxu0 %v9352
        %11496 = vmatprep.subr.bf16.mxu0 %v9332
        %11497 = vmatpush1.bf16.msra.mxu0 %v9331
        %11498 = vmatprep.subr.bf16.mxu0 %v9311
        %11499 = vmatpush1.bf16.msra.mxu0 %v9310
        %11500 = vmatprep.subr.bf16.mxu0 %v9290
        %11501 = vmatpush1.bf16.msra.mxu0 %v9289
        %11502 = vmatprep.subr.bf16.mxu0 %v9269
        %11503 = vmatpush1.bf16.msra.mxu0 %v9268
        %11504 = vmatprep.subr.bf16.mxu0 %v9248
        %11505 = vmatpush1.bf16.msra.mxu0 %v9247
        %11506 = vmatprep.subr.bf16.mxu0 %v9227
        %11507 = vmatpush1.bf16.msra.mxu0 %v9226
        %11508 = vmatprep.subr.bf16.mxu0 %v9206
        %11509 = vmatpush1.bf16.msra.mxu0 %v9205
        %11510 = vmatprep.subr.bf16.mxu0 %v9521
        %11511 = vmatpush2.bf16.msra.mxu0 %v9520
        %11512 = vmatprep.subr.bf16.mxu0 %v9500
        %11513 = vmatpush2.bf16.msra.mxu0 %v9499
        %11514 = vmatprep.subr.bf16.mxu0 %v9479
        %11515 = vmatpush2.bf16.msra.mxu0 %v9478
        %11516 = vmatprep.subr.bf16.mxu0 %v9458
        %11517 = vmatpush2.bf16.msra.mxu0 %v9457
        %11518 = vmatprep.subr.bf16.mxu0 %v9437
        %11519 = vmatpush2.bf16.msra.mxu0 %v9436
        %11520 = vmatprep.subr.bf16.mxu0 %v9416
        %11521 = vmatpush2.bf16.msra.mxu0 %v9415
        %11522 = vmatprep.subr.bf16.mxu0 %v9395
        %11523 = vmatpush2.bf16.msra.mxu0 %v9394
        %11524 = vmatprep.subr.bf16.mxu0 %v9374
        %11525 = vmatpush2.bf16.msra.mxu0 %v9373
        %11526 = vmatprep.mubr.bf16.mxu0 %v4086
        %11527 = vmatmul.mubr.bf16.gmra.mxu0 %v4085
        %v11528 = vpop.f32.mrf.mxu0
        %v11529 = vadd.f32 %v11488, %v11528
        %v11530 = vpop.f32.mrf.mxu0
        %v11531 = vadd.f32 %v11490, %v11530
        %v11532 = vpop.f32.mrf.mxu0
        %v11533 = vpop.f32.mrf.mxu0
        %11534 = vdwg.mxu0
        %11535 = vmatprep.subr.bf16.mxu0 %v8347
        %11536 = vmatpush1.bf16.msra.mxu0 %v8346
        %11537 = vmatprep.subr.bf16.mxu0 %v8326
        %11538 = vmatpush1.bf16.msra.mxu0 %v8325
        %11539 = vmatprep.subr.bf16.mxu0 %v8305
        %11540 = vmatpush1.bf16.msra.mxu0 %v8304
        %11541 = vmatprep.subr.bf16.mxu0 %v8284
        %11542 = vmatpush1.bf16.msra.mxu0 %v8283
        %11543 = vmatprep.subr.bf16.mxu0 %v8263
        %11544 = vmatpush1.bf16.msra.mxu0 %v8262
        %11545 = vmatprep.subr.bf16.mxu0 %v8242
        %11546 = vmatpush1.bf16.msra.mxu0 %v8241
        %11547 = vmatprep.subr.bf16.mxu0 %v8221
        %11548 = vmatpush1.bf16.msra.mxu0 %v8220
        %11549 = vmatprep.subr.bf16.mxu0 %v8200
        %11550 = vmatpush1.bf16.msra.mxu0 %v8199
        %11551 = vmatprep.subr.bf16.mxu0 %v8515
        %11552 = vmatpush2.bf16.msra.mxu0 %v8514
        %11553 = vmatprep.subr.bf16.mxu0 %v8494
        %11554 = vmatpush2.bf16.msra.mxu0 %v8493
        %11555 = vmatprep.subr.bf16.mxu0 %v8473
        %11556 = vmatpush2.bf16.msra.mxu0 %v8472
        %11557 = vmatprep.subr.bf16.mxu0 %v8452
        %11558 = vmatpush2.bf16.msra.mxu0 %v8451
        %11559 = vmatprep.subr.bf16.mxu0 %v8431
        %11560 = vmatpush2.bf16.msra.mxu0 %v8430
        %11561 = vmatprep.subr.bf16.mxu0 %v8410
        %11562 = vmatpush2.bf16.msra.mxu0 %v8409
        %11563 = vmatprep.subr.bf16.mxu0 %v8389
        %11564 = vmatpush2.bf16.msra.mxu0 %v8388
        %11565 = vmatprep.subr.bf16.mxu0 %v8368
        %11566 = vmatpush2.bf16.msra.mxu0 %v8367
        %11567 = vmatprep.mubr.bf16.mxu0 %v4080
        %11568 = vmatmul.mubr.bf16.gmra.mxu0 %v4079
        %v11569 = vpop.f32.mrf.mxu0
        %v11570 = vadd.f32 %v3997, %v11569
        %v11571 = vpop.f32.mrf.mxu0
        %v11572 = vadd.f32 %v4001, %v11571
        %v11573 = vpop.f32.mrf.mxu0
        %v11574 = vpop.f32.mrf.mxu0
        %11575 = vdwg.mxu0
        %11576 = vmatprep.subr.bf16.mxu0 %v8683
        %11577 = vmatpush1.bf16.msra.mxu0 %v8682
        %11578 = vmatprep.subr.bf16.mxu0 %v8662
        %11579 = vmatpush1.bf16.msra.mxu0 %v8661
        %11580 = vmatprep.subr.bf16.mxu0 %v8641
        %11581 = vmatpush1.bf16.msra.mxu0 %v8640
        %11582 = vmatprep.subr.bf16.mxu0 %v8620
        %11583 = vmatpush1.bf16.msra.mxu0 %v8619
        %11584 = vmatprep.subr.bf16.mxu0 %v8599
        %11585 = vmatpush1.bf16.msra.mxu0 %v8598
        %11586 = vmatprep.subr.bf16.mxu0 %v8578
        %11587 = vmatpush1.bf16.msra.mxu0 %v8577
        %11588 = vmatprep.subr.bf16.mxu0 %v8557
        %11589 = vmatpush1.bf16.msra.mxu0 %v8556
        %11590 = vmatprep.subr.bf16.mxu0 %v8536
        %11591 = vmatpush1.bf16.msra.mxu0 %v8535
        %11592 = vmatprep.subr.bf16.mxu0 %v8851
        %11593 = vmatpush2.bf16.msra.mxu0 %v8850
        %11594 = vmatprep.subr.bf16.mxu0 %v8830
        %11595 = vmatpush2.bf16.msra.mxu0 %v8829
        %11596 = vmatprep.subr.bf16.mxu0 %v8809
        %11597 = vmatpush2.bf16.msra.mxu0 %v8808
        %11598 = vmatprep.subr.bf16.mxu0 %v8788
        %11599 = vmatpush2.bf16.msra.mxu0 %v8787
        %11600 = vmatprep.subr.bf16.mxu0 %v8767
        %11601 = vmatpush2.bf16.msra.mxu0 %v8766
        %11602 = vmatprep.subr.bf16.mxu0 %v8746
        %11603 = vmatpush2.bf16.msra.mxu0 %v8745
        %11604 = vmatprep.subr.bf16.mxu0 %v8725
        %11605 = vmatpush2.bf16.msra.mxu0 %v8724
        %11606 = vmatprep.subr.bf16.mxu0 %v8704
        %11607 = vmatpush2.bf16.msra.mxu0 %v8703
        %11608 = vmatprep.mubr.bf16.mxu0 %v4082
        %11609 = vmatmul.mubr.bf16.gmra.mxu0 %v4081
        %v11610 = vpop.f32.mrf.mxu0
        %v11611 = vadd.f32 %v11570, %v11610
        %v11612 = vpop.f32.mrf.mxu0
        %v11613 = vadd.f32 %v11572, %v11612
        %v11614 = vpop.f32.mrf.mxu0
        %v11615 = vpop.f32.mrf.mxu0
        %11616 = vdwg.mxu0
        %11617 = vmatprep.subr.bf16.mxu0 %v9019
        %11618 = vmatpush1.bf16.msra.mxu0 %v9018
        %11619 = vmatprep.subr.bf16.mxu0 %v8998
        %11620 = vmatpush1.bf16.msra.mxu0 %v8997
        %11621 = vmatprep.subr.bf16.mxu0 %v8977
        %11622 = vmatpush1.bf16.msra.mxu0 %v8976
        %11623 = vmatprep.subr.bf16.mxu0 %v8956
        %11624 = vmatpush1.bf16.msra.mxu0 %v8955
        %11625 = vmatprep.subr.bf16.mxu0 %v8935
        %11626 = vmatpush1.bf16.msra.mxu0 %v8934
        %11627 = vmatprep.subr.bf16.mxu0 %v8914
        %11628 = vmatpush1.bf16.msra.mxu0 %v8913
        %11629 = vmatprep.subr.bf16.mxu0 %v8893
        %11630 = vmatpush1.bf16.msra.mxu0 %v8892
        %11631 = vmatprep.subr.bf16.mxu0 %v8872
        %11632 = vmatpush1.bf16.msra.mxu0 %v8871
        %11633 = vmatprep.subr.bf16.mxu0 %v9187
        %11634 = vmatpush2.bf16.msra.mxu0 %v9186
        %11635 = vmatprep.subr.bf16.mxu0 %v9166
        %11636 = vmatpush2.bf16.msra.mxu0 %v9165
        %11637 = vmatprep.subr.bf16.mxu0 %v9145
        %11638 = vmatpush2.bf16.msra.mxu0 %v9144
        %11639 = vmatprep.subr.bf16.mxu0 %v9124
        %11640 = vmatpush2.bf16.msra.mxu0 %v9123
        %11641 = vmatprep.subr.bf16.mxu0 %v9103
        %11642 = vmatpush2.bf16.msra.mxu0 %v9102
        %11643 = vmatprep.subr.bf16.mxu0 %v9082
        %11644 = vmatpush2.bf16.msra.mxu0 %v9081
        %11645 = vmatprep.subr.bf16.mxu0 %v9061
        %11646 = vmatpush2.bf16.msra.mxu0 %v9060
        %11647 = vmatprep.subr.bf16.mxu0 %v9040
        %11648 = vmatpush2.bf16.msra.mxu0 %v9039
        %11649 = vmatprep.mubr.bf16.mxu0 %v4084
        %11650 = vmatmul.mubr.bf16.gmra.mxu0 %v4083
        %v11651 = vpop.f32.mrf.mxu0
        %v11652 = vadd.f32 %v11611, %v11651
        %v11653 = vpop.f32.mrf.mxu0
        %v11654 = vadd.f32 %v11613, %v11653
        %v11655 = vpop.f32.mrf.mxu0
        %v11656 = vpop.f32.mrf.mxu0
        %11657 = vdwg.mxu0
        %11658 = vmatprep.subr.bf16.mxu0 %v9355
        %11659 = vmatpush1.bf16.msra.mxu0 %v9354
        %11660 = vmatprep.subr.bf16.mxu0 %v9334
        %11661 = vmatpush1.bf16.msra.mxu0 %v9333
        %11662 = vmatprep.subr.bf16.mxu0 %v9313
        %11663 = vmatpush1.bf16.msra.mxu0 %v9312
        %11664 = vmatprep.subr.bf16.mxu0 %v9292
        %11665 = vmatpush1.bf16.msra.mxu0 %v9291
        %11666 = vmatprep.subr.bf16.mxu0 %v9271
        %11667 = vmatpush1.bf16.msra.mxu0 %v9270
        %11668 = vmatprep.subr.bf16.mxu0 %v9250
        %11669 = vmatpush1.bf16.msra.mxu0 %v9249
        %11670 = vmatprep.subr.bf16.mxu0 %v9229
        %11671 = vmatpush1.bf16.msra.mxu0 %v9228
        %11672 = vmatprep.subr.bf16.mxu0 %v9208
        %11673 = vmatpush1.bf16.msra.mxu0 %v9207
        %11674 = vmatprep.subr.bf16.mxu0 %v9523
        %11675 = vmatpush2.bf16.msra.mxu0 %v9522
        %11676 = vmatprep.subr.bf16.mxu0 %v9502
        %11677 = vmatpush2.bf16.msra.mxu0 %v9501
        %11678 = vmatprep.subr.bf16.mxu0 %v9481
        %11679 = vmatpush2.bf16.msra.mxu0 %v9480
        %11680 = vmatprep.subr.bf16.mxu0 %v9460
        %11681 = vmatpush2.bf16.msra.mxu0 %v9459
        %11682 = vmatprep.subr.bf16.mxu0 %v9439
        %11683 = vmatpush2.bf16.msra.mxu0 %v9438
        %11684 = vmatprep.subr.bf16.mxu0 %v9418
        %11685 = vmatpush2.bf16.msra.mxu0 %v9417
        %11686 = vmatprep.subr.bf16.mxu0 %v9397
        %11687 = vmatpush2.bf16.msra.mxu0 %v9396
        %11688 = vmatprep.subr.bf16.mxu0 %v9376
        %11689 = vmatpush2.bf16.msra.mxu0 %v9375
        %11690 = vmatprep.mubr.bf16.mxu0 %v4086
        %11691 = vmatmul.mubr.bf16.gmra.mxu0 %v4085
        %v11692 = vpop.f32.mrf.mxu0
        %v11693 = vadd.f32 %v11652, %v11692
        %v11694 = vpop.f32.mrf.mxu0
        %v11695 = vadd.f32 %v11654, %v11694
        %v11696 = vpop.f32.mrf.mxu0
        %v11697 = vpop.f32.mrf.mxu0
        %11698 = vdwg.mxu0
        %11699 = vmatprep.subr.bf16.mxu0 %v8349
        %11700 = vmatpush1.bf16.msra.mxu0 %v8348
        %11701 = vmatprep.subr.bf16.mxu0 %v8328
        %11702 = vmatpush1.bf16.msra.mxu0 %v8327
        %11703 = vmatprep.subr.bf16.mxu0 %v8307
        %11704 = vmatpush1.bf16.msra.mxu0 %v8306
        %11705 = vmatprep.subr.bf16.mxu0 %v8286
        %11706 = vmatpush1.bf16.msra.mxu0 %v8285
        %11707 = vmatprep.subr.bf16.mxu0 %v8265
        %11708 = vmatpush1.bf16.msra.mxu0 %v8264
        %11709 = vmatprep.subr.bf16.mxu0 %v8244
        %11710 = vmatpush1.bf16.msra.mxu0 %v8243
        %11711 = vmatprep.subr.bf16.mxu0 %v8223
        %11712 = vmatpush1.bf16.msra.mxu0 %v8222
        %11713 = vmatprep.subr.bf16.mxu0 %v8202
        %11714 = vmatpush1.bf16.msra.mxu0 %v8201
        %11715 = vmatprep.subr.bf16.mxu0 %v8517
        %11716 = vmatpush2.bf16.msra.mxu0 %v8516
        %11717 = vmatprep.subr.bf16.mxu0 %v8496
        %11718 = vmatpush2.bf16.msra.mxu0 %v8495
        %11719 = vmatprep.subr.bf16.mxu0 %v8475
        %11720 = vmatpush2.bf16.msra.mxu0 %v8474
        %11721 = vmatprep.subr.bf16.mxu0 %v8454
        %11722 = vmatpush2.bf16.msra.mxu0 %v8453
        %11723 = vmatprep.subr.bf16.mxu0 %v8433
        %11724 = vmatpush2.bf16.msra.mxu0 %v8432
        %11725 = vmatprep.subr.bf16.mxu0 %v8412
        %11726 = vmatpush2.bf16.msra.mxu0 %v8411
        %11727 = vmatprep.subr.bf16.mxu0 %v8391
        %11728 = vmatpush2.bf16.msra.mxu0 %v8390
        %11729 = vmatprep.subr.bf16.mxu0 %v8370
        %11730 = vmatpush2.bf16.msra.mxu0 %v8369
        %11731 = vmatprep.mubr.bf16.mxu0 %v4080
        %11732 = vmatmul.mubr.bf16.gmra.mxu0 %v4079
        %v11733 = vpop.f32.mrf.mxu0
        %v11734 = vadd.f32 %v4005, %v11733
        %v11735 = vpop.f32.mrf.mxu0
        %v11736 = vadd.f32 %v4009, %v11735
        %v11737 = vpop.f32.mrf.mxu0
        %v11738 = vpop.f32.mrf.mxu0
        %11739 = vdwg.mxu0
        %11740 = vmatprep.subr.bf16.mxu0 %v8685
        %11741 = vmatpush1.bf16.msra.mxu0 %v8684
        %11742 = vmatprep.subr.bf16.mxu0 %v8664
        %11743 = vmatpush1.bf16.msra.mxu0 %v8663
        %11744 = vmatprep.subr.bf16.mxu0 %v8643
        %11745 = vmatpush1.bf16.msra.mxu0 %v8642
        %11746 = vmatprep.subr.bf16.mxu0 %v8622
        %11747 = vmatpush1.bf16.msra.mxu0 %v8621
        %11748 = vmatprep.subr.bf16.mxu0 %v8601
        %11749 = vmatpush1.bf16.msra.mxu0 %v8600
        %11750 = vmatprep.subr.bf16.mxu0 %v8580
        %11751 = vmatpush1.bf16.msra.mxu0 %v8579
        %11752 = vmatprep.subr.bf16.mxu0 %v8559
        %11753 = vmatpush1.bf16.msra.mxu0 %v8558
        %11754 = vmatprep.subr.bf16.mxu0 %v8538
        %11755 = vmatpush1.bf16.msra.mxu0 %v8537
        %11756 = vmatprep.subr.bf16.mxu0 %v8853
        %11757 = vmatpush2.bf16.msra.mxu0 %v8852
        %11758 = vmatprep.subr.bf16.mxu0 %v8832
        %11759 = vmatpush2.bf16.msra.mxu0 %v8831
        %11760 = vmatprep.subr.bf16.mxu0 %v8811
        %11761 = vmatpush2.bf16.msra.mxu0 %v8810
        %11762 = vmatprep.subr.bf16.mxu0 %v8790
        %11763 = vmatpush2.bf16.msra.mxu0 %v8789
        %11764 = vmatprep.subr.bf16.mxu0 %v8769
        %11765 = vmatpush2.bf16.msra.mxu0 %v8768
        %11766 = vmatprep.subr.bf16.mxu0 %v8748
        %11767 = vmatpush2.bf16.msra.mxu0 %v8747
        %11768 = vmatprep.subr.bf16.mxu0 %v8727
        %11769 = vmatpush2.bf16.msra.mxu0 %v8726
        %11770 = vmatprep.subr.bf16.mxu0 %v8706
        %11771 = vmatpush2.bf16.msra.mxu0 %v8705
        %11772 = vmatprep.mubr.bf16.mxu0 %v4082
        %11773 = vmatmul.mubr.bf16.gmra.mxu0 %v4081
        %v11774 = vpop.f32.mrf.mxu0
        %v11775 = vadd.f32 %v11734, %v11774
        %v11776 = vpop.f32.mrf.mxu0
        %v11777 = vadd.f32 %v11736, %v11776
        %v11778 = vpop.f32.mrf.mxu0
        %v11779 = vpop.f32.mrf.mxu0
        %11780 = vdwg.mxu0
        %11781 = vmatprep.subr.bf16.mxu0 %v9021
        %11782 = vmatpush1.bf16.msra.mxu0 %v9020
        %11783 = vmatprep.subr.bf16.mxu0 %v9000
        %11784 = vmatpush1.bf16.msra.mxu0 %v8999
        %11785 = vmatprep.subr.bf16.mxu0 %v8979
        %11786 = vmatpush1.bf16.msra.mxu0 %v8978
        %11787 = vmatprep.subr.bf16.mxu0 %v8958
        %11788 = vmatpush1.bf16.msra.mxu0 %v8957
        %11789 = vmatprep.subr.bf16.mxu0 %v8937
        %11790 = vmatpush1.bf16.msra.mxu0 %v8936
        %11791 = vmatprep.subr.bf16.mxu0 %v8916
        %11792 = vmatpush1.bf16.msra.mxu0 %v8915
        %11793 = vmatprep.subr.bf16.mxu0 %v8895
        %11794 = vmatpush1.bf16.msra.mxu0 %v8894
        %11795 = vmatprep.subr.bf16.mxu0 %v8874
        %11796 = vmatpush1.bf16.msra.mxu0 %v8873
        %11797 = vmatprep.subr.bf16.mxu0 %v9189
        %11798 = vmatpush2.bf16.msra.mxu0 %v9188
        %11799 = vmatprep.subr.bf16.mxu0 %v9168
        %11800 = vmatpush2.bf16.msra.mxu0 %v9167
        %11801 = vmatprep.subr.bf16.mxu0 %v9147
        %11802 = vmatpush2.bf16.msra.mxu0 %v9146
        %11803 = vmatprep.subr.bf16.mxu0 %v9126
        %11804 = vmatpush2.bf16.msra.mxu0 %v9125
        %11805 = vmatprep.subr.bf16.mxu0 %v9105
        %11806 = vmatpush2.bf16.msra.mxu0 %v9104
        %11807 = vmatprep.subr.bf16.mxu0 %v9084
        %11808 = vmatpush2.bf16.msra.mxu0 %v9083
        %11809 = vmatprep.subr.bf16.mxu0 %v9063
        %11810 = vmatpush2.bf16.msra.mxu0 %v9062
        %11811 = vmatprep.subr.bf16.mxu0 %v9042
        %11812 = vmatpush2.bf16.msra.mxu0 %v9041
        %11813 = vmatprep.mubr.bf16.mxu0 %v4084
        %11814 = vmatmul.mubr.bf16.gmra.mxu0 %v4083
        %v11815 = vpop.f32.mrf.mxu0
        %v11816 = vadd.f32 %v11775, %v11815
        %v11817 = vpop.f32.mrf.mxu0
        %v11818 = vadd.f32 %v11777, %v11817
        %v11819 = vpop.f32.mrf.mxu0
        %v11820 = vpop.f32.mrf.mxu0
        %11821 = vdwg.mxu0
        %11822 = vmatprep.subr.bf16.mxu0 %v9357
        %11823 = vmatpush1.bf16.msra.mxu0 %v9356
        %11824 = vmatprep.subr.bf16.mxu0 %v9336
        %11825 = vmatpush1.bf16.msra.mxu0 %v9335
        %11826 = vmatprep.subr.bf16.mxu0 %v9315
        %11827 = vmatpush1.bf16.msra.mxu0 %v9314
        %11828 = vmatprep.subr.bf16.mxu0 %v9294
        %11829 = vmatpush1.bf16.msra.mxu0 %v9293
        %11830 = vmatprep.subr.bf16.mxu0 %v9273
        %11831 = vmatpush1.bf16.msra.mxu0 %v9272
        %11832 = vmatprep.subr.bf16.mxu0 %v9252
        %11833 = vmatpush1.bf16.msra.mxu0 %v9251
        %11834 = vmatprep.subr.bf16.mxu0 %v9231
        %11835 = vmatpush1.bf16.msra.mxu0 %v9230
        %11836 = vmatprep.subr.bf16.mxu0 %v9210
        %11837 = vmatpush1.bf16.msra.mxu0 %v9209
        %11838 = vmatprep.subr.bf16.mxu0 %v9525
        %11839 = vmatpush2.bf16.msra.mxu0 %v9524
        %11840 = vmatprep.subr.bf16.mxu0 %v9504
        %11841 = vmatpush2.bf16.msra.mxu0 %v9503
        %11842 = vmatprep.subr.bf16.mxu0 %v9483
        %11843 = vmatpush2.bf16.msra.mxu0 %v9482
        %11844 = vmatprep.subr.bf16.mxu0 %v9462
        %11845 = vmatpush2.bf16.msra.mxu0 %v9461
        %11846 = vmatprep.subr.bf16.mxu0 %v9441
        %11847 = vmatpush2.bf16.msra.mxu0 %v9440
        %11848 = vmatprep.subr.bf16.mxu0 %v9420
        %11849 = vmatpush2.bf16.msra.mxu0 %v9419
        %11850 = vmatprep.subr.bf16.mxu0 %v9399
        %11851 = vmatpush2.bf16.msra.mxu0 %v9398
        %11852 = vmatprep.subr.bf16.mxu0 %v9378
        %11853 = vmatpush2.bf16.msra.mxu0 %v9377
        %11854 = vmatprep.mubr.bf16.mxu0 %v4086
        %11855 = vmatmul.mubr.bf16.gmra.mxu0 %v4085
        %v11856 = vpop.f32.mrf.mxu0
        %v11857 = vadd.f32 %v11816, %v11856
        %v11858 = vpop.f32.mrf.mxu0
        %v11859 = vadd.f32 %v11818, %v11858
        %v11860 = vpop.f32.mrf.mxu0
        %v11861 = vpop.f32.mrf.mxu0
        %11862 = vdwg.mxu0
        %11863 = vmatprep.subr.bf16.mxu0 %v8351
        %11864 = vmatpush1.bf16.msra.mxu0 %v8350
        %11865 = vmatprep.subr.bf16.mxu0 %v8330
        %11866 = vmatpush1.bf16.msra.mxu0 %v8329
        %11867 = vmatprep.subr.bf16.mxu0 %v8309
        %11868 = vmatpush1.bf16.msra.mxu0 %v8308
        %11869 = vmatprep.subr.bf16.mxu0 %v8288
        %11870 = vmatpush1.bf16.msra.mxu0 %v8287
        %11871 = vmatprep.subr.bf16.mxu0 %v8267
        %11872 = vmatpush1.bf16.msra.mxu0 %v8266
        %11873 = vmatprep.subr.bf16.mxu0 %v8246
        %11874 = vmatpush1.bf16.msra.mxu0 %v8245
        %11875 = vmatprep.subr.bf16.mxu0 %v8225
        %11876 = vmatpush1.bf16.msra.mxu0 %v8224
        %11877 = vmatprep.subr.bf16.mxu0 %v8204
        %11878 = vmatpush1.bf16.msra.mxu0 %v8203
        %11879 = vmatprep.subr.bf16.mxu0 %v8519
        %11880 = vmatpush2.bf16.msra.mxu0 %v8518
        %11881 = vmatprep.subr.bf16.mxu0 %v8498
        %11882 = vmatpush2.bf16.msra.mxu0 %v8497
        %11883 = vmatprep.subr.bf16.mxu0 %v8477
        %11884 = vmatpush2.bf16.msra.mxu0 %v8476
        %11885 = vmatprep.subr.bf16.mxu0 %v8456
        %11886 = vmatpush2.bf16.msra.mxu0 %v8455
        %11887 = vmatprep.subr.bf16.mxu0 %v8435
        %11888 = vmatpush2.bf16.msra.mxu0 %v8434
        %11889 = vmatprep.subr.bf16.mxu0 %v8414
        %11890 = vmatpush2.bf16.msra.mxu0 %v8413
        %11891 = vmatprep.subr.bf16.mxu0 %v8393
        %11892 = vmatpush2.bf16.msra.mxu0 %v8392
        %11893 = vmatprep.subr.bf16.mxu0 %v8372
        %11894 = vmatpush2.bf16.msra.mxu0 %v8371
        %11895 = vmatprep.mubr.bf16.mxu0 %v4080
        %11896 = vmatmul.mubr.bf16.gmra.mxu0 %v4079
        %v11897 = vpop.f32.mrf.mxu0
        %v11898 = vadd.f32 %v4013, %v11897
        %v11899 = vpop.f32.mrf.mxu0
        %v11900 = vadd.f32 %v4017, %v11899
        %v11901 = vpop.f32.mrf.mxu0
        %v11902 = vpop.f32.mrf.mxu0
        %11903 = vdwg.mxu0
        %11904 = vmatprep.subr.bf16.mxu0 %v8687
        %11905 = vmatpush1.bf16.msra.mxu0 %v8686
        %11906 = vmatprep.subr.bf16.mxu0 %v8666
        %11907 = vmatpush1.bf16.msra.mxu0 %v8665
        %11908 = vmatprep.subr.bf16.mxu0 %v8645
        %11909 = vmatpush1.bf16.msra.mxu0 %v8644
        %11910 = vmatprep.subr.bf16.mxu0 %v8624
        %11911 = vmatpush1.bf16.msra.mxu0 %v8623
        %11912 = vmatprep.subr.bf16.mxu0 %v8603
        %11913 = vmatpush1.bf16.msra.mxu0 %v8602
        %11914 = vmatprep.subr.bf16.mxu0 %v8582
        %11915 = vmatpush1.bf16.msra.mxu0 %v8581
        %11916 = vmatprep.subr.bf16.mxu0 %v8561
        %11917 = vmatpush1.bf16.msra.mxu0 %v8560
        %11918 = vmatprep.subr.bf16.mxu0 %v8540
        %11919 = vmatpush1.bf16.msra.mxu0 %v8539
        %11920 = vmatprep.subr.bf16.mxu0 %v8855
        %11921 = vmatpush2.bf16.msra.mxu0 %v8854
        %11922 = vmatprep.subr.bf16.mxu0 %v8834
        %11923 = vmatpush2.bf16.msra.mxu0 %v8833
        %11924 = vmatprep.subr.bf16.mxu0 %v8813
        %11925 = vmatpush2.bf16.msra.mxu0 %v8812
        %11926 = vmatprep.subr.bf16.mxu0 %v8792
        %11927 = vmatpush2.bf16.msra.mxu0 %v8791
        %11928 = vmatprep.subr.bf16.mxu0 %v8771
        %11929 = vmatpush2.bf16.msra.mxu0 %v8770
        %11930 = vmatprep.subr.bf16.mxu0 %v8750
        %11931 = vmatpush2.bf16.msra.mxu0 %v8749
        %11932 = vmatprep.subr.bf16.mxu0 %v8729
        %11933 = vmatpush2.bf16.msra.mxu0 %v8728
        %11934 = vmatprep.subr.bf16.mxu0 %v8708
        %11935 = vmatpush2.bf16.msra.mxu0 %v8707
        %11936 = vmatprep.mubr.bf16.mxu0 %v4082
        %11937 = vmatmul.mubr.bf16.gmra.mxu0 %v4081
        %v11938 = vpop.f32.mrf.mxu0
        %v11939 = vadd.f32 %v11898, %v11938
        %v11940 = vpop.f32.mrf.mxu0
        %v11941 = vadd.f32 %v11900, %v11940
        %v11942 = vpop.f32.mrf.mxu0
        %v11943 = vpop.f32.mrf.mxu0
        %11944 = vdwg.mxu0
        %11945 = vmatprep.subr.bf16.mxu0 %v9023
        %11946 = vmatpush1.bf16.msra.mxu0 %v9022
        %11947 = vmatprep.subr.bf16.mxu0 %v9002
        %11948 = vmatpush1.bf16.msra.mxu0 %v9001
        %11949 = vmatprep.subr.bf16.mxu0 %v8981
        %11950 = vmatpush1.bf16.msra.mxu0 %v8980
        %11951 = vmatprep.subr.bf16.mxu0 %v8960
        %11952 = vmatpush1.bf16.msra.mxu0 %v8959
        %11953 = vmatprep.subr.bf16.mxu0 %v8939
        %11954 = vmatpush1.bf16.msra.mxu0 %v8938
        %11955 = vmatprep.subr.bf16.mxu0 %v8918
        %11956 = vmatpush1.bf16.msra.mxu0 %v8917
        %11957 = vmatprep.subr.bf16.mxu0 %v8897
        %11958 = vmatpush1.bf16.msra.mxu0 %v8896
        %11959 = vmatprep.subr.bf16.mxu0 %v8876
        %11960 = vmatpush1.bf16.msra.mxu0 %v8875
        %11961 = vmatprep.subr.bf16.mxu0 %v9191
        %11962 = vmatpush2.bf16.msra.mxu0 %v9190
        %11963 = vmatprep.subr.bf16.mxu0 %v9170
        %11964 = vmatpush2.bf16.msra.mxu0 %v9169
        %11965 = vmatprep.subr.bf16.mxu0 %v9149
        %11966 = vmatpush2.bf16.msra.mxu0 %v9148
        %11967 = vmatprep.subr.bf16.mxu0 %v9128
        %11968 = vmatpush2.bf16.msra.mxu0 %v9127
        %11969 = vmatprep.subr.bf16.mxu0 %v9107
        %11970 = vmatpush2.bf16.msra.mxu0 %v9106
        %11971 = vmatprep.subr.bf16.mxu0 %v9086
        %11972 = vmatpush2.bf16.msra.mxu0 %v9085
        %11973 = vmatprep.subr.bf16.mxu0 %v9065
        %11974 = vmatpush2.bf16.msra.mxu0 %v9064
        %11975 = vmatprep.subr.bf16.mxu0 %v9044
        %11976 = vmatpush2.bf16.msra.mxu0 %v9043
        %11977 = vmatprep.mubr.bf16.mxu0 %v4084
        %11978 = vmatmul.mubr.bf16.gmra.mxu0 %v4083
        %v11979 = vpop.f32.mrf.mxu0
        %v11980 = vadd.f32 %v11939, %v11979
        %v11981 = vpop.f32.mrf.mxu0
        %v11982 = vadd.f32 %v11941, %v11981
        %v11983 = vpop.f32.mrf.mxu0
        %v11984 = vpop.f32.mrf.mxu0
        %11985 = vdwg.mxu0
        %11986 = vmatprep.subr.bf16.mxu0 %v9359
        %11987 = vmatpush1.bf16.msra.mxu0 %v9358
        %11988 = vmatprep.subr.bf16.mxu0 %v9338
        %11989 = vmatpush1.bf16.msra.mxu0 %v9337
        %11990 = vmatprep.subr.bf16.mxu0 %v9317
        %11991 = vmatpush1.bf16.msra.mxu0 %v9316
        %11992 = vmatprep.subr.bf16.mxu0 %v9296
        %11993 = vmatpush1.bf16.msra.mxu0 %v9295
        %11994 = vmatprep.subr.bf16.mxu0 %v9275
        %11995 = vmatpush1.bf16.msra.mxu0 %v9274
        %11996 = vmatprep.subr.bf16.mxu0 %v9254
        %11997 = vmatpush1.bf16.msra.mxu0 %v9253
        %11998 = vmatprep.subr.bf16.mxu0 %v9233
        %11999 = vmatpush1.bf16.msra.mxu0 %v9232
        %12000 = vmatprep.subr.bf16.mxu0 %v9212
        %12001 = vmatpush1.bf16.msra.mxu0 %v9211
        %12002 = vmatprep.subr.bf16.mxu0 %v9527
        %12003 = vmatpush2.bf16.msra.mxu0 %v9526
        %12004 = vmatprep.subr.bf16.mxu0 %v9506
        %12005 = vmatpush2.bf16.msra.mxu0 %v9505
        %12006 = vmatprep.subr.bf16.mxu0 %v9485
        %12007 = vmatpush2.bf16.msra.mxu0 %v9484
        %12008 = vmatprep.subr.bf16.mxu0 %v9464
        %12009 = vmatpush2.bf16.msra.mxu0 %v9463
        %12010 = vmatprep.subr.bf16.mxu0 %v9443
        %12011 = vmatpush2.bf16.msra.mxu0 %v9442
        %12012 = vmatprep.subr.bf16.mxu0 %v9422
        %12013 = vmatpush2.bf16.msra.mxu0 %v9421
        %12014 = vmatprep.subr.bf16.mxu0 %v9401
        %12015 = vmatpush2.bf16.msra.mxu0 %v9400
        %12016 = vmatprep.subr.bf16.mxu0 %v9380
        %12017 = vmatpush2.bf16.msra.mxu0 %v9379
        %12018 = vmatprep.mubr.bf16.mxu0 %v4086
        %12019 = vmatmul.mubr.bf16.gmra.mxu0 %v4085
        %v12020 = vpop.f32.mrf.mxu0
        %v12021 = vadd.f32 %v11980, %v12020
        %v12022 = vpop.f32.mrf.mxu0
        %v12023 = vadd.f32 %v11982, %v12022
        %v12024 = vpop.f32.mrf.mxu0
        %v12025 = vpop.f32.mrf.mxu0
        %12026 = vdwg.mxu0
        %12027 = vmatprep.subr.bf16.mxu0 %v8353
        %12028 = vmatpush1.bf16.msra.mxu0 %v8352
        %12029 = vmatprep.subr.bf16.mxu0 %v8332
        %12030 = vmatpush1.bf16.msra.mxu0 %v8331
        %12031 = vmatprep.subr.bf16.mxu0 %v8311
        %12032 = vmatpush1.bf16.msra.mxu0 %v8310
        %12033 = vmatprep.subr.bf16.mxu0 %v8290
        %12034 = vmatpush1.bf16.msra.mxu0 %v8289
        %12035 = vmatprep.subr.bf16.mxu0 %v8269
        %12036 = vmatpush1.bf16.msra.mxu0 %v8268
        %12037 = vmatprep.subr.bf16.mxu0 %v8248
        %12038 = vmatpush1.bf16.msra.mxu0 %v8247
        %12039 = vmatprep.subr.bf16.mxu0 %v8227
        %12040 = vmatpush1.bf16.msra.mxu0 %v8226
        %12041 = vmatprep.subr.bf16.mxu0 %v8206
        %12042 = vmatpush1.bf16.msra.mxu0 %v8205
        %12043 = vmatprep.subr.bf16.mxu0 %v8521
        %12044 = vmatpush2.bf16.msra.mxu0 %v8520
        %12045 = vmatprep.subr.bf16.mxu0 %v8500
        %12046 = vmatpush2.bf16.msra.mxu0 %v8499
        %12047 = vmatprep.subr.bf16.mxu0 %v8479
        %12048 = vmatpush2.bf16.msra.mxu0 %v8478
        %12049 = vmatprep.subr.bf16.mxu0 %v8458
        %12050 = vmatpush2.bf16.msra.mxu0 %v8457
        %12051 = vmatprep.subr.bf16.mxu0 %v8437
        %12052 = vmatpush2.bf16.msra.mxu0 %v8436
        %12053 = vmatprep.subr.bf16.mxu0 %v8416
        %12054 = vmatpush2.bf16.msra.mxu0 %v8415
        %12055 = vmatprep.subr.bf16.mxu0 %v8395
        %12056 = vmatpush2.bf16.msra.mxu0 %v8394
        %12057 = vmatprep.subr.bf16.mxu0 %v8374
        %12058 = vmatpush2.bf16.msra.mxu0 %v8373
        %12059 = vmatprep.mubr.bf16.mxu0 %v4080
        %12060 = vmatmul.mubr.bf16.gmra.mxu0 %v4079
        %v12061 = vpop.f32.mrf.mxu0
        %v12062 = vadd.f32 %v4021, %v12061
        %v12063 = vpop.f32.mrf.mxu0
        %v12064 = vadd.f32 %v4025, %v12063
        %v12065 = vpop.f32.mrf.mxu0
        %v12066 = vpop.f32.mrf.mxu0
        %12067 = vdwg.mxu0
        %12068 = vmatprep.subr.bf16.mxu0 %v8689
        %12069 = vmatpush1.bf16.msra.mxu0 %v8688
        %12070 = vmatprep.subr.bf16.mxu0 %v8668
        %12071 = vmatpush1.bf16.msra.mxu0 %v8667
        %12072 = vmatprep.subr.bf16.mxu0 %v8647
        %12073 = vmatpush1.bf16.msra.mxu0 %v8646
        %12074 = vmatprep.subr.bf16.mxu0 %v8626
        %12075 = vmatpush1.bf16.msra.mxu0 %v8625
        %12076 = vmatprep.subr.bf16.mxu0 %v8605
        %12077 = vmatpush1.bf16.msra.mxu0 %v8604
        %12078 = vmatprep.subr.bf16.mxu0 %v8584
        %12079 = vmatpush1.bf16.msra.mxu0 %v8583
        %12080 = vmatprep.subr.bf16.mxu0 %v8563
        %12081 = vmatpush1.bf16.msra.mxu0 %v8562
        %12082 = vmatprep.subr.bf16.mxu0 %v8542
        %12083 = vmatpush1.bf16.msra.mxu0 %v8541
        %12084 = vmatprep.subr.bf16.mxu0 %v8857
        %12085 = vmatpush2.bf16.msra.mxu0 %v8856
        %12086 = vmatprep.subr.bf16.mxu0 %v8836
        %12087 = vmatpush2.bf16.msra.mxu0 %v8835
        %12088 = vmatprep.subr.bf16.mxu0 %v8815
        %12089 = vmatpush2.bf16.msra.mxu0 %v8814
        %12090 = vmatprep.subr.bf16.mxu0 %v8794
        %12091 = vmatpush2.bf16.msra.mxu0 %v8793
        %12092 = vmatprep.subr.bf16.mxu0 %v8773
        %12093 = vmatpush2.bf16.msra.mxu0 %v8772
        %12094 = vmatprep.subr.bf16.mxu0 %v8752
        %12095 = vmatpush2.bf16.msra.mxu0 %v8751
        %12096 = vmatprep.subr.bf16.mxu0 %v8731
        %12097 = vmatpush2.bf16.msra.mxu0 %v8730
        %12098 = vmatprep.subr.bf16.mxu0 %v8710
        %12099 = vmatpush2.bf16.msra.mxu0 %v8709
        %12100 = vmatprep.mubr.bf16.mxu0 %v4082
        %12101 = vmatmul.mubr.bf16.gmra.mxu0 %v4081
        %v12102 = vpop.f32.mrf.mxu0
        %v12103 = vadd.f32 %v12062, %v12102
        %v12104 = vpop.f32.mrf.mxu0
        %v12105 = vadd.f32 %v12064, %v12104
        %v12106 = vpop.f32.mrf.mxu0
        %v12107 = vpop.f32.mrf.mxu0
        %12108 = vdwg.mxu0
        %12109 = vmatprep.subr.bf16.mxu0 %v9025
        %12110 = vmatpush1.bf16.msra.mxu0 %v9024
        %12111 = vmatprep.subr.bf16.mxu0 %v9004
        %12112 = vmatpush1.bf16.msra.mxu0 %v9003
        %12113 = vmatprep.subr.bf16.mxu0 %v8983
        %12114 = vmatpush1.bf16.msra.mxu0 %v8982
        %12115 = vmatprep.subr.bf16.mxu0 %v8962
        %12116 = vmatpush1.bf16.msra.mxu0 %v8961
        %12117 = vmatprep.subr.bf16.mxu0 %v8941
        %12118 = vmatpush1.bf16.msra.mxu0 %v8940
        %12119 = vmatprep.subr.bf16.mxu0 %v8920
        %12120 = vmatpush1.bf16.msra.mxu0 %v8919
        %12121 = vmatprep.subr.bf16.mxu0 %v8899
        %12122 = vmatpush1.bf16.msra.mxu0 %v8898
        %12123 = vmatprep.subr.bf16.mxu0 %v8878
        %12124 = vmatpush1.bf16.msra.mxu0 %v8877
        %12125 = vmatprep.subr.bf16.mxu0 %v9193
        %12126 = vmatpush2.bf16.msra.mxu0 %v9192
        %12127 = vmatprep.subr.bf16.mxu0 %v9172
        %12128 = vmatpush2.bf16.msra.mxu0 %v9171
        %12129 = vmatprep.subr.bf16.mxu0 %v9151
        %12130 = vmatpush2.bf16.msra.mxu0 %v9150
        %12131 = vmatprep.subr.bf16.mxu0 %v9130
        %12132 = vmatpush2.bf16.msra.mxu0 %v9129
        %12133 = vmatprep.subr.bf16.mxu0 %v9109
        %12134 = vmatpush2.bf16.msra.mxu0 %v9108
        %12135 = vmatprep.subr.bf16.mxu0 %v9088
        %12136 = vmatpush2.bf16.msra.mxu0 %v9087
        %12137 = vmatprep.subr.bf16.mxu0 %v9067
        %12138 = vmatpush2.bf16.msra.mxu0 %v9066
        %12139 = vmatprep.subr.bf16.mxu0 %v9046
        %12140 = vmatpush2.bf16.msra.mxu0 %v9045
        %12141 = vmatprep.mubr.bf16.mxu0 %v4084
        %12142 = vmatmul.mubr.bf16.gmra.mxu0 %v4083
        %v12143 = vpop.f32.mrf.mxu0
        %v12144 = vadd.f32 %v12103, %v12143
        %v12145 = vpop.f32.mrf.mxu0
        %v12146 = vadd.f32 %v12105, %v12145
        %v12147 = vpop.f32.mrf.mxu0
        %v12148 = vpop.f32.mrf.mxu0
        %12149 = vdwg.mxu0
        %12150 = vmatprep.subr.bf16.mxu0 %v9361
        %12151 = vmatpush1.bf16.msra.mxu0 %v9360
        %12152 = vmatprep.subr.bf16.mxu0 %v9340
        %12153 = vmatpush1.bf16.msra.mxu0 %v9339
        %12154 = vmatprep.subr.bf16.mxu0 %v9319
        %12155 = vmatpush1.bf16.msra.mxu0 %v9318
        %12156 = vmatprep.subr.bf16.mxu0 %v9298
        %12157 = vmatpush1.bf16.msra.mxu0 %v9297
        %12158 = vmatprep.subr.bf16.mxu0 %v9277
        %12159 = vmatpush1.bf16.msra.mxu0 %v9276
        %12160 = vmatprep.subr.bf16.mxu0 %v9256
        %12161 = vmatpush1.bf16.msra.mxu0 %v9255
        %12162 = vmatprep.subr.bf16.mxu0 %v9235
        %12163 = vmatpush1.bf16.msra.mxu0 %v9234
        %12164 = vmatprep.subr.bf16.mxu0 %v9214
        %12165 = vmatpush1.bf16.msra.mxu0 %v9213
        %12166 = vmatprep.subr.bf16.mxu0 %v9529
        %12167 = vmatpush2.bf16.msra.mxu0 %v9528
        %12168 = vmatprep.subr.bf16.mxu0 %v9508
        %12169 = vmatpush2.bf16.msra.mxu0 %v9507
        %12170 = vmatprep.subr.bf16.mxu0 %v9487
        %12171 = vmatpush2.bf16.msra.mxu0 %v9486
        %12172 = vmatprep.subr.bf16.mxu0 %v9466
        %12173 = vmatpush2.bf16.msra.mxu0 %v9465
        %12174 = vmatprep.subr.bf16.mxu0 %v9445
        %12175 = vmatpush2.bf16.msra.mxu0 %v9444
        %12176 = vmatprep.subr.bf16.mxu0 %v9424
        %12177 = vmatpush2.bf16.msra.mxu0 %v9423
        %12178 = vmatprep.subr.bf16.mxu0 %v9403
        %12179 = vmatpush2.bf16.msra.mxu0 %v9402
        %12180 = vmatprep.subr.bf16.mxu0 %v9382
        %12181 = vmatpush2.bf16.msra.mxu0 %v9381
        %12182 = vmatprep.mubr.bf16.mxu0 %v4086
        %12183 = vmatmul.mubr.bf16.gmra.mxu0 %v4085
        %v12184 = vpop.f32.mrf.mxu0
        %v12185 = vadd.f32 %v12144, %v12184
        %v12186 = vpop.f32.mrf.mxu0
        %v12187 = vadd.f32 %v12146, %v12186
        %v12188 = vpop.f32.mrf.mxu0
        %v12189 = vpop.f32.mrf.mxu0
        %12190 = vdwg.mxu0
        %12191 = vmatprep.subr.bf16.mxu0 %v8355
        %12192 = vmatpush1.bf16.msra.mxu0 %v8354
        %12193 = vmatprep.subr.bf16.mxu0 %v8334
        %12194 = vmatpush1.bf16.msra.mxu0 %v8333
        %12195 = vmatprep.subr.bf16.mxu0 %v8313
        %12196 = vmatpush1.bf16.msra.mxu0 %v8312
        %12197 = vmatprep.subr.bf16.mxu0 %v8292
        %12198 = vmatpush1.bf16.msra.mxu0 %v8291
        %12199 = vmatprep.subr.bf16.mxu0 %v8271
        %12200 = vmatpush1.bf16.msra.mxu0 %v8270
        %12201 = vmatprep.subr.bf16.mxu0 %v8250
        %12202 = vmatpush1.bf16.msra.mxu0 %v8249
        %12203 = vmatprep.subr.bf16.mxu0 %v8229
        %12204 = vmatpush1.bf16.msra.mxu0 %v8228
        %12205 = vmatprep.subr.bf16.mxu0 %v8208
        %12206 = vmatpush1.bf16.msra.mxu0 %v8207
        %12207 = vmatprep.subr.bf16.mxu0 %v8523
        %12208 = vmatpush2.bf16.msra.mxu0 %v8522
        %12209 = vmatprep.subr.bf16.mxu0 %v8502
        %12210 = vmatpush2.bf16.msra.mxu0 %v8501
        %12211 = vmatprep.subr.bf16.mxu0 %v8481
        %12212 = vmatpush2.bf16.msra.mxu0 %v8480
        %12213 = vmatprep.subr.bf16.mxu0 %v8460
        %12214 = vmatpush2.bf16.msra.mxu0 %v8459
        %12215 = vmatprep.subr.bf16.mxu0 %v8439
        %12216 = vmatpush2.bf16.msra.mxu0 %v8438
        %12217 = vmatprep.subr.bf16.mxu0 %v8418
        %12218 = vmatpush2.bf16.msra.mxu0 %v8417
        %12219 = vmatprep.subr.bf16.mxu0 %v8397
        %12220 = vmatpush2.bf16.msra.mxu0 %v8396
        %12221 = vmatprep.subr.bf16.mxu0 %v8376
        %12222 = vmatpush2.bf16.msra.mxu0 %v8375
        %12223 = vmatprep.mubr.bf16.mxu0 %v4080
        %12224 = vmatmul.mubr.bf16.gmra.mxu0 %v4079
        %v12225 = vpop.f32.mrf.mxu0
        %v12226 = vadd.f32 %v4029, %v12225
        %v12227 = vpop.f32.mrf.mxu0
        %v12228 = vadd.f32 %v4033, %v12227
        %v12229 = vpop.f32.mrf.mxu0
        %v12230 = vpop.f32.mrf.mxu0
        %12231 = vdwg.mxu0
        %12232 = vmatprep.subr.bf16.mxu0 %v8691
        %12233 = vmatpush1.bf16.msra.mxu0 %v8690
        %12234 = vmatprep.subr.bf16.mxu0 %v8670
        %12235 = vmatpush1.bf16.msra.mxu0 %v8669
        %12236 = vmatprep.subr.bf16.mxu0 %v8649
        %12237 = vmatpush1.bf16.msra.mxu0 %v8648
        %12238 = vmatprep.subr.bf16.mxu0 %v8628
        %12239 = vmatpush1.bf16.msra.mxu0 %v8627
        %12240 = vmatprep.subr.bf16.mxu0 %v8607
        %12241 = vmatpush1.bf16.msra.mxu0 %v8606
        %12242 = vmatprep.subr.bf16.mxu0 %v8586
        %12243 = vmatpush1.bf16.msra.mxu0 %v8585
        %12244 = vmatprep.subr.bf16.mxu0 %v8565
        %12245 = vmatpush1.bf16.msra.mxu0 %v8564
        %12246 = vmatprep.subr.bf16.mxu0 %v8544
        %12247 = vmatpush1.bf16.msra.mxu0 %v8543
        %12248 = vmatprep.subr.bf16.mxu0 %v8859
        %12249 = vmatpush2.bf16.msra.mxu0 %v8858
        %12250 = vmatprep.subr.bf16.mxu0 %v8838
        %12251 = vmatpush2.bf16.msra.mxu0 %v8837
        %12252 = vmatprep.subr.bf16.mxu0 %v8817
        %12253 = vmatpush2.bf16.msra.mxu0 %v8816
        %12254 = vmatprep.subr.bf16.mxu0 %v8796
        %12255 = vmatpush2.bf16.msra.mxu0 %v8795
        %12256 = vmatprep.subr.bf16.mxu0 %v8775
        %12257 = vmatpush2.bf16.msra.mxu0 %v8774
        %12258 = vmatprep.subr.bf16.mxu0 %v8754
        %12259 = vmatpush2.bf16.msra.mxu0 %v8753
        %12260 = vmatprep.subr.bf16.mxu0 %v8733
        %12261 = vmatpush2.bf16.msra.mxu0 %v8732
        %12262 = vmatprep.subr.bf16.mxu0 %v8712
        %12263 = vmatpush2.bf16.msra.mxu0 %v8711
        %12264 = vmatprep.mubr.bf16.mxu0 %v4082
        %12265 = vmatmul.mubr.bf16.gmra.mxu0 %v4081
        %v12266 = vpop.f32.mrf.mxu0
        %v12267 = vadd.f32 %v12226, %v12266
        %v12268 = vpop.f32.mrf.mxu0
        %v12269 = vadd.f32 %v12228, %v12268
        %v12270 = vpop.f32.mrf.mxu0
        %v12271 = vpop.f32.mrf.mxu0
        %12272 = vdwg.mxu0
        %12273 = vmatprep.subr.bf16.mxu0 %v9027
        %12274 = vmatpush1.bf16.msra.mxu0 %v9026
        %12275 = vmatprep.subr.bf16.mxu0 %v9006
        %12276 = vmatpush1.bf16.msra.mxu0 %v9005
        %12277 = vmatprep.subr.bf16.mxu0 %v8985
        %12278 = vmatpush1.bf16.msra.mxu0 %v8984
        %12279 = vmatprep.subr.bf16.mxu0 %v8964
        %12280 = vmatpush1.bf16.msra.mxu0 %v8963
        %12281 = vmatprep.subr.bf16.mxu0 %v8943
        %12282 = vmatpush1.bf16.msra.mxu0 %v8942
        %12283 = vmatprep.subr.bf16.mxu0 %v8922
        %12284 = vmatpush1.bf16.msra.mxu0 %v8921
        %12285 = vmatprep.subr.bf16.mxu0 %v8901
        %12286 = vmatpush1.bf16.msra.mxu0 %v8900
        %12287 = vmatprep.subr.bf16.mxu0 %v8880
        %12288 = vmatpush1.bf16.msra.mxu0 %v8879
        %12289 = vmatprep.subr.bf16.mxu0 %v9195
        %12290 = vmatpush2.bf16.msra.mxu0 %v9194
        %12291 = vmatprep.subr.bf16.mxu0 %v9174
        %12292 = vmatpush2.bf16.msra.mxu0 %v9173
        %12293 = vmatprep.subr.bf16.mxu0 %v9153
        %12294 = vmatpush2.bf16.msra.mxu0 %v9152
        %12295 = vmatprep.subr.bf16.mxu0 %v9132
        %12296 = vmatpush2.bf16.msra.mxu0 %v9131
        %12297 = vmatprep.subr.bf16.mxu0 %v9111
        %12298 = vmatpush2.bf16.msra.mxu0 %v9110
        %12299 = vmatprep.subr.bf16.mxu0 %v9090
        %12300 = vmatpush2.bf16.msra.mxu0 %v9089
        %12301 = vmatprep.subr.bf16.mxu0 %v9069
        %12302 = vmatpush2.bf16.msra.mxu0 %v9068
        %12303 = vmatprep.subr.bf16.mxu0 %v9048
        %12304 = vmatpush2.bf16.msra.mxu0 %v9047
        %12305 = vmatprep.mubr.bf16.mxu0 %v4084
        %12306 = vmatmul.mubr.bf16.gmra.mxu0 %v4083
        %v12307 = vpop.f32.mrf.mxu0
        %v12308 = vadd.f32 %v12267, %v12307
        %v12309 = vpop.f32.mrf.mxu0
        %v12310 = vadd.f32 %v12269, %v12309
        %v12311 = vpop.f32.mrf.mxu0
        %v12312 = vpop.f32.mrf.mxu0
        %12313 = vdwg.mxu0
        %12314 = vmatprep.subr.bf16.mxu0 %v9363
        %12315 = vmatpush1.bf16.msra.mxu0 %v9362
        %12316 = vmatprep.subr.bf16.mxu0 %v9342
        %12317 = vmatpush1.bf16.msra.mxu0 %v9341
        %12318 = vmatprep.subr.bf16.mxu0 %v9321
        %12319 = vmatpush1.bf16.msra.mxu0 %v9320
        %12320 = vmatprep.subr.bf16.mxu0 %v9300
        %12321 = vmatpush1.bf16.msra.mxu0 %v9299
        %12322 = vmatprep.subr.bf16.mxu0 %v9279
        %12323 = vmatpush1.bf16.msra.mxu0 %v9278
        %12324 = vmatprep.subr.bf16.mxu0 %v9258
        %12325 = vmatpush1.bf16.msra.mxu0 %v9257
        %12326 = vmatprep.subr.bf16.mxu0 %v9237
        %12327 = vmatpush1.bf16.msra.mxu0 %v9236
        %12328 = vmatprep.subr.bf16.mxu0 %v9216
        %12329 = vmatpush1.bf16.msra.mxu0 %v9215
        %12330 = vmatprep.subr.bf16.mxu0 %v9531
        %12331 = vmatpush2.bf16.msra.mxu0 %v9530
        %12332 = vmatprep.subr.bf16.mxu0 %v9510
        %12333 = vmatpush2.bf16.msra.mxu0 %v9509
        %12334 = vmatprep.subr.bf16.mxu0 %v9489
        %12335 = vmatpush2.bf16.msra.mxu0 %v9488
        %12336 = vmatprep.subr.bf16.mxu0 %v9468
        %12337 = vmatpush2.bf16.msra.mxu0 %v9467
        %12338 = vmatprep.subr.bf16.mxu0 %v9447
        %12339 = vmatpush2.bf16.msra.mxu0 %v9446
        %12340 = vmatprep.subr.bf16.mxu0 %v9426
        %12341 = vmatpush2.bf16.msra.mxu0 %v9425
        %12342 = vmatprep.subr.bf16.mxu0 %v9405
        %12343 = vmatpush2.bf16.msra.mxu0 %v9404
        %12344 = vmatprep.subr.bf16.mxu0 %v9384
        %12345 = vmatpush2.bf16.msra.mxu0 %v9383
        %12346 = vmatprep.mubr.bf16.mxu0 %v4086
        %12347 = vmatmul.mubr.bf16.gmra.mxu0 %v4085
        %v12348 = vpop.f32.mrf.mxu0
        %v12349 = vadd.f32 %v12308, %v12348
        %v12350 = vpop.f32.mrf.mxu0
        %v12351 = vadd.f32 %v12310, %v12350
        %v12352 = vpop.f32.mrf.mxu0
        %v12353 = vpop.f32.mrf.mxu0
        %12354 = vdwg.mxu0
        %12355 = vmatprep.subr.bf16.mxu0 %v8357
        %12356 = vmatpush1.bf16.msra.mxu0 %v8356
        %12357 = vmatprep.subr.bf16.mxu0 %v8336
        %12358 = vmatpush1.bf16.msra.mxu0 %v8335
        %12359 = vmatprep.subr.bf16.mxu0 %v8315
        %12360 = vmatpush1.bf16.msra.mxu0 %v8314
        %12361 = vmatprep.subr.bf16.mxu0 %v8294
        %12362 = vmatpush1.bf16.msra.mxu0 %v8293
        %12363 = vmatprep.subr.bf16.mxu0 %v8273
        %12364 = vmatpush1.bf16.msra.mxu0 %v8272
        %12365 = vmatprep.subr.bf16.mxu0 %v8252
        %12366 = vmatpush1.bf16.msra.mxu0 %v8251
        %12367 = vmatprep.subr.bf16.mxu0 %v8231
        %12368 = vmatpush1.bf16.msra.mxu0 %v8230
        %12369 = vmatprep.subr.bf16.mxu0 %v8210
        %12370 = vmatpush1.bf16.msra.mxu0 %v8209
        %12371 = vmatprep.subr.bf16.mxu0 %v8525
        %12372 = vmatpush2.bf16.msra.mxu0 %v8524
        %12373 = vmatprep.subr.bf16.mxu0 %v8504
        %12374 = vmatpush2.bf16.msra.mxu0 %v8503
        %12375 = vmatprep.subr.bf16.mxu0 %v8483
        %12376 = vmatpush2.bf16.msra.mxu0 %v8482
        %12377 = vmatprep.subr.bf16.mxu0 %v8462
        %12378 = vmatpush2.bf16.msra.mxu0 %v8461
        %12379 = vmatprep.subr.bf16.mxu0 %v8441
        %12380 = vmatpush2.bf16.msra.mxu0 %v8440
        %12381 = vmatprep.subr.bf16.mxu0 %v8420
        %12382 = vmatpush2.bf16.msra.mxu0 %v8419
        %12383 = vmatprep.subr.bf16.mxu0 %v8399
        %12384 = vmatpush2.bf16.msra.mxu0 %v8398
        %12385 = vmatprep.subr.bf16.mxu0 %v8378
        %12386 = vmatpush2.bf16.msra.mxu0 %v8377
        %12387 = vmatprep.mubr.bf16.mxu0 %v4080
        %12388 = vmatmul.mubr.bf16.gmra.mxu0 %v4079
        %v12389 = vpop.f32.mrf.mxu0
        %v12390 = vadd.f32 %v4037, %v12389
        %v12391 = vpop.f32.mrf.mxu0
        %v12392 = vadd.f32 %v4041, %v12391
        %v12393 = vpop.f32.mrf.mxu0
        %v12394 = vpop.f32.mrf.mxu0
        %12395 = vdwg.mxu0
        %12396 = vmatprep.subr.bf16.mxu0 %v8693
        %12397 = vmatpush1.bf16.msra.mxu0 %v8692
        %12398 = vmatprep.subr.bf16.mxu0 %v8672
        %12399 = vmatpush1.bf16.msra.mxu0 %v8671
        %12400 = vmatprep.subr.bf16.mxu0 %v8651
        %12401 = vmatpush1.bf16.msra.mxu0 %v8650
        %12402 = vmatprep.subr.bf16.mxu0 %v8630
        %12403 = vmatpush1.bf16.msra.mxu0 %v8629
        %12404 = vmatprep.subr.bf16.mxu0 %v8609
        %12405 = vmatpush1.bf16.msra.mxu0 %v8608
        %12406 = vmatprep.subr.bf16.mxu0 %v8588
        %12407 = vmatpush1.bf16.msra.mxu0 %v8587
        %12408 = vmatprep.subr.bf16.mxu0 %v8567
        %12409 = vmatpush1.bf16.msra.mxu0 %v8566
        %12410 = vmatprep.subr.bf16.mxu0 %v8546
        %12411 = vmatpush1.bf16.msra.mxu0 %v8545
        %12412 = vmatprep.subr.bf16.mxu0 %v8861
        %12413 = vmatpush2.bf16.msra.mxu0 %v8860
        %12414 = vmatprep.subr.bf16.mxu0 %v8840
        %12415 = vmatpush2.bf16.msra.mxu0 %v8839
        %12416 = vmatprep.subr.bf16.mxu0 %v8819
        %12417 = vmatpush2.bf16.msra.mxu0 %v8818
        %12418 = vmatprep.subr.bf16.mxu0 %v8798
        %12419 = vmatpush2.bf16.msra.mxu0 %v8797
        %12420 = vmatprep.subr.bf16.mxu0 %v8777
        %12421 = vmatpush2.bf16.msra.mxu0 %v8776
        %12422 = vmatprep.subr.bf16.mxu0 %v8756
        %12423 = vmatpush2.bf16.msra.mxu0 %v8755
        %12424 = vmatprep.subr.bf16.mxu0 %v8735
        %12425 = vmatpush2.bf16.msra.mxu0 %v8734
        %12426 = vmatprep.subr.bf16.mxu0 %v8714
        %12427 = vmatpush2.bf16.msra.mxu0 %v8713
        %12428 = vmatprep.mubr.bf16.mxu0 %v4082
        %12429 = vmatmul.mubr.bf16.gmra.mxu0 %v4081
        %v12430 = vpop.f32.mrf.mxu0
        %v12431 = vadd.f32 %v12390, %v12430
        %v12432 = vpop.f32.mrf.mxu0
        %v12433 = vadd.f32 %v12392, %v12432
        %v12434 = vpop.f32.mrf.mxu0
        %v12435 = vpop.f32.mrf.mxu0
        %12436 = vdwg.mxu0
        %12437 = vmatprep.subr.bf16.mxu0 %v9029
        %12438 = vmatpush1.bf16.msra.mxu0 %v9028
        %12439 = vmatprep.subr.bf16.mxu0 %v9008
        %12440 = vmatpush1.bf16.msra.mxu0 %v9007
        %12441 = vmatprep.subr.bf16.mxu0 %v8987
        %12442 = vmatpush1.bf16.msra.mxu0 %v8986
        %12443 = vmatprep.subr.bf16.mxu0 %v8966
        %12444 = vmatpush1.bf16.msra.mxu0 %v8965
        %12445 = vmatprep.subr.bf16.mxu0 %v8945
        %12446 = vmatpush1.bf16.msra.mxu0 %v8944
        %12447 = vmatprep.subr.bf16.mxu0 %v8924
        %12448 = vmatpush1.bf16.msra.mxu0 %v8923
        %12449 = vmatprep.subr.bf16.mxu0 %v8903
        %12450 = vmatpush1.bf16.msra.mxu0 %v8902
        %12451 = vmatprep.subr.bf16.mxu0 %v8882
        %12452 = vmatpush1.bf16.msra.mxu0 %v8881
        %12453 = vmatprep.subr.bf16.mxu0 %v9197
        %12454 = vmatpush2.bf16.msra.mxu0 %v9196
        %12455 = vmatprep.subr.bf16.mxu0 %v9176
        %12456 = vmatpush2.bf16.msra.mxu0 %v9175
        %12457 = vmatprep.subr.bf16.mxu0 %v9155
        %12458 = vmatpush2.bf16.msra.mxu0 %v9154
        %12459 = vmatprep.subr.bf16.mxu0 %v9134
        %12460 = vmatpush2.bf16.msra.mxu0 %v9133
        %12461 = vmatprep.subr.bf16.mxu0 %v9113
        %12462 = vmatpush2.bf16.msra.mxu0 %v9112
        %12463 = vmatprep.subr.bf16.mxu0 %v9092
        %12464 = vmatpush2.bf16.msra.mxu0 %v9091
        %12465 = vmatprep.subr.bf16.mxu0 %v9071
        %12466 = vmatpush2.bf16.msra.mxu0 %v9070
        %12467 = vmatprep.subr.bf16.mxu0 %v9050
        %12468 = vmatpush2.bf16.msra.mxu0 %v9049
        %12469 = vmatprep.mubr.bf16.mxu0 %v4084
        %12470 = vmatmul.mubr.bf16.gmra.mxu0 %v4083
        %v12471 = vpop.f32.mrf.mxu0
        %v12472 = vadd.f32 %v12431, %v12471
        %v12473 = vpop.f32.mrf.mxu0
        %v12474 = vadd.f32 %v12433, %v12473
        %v12475 = vpop.f32.mrf.mxu0
        %v12476 = vpop.f32.mrf.mxu0
        %12477 = vdwg.mxu0
        %12478 = vmatprep.subr.bf16.mxu0 %v9365
        %12479 = vmatpush1.bf16.msra.mxu0 %v9364
        %12480 = vmatprep.subr.bf16.mxu0 %v9344
        %12481 = vmatpush1.bf16.msra.mxu0 %v9343
        %12482 = vmatprep.subr.bf16.mxu0 %v9323
        %12483 = vmatpush1.bf16.msra.mxu0 %v9322
        %12484 = vmatprep.subr.bf16.mxu0 %v9302
        %12485 = vmatpush1.bf16.msra.mxu0 %v9301
        %12486 = vmatprep.subr.bf16.mxu0 %v9281
        %12487 = vmatpush1.bf16.msra.mxu0 %v9280
        %12488 = vmatprep.subr.bf16.mxu0 %v9260
        %12489 = vmatpush1.bf16.msra.mxu0 %v9259
        %12490 = vmatprep.subr.bf16.mxu0 %v9239
        %12491 = vmatpush1.bf16.msra.mxu0 %v9238
        %12492 = vmatprep.subr.bf16.mxu0 %v9218
        %12493 = vmatpush1.bf16.msra.mxu0 %v9217
        %12494 = vmatprep.subr.bf16.mxu0 %v9533
        %12495 = vmatpush2.bf16.msra.mxu0 %v9532
        %12496 = vmatprep.subr.bf16.mxu0 %v9512
        %12497 = vmatpush2.bf16.msra.mxu0 %v9511
        %12498 = vmatprep.subr.bf16.mxu0 %v9491
        %12499 = vmatpush2.bf16.msra.mxu0 %v9490
        %12500 = vmatprep.subr.bf16.mxu0 %v9470
        %12501 = vmatpush2.bf16.msra.mxu0 %v9469
        %12502 = vmatprep.subr.bf16.mxu0 %v9449
        %12503 = vmatpush2.bf16.msra.mxu0 %v9448
        %12504 = vmatprep.subr.bf16.mxu0 %v9428
        %12505 = vmatpush2.bf16.msra.mxu0 %v9427
        %12506 = vmatprep.subr.bf16.mxu0 %v9407
        %12507 = vmatpush2.bf16.msra.mxu0 %v9406
        %12508 = vmatprep.subr.bf16.mxu0 %v9386
        %12509 = vmatpush2.bf16.msra.mxu0 %v9385
        %12510 = vmatprep.mubr.bf16.mxu0 %v4086
        %12511 = vmatmul.mubr.bf16.gmra.mxu0 %v4085
        %v12512 = vpop.f32.mrf.mxu0
        %v12513 = vadd.f32 %v12472, %v12512
        %v12514 = vpop.f32.mrf.mxu0
        %v12515 = vadd.f32 %v12474, %v12514
        %v12516 = vpop.f32.mrf.mxu0
        %v12517 = vpop.f32.mrf.mxu0
        %12518 = vdwg.mxu0
        %12519 = vmatprep.subr.bf16.mxu0 0
        %12520 = vmatpush1.bf16.msra.mxu0 %v8358
        %12521 = vmatprep.subr.bf16.mxu0 0
        %12522 = vmatpush1.bf16.msra.mxu0 %v8337
        %12523 = vmatprep.subr.bf16.mxu0 0
        %12524 = vmatpush1.bf16.msra.mxu0 %v8316
        %12525 = vmatprep.subr.bf16.mxu0 0
        %12526 = vmatpush1.bf16.msra.mxu0 %v8295
        %12527 = vmatprep.subr.bf16.mxu0 0
        %12528 = vmatpush1.bf16.msra.mxu0 %v8274
        %12529 = vmatprep.subr.bf16.mxu0 0
        %12530 = vmatpush1.bf16.msra.mxu0 %v8253
        %12531 = vmatprep.subr.bf16.mxu0 0
        %12532 = vmatpush1.bf16.msra.mxu0 %v8232
        %12533 = vmatprep.subr.bf16.mxu0 0
        %12534 = vmatpush1.bf16.msra.mxu0 %v8211
        %12535 = vmatprep.subr.bf16.mxu0 0
        %12536 = vmatpush2.bf16.msra.mxu0 %v8526
        %12537 = vmatprep.subr.bf16.mxu0 0
        %12538 = vmatpush2.bf16.msra.mxu0 %v8505
        %12539 = vmatprep.subr.bf16.mxu0 0
        %12540 = vmatpush2.bf16.msra.mxu0 %v8484
        %12541 = vmatprep.subr.bf16.mxu0 0
        %12542 = vmatpush2.bf16.msra.mxu0 %v8463
        %12543 = vmatprep.subr.bf16.mxu0 0
        %12544 = vmatpush2.bf16.msra.mxu0 %v8442
        %12545 = vmatprep.subr.bf16.mxu0 0
        %12546 = vmatpush2.bf16.msra.mxu0 %v8421
        %12547 = vmatprep.subr.bf16.mxu0 0
        %12548 = vmatpush2.bf16.msra.mxu0 %v8400
        %12549 = vmatprep.subr.bf16.mxu0 0
        %12550 = vmatpush2.bf16.msra.mxu0 %v8379
        %12551 = vmatprep.mubr.bf16.mxu0 %v4080
        %12552 = vmatmul.mubr.bf16.gmra.mxu0 %v4079
        %v12553 = vpop.f32.mrf.mxu0
        %v12554 = vadd.f32 %v4045, %v12553
        %v12555 = vpop.f32.mrf.mxu0
        %v12556 = vpop.f32.mrf.mxu0
        %v12557 = vpop.f32.mrf.mxu0
        %12558 = vdwg.mxu0
        %12559 = vmatprep.subr.bf16.mxu0 0
        %12560 = vmatpush1.bf16.msra.mxu0 %v8694
        %12561 = vmatprep.subr.bf16.mxu0 0
        %12562 = vmatpush1.bf16.msra.mxu0 %v8673
        %12563 = vmatprep.subr.bf16.mxu0 0
        %12564 = vmatpush1.bf16.msra.mxu0 %v8652
        %12565 = vmatprep.subr.bf16.mxu0 0
        %12566 = vmatpush1.bf16.msra.mxu0 %v8631
        %12567 = vmatprep.subr.bf16.mxu0 0
        %12568 = vmatpush1.bf16.msra.mxu0 %v8610
        %12569 = vmatprep.subr.bf16.mxu0 0
        %12570 = vmatpush1.bf16.msra.mxu0 %v8589
        %12571 = vmatprep.subr.bf16.mxu0 0
        %12572 = vmatpush1.bf16.msra.mxu0 %v8568
        %12573 = vmatprep.subr.bf16.mxu0 0
        %12574 = vmatpush1.bf16.msra.mxu0 %v8547
        %12575 = vmatprep.subr.bf16.mxu0 0
        %12576 = vmatpush2.bf16.msra.mxu0 %v8862
        %12577 = vmatprep.subr.bf16.mxu0 0
        %12578 = vmatpush2.bf16.msra.mxu0 %v8841
        %12579 = vmatprep.subr.bf16.mxu0 0
        %12580 = vmatpush2.bf16.msra.mxu0 %v8820
        %12581 = vmatprep.subr.bf16.mxu0 0
        %12582 = vmatpush2.bf16.msra.mxu0 %v8799
        %12583 = vmatprep.subr.bf16.mxu0 0
        %12584 = vmatpush2.bf16.msra.mxu0 %v8778
        %12585 = vmatprep.subr.bf16.mxu0 0
        %12586 = vmatpush2.bf16.msra.mxu0 %v8757
        %12587 = vmatprep.subr.bf16.mxu0 0
        %12588 = vmatpush2.bf16.msra.mxu0 %v8736
        %12589 = vmatprep.subr.bf16.mxu0 0
        %12590 = vmatpush2.bf16.msra.mxu0 %v8715
        %12591 = vmatprep.mubr.bf16.mxu0 %v4082
        %12592 = vmatmul.mubr.bf16.gmra.mxu0 %v4081
        %v12593 = vpop.f32.mrf.mxu0
        %v12594 = vadd.f32 %v12554, %v12593
        %v12595 = vpop.f32.mrf.mxu0
        %v12596 = vpop.f32.mrf.mxu0
        %v12597 = vpop.f32.mrf.mxu0
        %12598 = vdwg.mxu0
        %12599 = vmatprep.subr.bf16.mxu0 0
        %12600 = vmatpush1.bf16.msra.mxu0 %v9030
        %12601 = vmatprep.subr.bf16.mxu0 0
        %12602 = vmatpush1.bf16.msra.mxu0 %v9009
        %12603 = vmatprep.subr.bf16.mxu0 0
        %12604 = vmatpush1.bf16.msra.mxu0 %v8988
        %12605 = vmatprep.subr.bf16.mxu0 0
        %12606 = vmatpush1.bf16.msra.mxu0 %v8967
        %12607 = vmatprep.subr.bf16.mxu0 0
        %12608 = vmatpush1.bf16.msra.mxu0 %v8946
        %12609 = vmatprep.subr.bf16.mxu0 0
        %12610 = vmatpush1.bf16.msra.mxu0 %v8925
        %12611 = vmatprep.subr.bf16.mxu0 0
        %12612 = vmatpush1.bf16.msra.mxu0 %v8904
        %12613 = vmatprep.subr.bf16.mxu0 0
        %12614 = vmatpush1.bf16.msra.mxu0 %v8883
        %12615 = vmatprep.subr.bf16.mxu0 0
        %12616 = vmatpush2.bf16.msra.mxu0 %v9198
        %12617 = vmatprep.subr.bf16.mxu0 0
        %12618 = vmatpush2.bf16.msra.mxu0 %v9177
        %12619 = vmatprep.subr.bf16.mxu0 0
        %12620 = vmatpush2.bf16.msra.mxu0 %v9156
        %12621 = vmatprep.subr.bf16.mxu0 0
        %12622 = vmatpush2.bf16.msra.mxu0 %v9135
        %12623 = vmatprep.subr.bf16.mxu0 0
        %12624 = vmatpush2.bf16.msra.mxu0 %v9114
        %12625 = vmatprep.subr.bf16.mxu0 0
        %12626 = vmatpush2.bf16.msra.mxu0 %v9093
        %12627 = vmatprep.subr.bf16.mxu0 0
        %12628 = vmatpush2.bf16.msra.mxu0 %v9072
        %12629 = vmatprep.subr.bf16.mxu0 0
        %12630 = vmatpush2.bf16.msra.mxu0 %v9051
        %12631 = vmatprep.mubr.bf16.mxu0 %v4084
        %12632 = vmatmul.mubr.bf16.gmra.mxu0 %v4083
        %v12633 = vpop.f32.mrf.mxu0
        %v12634 = vadd.f32 %v12594, %v12633
        %v12635 = vpop.f32.mrf.mxu0
        %v12636 = vpop.f32.mrf.mxu0
        %v12637 = vpop.f32.mrf.mxu0
        %12638 = vdwg.mxu0
        %12639 = vmatprep.subr.bf16.mxu0 0
        %12640 = vmatpush1.bf16.msra.mxu0 %v9366
        %12641 = vmatprep.subr.bf16.mxu0 0
        %12642 = vmatpush1.bf16.msra.mxu0 %v9345
        %12643 = vmatprep.subr.bf16.mxu0 0
        %12644 = vmatpush1.bf16.msra.mxu0 %v9324
        %12645 = vmatprep.subr.bf16.mxu0 0
        %12646 = vmatpush1.bf16.msra.mxu0 %v9303
        %12647 = vmatprep.subr.bf16.mxu0 0
        %12648 = vmatpush1.bf16.msra.mxu0 %v9282
        %12649 = vmatprep.subr.bf16.mxu0 0
        %12650 = vmatpush1.bf16.msra.mxu0 %v9261
        %12651 = vmatprep.subr.bf16.mxu0 0
        %12652 = vmatpush1.bf16.msra.mxu0 %v9240
        %12653 = vmatprep.subr.bf16.mxu0 0
        %12654 = vmatpush1.bf16.msra.mxu0 %v9219
        %12655 = vmatprep.subr.bf16.mxu0 0
        %12656 = vmatpush2.bf16.msra.mxu0 %v9534
        %12657 = vmatprep.subr.bf16.mxu0 0
        %12658 = vmatpush2.bf16.msra.mxu0 %v9513
        %12659 = vmatprep.subr.bf16.mxu0 0
        %12660 = vmatpush2.bf16.msra.mxu0 %v9492
        %12661 = vmatprep.subr.bf16.mxu0 0
        %12662 = vmatpush2.bf16.msra.mxu0 %v9471
        %12663 = vmatprep.subr.bf16.mxu0 0
        %12664 = vmatpush2.bf16.msra.mxu0 %v9450
        %12665 = vmatprep.subr.bf16.mxu0 0
        %12666 = vmatpush2.bf16.msra.mxu0 %v9429
        %12667 = vmatprep.subr.bf16.mxu0 0
        %12668 = vmatpush2.bf16.msra.mxu0 %v9408
        %12669 = vmatprep.subr.bf16.mxu0 0
        %12670 = vmatpush2.bf16.msra.mxu0 %v9387
        %12671 = vmatprep.mubr.bf16.mxu0 %v4086
        %12672 = vmatmul.mubr.bf16.gmra.mxu0 %v4085
        %v12673 = vpop.f32.mrf.mxu0
        %v12674 = vadd.f32 %v12634, %v12673
        %v12675 = vpop.f32.mrf.mxu0
        %v12676 = vpop.f32.mrf.mxu0
        %v12677 = vpop.f32.mrf.mxu0
        %12678 = vdwg.mxu0
        %v12679 = vsub.f32 0.0, %v11037
        %v12680 = vsub.f32 0.0, %v11039
        %v12681 = vsub.f32 0.0, %v11201
        %v12682 = vsub.f32 0.0, %v11203
        %v12683 = vsub.f32 0.0, %v11365
        %v12684 = vsub.f32 0.0, %v11367
        %v12685 = vsub.f32 0.0, %v11529
        %v12686 = vsub.f32 0.0, %v11531
        %v12687 = vsub.f32 0.0, %v11693
        %v12688 = vsub.f32 0.0, %v11695
        %v12689 = vsub.f32 0.0, %v11857
        %v12690 = vsub.f32 0.0, %v11859
        %v12691 = vsub.f32 0.0, %v12021
        %v12692 = vsub.f32 0.0, %v12023
        %v12693 = vsub.f32 0.0, %v12185
        %v12694 = vsub.f32 0.0, %v12187
        %v12695 = vsub.f32 0.0, %v12349
        %v12696 = vsub.f32 0.0, %v12351
        %v12697 = vsub.f32 0.0, %v12513
        %v12698 = vsub.f32 0.0, %v12515
        %v12699 = vsub.f32 0.0, %v12674
        %v12700 = vmul.f32 %v12679, 1.442695
        %v12701 = vpow.pop %v12700
        %v12702 = vmul.f32 %v12680, 1.442695
        %v12703 = vpow.pop %v12702
        %v12704 = vmul.f32 %v12681, 1.442695
        %v12705 = vpow.pop %v12704
        %v12706 = vmul.f32 %v12682, 1.442695
        %v12707 = vpow.pop %v12706
        %v12708 = vmul.f32 %v12683, 1.442695
        %v12709 = vpow.pop %v12708
        %v12710 = vmul.f32 %v12684, 1.442695
        %v12711 = vpow.pop %v12710
        %v12712 = vmul.f32 %v12685, 1.442695
        %v12713 = vpow.pop %v12712
        %v12714 = vmul.f32 %v12686, 1.442695
        %v12715 = vpow.pop %v12714
        %v12716 = vmul.f32 %v12687, 1.442695
        %v12717 = vpow.pop %v12716
        %v12718 = vmul.f32 %v12688, 1.442695
        %v12719 = vpow.pop %v12718
        %v12720 = vmul.f32 %v12689, 1.442695
        %v12721 = vpow.pop %v12720
        %v12722 = vmul.f32 %v12690, 1.442695
        %v12723 = vpow.pop %v12722
        %v12724 = vmul.f32 %v12691, 1.442695
        %v12725 = vpow.pop %v12724
        %v12726 = vmul.f32 %v12692, 1.442695
        %v12727 = vpow.pop %v12726
        %v12728 = vmul.f32 %v12693, 1.442695
        %v12729 = vpow.pop %v12728
        %v12730 = vmul.f32 %v12694, 1.442695
        %v12731 = vpow.pop %v12730
        %v12732 = vmul.f32 %v12695, 1.442695
        %v12733 = vpow.pop %v12732
        %v12734 = vmul.f32 %v12696, 1.442695
        %v12735 = vpow.pop %v12734
        %v12736 = vmul.f32 %v12697, 1.442695
        %v12737 = vpow.pop %v12736
        %v12738 = vmul.f32 %v12698, 1.442695
        %v12739 = vpow.pop %v12738
        %v12740 = vmul.f32 %v12699, 1.442695
        %v12741 = vpow.pop %v12740
        %v12742 = vadd.f32 %v12701, 1.0
        %v12743 = vadd.f32 %v12703, 1.0
        %v12744 = vadd.f32 %v12705, 1.0
        %v12745 = vadd.f32 %v12707, 1.0
        %v12746 = vadd.f32 %v12709, 1.0
        %v12747 = vadd.f32 %v12711, 1.0
        %v12748 = vadd.f32 %v12713, 1.0
        %v12749 = vadd.f32 %v12715, 1.0
        %v12750 = vadd.f32 %v12717, 1.0
        %v12751 = vadd.f32 %v12719, 1.0
        %v12752 = vadd.f32 %v12721, 1.0
        %v12753 = vadd.f32 %v12723, 1.0
        %v12754 = vadd.f32 %v12725, 1.0
        %v12755 = vadd.f32 %v12727, 1.0
        %v12756 = vadd.f32 %v12729, 1.0
        %v12757 = vadd.f32 %v12731, 1.0
        %v12758 = vadd.f32 %v12733, 1.0
        %v12759 = vadd.f32 %v12735, 1.0
        %v12760 = vadd.f32 %v12737, 1.0
        %v12761 = vadd.f32 %v12739, 1.0
        %v12762 = vadd.f32 %v12741, 1.0
        %v12763 = vrcp.pop %v12742
        %v12764 = vmul.f32 1.0, %v12763
        %v12765 = vrcp.pop %v12743
        %v12766 = vmul.f32 1.0, %v12765
        %v12767 = vrcp.pop %v12744
        %v12768 = vmul.f32 1.0, %v12767
        %v12769 = vrcp.pop %v12745
        %v12770 = vmul.f32 1.0, %v12769
        %v12771 = vrcp.pop %v12746
        %v12772 = vmul.f32 1.0, %v12771
        %v12773 = vrcp.pop %v12747
        %v12774 = vmul.f32 1.0, %v12773
        %v12775 = vrcp.pop %v12748
        %v12776 = vmul.f32 1.0, %v12775
        %v12777 = vrcp.pop %v12749
        %v12778 = vmul.f32 1.0, %v12777
        %v12779 = vrcp.pop %v12750
        %v12780 = vmul.f32 1.0, %v12779
        %v12781 = vrcp.pop %v12751
        %v12782 = vmul.f32 1.0, %v12781
        %v12783 = vrcp.pop %v12752
        %v12784 = vmul.f32 1.0, %v12783
        %v12785 = vrcp.pop %v12753
        %v12786 = vmul.f32 1.0, %v12785
        %v12787 = vrcp.pop %v12754
        %v12788 = vmul.f32 1.0, %v12787
        %v12789 = vrcp.pop %v12755
        %v12790 = vmul.f32 1.0, %v12789
        %v12791 = vrcp.pop %v12756
        %v12792 = vmul.f32 1.0, %v12791
        %v12793 = vrcp.pop %v12757
        %v12794 = vmul.f32 1.0, %v12793
        %v12795 = vrcp.pop %v12758
        %v12796 = vmul.f32 1.0, %v12795
        %v12797 = vrcp.pop %v12759
        %v12798 = vmul.f32 1.0, %v12797
        %v12799 = vrcp.pop %v12760
        %v12800 = vmul.f32 1.0, %v12799
        %v12801 = vrcp.pop %v12761
        %v12802 = vmul.f32 1.0, %v12801
        %v12803 = vrcp.pop %v12762
        %v12804 = vmul.f32 1.0, %v12803
        %12805 = vst [vmem:[%s419] sm:$0xff] %v12764
        %12806 = vst [vmem:[%s419 + $0x8] sm:$0xff] %v12766
        %12807 = vst [vmem:[%s419 + $0x10] sm:$0xff] %v12768
        %12808 = vst [vmem:[%s419 + $0x18] sm:$0xff] %v12770
        %12809 = vst [vmem:[%s419 + $0x20] sm:$0xff] %v12772
        %12810 = vst [vmem:[%s419 + $0x28] sm:$0xff] %v12774
        %12811 = vst [vmem:[%s419 + $0x30] sm:$0xff] %v12776
        %12812 = vst [vmem:[%s419 + $0x38] sm:$0xff] %v12778
        %12813 = vst [vmem:[%s419 + $0x40] sm:$0xff] %v12780
        %12814 = vst [vmem:[%s419 + $0x48] sm:$0xff] %v12782
        %12815 = vst [vmem:[%s419 + $0x50] sm:$0xff] %v12784
        %12816 = vst [vmem:[%s419 + $0x58] sm:$0xff] %v12786
        %12817 = vst [vmem:[%s419 + $0x60] sm:$0xff] %v12788
        %12818 = vst [vmem:[%s419 + $0x68] sm:$0xff] %v12790
        %12819 = vst [vmem:[%s419 + $0x70] sm:$0xff] %v12792
        %12820 = vst [vmem:[%s419 + $0x78] sm:$0xff] %v12794
        %12821 = vst [vmem:[%s419 + $0x80] sm:$0xff] %v12796
        %12822 = vst [vmem:[%s419 + $0x88] sm:$0xff] %v12798
        %12823 = vst [vmem:[%s419 + $0x90] sm:$0xff] %v12800
        %12824 = vst [vmem:[%s419 + $0x98] sm:$0xff] %v12802
        %12825 = vst [vmem:[%s419 + $0xa0] sm:$0xff] %v12804
        %s12826 = sand.u32 %s211, 1
        %s12827 = scalar_lea.sflag [#allocation5], %s12826
        %s12828 = sand.u32 %s211, 1
        %s12829 = smul.addr %s12828, 168
        %s12830 = scalar_lea.vmem [#allocation15], %s12829
        // Predicated region
        $region81: #{tpu_custom_call.1} parent=47 // pred_check
          %p12831 = pneg %p221
        $region82: #{tpu_custom_call.1} parent=47 // pred_check_branch
          %12833 = sbr.rel (%p12831) target = $region84
        $region83: #{tpu_custom_call.1} parent=47 // pred_region
          %s12834 = smul.u32 21, %s32
          %s12836 = ssub.s32 2688, 2688
          %12837 = vsyncadd %s12827, %s12836
          %s12838 = smul.addr %s31, 168
          %s12839 = sadd.s32 %s12834, %s12838
          %s12840 = smul.addr %s12839, 128
          %s12841 = scalar_lea.hbm %s7, %s12840
          %s12843 = sshll.u32 %s12830, 4
          %s12844 = int_to_ptr.vmem [resolvable:$true] %s12843
          %12846 = dma.vmem_to_hbm [thread:$0]  %s12844, 2688, %s12841, %s12827
        $region84: #{tpu_custom_call.1} parent=47 // pred_fallthru
          _
      $region48: #{tpu_custom_call.1} parent=5 // pred_fallthru
        _
      %p12847 = scmp.le.s32.totalorder 2, %s22
      // Predicated region
      $region85: #{tpu_custom_call.1} parent=5 // pred_check
        %p12848 = pneg %p12847
      $region86: #{tpu_custom_call.1} parent=5 // pred_check_branch
        %12850 = sbr.rel (%p12848) target = $region88
      $region87: #{tpu_custom_call.1} parent=5 // pred_region
        %s12851 = ssub.s32 %s22, 2
        // Predicated region
        $region89: #{tpu_custom_call.1} parent=87 // pred_check
          %p12852 = pneg %p227
        $region90: #{tpu_custom_call.1} parent=87 // pred_check_branch
          %12854 = sbr.rel (%p12852) target = $region92
        $region91: #{tpu_custom_call.1} parent=87 // pred_region
          %s12855 = sand.u32 %s212, 1
          %s12856 = scalar_lea.sflag [#allocation5], %s12855
          %s12857 = sand.u32 %s212, 1
          %s12858 = smul.addr %s12857, 168
          %s12859 = scalar_lea.vmem [#allocation15], %s12858
          %12860 = dma.done %s12856, 2688
        $region92: #{tpu_custom_call.1} parent=87 // pred_fallthru
          _
      $region88: #{tpu_custom_call.1} parent=5 // pred_fallthru
        _
    $region6: #{tpu_custom_call.1} parent=1 // loop_footer
      %s26 = sadd.s32 1, %s22
    $region7: #{tpu_custom_call.1} parent=1 // loop_footer_branch
      %21 = sbr.rel target = $region3
    $region8: #{tpu_custom_call.1} parent=1 // loop_exit
      _
    %12861 = vsyncpa [#allocation4], 1
    %s12862 = scalar_lea.sflag [#allocation4], 1
    %12863 = vsyncpa %s12862, 1
    %12864 = vsyncpa [#allocation7], 1
    %12865 = vsyncpa [#allocation10], 1
    %12866 = vsyncpa [#allocation13], 1
    %s12867 = scalar_lea.sflag [#allocation13], 1
    %12868 = vsyncpa %s12867, 1
    %12869 = vsyncpa [#allocation5], 1
    %s12870 = scalar_lea.sflag [#allocation5], 1
    %12871 = vsyncpa %s12870, 1

</llo_original>
